<compile_context>
chip_gen: v7x
topology: tpu7x:2x2x1
jax: 0.10.0
libtpu: 0.0.40
codegen_flags: <defaults>
</compile_context>

<pallas_src>
import functools

import numpy as np
import jax
import jax.numpy as jnp
from jax.experimental import pallas as pl
from jax.experimental.pallas import tpu as pltpu


BCBK_CHANNELS_RESNET = (64, 256, 512, 1024, 2048)


# -----------------------------------------------------------------------------
# Subsample-prefix ordering: order spatial positions so that, for every stage
# k, the positions surviving the cumulative ::2^k subsample form a contiguous
# prefix.  This turns the per-stage spatial subsample into a static prefix row
# slice inside the fused kernel.
# -----------------------------------------------------------------------------
def _subsample_order(height, width, num_stages):
    hs, ws = np.meshgrid(np.arange(height), np.arange(width), indexing="ij")
    lvl = np.zeros((height, width), dtype=np.int64)
    for k in range(1, num_stages + 1):
        lvl[(hs % (1 << k) == 0) & (ws % (1 << k) == 0)] = k
    # Stable sort by descending level: positions with level >= k are exactly
    # the first ceil(H/2^k)*ceil(W/2^k) rows.
    order = np.argsort(-lvl.reshape(-1), kind="stable").astype(np.int64)
    sizes = []
    hh, ww = height, width
    for _ in range(num_stages):
        hh = -(-hh // 2)
        ww = -(-ww // 2)
        sizes.append((hh, ww))
    return order, sizes


# -----------------------------------------------------------------------------
# Fused kernel: init_conv (optional) + num_stages x (prefix-subsample,
# channel GEMM, bias, ReLU).  Everything stays in VMEM; only the 5 feature
# matrices are written out.
# -----------------------------------------------------------------------------
def _fused_backbone_kernel(*refs, has_init_conv, row_counts, num_stages):
    n_in = 1 + (2 if has_init_conv else 0) + 2 * num_stages
    in_refs, out_refs = refs[:n_in], refs[n_in:]
    it = iter(in_refs)

    a = next(it)[...]                                     # (M0, Cin) bf16
    if has_init_conv:
        w = next(it)[...]
        b = next(it)[...]
        a = jnp.dot(a, w, preferred_element_type=jnp.float32) + b
        a = a.astype(jnp.bfloat16)                        # (M0, 3)

    for j in range(num_stages):
        w = next(it)[...]
        b = next(it)[...]
        a = a[:row_counts[j]]                             # stride-2 subsample
        z = jnp.dot(a, w, preferred_element_type=jnp.float32) + b
        z = jnp.maximum(z, 0.0)
        out_refs[j][...] = z.astype(out_refs[j].dtype)
        if j + 1 < num_stages:
            a = z.astype(jnp.bfloat16)


def _full_spec(shape):
    # grid=(1,): every operand is one full-array VMEM block.
    return pl.BlockSpec(shape, lambda i: (0, 0))


def fused_backbone_call(x_perm, init_w, init_b, stage_w, stage_b,
                        row_counts, num_channels):
    has_init_conv = init_w is not None
    inputs = [x_perm]
    if has_init_conv:
        inputs += [init_w, init_b]
    for wj, bj in zip(stage_w, stage_b):
        inputs += [wj, bj]

    out_shape = tuple(
        jax.ShapeDtypeStruct((row_counts[j], num_channels[j]), jnp.float32)
        for j in range(len(num_channels)))

    # VMEM budget sanity (double-buffered operands + lane-padded chained
    # activations must fit the scoped limit requested below).
    # TODO(synk): for production-size images (large N*H*W) this whole-network
    # fusion would exceed VMEM; a tiled per-stage path would be needed.
    est = 0
    for a in inputs:
        est += 2 * int(np.prod(a.shape)) * jnp.dtype(a.dtype).itemsize
    for s in out_shape:
        est += 2 * int(np.prod(s.shape)) * jnp.dtype(s.dtype).itemsize
    est += 6 * row_counts[0] * 128                        # early activations
    assert est < 24 * 1024 * 1024, "fused kernel sized for small inputs"

    kernel = functools.partial(
        _fused_backbone_kernel,
        has_init_conv=has_init_conv,
        row_counts=tuple(row_counts),
        num_stages=len(num_channels))

    return pl.pallas_call(
        kernel,
        out_shape=out_shape,
        grid=(1,),
        in_specs=[_full_spec(a.shape) for a in inputs],
        out_specs=tuple(_full_spec(s.shape) for s in out_shape),
        compiler_params=pltpu.CompilerParams(
            dimension_semantics=("arbitrary",),
            vmem_limit_bytes=32 * 1024 * 1024,
        ),
    )(*inputs)


# -----------------------------------------------------------------------------
# Forward (jitted): one input permutation, one fused pallas_call, five output
# un-permutations back to NCHW.
# -----------------------------------------------------------------------------
def _backbone_forward(params, x_nchw, *, has_init_conv, num_channels):
    n, cin, height, width = x_nchw.shape
    num_stages = len(num_channels)
    order, sizes = _subsample_order(height, width, num_stages)
    row_counts = [hh * ww * n for hh, ww in sizes]

    # NCHW -> (level-sorted position, batch, channel) -> (M0, Cin), bf16.
    x = jnp.transpose(x_nchw, (0, 2, 3, 1)).reshape(n, height * width, cin)
    x = jnp.transpose(x[:, order, :], (1, 0, 2))
    x = x.reshape(height * width * n, cin).astype(jnp.bfloat16)

    outs = fused_backbone_call(
        x,
        params.get("init_w"), params.get("init_b"),
        params["stage_w"], params["stage_b"],
        row_counts, num_channels)

    feats = {}
    for j, out in enumerate(outs):
        s = j + 1
        hh, ww = sizes[j]
        cnt = hh * ww
        sel = order[:cnt]                                  # surviving positions
        dest = ((sel // width) >> s) * ww + ((sel % width) >> s)
        inv = np.zeros(cnt, dtype=np.int64)
        inv[dest] = np.arange(cnt)                         # bijection inverse
        f = out.reshape(cnt, n, num_channels[j])[inv]      # spatial row-major
        f = f.reshape(hh, ww, n, num_channels[j])
        feats[str(j + 2)] = jnp.transpose(f, (2, 3, 0, 1)) # NCHW
    return feats


# -----------------------------------------------------------------------------
# Pure-JAX reference (same bf16/f32 numerics) for a correctness check.
# -----------------------------------------------------------------------------
def _reference_forward(params, x_nchw, has_init_conv, num_channels):
    x = jnp.transpose(x_nchw, (0, 2, 3, 1)).astype(jnp.bfloat16)
    if has_init_conv:
        x = jnp.einsum("nhwc,cd->nhwd", x, params["init_w"],
                       preferred_element_type=jnp.float32)
        x = (x + params["init_b"].reshape(-1)).astype(jnp.bfloat16)
    feats = {}
    cur = x
    for j, cout in enumerate(num_channels):
        cur = cur[:, ::2, ::2, :]
        z = jnp.einsum("nhwc,cd->nhwd", cur.astype(jnp.bfloat16),
                       params["stage_w"][j],
                       preferred_element_type=jnp.float32)
        z = jnp.maximum(z + params["stage_b"][j].reshape(-1), 0.0)
        feats[str(j + 2)] = jnp.transpose(z, (0, 3, 1, 2))
        cur = z.astype(jnp.bfloat16)
    return feats


# -----------------------------------------------------------------------------
# BackboneBase equivalent ('resnet' branch; in_channels != 3 -> init_conv)
# -----------------------------------------------------------------------------
class BackboneBasePallas:
    def __init__(self, in_channels: int, key):
        self.num_channels = list(BCBK_CHANNELS_RESNET)
        self.strides = [2 ** (i + 1) for i in range(len(self.num_channels))]
        self.has_init_conv = in_channels != 3

        keys = jax.random.split(key, 2 + 2 * len(self.num_channels))
        params = {}

        # init_conv: nn.Conv2d(in_channels, 3, 1) (only when in_channels != 3)
        if self.has_init_conv:
            scale = 1.0 / jnp.sqrt(jnp.float32(in_channels))
            w = jax.random.normal(keys[0], (in_channels, 3), jnp.float32) * scale
            b = jax.random.normal(keys[1], (3,), jnp.float32) * 0.01
            params["init_w"] = w.astype(jnp.bfloat16)
            params["init_b"] = b.reshape(1, -1).astype(jnp.float32)

        # TODO(synk): synthetic stand-in for the external torchvision backbone
        # wrapped by IntermediateLayerGetter; each stage = stride-2 1x1 conv +
        # ReLU with the resnet-branch channel progression.
        stage_w, stage_b = [], []
        cin = 3
        for i, cout in enumerate(self.num_channels):
            scale = 1.0 / jnp.sqrt(jnp.float32(cin))
            w = jax.random.normal(keys[2 + 2 * i], (cin, cout), jnp.float32) * scale
            b = jax.random.normal(keys[3 + 2 * i], (cout,), jnp.float32) * 0.01
            stage_w.append(w.astype(jnp.bfloat16))
            stage_b.append(b.reshape(1, -1).astype(jnp.float32))
            cin = cout
        params["stage_w"] = stage_w
        params["stage_b"] = stage_b
        self.params = params

        self._forward = jax.jit(functools.partial(
            _backbone_forward,
            has_init_conv=self.has_init_conv,
            num_channels=tuple(self.num_channels)))

    def __call__(self, x_nchw):
        return self._forward(self.params, x_nchw)


# -----------------------------------------------------------------------------
if __name__ == "__main__":
    key = jax.random.PRNGKey(0)
    k_param, k_x = jax.random.split(key)

    # batch=2, in_channels=4 (!= 3, exercises init_conv), spatial=32
    # (32 is the minimum spatial size supporting all 5 strides up to 32)
    x = jax.random.normal(k_x, (2, 4, 32, 32), jnp.float32)

    model = BackboneBasePallas(in_channels=4, key=k_param)
    feats = jax.block_until_ready(model(x))

    # sanity: expected shapes / strides / channels of the resnet branch
    expected = {
        "2": (2, 64, 16, 16),
        "3": (2, 256, 8, 8),
        "4": (2, 512, 4, 4),
        "5": (2, 1024, 2, 2),
        "6": (2, 2048, 1, 1),
    }
    assert model.strides == [2, 4, 8, 16, 32]

    ref = jax.block_until_ready(_reference_forward(
        model.params, x, model.has_init_conv, tuple(model.num_channels)))

    for name, shape in expected.items():
        got = feats[name]
        assert got.shape == shape, (name, got.shape, shape)
        assert bool(jnp.all(jnp.isfinite(got)))
        err = float(jnp.max(jnp.abs(got - ref[name])))
        tol = 3e-2 * (float(jnp.max(jnp.abs(ref[name]))) + 1.0)
        assert err <= tol, (name, err, tol)

    print("KERNEL_OK")
</pallas_src>

<mosaic_0001>
module attributes {stable_mosaic.version = 11 : i64} {
  func.func @_fused_backbone_kernel(%arg0: i32, %arg1: memref<2048x4xbf16, #tpu.memory_space<vmem>>, %arg2: memref<4x3xbf16, #tpu.memory_space<vmem>>, %arg3: memref<1x3xf32, #tpu.memory_space<vmem>>, %arg4: memref<3x64xbf16, #tpu.memory_space<vmem>>, %arg5: memref<1x64xf32, #tpu.memory_space<vmem>>, %arg6: memref<64x256xbf16, #tpu.memory_space<vmem>>, %arg7: memref<1x256xf32, #tpu.memory_space<vmem>>, %arg8: memref<256x512xbf16, #tpu.memory_space<vmem>>, %arg9: memref<1x512xf32, #tpu.memory_space<vmem>>, %arg10: memref<512x1024xbf16, #tpu.memory_space<vmem>>, %arg11: memref<1x1024xf32, #tpu.memory_space<vmem>>, %arg12: memref<1024x2048xbf16, #tpu.memory_space<vmem>>, %arg13: memref<1x2048xf32, #tpu.memory_space<vmem>>, %arg14: memref<512x64xf32, #tpu.memory_space<vmem>>, %arg15: memref<128x256xf32, #tpu.memory_space<vmem>>, %arg16: memref<32x512xf32, #tpu.memory_space<vmem>>, %arg17: memref<8x1024xf32, #tpu.memory_space<vmem>>, %arg18: memref<2x2048xf32, #tpu.memory_space<vmem>>) attributes {dimension_semantics = [#tpu.dimension_semantics<arbitrary>], iteration_bounds = array<i64: 1>, scalar_prefetch = 0 : i64, scratch_operands = 0 : i64, tpu.core_type = #tpu.core_type<tc>, window_params = [{pipeline_mode = #tpu.pipeline_mode<synchronous>, transform_indices = @transform_0, window_bounds = array<i64: 2048, 4>}, {pipeline_mode = #tpu.pipeline_mode<synchronous>, transform_indices = @transform_1, window_bounds = array<i64: 4, 3>}, {pipeline_mode = #tpu.pipeline_mode<synchronous>, transform_indices = @transform_2, window_bounds = array<i64: 1, 3>}, {pipeline_mode = #tpu.pipeline_mode<synchronous>, transform_indices = @transform_3, window_bounds = array<i64: 3, 64>}, {pipeline_mode = #tpu.pipeline_mode<synchronous>, transform_indices = @transform_4, window_bounds = array<i64: 1, 64>}, {pipeline_mode = #tpu.pipeline_mode<synchronous>, transform_indices = @transform_5, window_bounds = array<i64: 64, 256>}, {pipeline_mode = #tpu.pipeline_mode<synchronous>, transform_indices = @transform_6, window_bounds = array<i64: 1, 256>}, {pipeline_mode = #tpu.pipeline_mode<synchronous>, transform_indices = @transform_7, window_bounds = array<i64: 256, 512>}, {pipeline_mode = #tpu.pipeline_mode<synchronous>, transform_indices = @transform_8, window_bounds = array<i64: 1, 512>}, {pipeline_mode = #tpu.pipeline_mode<synchronous>, transform_indices = @transform_9, window_bounds = array<i64: 512, 1024>}, {pipeline_mode = #tpu.pipeline_mode<synchronous>, transform_indices = @transform_10, window_bounds = array<i64: 1, 1024>}, {pipeline_mode = #tpu.pipeline_mode<synchronous>, transform_indices = @transform_11, window_bounds = array<i64: 1024, 2048>}, {pipeline_mode = #tpu.pipeline_mode<synchronous>, transform_indices = @transform_12, window_bounds = array<i64: 1, 2048>}, {pipeline_mode = #tpu.pipeline_mode<synchronous>, transform_indices = @transform_13, window_bounds = array<i64: 512, 64>}, {pipeline_mode = #tpu.pipeline_mode<synchronous>, transform_indices = @transform_14, window_bounds = array<i64: 128, 256>}, {pipeline_mode = #tpu.pipeline_mode<synchronous>, transform_indices = @transform_15, window_bounds = array<i64: 32, 512>}, {pipeline_mode = #tpu.pipeline_mode<synchronous>, transform_indices = @transform_16, window_bounds = array<i64: 8, 1024>}, {pipeline_mode = #tpu.pipeline_mode<synchronous>, transform_indices = @transform_17, window_bounds = array<i64: 2, 2048>}]} {
    %c0 = arith.constant 0 : index
    %c0_0 = arith.constant 0 : index
    %0 = vector.load %arg1[%c0, %c0_0] : memref<2048x4xbf16, #tpu.memory_space<vmem>>, vector<2048x4xbf16>
    %c0_1 = arith.constant 0 : index
    %c0_2 = arith.constant 0 : index
    %1 = vector.load %arg2[%c0_1, %c0_2] : memref<4x3xbf16, #tpu.memory_space<vmem>>, vector<4x3xbf16>
    %c0_3 = arith.constant 0 : index
    %c0_4 = arith.constant 0 : index
    %2 = vector.load %arg3[%c0_3, %c0_4] : memref<1x3xf32, #tpu.memory_space<vmem>>, vector<1x3xf32>
    %cst = arith.constant dense<0.000000e+00> : vector<2048x3xf32>
    %3 = tpu.matmul %0, %1, %cst {dimension_numbers = #tpu.dot_dimension_numbers<[1], [0], [0], [1], [0, 0, 1, 1], [], []>} : vector<2048x4xbf16>, vector<4x3xbf16>, vector<2048x3xf32> -> vector<2048x3xf32>
    %4 = vector.broadcast %2 : vector<1x3xf32> to vector<2048x3xf32>
    %5 = arith.addf %3, %4 : vector<2048x3xf32>
    %6 = arith.truncf %5 : vector<2048x3xf32> to vector<2048x3xbf16>
    %c0_5 = arith.constant 0 : index
    %c0_6 = arith.constant 0 : index
    %7 = vector.load %arg4[%c0_5, %c0_6] : memref<3x64xbf16, #tpu.memory_space<vmem>>, vector<3x64xbf16>
    %c0_7 = arith.constant 0 : index
    %c0_8 = arith.constant 0 : index
    %8 = vector.load %arg5[%c0_7, %c0_8] : memref<1x64xf32, #tpu.memory_space<vmem>>, vector<1x64xf32>
    %9 = vector.extract_strided_slice %6 {offsets = [0, 0], sizes = [512, 3], strides = [1, 1]} : vector<2048x3xbf16> to vector<512x3xbf16>
    %cst_9 = arith.constant dense<0.000000e+00> : vector<512x64xf32>
    %10 = tpu.matmul %9, %7, %cst_9 {dimension_numbers = #tpu.dot_dimension_numbers<[1], [0], [0], [1], [0, 0, 1, 1], [], []>} : vector<512x3xbf16>, vector<3x64xbf16>, vector<512x64xf32> -> vector<512x64xf32>
    %11 = vector.broadcast %8 : vector<1x64xf32> to vector<512x64xf32>
    %12 = arith.addf %10, %11 : vector<512x64xf32>
    %cst_10 = arith.constant 0.000000e+00 : f32
    %13 = vector.broadcast %cst_10 : f32 to vector<512x64xf32>
    %14 = arith.maximumf %12, %13 : vector<512x64xf32>
    %c0_11 = arith.constant 0 : index
    %c0_12 = arith.constant 0 : index
    %15 = vector.load %arg14[%c0_11, %c0_12] : memref<512x64xf32, #tpu.memory_space<vmem>>, vector<512x64xf32>
    tpu.vector_store %arg14[%c0_11, %c0_12], %14 {strides = array<i32>} : memref<512x64xf32, #tpu.memory_space<vmem>>, vector<512x64xf32>,
    %16 = arith.truncf %14 : vector<512x64xf32> to vector<512x64xbf16>
    %c0_13 = arith.constant 0 : index
    %c0_14 = arith.constant 0 : index
    %17 = vector.load %arg6[%c0_13, %c0_14] : memref<64x256xbf16, #tpu.memory_space<vmem>>, vector<64x256xbf16>
    %c0_15 = arith.constant 0 : index
    %c0_16 = arith.constant 0 : index
    %18 = vector.load %arg7[%c0_15, %c0_16] : memref<1x256xf32, #tpu.memory_space<vmem>>, vector<1x256xf32>
    %19 = vector.extract_strided_slice %16 {offsets = [0, 0], sizes = [128, 64], strides = [1, 1]} : vector<512x64xbf16> to vector<128x64xbf16>
    %cst_17 = arith.constant dense<0.000000e+00> : vector<128x256xf32>
    %20 = tpu.matmul %19, %17, %cst_17 {dimension_numbers = #tpu.dot_dimension_numbers<[1], [0], [0], [1], [0, 0, 1, 1], [], []>} : vector<128x64xbf16>, vector<64x256xbf16>, vector<128x256xf32> -> vector<128x256xf32>
    %21 = vector.broadcast %18 : vector<1x256xf32> to vector<128x256xf32>
    %22 = arith.addf %20, %21 : vector<128x256xf32>
    %cst_18 = arith.constant 0.000000e+00 : f32
    %23 = vector.broadcast %cst_18 : f32 to vector<128x256xf32>
    %24 = arith.maximumf %22, %23 : vector<128x256xf32>
    %c0_19 = arith.constant 0 : index
    %c0_20 = arith.constant 0 : index
    %25 = vector.load %arg15[%c0_19, %c0_20] : memref<128x256xf32, #tpu.memory_space<vmem>>, vector<128x256xf32>
    tpu.vector_store %arg15[%c0_19, %c0_20], %24 {strides = array<i32>} : memref<128x256xf32, #tpu.memory_space<vmem>>, vector<128x256xf32>,
    %26 = arith.truncf %24 : vector<128x256xf32> to vector<128x256xbf16>
    %c0_21 = arith.constant 0 : index
    %c0_22 = arith.constant 0 : index
    %27 = vector.load %arg8[%c0_21, %c0_22] : memref<256x512xbf16, #tpu.memory_space<vmem>>, vector<256x512xbf16>
    %c0_23 = arith.constant 0 : index
    %c0_24 = arith.constant 0 : index
    %28 = vector.load %arg9[%c0_23, %c0_24] : memref<1x512xf32, #tpu.memory_space<vmem>>, vector<1x512xf32>
    %29 = vector.extract_strided_slice %26 {offsets = [0, 0], sizes = [32, 256], strides = [1, 1]} : vector<128x256xbf16> to vector<32x256xbf16>
    %cst_25 = arith.constant dense<0.000000e+00> : vector<32x512xf32>
    %30 = tpu.matmul %29, %27, %cst_25 {dimension_numbers = #tpu.dot_dimension_numbers<[1], [0], [0], [1], [0, 0, 1, 1], [], []>} : vector<32x256xbf16>, vector<256x512xbf16>, vector<32x512xf32> -> vector<32x512xf32>
    %31 = vector.broadcast %28 : vector<1x512xf32> to vector<32x512xf32>
    %32 = arith.addf %30, %31 : vector<32x512xf32>
    %cst_26 = arith.constant 0.000000e+00 : f32
    %33 = vector.broadcast %cst_26 : f32 to vector<32x512xf32>
    %34 = arith.maximumf %32, %33 : vector<32x512xf32>
    %c0_27 = arith.constant 0 : index
    %c0_28 = arith.constant 0 : index
    %35 = vector.load %arg16[%c0_27, %c0_28] : memref<32x512xf32, #tpu.memory_space<vmem>>, vector<32x512xf32>
    tpu.vector_store %arg16[%c0_27, %c0_28], %34 {strides = array<i32>} : memref<32x512xf32, #tpu.memory_space<vmem>>, vector<32x512xf32>,
    %36 = arith.truncf %34 : vector<32x512xf32> to vector<32x512xbf16>
    %c0_29 = arith.constant 0 : index
    %c0_30 = arith.constant 0 : index
    %37 = vector.load %arg10[%c0_29, %c0_30] : memref<512x1024xbf16, #tpu.memory_space<vmem>>, vector<512x1024xbf16>
    %c0_31 = arith.constant 0 : index
    %c0_32 = arith.constant 0 : index
    %38 = vector.load %arg11[%c0_31, %c0_32] : memref<1x1024xf32, #tpu.memory_space<vmem>>, vector<1x1024xf32>
    %39 = vector.extract_strided_slice %36 {offsets = [0, 0], sizes = [8, 512], strides = [1, 1]} : vector<32x512xbf16> to vector<8x512xbf16>
    %cst_33 = arith.constant dense<0.000000e+00> : vector<8x1024xf32>
    %40 = tpu.matmul %39, %37, %cst_33 {dimension_numbers = #tpu.dot_dimension_numbers<[1], [0], [0], [1], [0, 0, 1, 1], [], []>} : vector<8x512xbf16>, vector<512x1024xbf16>, vector<8x1024xf32> -> vector<8x1024xf32>
    %41 = vector.broadcast %38 : vector<1x1024xf32> to vector<8x1024xf32>
    %42 = arith.addf %40, %41 : vector<8x1024xf32>
    %cst_34 = arith.constant 0.000000e+00 : f32
    %43 = vector.broadcast %cst_34 : f32 to vector<8x1024xf32>
    %44 = arith.maximumf %42, %43 : vector<8x1024xf32>
    %c0_35 = arith.constant 0 : index
    %c0_36 = arith.constant 0 : index
    %45 = vector.load %arg17[%c0_35, %c0_36] : memref<8x1024xf32, #tpu.memory_space<vmem>>, vector<8x1024xf32>
    tpu.vector_store %arg17[%c0_35, %c0_36], %44 {strides = array<i32>} : memref<8x1024xf32, #tpu.memory_space<vmem>>, vector<8x1024xf32>,
    %46 = arith.truncf %44 : vector<8x1024xf32> to vector<8x1024xbf16>
    %c0_37 = arith.constant 0 : index
    %c0_38 = arith.constant 0 : index
    %47 = vector.load %arg12[%c0_37, %c0_38] : memref<1024x2048xbf16, #tpu.memory_space<vmem>>, vector<1024x2048xbf16>
    %c0_39 = arith.constant 0 : index
    %c0_40 = arith.constant 0 : index
    %48 = vector.load %arg13[%c0_39, %c0_40] : memref<1x2048xf32, #tpu.memory_space<vmem>>, vector<1x2048xf32>
    %49 = vector.extract_strided_slice %46 {offsets = [0, 0], sizes = [2, 1024], strides = [1, 1]} : vector<8x1024xbf16> to vector<2x1024xbf16>
    %cst_41 = arith.constant dense<0.000000e+00> : vector<2x2048xf32>
    %50 = tpu.matmul %49, %47, %cst_41 {dimension_numbers = #tpu.dot_dimension_numbers<[1], [0], [0], [1], [0, 0, 1, 1], [], []>} : vector<2x1024xbf16>, vector<1024x2048xbf16>, vector<2x2048xf32> -> vector<2x2048xf32>
    %51 = vector.broadcast %48 : vector<1x2048xf32> to vector<2x2048xf32>
    %52 = arith.addf %50, %51 : vector<2x2048xf32>
    %cst_42 = arith.constant 0.000000e+00 : f32
    %53 = vector.broadcast %cst_42 : f32 to vector<2x2048xf32>
    %54 = arith.maximumf %52, %53 : vector<2x2048xf32>
    %c0_43 = arith.constant 0 : index
    %c0_44 = arith.constant 0 : index
    %55 = vector.load %arg18[%c0_43, %c0_44] : memref<2x2048xf32, #tpu.memory_space<vmem>>, vector<2x2048xf32>
    tpu.vector_store %arg18[%c0_43, %c0_44], %54 {strides = array<i32>} : memref<2x2048xf32, #tpu.memory_space<vmem>>, vector<2x2048xf32>,
    return
  }
  func.func @transform_0(%arg0: i32) -> (i32, i32) {
    %c0_i32 = arith.constant 0 : i32
    %c0_i32_0 = arith.constant 0 : i32
    %c0_i32_1 = arith.constant 0 : i32
    return %c0_i32, %c0_i32_0 : i32, i32
  }
  func.func @transform_1(%arg0: i32) -> (i32, i32) {
    %c0_i32 = arith.constant 0 : i32
    %c0_i32_0 = arith.constant 0 : i32
    %c0_i32_1 = arith.constant 0 : i32
    return %c0_i32, %c0_i32_0 : i32, i32
  }
  func.func @transform_2(%arg0: i32) -> (i32, i32) {
    %c0_i32 = arith.constant 0 : i32
    %c0_i32_0 = arith.constant 0 : i32
    %c0_i32_1 = arith.constant 0 : i32
    return %c0_i32, %c0_i32_0 : i32, i32
  }
  func.func @transform_3(%arg0: i32) -> (i32, i32) {
    %c0_i32 = arith.constant 0 : i32
    %c0_i32_0 = arith.constant 0 : i32
    %c0_i32_1 = arith.constant 0 : i32
    return %c0_i32, %c0_i32_0 : i32, i32
  }
  func.func @transform_4(%arg0: i32) -> (i32, i32) {
    %c0_i32 = arith.constant 0 : i32
    %c0_i32_0 = arith.constant 0 : i32
    %c0_i32_1 = arith.constant 0 : i32
    return %c0_i32, %c0_i32_0 : i32, i32
  }
  func.func @transform_5(%arg0: i32) -> (i32, i32) {
    %c0_i32 = arith.constant 0 : i32
    %c0_i32_0 = arith.constant 0 : i32
    %c0_i32_1 = arith.constant 0 : i32
    return %c0_i32, %c0_i32_0 : i32, i32
  }
  func.func @transform_6(%arg0: i32) -> (i32, i32) {
    %c0_i32 = arith.constant 0 : i32
    %c0_i32_0 = arith.constant 0 : i32
    %c0_i32_1 = arith.constant 0 : i32
    return %c0_i32, %c0_i32_0 : i32, i32
  }
  func.func @transform_7(%arg0: i32) -> (i32, i32) {
    %c0_i32 = arith.constant 0 : i32
    %c0_i32_0 = arith.constant 0 : i32
    %c0_i32_1 = arith.constant 0 : i32
    return %c0_i32, %c0_i32_0 : i32, i32
  }
  func.func @transform_8(%arg0: i32) -> (i32, i32) {
    %c0_i32 = arith.constant 0 : i32
    %c0_i32_0 = arith.constant 0 : i32
    %c0_i32_1 = arith.constant 0 : i32
    return %c0_i32, %c0_i32_0 : i32, i32
  }
  func.func @transform_9(%arg0: i32) -> (i32, i32) {
    %c0_i32 = arith.constant 0 : i32
    %c0_i32_0 = arith.constant 0 : i32
    %c0_i32_1 = arith.constant 0 : i32
    return %c0_i32, %c0_i32_0 : i32, i32
  }
  func.func @transform_10(%arg0: i32) -> (i32, i32) {
    %c0_i32 = arith.constant 0 : i32
    %c0_i32_0 = arith.constant 0 : i32
    %c0_i32_1 = arith.constant 0 : i32
    return %c0_i32, %c0_i32_0 : i32, i32
  }
  func.func @transform_11(%arg0: i32) -> (i32, i32) {
    %c0_i32 = arith.constant 0 : i32
    %c0_i32_0 = arith.constant 0 : i32
    %c0_i32_1 = arith.constant 0 : i32
    return %c0_i32, %c0_i32_0 : i32, i32
  }
  func.func @transform_12(%arg0: i32) -> (i32, i32) {
    %c0_i32 = arith.constant 0 : i32
    %c0_i32_0 = arith.constant 0 : i32
    %c0_i32_1 = arith.constant 0 : i32
    return %c0_i32, %c0_i32_0 : i32, i32
  }
  func.func @transform_13(%arg0: i32) -> (i32, i32) {
    %c0_i32 = arith.constant 0 : i32
    %c0_i32_0 = arith.constant 0 : i32
    %c0_i32_1 = arith.constant 0 : i32
    return %c0_i32, %c0_i32_0 : i32, i32
  }
  func.func @transform_14(%arg0: i32) -> (i32, i32) {
    %c0_i32 = arith.constant 0 : i32
    %c0_i32_0 = arith.constant 0 : i32
    %c0_i32_1 = arith.constant 0 : i32
    return %c0_i32, %c0_i32_0 : i32, i32
  }
  func.func @transform_15(%arg0: i32) -> (i32, i32) {
    %c0_i32 = arith.constant 0 : i32
    %c0_i32_0 = arith.constant 0 : i32
    %c0_i32_1 = arith.constant 0 : i32
    return %c0_i32, %c0_i32_0 : i32, i32
  }
  func.func @transform_16(%arg0: i32) -> (i32, i32) {
    %c0_i32 = arith.constant 0 : i32
    %c0_i32_0 = arith.constant 0 : i32
    %c0_i32_1 = arith.constant 0 : i32
    return %c0_i32, %c0_i32_0 : i32, i32
  }
  func.func @transform_17(%arg0: i32) -> (i32, i32) {
    %c0_i32 = arith.constant 0 : i32
    %c0_i32_0 = arith.constant 0 : i32
    %c0_i32_1 = arith.constant 0 : i32
    return %c0_i32, %c0_i32_0 : i32, i32
  }
}

</mosaic_0001>

<llo_original>
// kernel: _backbone_forward.1
$region0: #{_backbone_forward.1}
  #allocation0 [shape = 'u32[]', space=smem, size = 0x4, offset = 0x4, fixed_abs, tag = 'smem constant byte address 0x4 - core index']
  #allocation1 [shape = 'u32[144,128]{1,0:T(1,128)}', space=vmem, size = 0x12000, scoped, tag = 'internal scratch']
  %s0 = inlined_call_operand.vmem [shape: bf16[2048,4], index: 0, kind: input, shape index: {}]
  %s1 = inlined_call_operand.hbm [shape: bf16[4,3], index: 1, kind: input, shape index: {}]
  %s2 = inlined_call_operand.hbm [shape: f32[1,3], index: 2, kind: input, shape index: {}]
  %s3 = inlined_call_operand.hbm [shape: bf16[3,64], index: 3, kind: input, shape index: {}]
  %s4 = inlined_call_operand.hbm [shape: f32[1,64], index: 4, kind: input, shape index: {}]
  %s5 = inlined_call_operand.hbm [shape: bf16[64,256], index: 5, kind: input, shape index: {}]
  %s6 = inlined_call_operand.hbm [shape: f32[1,256], index: 6, kind: input, shape index: {}]
  %s7 = inlined_call_operand.hbm [shape: bf16[256,512], index: 7, kind: input, shape index: {}]
  %s8 = inlined_call_operand.hbm [shape: f32[1,512], index: 8, kind: input, shape index: {}]
  %s9 = inlined_call_operand.hbm [shape: bf16[512,1024], index: 9, kind: input, shape index: {}]
  %s10 = inlined_call_operand.hbm [shape: f32[1,1024], index: 10, kind: input, shape index: {}]
  %s11 = inlined_call_operand.hbm [shape: bf16[1024,2048], index: 11, kind: input, shape index: {}]
  %s12 = inlined_call_operand.hbm [shape: f32[1,2048], index: 12, kind: input, shape index: {}]
  %s13 = inlined_call_operand.vmem [shape: f32[512,64], index: 13, kind: output, shape index: {0}]
  %s14 = inlined_call_operand.vmem [shape: f32[128,256], index: 14, kind: output, shape index: {1}]
  %s15 = inlined_call_operand.vmem [shape: f32[32,512], index: 15, kind: output, shape index: {2}]
  %s16 = inlined_call_operand.vmem [shape: f32[8,1024], index: 16, kind: output, shape index: {3}]
  %s17 = inlined_call_operand.vmem [shape: f32[2,2048], index: 17, kind: output, shape index: {4}]
  %18 = xla_tuple %s13, %s14, %s15, %s16, %s17
  %s19 = sld [smem:[#allocation0]]
  $region142: #{_backbone_forward.1} parent=0
    _
  %s21 = ssub.s32 1, %s19
  %s22 = scalar_select 0, %s21, %s19
  $region1: #{_backbone_forward.1} parent=0
    #allocation2 [shape = 'u8[1024]{0}', space=vmem, size = 0x400, scoped, tag = 'input window, operand 1, single buffered']
    #allocation3 [shape = 's32[1]{0}', space=sflag, size = 0x4, scoped, tag = 'scoped memory for _backbone_forward.1']
    #allocation4 [shape = 'u8[512]{0}', space=vmem, size = 0x400, scoped, tag = 'input window, operand 2, single buffered']
    #allocation5 [shape = 's32[1]{0}', space=sflag, size = 0x4, scoped, tag = 'scoped memory for _backbone_forward.1']
    #allocation6 [shape = 'u8[1024]{0}', space=vmem, size = 0x400, scoped, tag = 'input window, operand 3, single buffered']
    #allocation7 [shape = 'u8[512]{0}', space=vmem, size = 0x400, scoped, tag = 'input window, operand 4, single buffered']
    #allocation8 [shape = 's32[1]{0}', space=sflag, size = 0x4, scoped, tag = 'scoped memory for _backbone_forward.1']
    #allocation9 [shape = 'u8[32768]{0}', space=vmem, size = 0x8000, scoped, tag = 'input window, operand 5, single buffered']
    #allocation10 [shape = 'u8[1024]{0}', space=vmem, size = 0x400, scoped, tag = 'input window, operand 6, single buffered']
    #allocation11 [shape = 's32[1]{0}', space=sflag, size = 0x4, scoped, tag = 'scoped memory for _backbone_forward.1']
    #allocation12 [shape = 'u8[262144]{0}', space=vmem, size = 0x40000, scoped, tag = 'input window, operand 7, single buffered']
    #allocation13 [shape = 'u8[2048]{0}', space=vmem, size = 0x800, scoped, tag = 'input window, operand 8, single buffered']
    #allocation14 [shape = 's32[1]{0}', space=sflag, size = 0x4, scoped, tag = 'scoped memory for _backbone_forward.1']
    #allocation15 [shape = 'u8[1048576]{0}', space=vmem, size = 0x100000, scoped, tag = 'input window, operand 9, single buffered']
    #allocation16 [shape = 'u8[4096]{0}', space=vmem, size = 0x1000, scoped, tag = 'input window, operand 10, single buffered']
    #allocation17 [shape = 's32[1]{0}', space=sflag, size = 0x4, scoped, tag = 'scoped memory for _backbone_forward.1']
    #allocation18 [shape = 'u8[4194304]{0}', space=vmem, size = 0x400000, scoped, tag = 'input window, operand 11, single buffered']
    #allocation19 [shape = 'u8[8192]{0}', space=vmem, size = 0x2000, scoped, tag = 'input window, operand 12, single buffered']
    #allocation20 [shape = 's32[1]{0}', space=sflag, size = 0x4, scoped, tag = 'scoped memory for _backbone_forward.1']
    %23 = vsyncpa [#allocation3], 0
    %24 = vsyncpa [#allocation5], 0
    %25 = vsyncpa [#allocation8], 0
    %26 = vsyncpa [#allocation11], 0
    %27 = vsyncpa [#allocation14], 0
    %28 = vsyncpa [#allocation17], 0
    %29 = vsyncpa [#allocation20], 0
    // Predicated region
    $region2: #{_backbone_forward.1} parent=1 // pred_check
      _
    $region3: #{_backbone_forward.1} parent=1 // pred_check_branch
      %31 = sbr.rel (0) target = $region5
    $region4: #{_backbone_forward.1} parent=1 // pred_region
      _
    $region5: #{_backbone_forward.1} parent=1 // pred_fallthru
      _
    // Predicated region
    $region6: #{_backbone_forward.1} parent=1 // pred_check
      _
    $region7: #{_backbone_forward.1} parent=1 // pred_check_branch
      %33 = sbr.rel (0) target = $region9
    $region8: #{_backbone_forward.1} parent=1 // pred_region
      %s35 = ssub.s32 32, 32
      %36 = vsyncadd [#allocation3], %s35
      %s38 = sshll.u32 [#allocation2], 4
      %s39 = int_to_ptr.vmem [resolvable:$true] %s38
      %41 = dma.hbm_to_vmem [thread:$0]  %s1, 32, %s39, [#allocation3]
    $region9: #{_backbone_forward.1} parent=1 // pred_fallthru
      _
    // Predicated region
    $region10: #{_backbone_forward.1} parent=1 // pred_check
      _
    $region11: #{_backbone_forward.1} parent=1 // pred_check_branch
      %43 = sbr.rel (0) target = $region13
    $region12: #{_backbone_forward.1} parent=1 // pred_region
      %s45 = ssub.s32 16, 16
      %46 = vsyncadd [#allocation5], %s45
      %s48 = sshll.u32 [#allocation4], 4
      %s49 = int_to_ptr.vmem [resolvable:$true] %s48
      %51 = dma.hbm_to_vmem [thread:$0]  %s2, 16, %s49, [#allocation5]
    $region13: #{_backbone_forward.1} parent=1 // pred_fallthru
      _
    // Predicated region
    $region14: #{_backbone_forward.1} parent=1 // pred_check
      _
    $region15: #{_backbone_forward.1} parent=1 // pred_check_branch
      %53 = sbr.rel (0) target = $region17
    $region16: #{_backbone_forward.1} parent=1 // pred_region
      %s55 = ssub.s32 32, 32
      %56 = vsyncadd [#allocation5], %s55
      %s58 = sshll.u32 [#allocation6], 4
      %s59 = int_to_ptr.vmem [resolvable:$true] %s58
      %61 = dma.hbm_to_vmem [thread:$0]  %s3, 32, %s59, [#allocation5]
    $region17: #{_backbone_forward.1} parent=1 // pred_fallthru
      _
    // Predicated region
    $region18: #{_backbone_forward.1} parent=1 // pred_check
      _
    $region19: #{_backbone_forward.1} parent=1 // pred_check_branch
      %63 = sbr.rel (0) target = $region21
    $region20: #{_backbone_forward.1} parent=1 // pred_region
      %s65 = ssub.s32 16, 16
      %66 = vsyncadd [#allocation8], %s65
      %s68 = sshll.u32 [#allocation7], 4
      %s69 = int_to_ptr.vmem [resolvable:$true] %s68
      %71 = dma.hbm_to_vmem [thread:$0]  %s4, 16, %s69, [#allocation8]
    $region21: #{_backbone_forward.1} parent=1 // pred_fallthru
      _
    // Predicated region
    $region22: #{_backbone_forward.1} parent=1 // pred_check
      _
    $region23: #{_backbone_forward.1} parent=1 // pred_check_branch
      %73 = sbr.rel (0) target = $region25
    $region24: #{_backbone_forward.1} parent=1 // pred_region
      %s75 = ssub.s32 1024, 1024
      %76 = vsyncadd [#allocation8], %s75
      %s77 = sshll.u32 [#allocation9], 4
      %s78 = int_to_ptr.vmem [resolvable:$true] %s77
      %83 = dma.hbm_to_vmem [thread:$0]  %s5, 1024, %s78, [#allocation8], 128, 128, 8
    $region25: #{_backbone_forward.1} parent=1 // pred_fallthru
      _
    // Predicated region
    $region26: #{_backbone_forward.1} parent=1 // pred_check
      _
    $region27: #{_backbone_forward.1} parent=1 // pred_check_branch
      %85 = sbr.rel (0) target = $region29
    $region28: #{_backbone_forward.1} parent=1 // pred_region
      %s87 = ssub.s32 32, 32
      %88 = vsyncadd [#allocation11], %s87
      %s90 = sshll.u32 [#allocation10], 4
      %s91 = int_to_ptr.vmem [resolvable:$true] %s90
      %93 = dma.hbm_to_vmem [thread:$0]  %s6, 32, %s91, [#allocation11]
    $region29: #{_backbone_forward.1} parent=1 // pred_fallthru
      _
    // Predicated region
    $region30: #{_backbone_forward.1} parent=1 // pred_check
      _
    $region31: #{_backbone_forward.1} parent=1 // pred_check_branch
      %95 = sbr.rel (0) target = $region33
    $region32: #{_backbone_forward.1} parent=1 // pred_region
      %s97 = ssub.s32 8192, 8192
      %98 = vsyncadd [#allocation11], %s97
      %s99 = sshll.u32 [#allocation12], 4
      %s100 = int_to_ptr.vmem [resolvable:$true] %s99
      %105 = dma.hbm_to_vmem [thread:$0]  %s7, 8192, %s100, [#allocation11], 256, 256, 16
    $region33: #{_backbone_forward.1} parent=1 // pred_fallthru
      _
    // Predicated region
    $region34: #{_backbone_forward.1} parent=1 // pred_check
      _
    $region35: #{_backbone_forward.1} parent=1 // pred_check_branch
      %107 = sbr.rel (0) target = $region37
    $region36: #{_backbone_forward.1} parent=1 // pred_region
      %s109 = ssub.s32 64, 64
      %110 = vsyncadd [#allocation14], %s109
      %s112 = sshll.u32 [#allocation13], 4
      %s113 = int_to_ptr.vmem [resolvable:$true] %s112
      %115 = dma.hbm_to_vmem [thread:$0]  %s8, 64, %s113, [#allocation14]
    $region37: #{_backbone_forward.1} parent=1 // pred_fallthru
      _
    // Predicated region
    $region38: #{_backbone_forward.1} parent=1 // pred_check
      _
    $region39: #{_backbone_forward.1} parent=1 // pred_check_branch
      %117 = sbr.rel (0) target = $region41
    $region40: #{_backbone_forward.1} parent=1 // pred_region
      %s119 = ssub.s32 32768, 32768
      %120 = vsyncadd [#allocation14], %s119
      %s121 = sshll.u32 [#allocation15], 4
      %s122 = int_to_ptr.vmem [resolvable:$true] %s121
      %127 = dma.hbm_to_vmem [thread:$0]  %s9, 32768, %s122, [#allocation14], 512, 512, 32
    $region41: #{_backbone_forward.1} parent=1 // pred_fallthru
      _
    // Predicated region
    $region42: #{_backbone_forward.1} parent=1 // pred_check
      _
    $region43: #{_backbone_forward.1} parent=1 // pred_check_branch
      %129 = sbr.rel (0) target = $region45
    $region44: #{_backbone_forward.1} parent=1 // pred_region
      %s131 = ssub.s32 128, 128
      %132 = vsyncadd [#allocation17], %s131
      %s134 = sshll.u32 [#allocation16], 4
      %s135 = int_to_ptr.vmem [resolvable:$true] %s134
      %137 = dma.hbm_to_vmem [thread:$0]  %s10, 128, %s135, [#allocation17]
    $region45: #{_backbone_forward.1} parent=1 // pred_fallthru
      _
    // Predicated region
    $region46: #{_backbone_forward.1} parent=1 // pred_check
      _
    $region47: #{_backbone_forward.1} parent=1 // pred_check_branch
      %139 = sbr.rel (0) target = $region49
    $region48: #{_backbone_forward.1} parent=1 // pred_region
      %s141 = ssub.s32 131072, 131072
      %142 = vsyncadd [#allocation17], %s141
      %s143 = sshll.u32 [#allocation18], 4
      %s144 = int_to_ptr.vmem [resolvable:$true] %s143
      %149 = dma.hbm_to_vmem [thread:$0]  %s11, 131072, %s144, [#allocation17], 1024, 1024, 64
    $region49: #{_backbone_forward.1} parent=1 // pred_fallthru
      _
    // Predicated region
    $region50: #{_backbone_forward.1} parent=1 // pred_check
      _
    $region51: #{_backbone_forward.1} parent=1 // pred_check_branch
      %151 = sbr.rel (0) target = $region53
    $region52: #{_backbone_forward.1} parent=1 // pred_region
      %s153 = ssub.s32 256, 256
      %154 = vsyncadd [#allocation20], %s153
      %s156 = sshll.u32 [#allocation19], 4
      %s157 = int_to_ptr.vmem [resolvable:$true] %s156
      %159 = dma.hbm_to_vmem [thread:$0]  %s12, 256, %s157, [#allocation20]
    $region53: #{_backbone_forward.1} parent=1 // pred_fallthru
      _
    // Predicated region
    $region54: #{_backbone_forward.1} parent=1 // pred_check
      _
    $region55: #{_backbone_forward.1} parent=1 // pred_check_branch
      %161 = sbr.rel (0) target = $region57
    $region56: #{_backbone_forward.1} parent=1 // pred_region
      %162 = dma.done [#allocation3], 32
    $region57: #{_backbone_forward.1} parent=1 // pred_fallthru
      _
    // Predicated region
    $region58: #{_backbone_forward.1} parent=1 // pred_check
      _
    $region59: #{_backbone_forward.1} parent=1 // pred_check_branch
      %164 = sbr.rel (0) target = $region61
    $region60: #{_backbone_forward.1} parent=1 // pred_region
      %165 = dma.done [#allocation5], 16
    $region61: #{_backbone_forward.1} parent=1 // pred_fallthru
      _
    // Predicated region
    $region62: #{_backbone_forward.1} parent=1 // pred_check
      _
    $region63: #{_backbone_forward.1} parent=1 // pred_check_branch
      %167 = sbr.rel (0) target = $region65
    $region64: #{_backbone_forward.1} parent=1 // pred_region
      %168 = dma.done [#allocation5], 32
    $region65: #{_backbone_forward.1} parent=1 // pred_fallthru
      _
    // Predicated region
    $region66: #{_backbone_forward.1} parent=1 // pred_check
      _
    $region67: #{_backbone_forward.1} parent=1 // pred_check_branch
      %170 = sbr.rel (0) target = $region69
    $region68: #{_backbone_forward.1} parent=1 // pred_region
      %171 = dma.done [#allocation8], 16
    $region69: #{_backbone_forward.1} parent=1 // pred_fallthru
      _
    // Predicated region
    $region70: #{_backbone_forward.1} parent=1 // pred_check
      _
    $region71: #{_backbone_forward.1} parent=1 // pred_check_branch
      %173 = sbr.rel (0) target = $region73
    $region72: #{_backbone_forward.1} parent=1 // pred_region
      %174 = dma.done [#allocation8], 1024
    $region73: #{_backbone_forward.1} parent=1 // pred_fallthru
      _
    // Predicated region
    $region74: #{_backbone_forward.1} parent=1 // pred_check
      _
    $region75: #{_backbone_forward.1} parent=1 // pred_check_branch
      %176 = sbr.rel (0) target = $region77
    $region76: #{_backbone_forward.1} parent=1 // pred_region
      %177 = dma.done [#allocation11], 32
    $region77: #{_backbone_forward.1} parent=1 // pred_fallthru
      _
    // Predicated region
    $region78: #{_backbone_forward.1} parent=1 // pred_check
      _
    $region79: #{_backbone_forward.1} parent=1 // pred_check_branch
      %179 = sbr.rel (0) target = $region81
    $region80: #{_backbone_forward.1} parent=1 // pred_region
      %180 = dma.done [#allocation11], 8192
    $region81: #{_backbone_forward.1} parent=1 // pred_fallthru
      _
    // Predicated region
    $region82: #{_backbone_forward.1} parent=1 // pred_check
      _
    $region83: #{_backbone_forward.1} parent=1 // pred_check_branch
      %182 = sbr.rel (0) target = $region85
    $region84: #{_backbone_forward.1} parent=1 // pred_region
      %183 = dma.done [#allocation14], 64
    $region85: #{_backbone_forward.1} parent=1 // pred_fallthru
      _
    // Predicated region
    $region86: #{_backbone_forward.1} parent=1 // pred_check
      _
    $region87: #{_backbone_forward.1} parent=1 // pred_check_branch
      %185 = sbr.rel (0) target = $region89
    $region88: #{_backbone_forward.1} parent=1 // pred_region
      %186 = dma.done [#allocation14], 32768
    $region89: #{_backbone_forward.1} parent=1 // pred_fallthru
      _
    // Predicated region
    $region90: #{_backbone_forward.1} parent=1 // pred_check
      _
    $region91: #{_backbone_forward.1} parent=1 // pred_check_branch
      %188 = sbr.rel (0) target = $region93
    $region92: #{_backbone_forward.1} parent=1 // pred_region
      %189 = dma.done [#allocation17], 128
    $region93: #{_backbone_forward.1} parent=1 // pred_fallthru
      _
    // Predicated region
    $region94: #{_backbone_forward.1} parent=1 // pred_check
      _
    $region95: #{_backbone_forward.1} parent=1 // pred_check_branch
      %191 = sbr.rel (0) target = $region97
    $region96: #{_backbone_forward.1} parent=1 // pred_region
      %192 = dma.done [#allocation17], 131072
    $region97: #{_backbone_forward.1} parent=1 // pred_fallthru
      _
    // Predicated region
    $region98: #{_backbone_forward.1} parent=1 // pred_check
      _
    $region99: #{_backbone_forward.1} parent=1 // pred_check_branch
      %194 = sbr.rel (0) target = $region101
    $region100: #{_backbone_forward.1} parent=1 // pred_region
      %195 = dma.done [#allocation20], 256
    $region101: #{_backbone_forward.1} parent=1 // pred_fallthru
      _
    %v197 = vld [vmem:[%s0] sm:$0xf]
    %v198 = vld [vmem:[%s0 + $0x4] sm:$0xf]
    %v199 = vld [vmem:[%s0 + $0x8] sm:$0xf]
    %v200 = vld [vmem:[%s0 + $0xc] sm:$0xf]
    %v201 = vld [vmem:[%s0 + $0x10] sm:$0xf]
    %v202 = vld [vmem:[%s0 + $0x14] sm:$0xf]
    %v203 = vld [vmem:[%s0 + $0x18] sm:$0xf]
    %v204 = vld [vmem:[%s0 + $0x1c] sm:$0xf]
    %v205 = vld [vmem:[%s0 + $0x20] sm:$0xf]
    %v206 = vld [vmem:[%s0 + $0x24] sm:$0xf]
    %v207 = vld [vmem:[%s0 + $0x28] sm:$0xf]
    %v208 = vld [vmem:[%s0 + $0x2c] sm:$0xf]
    %v209 = vld [vmem:[%s0 + $0x30] sm:$0xf]
    %v210 = vld [vmem:[%s0 + $0x34] sm:$0xf]
    %v211 = vld [vmem:[%s0 + $0x38] sm:$0xf]
    %v212 = vld [vmem:[%s0 + $0x3c] sm:$0xf]
    %v213 = vld [vmem:[%s0 + $0x40] sm:$0xf]
    %v214 = vld [vmem:[%s0 + $0x44] sm:$0xf]
    %v215 = vld [vmem:[%s0 + $0x48] sm:$0xf]
    %v216 = vld [vmem:[%s0 + $0x4c] sm:$0xf]
    %v217 = vld [vmem:[%s0 + $0x50] sm:$0xf]
    %v218 = vld [vmem:[%s0 + $0x54] sm:$0xf]
    %v219 = vld [vmem:[%s0 + $0x58] sm:$0xf]
    %v220 = vld [vmem:[%s0 + $0x5c] sm:$0xf]
    %v221 = vld [vmem:[%s0 + $0x60] sm:$0xf]
    %v222 = vld [vmem:[%s0 + $0x64] sm:$0xf]
    %v223 = vld [vmem:[%s0 + $0x68] sm:$0xf]
    %v224 = vld [vmem:[%s0 + $0x6c] sm:$0xf]
    %v225 = vld [vmem:[%s0 + $0x70] sm:$0xf]
    %v226 = vld [vmem:[%s0 + $0x74] sm:$0xf]
    %v227 = vld [vmem:[%s0 + $0x78] sm:$0xf]
    %v228 = vld [vmem:[%s0 + $0x7c] sm:$0xf]
    %v229 = vld [vmem:[%s0 + $0x80] sm:$0xf]
    %v230 = vld [vmem:[%s0 + $0x84] sm:$0xf]
    %v231 = vld [vmem:[%s0 + $0x88] sm:$0xf]
    %v232 = vld [vmem:[%s0 + $0x8c] sm:$0xf]
    %v233 = vld [vmem:[%s0 + $0x90] sm:$0xf]
    %v234 = vld [vmem:[%s0 + $0x94] sm:$0xf]
    %v235 = vld [vmem:[%s0 + $0x98] sm:$0xf]
    %v236 = vld [vmem:[%s0 + $0x9c] sm:$0xf]
    %v237 = vld [vmem:[%s0 + $0xa0] sm:$0xf]
    %v238 = vld [vmem:[%s0 + $0xa4] sm:$0xf]
    %v239 = vld [vmem:[%s0 + $0xa8] sm:$0xf]
    %v240 = vld [vmem:[%s0 + $0xac] sm:$0xf]
    %v241 = vld [vmem:[%s0 + $0xb0] sm:$0xf]
    %v242 = vld [vmem:[%s0 + $0xb4] sm:$0xf]
    %v243 = vld [vmem:[%s0 + $0xb8] sm:$0xf]
    %v244 = vld [vmem:[%s0 + $0xbc] sm:$0xf]
    %v245 = vld [vmem:[%s0 + $0xc0] sm:$0xf]
    %v246 = vld [vmem:[%s0 + $0xc4] sm:$0xf]
    %v247 = vld [vmem:[%s0 + $0xc8] sm:$0xf]
    %v248 = vld [vmem:[%s0 + $0xcc] sm:$0xf]
    %v249 = vld [vmem:[%s0 + $0xd0] sm:$0xf]
    %v250 = vld [vmem:[%s0 + $0xd4] sm:$0xf]
    %v251 = vld [vmem:[%s0 + $0xd8] sm:$0xf]
    %v252 = vld [vmem:[%s0 + $0xdc] sm:$0xf]
    %v253 = vld [vmem:[%s0 + $0xe0] sm:$0xf]
    %v254 = vld [vmem:[%s0 + $0xe4] sm:$0xf]
    %v255 = vld [vmem:[%s0 + $0xe8] sm:$0xf]
    %v256 = vld [vmem:[%s0 + $0xec] sm:$0xf]
    %v257 = vld [vmem:[%s0 + $0xf0] sm:$0xf]
    %v258 = vld [vmem:[%s0 + $0xf4] sm:$0xf]
    %v259 = vld [vmem:[%s0 + $0xf8] sm:$0xf]
    %v260 = vld [vmem:[%s0 + $0xfc] sm:$0xf]
    %v261 = vld [vmem:[%s0 + $0x100] sm:$0xf]
    %v262 = vld [vmem:[%s0 + $0x104] sm:$0xf]
    %v263 = vld [vmem:[%s0 + $0x108] sm:$0xf]
    %v264 = vld [vmem:[%s0 + $0x10c] sm:$0xf]
    %v265 = vld [vmem:[%s0 + $0x110] sm:$0xf]
    %v266 = vld [vmem:[%s0 + $0x114] sm:$0xf]
    %v267 = vld [vmem:[%s0 + $0x118] sm:$0xf]
    %v268 = vld [vmem:[%s0 + $0x11c] sm:$0xf]
    %v269 = vld [vmem:[%s0 + $0x120] sm:$0xf]
    %v270 = vld [vmem:[%s0 + $0x124] sm:$0xf]
    %v271 = vld [vmem:[%s0 + $0x128] sm:$0xf]
    %v272 = vld [vmem:[%s0 + $0x12c] sm:$0xf]
    %v273 = vld [vmem:[%s0 + $0x130] sm:$0xf]
    %v274 = vld [vmem:[%s0 + $0x134] sm:$0xf]
    %v275 = vld [vmem:[%s0 + $0x138] sm:$0xf]
    %v276 = vld [vmem:[%s0 + $0x13c] sm:$0xf]
    %v277 = vld [vmem:[%s0 + $0x140] sm:$0xf]
    %v278 = vld [vmem:[%s0 + $0x144] sm:$0xf]
    %v279 = vld [vmem:[%s0 + $0x148] sm:$0xf]
    %v280 = vld [vmem:[%s0 + $0x14c] sm:$0xf]
    %v281 = vld [vmem:[%s0 + $0x150] sm:$0xf]
    %v282 = vld [vmem:[%s0 + $0x154] sm:$0xf]
    %v283 = vld [vmem:[%s0 + $0x158] sm:$0xf]
    %v284 = vld [vmem:[%s0 + $0x15c] sm:$0xf]
    %v285 = vld [vmem:[%s0 + $0x160] sm:$0xf]
    %v286 = vld [vmem:[%s0 + $0x164] sm:$0xf]
    %v287 = vld [vmem:[%s0 + $0x168] sm:$0xf]
    %v288 = vld [vmem:[%s0 + $0x16c] sm:$0xf]
    %v289 = vld [vmem:[%s0 + $0x170] sm:$0xf]
    %v290 = vld [vmem:[%s0 + $0x174] sm:$0xf]
    %v291 = vld [vmem:[%s0 + $0x178] sm:$0xf]
    %v292 = vld [vmem:[%s0 + $0x17c] sm:$0xf]
    %v293 = vld [vmem:[%s0 + $0x180] sm:$0xf]
    %v294 = vld [vmem:[%s0 + $0x184] sm:$0xf]
    %v295 = vld [vmem:[%s0 + $0x188] sm:$0xf]
    %v296 = vld [vmem:[%s0 + $0x18c] sm:$0xf]
    %v297 = vld [vmem:[%s0 + $0x190] sm:$0xf]
    %v298 = vld [vmem:[%s0 + $0x194] sm:$0xf]
    %v299 = vld [vmem:[%s0 + $0x198] sm:$0xf]
    %v300 = vld [vmem:[%s0 + $0x19c] sm:$0xf]
    %v301 = vld [vmem:[%s0 + $0x1a0] sm:$0xf]
    %v302 = vld [vmem:[%s0 + $0x1a4] sm:$0xf]
    %v303 = vld [vmem:[%s0 + $0x1a8] sm:$0xf]
    %v304 = vld [vmem:[%s0 + $0x1ac] sm:$0xf]
    %v305 = vld [vmem:[%s0 + $0x1b0] sm:$0xf]
    %v306 = vld [vmem:[%s0 + $0x1b4] sm:$0xf]
    %v307 = vld [vmem:[%s0 + $0x1b8] sm:$0xf]
    %v308 = vld [vmem:[%s0 + $0x1bc] sm:$0xf]
    %v309 = vld [vmem:[%s0 + $0x1c0] sm:$0xf]
    %v310 = vld [vmem:[%s0 + $0x1c4] sm:$0xf]
    %v311 = vld [vmem:[%s0 + $0x1c8] sm:$0xf]
    %v312 = vld [vmem:[%s0 + $0x1cc] sm:$0xf]
    %v313 = vld [vmem:[%s0 + $0x1d0] sm:$0xf]
    %v314 = vld [vmem:[%s0 + $0x1d4] sm:$0xf]
    %v315 = vld [vmem:[%s0 + $0x1d8] sm:$0xf]
    %v316 = vld [vmem:[%s0 + $0x1dc] sm:$0xf]
    %v317 = vld [vmem:[%s0 + $0x1e0] sm:$0xf]
    %v318 = vld [vmem:[%s0 + $0x1e4] sm:$0xf]
    %v319 = vld [vmem:[%s0 + $0x1e8] sm:$0xf]
    %v320 = vld [vmem:[%s0 + $0x1ec] sm:$0xf]
    %v321 = vld [vmem:[%s0 + $0x1f0] sm:$0xf]
    %v322 = vld [vmem:[%s0 + $0x1f4] sm:$0xf]
    %v323 = vld [vmem:[%s0 + $0x1f8] sm:$0xf]
    %v324 = vld [vmem:[%s0 + $0x1fc] sm:$0xf]
    %v325 = vld [vmem:[%s0 + $0x200] sm:$0xf]
    %v326 = vld [vmem:[%s0 + $0x204] sm:$0xf]
    %v327 = vld [vmem:[%s0 + $0x208] sm:$0xf]
    %v328 = vld [vmem:[%s0 + $0x20c] sm:$0xf]
    %v329 = vld [vmem:[%s0 + $0x210] sm:$0xf]
    %v330 = vld [vmem:[%s0 + $0x214] sm:$0xf]
    %v331 = vld [vmem:[%s0 + $0x218] sm:$0xf]
    %v332 = vld [vmem:[%s0 + $0x21c] sm:$0xf]
    %v333 = vld [vmem:[%s0 + $0x220] sm:$0xf]
    %v334 = vld [vmem:[%s0 + $0x224] sm:$0xf]
    %v335 = vld [vmem:[%s0 + $0x228] sm:$0xf]
    %v336 = vld [vmem:[%s0 + $0x22c] sm:$0xf]
    %v337 = vld [vmem:[%s0 + $0x230] sm:$0xf]
    %v338 = vld [vmem:[%s0 + $0x234] sm:$0xf]
    %v339 = vld [vmem:[%s0 + $0x238] sm:$0xf]
    %v340 = vld [vmem:[%s0 + $0x23c] sm:$0xf]
    %v341 = vld [vmem:[%s0 + $0x240] sm:$0xf]
    %v342 = vld [vmem:[%s0 + $0x244] sm:$0xf]
    %v343 = vld [vmem:[%s0 + $0x248] sm:$0xf]
    %v344 = vld [vmem:[%s0 + $0x24c] sm:$0xf]
    %v345 = vld [vmem:[%s0 + $0x250] sm:$0xf]
    %v346 = vld [vmem:[%s0 + $0x254] sm:$0xf]
    %v347 = vld [vmem:[%s0 + $0x258] sm:$0xf]
    %v348 = vld [vmem:[%s0 + $0x25c] sm:$0xf]
    %v349 = vld [vmem:[%s0 + $0x260] sm:$0xf]
    %v350 = vld [vmem:[%s0 + $0x264] sm:$0xf]
    %v351 = vld [vmem:[%s0 + $0x268] sm:$0xf]
    %v352 = vld [vmem:[%s0 + $0x26c] sm:$0xf]
    %v353 = vld [vmem:[%s0 + $0x270] sm:$0xf]
    %v354 = vld [vmem:[%s0 + $0x274] sm:$0xf]
    %v355 = vld [vmem:[%s0 + $0x278] sm:$0xf]
    %v356 = vld [vmem:[%s0 + $0x27c] sm:$0xf]
    %v357 = vld [vmem:[%s0 + $0x280] sm:$0xf]
    %v358 = vld [vmem:[%s0 + $0x284] sm:$0xf]
    %v359 = vld [vmem:[%s0 + $0x288] sm:$0xf]
    %v360 = vld [vmem:[%s0 + $0x28c] sm:$0xf]
    %v361 = vld [vmem:[%s0 + $0x290] sm:$0xf]
    %v362 = vld [vmem:[%s0 + $0x294] sm:$0xf]
    %v363 = vld [vmem:[%s0 + $0x298] sm:$0xf]
    %v364 = vld [vmem:[%s0 + $0x29c] sm:$0xf]
    %v365 = vld [vmem:[%s0 + $0x2a0] sm:$0xf]
    %v366 = vld [vmem:[%s0 + $0x2a4] sm:$0xf]
    %v367 = vld [vmem:[%s0 + $0x2a8] sm:$0xf]
    %v368 = vld [vmem:[%s0 + $0x2ac] sm:$0xf]
    %v369 = vld [vmem:[%s0 + $0x2b0] sm:$0xf]
    %v370 = vld [vmem:[%s0 + $0x2b4] sm:$0xf]
    %v371 = vld [vmem:[%s0 + $0x2b8] sm:$0xf]
    %v372 = vld [vmem:[%s0 + $0x2bc] sm:$0xf]
    %v373 = vld [vmem:[%s0 + $0x2c0] sm:$0xf]
    %v374 = vld [vmem:[%s0 + $0x2c4] sm:$0xf]
    %v375 = vld [vmem:[%s0 + $0x2c8] sm:$0xf]
    %v376 = vld [vmem:[%s0 + $0x2cc] sm:$0xf]
    %v377 = vld [vmem:[%s0 + $0x2d0] sm:$0xf]
    %v378 = vld [vmem:[%s0 + $0x2d4] sm:$0xf]
    %v379 = vld [vmem:[%s0 + $0x2d8] sm:$0xf]
    %v380 = vld [vmem:[%s0 + $0x2dc] sm:$0xf]
    %v381 = vld [vmem:[%s0 + $0x2e0] sm:$0xf]
    %v382 = vld [vmem:[%s0 + $0x2e4] sm:$0xf]
    %v383 = vld [vmem:[%s0 + $0x2e8] sm:$0xf]
    %v384 = vld [vmem:[%s0 + $0x2ec] sm:$0xf]
    %v385 = vld [vmem:[%s0 + $0x2f0] sm:$0xf]
    %v386 = vld [vmem:[%s0 + $0x2f4] sm:$0xf]
    %v387 = vld [vmem:[%s0 + $0x2f8] sm:$0xf]
    %v388 = vld [vmem:[%s0 + $0x2fc] sm:$0xf]
    %v389 = vld [vmem:[%s0 + $0x300] sm:$0xf]
    %v390 = vld [vmem:[%s0 + $0x304] sm:$0xf]
    %v391 = vld [vmem:[%s0 + $0x308] sm:$0xf]
    %v392 = vld [vmem:[%s0 + $0x30c] sm:$0xf]
    %v393 = vld [vmem:[%s0 + $0x310] sm:$0xf]
    %v394 = vld [vmem:[%s0 + $0x314] sm:$0xf]
    %v395 = vld [vmem:[%s0 + $0x318] sm:$0xf]
    %v396 = vld [vmem:[%s0 + $0x31c] sm:$0xf]
    %v397 = vld [vmem:[%s0 + $0x320] sm:$0xf]
    %v398 = vld [vmem:[%s0 + $0x324] sm:$0xf]
    %v399 = vld [vmem:[%s0 + $0x328] sm:$0xf]
    %v400 = vld [vmem:[%s0 + $0x32c] sm:$0xf]
    %v401 = vld [vmem:[%s0 + $0x330] sm:$0xf]
    %v402 = vld [vmem:[%s0 + $0x334] sm:$0xf]
    %v403 = vld [vmem:[%s0 + $0x338] sm:$0xf]
    %v404 = vld [vmem:[%s0 + $0x33c] sm:$0xf]
    %v405 = vld [vmem:[%s0 + $0x340] sm:$0xf]
    %v406 = vld [vmem:[%s0 + $0x344] sm:$0xf]
    %v407 = vld [vmem:[%s0 + $0x348] sm:$0xf]
    %v408 = vld [vmem:[%s0 + $0x34c] sm:$0xf]
    %v409 = vld [vmem:[%s0 + $0x350] sm:$0xf]
    %v410 = vld [vmem:[%s0 + $0x354] sm:$0xf]
    %v411 = vld [vmem:[%s0 + $0x358] sm:$0xf]
    %v412 = vld [vmem:[%s0 + $0x35c] sm:$0xf]
    %v413 = vld [vmem:[%s0 + $0x360] sm:$0xf]
    %v414 = vld [vmem:[%s0 + $0x364] sm:$0xf]
    %v415 = vld [vmem:[%s0 + $0x368] sm:$0xf]
    %v416 = vld [vmem:[%s0 + $0x36c] sm:$0xf]
    %v417 = vld [vmem:[%s0 + $0x370] sm:$0xf]
    %v418 = vld [vmem:[%s0 + $0x374] sm:$0xf]
    %v419 = vld [vmem:[%s0 + $0x378] sm:$0xf]
    %v420 = vld [vmem:[%s0 + $0x37c] sm:$0xf]
    %v421 = vld [vmem:[%s0 + $0x380] sm:$0xf]
    %v422 = vld [vmem:[%s0 + $0x384] sm:$0xf]
    %v423 = vld [vmem:[%s0 + $0x388] sm:$0xf]
    %v424 = vld [vmem:[%s0 + $0x38c] sm:$0xf]
    %v425 = vld [vmem:[%s0 + $0x390] sm:$0xf]
    %v426 = vld [vmem:[%s0 + $0x394] sm:$0xf]
    %v427 = vld [vmem:[%s0 + $0x398] sm:$0xf]
    %v428 = vld [vmem:[%s0 + $0x39c] sm:$0xf]
    %v429 = vld [vmem:[%s0 + $0x3a0] sm:$0xf]
    %v430 = vld [vmem:[%s0 + $0x3a4] sm:$0xf]
    %v431 = vld [vmem:[%s0 + $0x3a8] sm:$0xf]
    %v432 = vld [vmem:[%s0 + $0x3ac] sm:$0xf]
    %v433 = vld [vmem:[%s0 + $0x3b0] sm:$0xf]
    %v434 = vld [vmem:[%s0 + $0x3b4] sm:$0xf]
    %v435 = vld [vmem:[%s0 + $0x3b8] sm:$0xf]
    %v436 = vld [vmem:[%s0 + $0x3bc] sm:$0xf]
    %v437 = vld [vmem:[%s0 + $0x3c0] sm:$0xf]
    %v438 = vld [vmem:[%s0 + $0x3c4] sm:$0xf]
    %v439 = vld [vmem:[%s0 + $0x3c8] sm:$0xf]
    %v440 = vld [vmem:[%s0 + $0x3cc] sm:$0xf]
    %v441 = vld [vmem:[%s0 + $0x3d0] sm:$0xf]
    %v442 = vld [vmem:[%s0 + $0x3d4] sm:$0xf]
    %v443 = vld [vmem:[%s0 + $0x3d8] sm:$0xf]
    %v444 = vld [vmem:[%s0 + $0x3dc] sm:$0xf]
    %v445 = vld [vmem:[%s0 + $0x3e0] sm:$0xf]
    %v446 = vld [vmem:[%s0 + $0x3e4] sm:$0xf]
    %v447 = vld [vmem:[%s0 + $0x3e8] sm:$0xf]
    %v448 = vld [vmem:[%s0 + $0x3ec] sm:$0xf]
    %v449 = vld [vmem:[%s0 + $0x3f0] sm:$0xf]
    %v450 = vld [vmem:[%s0 + $0x3f4] sm:$0xf]
    %v451 = vld [vmem:[%s0 + $0x3f8] sm:$0xf]
    %v452 = vld [vmem:[%s0 + $0x3fc] sm:$0xf]
    %v453 = vld [vmem:[#allocation2] sm:$0x3]
    %v454 = vld [vmem:[#allocation4] sm:$0x1]
    %v456 = vlaneseq
    %v457 = vshrl.u32 %v456, 7
    %v458 = vsub.s32 0, %v457
    %v459 = vrot.slane %v454, %v458
    %v717 = vunpack.c.l.b16 %v197
    %v718 = vunpack.c.l.b16 %v198
    %v719 = vunpack.c.l.b16 %v199
    %v720 = vunpack.c.l.b16 %v200
    %v721 = vunpack.c.l.b16 %v201
    %v722 = vunpack.c.l.b16 %v202
    %v723 = vunpack.c.l.b16 %v203
    %v724 = vunpack.c.l.b16 %v204
    %v725 = vunpack.c.l.b16 %v205
    %v726 = vunpack.c.l.b16 %v206
    %v727 = vunpack.c.l.b16 %v207
    %v728 = vunpack.c.l.b16 %v208
    %v729 = vunpack.c.l.b16 %v209
    %v730 = vunpack.c.l.b16 %v210
    %v731 = vunpack.c.l.b16 %v211
    %v732 = vunpack.c.l.b16 %v212
    %v733 = vunpack.c.l.b16 %v213
    %v734 = vunpack.c.l.b16 %v214
    %v735 = vunpack.c.l.b16 %v215
    %v736 = vunpack.c.l.b16 %v216
    %v737 = vunpack.c.l.b16 %v217
    %v738 = vunpack.c.l.b16 %v218
    %v739 = vunpack.c.l.b16 %v219
    %v740 = vunpack.c.l.b16 %v220
    %v741 = vunpack.c.l.b16 %v221
    %v742 = vunpack.c.l.b16 %v222
    %v743 = vunpack.c.l.b16 %v223
    %v744 = vunpack.c.l.b16 %v224
    %v745 = vunpack.c.l.b16 %v225
    %v746 = vunpack.c.l.b16 %v226
    %v747 = vunpack.c.l.b16 %v227
    %v748 = vunpack.c.l.b16 %v228
    %v749 = vunpack.c.l.b16 %v229
    %v750 = vunpack.c.l.b16 %v230
    %v751 = vunpack.c.l.b16 %v231
    %v752 = vunpack.c.l.b16 %v232
    %v753 = vunpack.c.l.b16 %v233
    %v754 = vunpack.c.l.b16 %v234
    %v755 = vunpack.c.l.b16 %v235
    %v756 = vunpack.c.l.b16 %v236
    %v757 = vunpack.c.l.b16 %v237
    %v758 = vunpack.c.l.b16 %v238
    %v759 = vunpack.c.l.b16 %v239
    %v760 = vunpack.c.l.b16 %v240
    %v761 = vunpack.c.l.b16 %v241
    %v762 = vunpack.c.l.b16 %v242
    %v763 = vunpack.c.l.b16 %v243
    %v764 = vunpack.c.l.b16 %v244
    %v765 = vunpack.c.l.b16 %v245
    %v766 = vunpack.c.l.b16 %v246
    %v767 = vunpack.c.l.b16 %v247
    %v768 = vunpack.c.l.b16 %v248
    %v769 = vunpack.c.l.b16 %v249
    %v770 = vunpack.c.l.b16 %v250
    %v771 = vunpack.c.l.b16 %v251
    %v772 = vunpack.c.l.b16 %v252
    %v773 = vunpack.c.l.b16 %v253
    %v774 = vunpack.c.l.b16 %v254
    %v775 = vunpack.c.l.b16 %v255
    %v776 = vunpack.c.l.b16 %v256
    %v777 = vunpack.c.l.b16 %v257
    %v778 = vunpack.c.l.b16 %v258
    %v779 = vunpack.c.l.b16 %v259
    %v780 = vunpack.c.l.b16 %v260
    %v781 = vunpack.c.l.b16 %v261
    %v782 = vunpack.c.l.b16 %v262
    %v783 = vunpack.c.l.b16 %v263
    %v784 = vunpack.c.l.b16 %v264
    %v785 = vunpack.c.l.b16 %v265
    %v786 = vunpack.c.l.b16 %v266
    %v787 = vunpack.c.l.b16 %v267
    %v788 = vunpack.c.l.b16 %v268
    %v789 = vunpack.c.l.b16 %v269
    %v790 = vunpack.c.l.b16 %v270
    %v791 = vunpack.c.l.b16 %v271
    %v792 = vunpack.c.l.b16 %v272
    %v793 = vunpack.c.l.b16 %v273
    %v794 = vunpack.c.l.b16 %v274
    %v795 = vunpack.c.l.b16 %v275
    %v796 = vunpack.c.l.b16 %v276
    %v797 = vunpack.c.l.b16 %v277
    %v798 = vunpack.c.l.b16 %v278
    %v799 = vunpack.c.l.b16 %v279
    %v800 = vunpack.c.l.b16 %v280
    %v801 = vunpack.c.l.b16 %v281
    %v802 = vunpack.c.l.b16 %v282
    %v803 = vunpack.c.l.b16 %v283
    %v804 = vunpack.c.l.b16 %v284
    %v805 = vunpack.c.l.b16 %v285
    %v806 = vunpack.c.l.b16 %v286
    %v807 = vunpack.c.l.b16 %v287
    %v808 = vunpack.c.l.b16 %v288
    %v809 = vunpack.c.l.b16 %v289
    %v810 = vunpack.c.l.b16 %v290
    %v811 = vunpack.c.l.b16 %v291
    %v812 = vunpack.c.l.b16 %v292
    %v813 = vunpack.c.l.b16 %v293
    %v814 = vunpack.c.l.b16 %v294
    %v815 = vunpack.c.l.b16 %v295
    %v816 = vunpack.c.l.b16 %v296
    %v817 = vunpack.c.l.b16 %v297
    %v818 = vunpack.c.l.b16 %v298
    %v819 = vunpack.c.l.b16 %v299
    %v820 = vunpack.c.l.b16 %v300
    %v821 = vunpack.c.l.b16 %v301
    %v822 = vunpack.c.l.b16 %v302
    %v823 = vunpack.c.l.b16 %v303
    %v824 = vunpack.c.l.b16 %v304
    %v825 = vunpack.c.l.b16 %v305
    %v826 = vunpack.c.l.b16 %v306
    %v827 = vunpack.c.l.b16 %v307
    %v828 = vunpack.c.l.b16 %v308
    %v829 = vunpack.c.l.b16 %v309
    %v830 = vunpack.c.l.b16 %v310
    %v831 = vunpack.c.l.b16 %v311
    %v832 = vunpack.c.l.b16 %v312
    %v833 = vunpack.c.l.b16 %v313
    %v834 = vunpack.c.l.b16 %v314
    %v835 = vunpack.c.l.b16 %v315
    %v836 = vunpack.c.l.b16 %v316
    %v837 = vunpack.c.l.b16 %v317
    %v838 = vunpack.c.l.b16 %v318
    %v839 = vunpack.c.l.b16 %v319
    %v840 = vunpack.c.l.b16 %v320
    %v841 = vunpack.c.l.b16 %v321
    %v842 = vunpack.c.l.b16 %v322
    %v843 = vunpack.c.l.b16 %v323
    %v844 = vunpack.c.l.b16 %v324
    %v845 = vunpack.c.l.b16 %v325
    %v846 = vunpack.c.l.b16 %v326
    %v847 = vunpack.c.l.b16 %v327
    %v848 = vunpack.c.l.b16 %v328
    %v849 = vunpack.c.l.b16 %v329
    %v850 = vunpack.c.l.b16 %v330
    %v851 = vunpack.c.l.b16 %v331
    %v852 = vunpack.c.l.b16 %v332
    %v853 = vunpack.c.l.b16 %v333
    %v854 = vunpack.c.l.b16 %v334
    %v855 = vunpack.c.l.b16 %v335
    %v856 = vunpack.c.l.b16 %v336
    %v857 = vunpack.c.l.b16 %v337
    %v858 = vunpack.c.l.b16 %v338
    %v859 = vunpack.c.l.b16 %v339
    %v860 = vunpack.c.l.b16 %v340
    %v861 = vunpack.c.l.b16 %v341
    %v862 = vunpack.c.l.b16 %v342
    %v863 = vunpack.c.l.b16 %v343
    %v864 = vunpack.c.l.b16 %v344
    %v865 = vunpack.c.l.b16 %v345
    %v866 = vunpack.c.l.b16 %v346
    %v867 = vunpack.c.l.b16 %v347
    %v868 = vunpack.c.l.b16 %v348
    %v869 = vunpack.c.l.b16 %v349
    %v870 = vunpack.c.l.b16 %v350
    %v871 = vunpack.c.l.b16 %v351
    %v872 = vunpack.c.l.b16 %v352
    %v873 = vunpack.c.l.b16 %v353
    %v874 = vunpack.c.l.b16 %v354
    %v875 = vunpack.c.l.b16 %v355
    %v876 = vunpack.c.l.b16 %v356
    %v877 = vunpack.c.l.b16 %v357
    %v878 = vunpack.c.l.b16 %v358
    %v879 = vunpack.c.l.b16 %v359
    %v880 = vunpack.c.l.b16 %v360
    %v881 = vunpack.c.l.b16 %v361
    %v882 = vunpack.c.l.b16 %v362
    %v883 = vunpack.c.l.b16 %v363
    %v884 = vunpack.c.l.b16 %v364
    %v885 = vunpack.c.l.b16 %v365
    %v886 = vunpack.c.l.b16 %v366
    %v887 = vunpack.c.l.b16 %v367
    %v888 = vunpack.c.l.b16 %v368
    %v889 = vunpack.c.l.b16 %v369
    %v890 = vunpack.c.l.b16 %v370
    %v891 = vunpack.c.l.b16 %v371
    %v892 = vunpack.c.l.b16 %v372
    %v893 = vunpack.c.l.b16 %v373
    %v894 = vunpack.c.l.b16 %v374
    %v895 = vunpack.c.l.b16 %v375
    %v896 = vunpack.c.l.b16 %v376
    %v897 = vunpack.c.l.b16 %v377
    %v898 = vunpack.c.l.b16 %v378
    %v899 = vunpack.c.l.b16 %v379
    %v900 = vunpack.c.l.b16 %v380
    %v901 = vunpack.c.l.b16 %v381
    %v902 = vunpack.c.l.b16 %v382
    %v903 = vunpack.c.l.b16 %v383
    %v904 = vunpack.c.l.b16 %v384
    %v905 = vunpack.c.l.b16 %v385
    %v906 = vunpack.c.l.b16 %v386
    %v907 = vunpack.c.l.b16 %v387
    %v908 = vunpack.c.l.b16 %v388
    %v909 = vunpack.c.l.b16 %v389
    %v910 = vunpack.c.l.b16 %v390
    %v911 = vunpack.c.l.b16 %v391
    %v912 = vunpack.c.l.b16 %v392
    %v913 = vunpack.c.l.b16 %v393
    %v914 = vunpack.c.l.b16 %v394
    %v915 = vunpack.c.l.b16 %v395
    %v916 = vunpack.c.l.b16 %v396
    %v917 = vunpack.c.l.b16 %v397
    %v918 = vunpack.c.l.b16 %v398
    %v919 = vunpack.c.l.b16 %v399
    %v920 = vunpack.c.l.b16 %v400
    %v921 = vunpack.c.l.b16 %v401
    %v922 = vunpack.c.l.b16 %v402
    %v923 = vunpack.c.l.b16 %v403
    %v924 = vunpack.c.l.b16 %v404
    %v925 = vunpack.c.l.b16 %v405
    %v926 = vunpack.c.l.b16 %v406
    %v927 = vunpack.c.l.b16 %v407
    %v928 = vunpack.c.l.b16 %v408
    %v929 = vunpack.c.l.b16 %v409
    %v930 = vunpack.c.l.b16 %v410
    %v931 = vunpack.c.l.b16 %v411
    %v932 = vunpack.c.l.b16 %v412
    %v933 = vunpack.c.l.b16 %v413
    %v934 = vunpack.c.l.b16 %v414
    %v935 = vunpack.c.l.b16 %v415
    %v936 = vunpack.c.l.b16 %v416
    %v937 = vunpack.c.l.b16 %v417
    %v938 = vunpack.c.l.b16 %v418
    %v939 = vunpack.c.l.b16 %v419
    %v940 = vunpack.c.l.b16 %v420
    %v941 = vunpack.c.l.b16 %v421
    %v942 = vunpack.c.l.b16 %v422
    %v943 = vunpack.c.l.b16 %v423
    %v944 = vunpack.c.l.b16 %v424
    %v945 = vunpack.c.l.b16 %v425
    %v946 = vunpack.c.l.b16 %v426
    %v947 = vunpack.c.l.b16 %v427
    %v948 = vunpack.c.l.b16 %v428
    %v949 = vunpack.c.l.b16 %v429
    %v950 = vunpack.c.l.b16 %v430
    %v951 = vunpack.c.l.b16 %v431
    %v952 = vunpack.c.l.b16 %v432
    %v953 = vunpack.c.l.b16 %v433
    %v954 = vunpack.c.l.b16 %v434
    %v955 = vunpack.c.l.b16 %v435
    %v956 = vunpack.c.l.b16 %v436
    %v957 = vunpack.c.l.b16 %v437
    %v958 = vunpack.c.l.b16 %v438
    %v959 = vunpack.c.l.b16 %v439
    %v960 = vunpack.c.l.b16 %v440
    %v961 = vunpack.c.l.b16 %v441
    %v962 = vunpack.c.l.b16 %v442
    %v963 = vunpack.c.l.b16 %v443
    %v964 = vunpack.c.l.b16 %v444
    %v965 = vunpack.c.l.b16 %v445
    %v966 = vunpack.c.l.b16 %v446
    %v967 = vunpack.c.l.b16 %v447
    %v968 = vunpack.c.l.b16 %v448
    %v969 = vunpack.c.l.b16 %v449
    %v970 = vunpack.c.l.b16 %v450
    %v971 = vunpack.c.l.b16 %v451
    %v972 = vunpack.c.l.b16 %v452
    %v973 = vpack.c.b16 %v718, %v717
    %v974 = vpack.c.b16 %v720, %v719
    %v975 = vpack.c.b16 %v722, %v721
    %v976 = vpack.c.b16 %v724, %v723
    %v977 = vpack.c.b16 %v726, %v725
    %v978 = vpack.c.b16 %v728, %v727
    %v979 = vpack.c.b16 %v730, %v729
    %v980 = vpack.c.b16 %v732, %v731
    %v981 = vpack.c.b16 %v734, %v733
    %v982 = vpack.c.b16 %v736, %v735
    %v983 = vpack.c.b16 %v738, %v737
    %v984 = vpack.c.b16 %v740, %v739
    %v985 = vpack.c.b16 %v742, %v741
    %v986 = vpack.c.b16 %v744, %v743
    %v987 = vpack.c.b16 %v746, %v745
    %v988 = vpack.c.b16 %v748, %v747
    %v989 = vpack.c.b16 %v750, %v749
    %v990 = vpack.c.b16 %v752, %v751
    %v991 = vpack.c.b16 %v754, %v753
    %v992 = vpack.c.b16 %v756, %v755
    %v993 = vpack.c.b16 %v758, %v757
    %v994 = vpack.c.b16 %v760, %v759
    %v995 = vpack.c.b16 %v762, %v761
    %v996 = vpack.c.b16 %v764, %v763
    %v997 = vpack.c.b16 %v766, %v765
    %v998 = vpack.c.b16 %v768, %v767
    %v999 = vpack.c.b16 %v770, %v769
    %v1000 = vpack.c.b16 %v772, %v771
    %v1001 = vpack.c.b16 %v774, %v773
    %v1002 = vpack.c.b16 %v776, %v775
    %v1003 = vpack.c.b16 %v778, %v777
    %v1004 = vpack.c.b16 %v780, %v779
    %v1005 = vpack.c.b16 %v782, %v781
    %v1006 = vpack.c.b16 %v784, %v783
    %v1007 = vpack.c.b16 %v786, %v785
    %v1008 = vpack.c.b16 %v788, %v787
    %v1009 = vpack.c.b16 %v790, %v789
    %v1010 = vpack.c.b16 %v792, %v791
    %v1011 = vpack.c.b16 %v794, %v793
    %v1012 = vpack.c.b16 %v796, %v795
    %v1013 = vpack.c.b16 %v798, %v797
    %v1014 = vpack.c.b16 %v800, %v799
    %v1015 = vpack.c.b16 %v802, %v801
    %v1016 = vpack.c.b16 %v804, %v803
    %v1017 = vpack.c.b16 %v806, %v805
    %v1018 = vpack.c.b16 %v808, %v807
    %v1019 = vpack.c.b16 %v810, %v809
    %v1020 = vpack.c.b16 %v812, %v811
    %v1021 = vpack.c.b16 %v814, %v813
    %v1022 = vpack.c.b16 %v816, %v815
    %v1023 = vpack.c.b16 %v818, %v817
    %v1024 = vpack.c.b16 %v820, %v819
    %v1025 = vpack.c.b16 %v822, %v821
    %v1026 = vpack.c.b16 %v824, %v823
    %v1027 = vpack.c.b16 %v826, %v825
    %v1028 = vpack.c.b16 %v828, %v827
    %v1029 = vpack.c.b16 %v830, %v829
    %v1030 = vpack.c.b16 %v832, %v831
    %v1031 = vpack.c.b16 %v834, %v833
    %v1032 = vpack.c.b16 %v836, %v835
    %v1033 = vpack.c.b16 %v838, %v837
    %v1034 = vpack.c.b16 %v840, %v839
    %v1035 = vpack.c.b16 %v842, %v841
    %v1036 = vpack.c.b16 %v844, %v843
    %v1037 = vpack.c.b16 %v846, %v845
    %v1038 = vpack.c.b16 %v848, %v847
    %v1039 = vpack.c.b16 %v850, %v849
    %v1040 = vpack.c.b16 %v852, %v851
    %v1041 = vpack.c.b16 %v854, %v853
    %v1042 = vpack.c.b16 %v856, %v855
    %v1043 = vpack.c.b16 %v858, %v857
    %v1044 = vpack.c.b16 %v860, %v859
    %v1045 = vpack.c.b16 %v862, %v861
    %v1046 = vpack.c.b16 %v864, %v863
    %v1047 = vpack.c.b16 %v866, %v865
    %v1048 = vpack.c.b16 %v868, %v867
    %v1049 = vpack.c.b16 %v870, %v869
    %v1050 = vpack.c.b16 %v872, %v871
    %v1051 = vpack.c.b16 %v874, %v873
    %v1052 = vpack.c.b16 %v876, %v875
    %v1053 = vpack.c.b16 %v878, %v877
    %v1054 = vpack.c.b16 %v880, %v879
    %v1055 = vpack.c.b16 %v882, %v881
    %v1056 = vpack.c.b16 %v884, %v883
    %v1057 = vpack.c.b16 %v886, %v885
    %v1058 = vpack.c.b16 %v888, %v887
    %v1059 = vpack.c.b16 %v890, %v889
    %v1060 = vpack.c.b16 %v892, %v891
    %v1061 = vpack.c.b16 %v894, %v893
    %v1062 = vpack.c.b16 %v896, %v895
    %v1063 = vpack.c.b16 %v898, %v897
    %v1064 = vpack.c.b16 %v900, %v899
    %v1065 = vpack.c.b16 %v902, %v901
    %v1066 = vpack.c.b16 %v904, %v903
    %v1067 = vpack.c.b16 %v906, %v905
    %v1068 = vpack.c.b16 %v908, %v907
    %v1069 = vpack.c.b16 %v910, %v909
    %v1070 = vpack.c.b16 %v912, %v911
    %v1071 = vpack.c.b16 %v914, %v913
    %v1072 = vpack.c.b16 %v916, %v915
    %v1073 = vpack.c.b16 %v918, %v917
    %v1074 = vpack.c.b16 %v920, %v919
    %v1075 = vpack.c.b16 %v922, %v921
    %v1076 = vpack.c.b16 %v924, %v923
    %v1077 = vpack.c.b16 %v926, %v925
    %v1078 = vpack.c.b16 %v928, %v927
    %v1079 = vpack.c.b16 %v930, %v929
    %v1080 = vpack.c.b16 %v932, %v931
    %v1081 = vpack.c.b16 %v934, %v933
    %v1082 = vpack.c.b16 %v936, %v935
    %v1083 = vpack.c.b16 %v938, %v937
    %v1084 = vpack.c.b16 %v940, %v939
    %v1085 = vpack.c.b16 %v942, %v941
    %v1086 = vpack.c.b16 %v944, %v943
    %v1087 = vpack.c.b16 %v946, %v945
    %v1088 = vpack.c.b16 %v948, %v947
    %v1089 = vpack.c.b16 %v950, %v949
    %v1090 = vpack.c.b16 %v952, %v951
    %v1091 = vpack.c.b16 %v954, %v953
    %v1092 = vpack.c.b16 %v956, %v955
    %v1093 = vpack.c.b16 %v958, %v957
    %v1094 = vpack.c.b16 %v960, %v959
    %v1095 = vpack.c.b16 %v962, %v961
    %v1096 = vpack.c.b16 %v964, %v963
    %v1097 = vpack.c.b16 %v966, %v965
    %v1098 = vpack.c.b16 %v968, %v967
    %v1099 = vpack.c.b16 %v970, %v969
    %v1100 = vpack.c.b16 %v972, %v971
    %vm1101 = vcmask 31744
    %v1103 = vsel %vm1101, %v973, 0
    %v1106 = vsel %vm1101, %v974, 0
    %v1109 = vsel %vm1101, %v975, 0
    %v1112 = vsel %vm1101, %v976, 0
    %v1115 = vsel %vm1101, %v977, 0
    %v1118 = vsel %vm1101, %v978, 0
    %v1121 = vsel %vm1101, %v979, 0
    %v1124 = vsel %vm1101, %v980, 0
    %v1127 = vsel %vm1101, %v981, 0
    %v1130 = vsel %vm1101, %v982, 0
    %v1133 = vsel %vm1101, %v983, 0
    %v1136 = vsel %vm1101, %v984, 0
    %v1139 = vsel %vm1101, %v985, 0
    %v1142 = vsel %vm1101, %v986, 0
    %v1145 = vsel %vm1101, %v987, 0
    %v1148 = vsel %vm1101, %v988, 0
    %v1151 = vsel %vm1101, %v989, 0
    %v1154 = vsel %vm1101, %v990, 0
    %v1157 = vsel %vm1101, %v991, 0
    %v1160 = vsel %vm1101, %v992, 0
    %v1163 = vsel %vm1101, %v993, 0
    %v1166 = vsel %vm1101, %v994, 0
    %v1169 = vsel %vm1101, %v995, 0
    %v1172 = vsel %vm1101, %v996, 0
    %v1175 = vsel %vm1101, %v997, 0
    %v1178 = vsel %vm1101, %v998, 0
    %v1181 = vsel %vm1101, %v999, 0
    %v1184 = vsel %vm1101, %v1000, 0
    %v1187 = vsel %vm1101, %v1001, 0
    %v1190 = vsel %vm1101, %v1002, 0
    %v1193 = vsel %vm1101, %v1003, 0
    %v1196 = vsel %vm1101, %v1004, 0
    %v1199 = vsel %vm1101, %v1005, 0
    %v1202 = vsel %vm1101, %v1006, 0
    %v1205 = vsel %vm1101, %v1007, 0
    %v1208 = vsel %vm1101, %v1008, 0
    %v1211 = vsel %vm1101, %v1009, 0
    %v1214 = vsel %vm1101, %v1010, 0
    %v1217 = vsel %vm1101, %v1011, 0
    %v1220 = vsel %vm1101, %v1012, 0
    %v1223 = vsel %vm1101, %v1013, 0
    %v1226 = vsel %vm1101, %v1014, 0
    %v1229 = vsel %vm1101, %v1015, 0
    %v1232 = vsel %vm1101, %v1016, 0
    %v1235 = vsel %vm1101, %v1017, 0
    %v1238 = vsel %vm1101, %v1018, 0
    %v1241 = vsel %vm1101, %v1019, 0
    %v1244 = vsel %vm1101, %v1020, 0
    %v1247 = vsel %vm1101, %v1021, 0
    %v1250 = vsel %vm1101, %v1022, 0
    %v1253 = vsel %vm1101, %v1023, 0
    %v1256 = vsel %vm1101, %v1024, 0
    %v1259 = vsel %vm1101, %v1025, 0
    %v1262 = vsel %vm1101, %v1026, 0
    %v1265 = vsel %vm1101, %v1027, 0
    %v1268 = vsel %vm1101, %v1028, 0
    %v1271 = vsel %vm1101, %v1029, 0
    %v1274 = vsel %vm1101, %v1030, 0
    %v1277 = vsel %vm1101, %v1031, 0
    %v1280 = vsel %vm1101, %v1032, 0
    %v1283 = vsel %vm1101, %v1033, 0
    %v1286 = vsel %vm1101, %v1034, 0
    %v1289 = vsel %vm1101, %v1035, 0
    %v1292 = vsel %vm1101, %v1036, 0
    %v1295 = vsel %vm1101, %v1037, 0
    %v1298 = vsel %vm1101, %v1038, 0
    %v1301 = vsel %vm1101, %v1039, 0
    %v1304 = vsel %vm1101, %v1040, 0
    %v1307 = vsel %vm1101, %v1041, 0
    %v1310 = vsel %vm1101, %v1042, 0
    %v1313 = vsel %vm1101, %v1043, 0
    %v1316 = vsel %vm1101, %v1044, 0
    %v1319 = vsel %vm1101, %v1045, 0
    %v1322 = vsel %vm1101, %v1046, 0
    %v1325 = vsel %vm1101, %v1047, 0
    %v1328 = vsel %vm1101, %v1048, 0
    %v1331 = vsel %vm1101, %v1049, 0
    %v1334 = vsel %vm1101, %v1050, 0
    %v1337 = vsel %vm1101, %v1051, 0
    %v1340 = vsel %vm1101, %v1052, 0
    %v1343 = vsel %vm1101, %v1053, 0
    %v1346 = vsel %vm1101, %v1054, 0
    %v1349 = vsel %vm1101, %v1055, 0
    %v1352 = vsel %vm1101, %v1056, 0
    %v1355 = vsel %vm1101, %v1057, 0
    %v1358 = vsel %vm1101, %v1058, 0
    %v1361 = vsel %vm1101, %v1059, 0
    %v1364 = vsel %vm1101, %v1060, 0
    %v1367 = vsel %vm1101, %v1061, 0
    %v1370 = vsel %vm1101, %v1062, 0
    %v1373 = vsel %vm1101, %v1063, 0
    %v1376 = vsel %vm1101, %v1064, 0
    %v1379 = vsel %vm1101, %v1065, 0
    %v1382 = vsel %vm1101, %v1066, 0
    %v1385 = vsel %vm1101, %v1067, 0
    %v1388 = vsel %vm1101, %v1068, 0
    %v1391 = vsel %vm1101, %v1069, 0
    %v1394 = vsel %vm1101, %v1070, 0
    %v1397 = vsel %vm1101, %v1071, 0
    %v1400 = vsel %vm1101, %v1072, 0
    %v1403 = vsel %vm1101, %v1073, 0
    %v1406 = vsel %vm1101, %v1074, 0
    %v1409 = vsel %vm1101, %v1075, 0
    %v1412 = vsel %vm1101, %v1076, 0
    %v1415 = vsel %vm1101, %v1077, 0
    %v1418 = vsel %vm1101, %v1078, 0
    %v1421 = vsel %vm1101, %v1079, 0
    %v1424 = vsel %vm1101, %v1080, 0
    %v1427 = vsel %vm1101, %v1081, 0
    %v1430 = vsel %vm1101, %v1082, 0
    %v1433 = vsel %vm1101, %v1083, 0
    %v1436 = vsel %vm1101, %v1084, 0
    %v1439 = vsel %vm1101, %v1085, 0
    %v1442 = vsel %vm1101, %v1086, 0
    %v1445 = vsel %vm1101, %v1087, 0
    %v1448 = vsel %vm1101, %v1088, 0
    %v1451 = vsel %vm1101, %v1089, 0
    %v1454 = vsel %vm1101, %v1090, 0
    %v1457 = vsel %vm1101, %v1091, 0
    %v1460 = vsel %vm1101, %v1092, 0
    %v1463 = vsel %vm1101, %v1093, 0
    %v1466 = vsel %vm1101, %v1094, 0
    %v1469 = vsel %vm1101, %v1095, 0
    %v1472 = vsel %vm1101, %v1096, 0
    %v1475 = vsel %vm1101, %v1097, 0
    %v1478 = vsel %vm1101, %v1098, 0
    %v1481 = vsel %vm1101, %v1099, 0
    %v1484 = vsel %vm1101, %v1100, 0
    %vm1486 = vcmask 1041408
    %v1488 = vsel %vm1486, %v453, 0
    %1490 = vmatprep.subr.bf16.mxu0 0
    %1491 = vmatpush1.bf16.msra.mxu0 %v1488
    %1492 = vmatprep.subr.bf16.mxu0 0
    %1493 = vmatpush1.bf16.msra.mxu0 0
    %1494 = vmatprep.subr.bf16.mxu0 0
    %1495 = vmatpush1.bf16.msra.mxu0 0
    %1496 = vmatprep.subr.bf16.mxu0 0
    %1497 = vmatpush1.bf16.msra.mxu0 0
    %1498 = vmatprep.subr.bf16.mxu0 0
    %1499 = vmatpush1.bf16.msra.mxu0 0
    %1500 = vmatprep.subr.bf16.mxu0 0
    %1501 = vmatpush1.bf16.msra.mxu0 0
    %1502 = vmatprep.subr.bf16.mxu0 0
    %1503 = vmatpush1.bf16.msra.mxu0 0
    %1504 = vmatprep.subr.bf16.mxu0 0
    %1505 = vmatpush1.bf16.msra.mxu0 0
    %1506 = vmatprep.subr.bf16.mxu0 0
    %1507 = vmatpush1.bf16.msra.mxu0 0
    %1508 = vmatprep.subr.bf16.mxu0 0
    %1509 = vmatpush1.bf16.msra.mxu0 0
    %1510 = vmatprep.subr.bf16.mxu0 0
    %1511 = vmatpush1.bf16.msra.mxu0 0
    %1512 = vmatprep.subr.bf16.mxu0 0
    %1513 = vmatpush1.bf16.msra.mxu0 0
    %1514 = vmatprep.subr.bf16.mxu0 0
    %1515 = vmatpush1.bf16.msra.mxu0 0
    %1516 = vmatprep.subr.bf16.mxu0 0
    %1517 = vmatpush1.bf16.msra.mxu0 0
    %1518 = vmatprep.subr.bf16.mxu0 0
    %1519 = vmatpush1.bf16.msra.mxu0 0
    %1520 = vmatprep.subr.bf16.mxu0 0
    %1521 = vmatpush1.bf16.msra.mxu0 0
    %1522 = vmatprep.mubr.bf16.mxu0 0
    %1523 = vmatmul.mubr.bf16.gmra.mrb[0].mxu0 %v1103
    %v1524 = vpop.f32.mrb[0].mxu0
    %v1525 = vadd.f32 %v459, %v1524
    %v1526 = vpop.f32.mrb[0].mxu0
    %v1527 = vpop.f32.mrb[0].mxu0
    %v1528 = vadd.f32 %v459, %v1527
    %v1529 = vpop.f32.mrb[0].mxu0
    %1530 = vmatprep.mubr.bf16.mxu0 0
    %1531 = vmatmul.mubr.bf16.gmra.mrb[0].mxu0 %v1106
    %v1532 = vpop.f32.mrb[0].mxu0
    %v1533 = vadd.f32 %v459, %v1532
    %v1534 = vpop.f32.mrb[0].mxu0
    %v1535 = vpop.f32.mrb[0].mxu0
    %v1536 = vadd.f32 %v459, %v1535
    %v1537 = vpop.f32.mrb[0].mxu0
    %1538 = vmatprep.mubr.bf16.mxu0 0
    %1539 = vmatmul.mubr.bf16.gmra.mrb[0].mxu0 %v1109
    %v1540 = vpop.f32.mrb[0].mxu0
    %v1541 = vadd.f32 %v459, %v1540
    %v1542 = vpop.f32.mrb[0].mxu0
    %v1543 = vpop.f32.mrb[0].mxu0
    %v1544 = vadd.f32 %v459, %v1543
    %v1545 = vpop.f32.mrb[0].mxu0
    %1546 = vmatprep.mubr.bf16.mxu0 0
    %1547 = vmatmul.mubr.bf16.gmra.mrb[0].mxu0 %v1112
    %v1548 = vpop.f32.mrb[0].mxu0
    %v1549 = vadd.f32 %v459, %v1548
    %v1550 = vpop.f32.mrb[0].mxu0
    %v1551 = vpop.f32.mrb[0].mxu0
    %v1552 = vadd.f32 %v459, %v1551
    %v1553 = vpop.f32.mrb[0].mxu0
    %1554 = vmatprep.mubr.bf16.mxu0 0
    %1555 = vmatmul.mubr.bf16.gmra.mrb[0].mxu0 %v1115
    %v1556 = vpop.f32.mrb[0].mxu0
    %v1557 = vadd.f32 %v459, %v1556
    %v1558 = vpop.f32.mrb[0].mxu0
    %v1559 = vpop.f32.mrb[0].mxu0
    %v1560 = vadd.f32 %v459, %v1559
    %v1561 = vpop.f32.mrb[0].mxu0
    %1562 = vmatprep.mubr.bf16.mxu0 0
    %1563 = vmatmul.mubr.bf16.gmra.mrb[0].mxu0 %v1118
    %v1564 = vpop.f32.mrb[0].mxu0
    %v1565 = vadd.f32 %v459, %v1564
    %v1566 = vpop.f32.mrb[0].mxu0
    %v1567 = vpop.f32.mrb[0].mxu0
    %v1568 = vadd.f32 %v459, %v1567
    %v1569 = vpop.f32.mrb[0].mxu0
    %1570 = vmatprep.mubr.bf16.mxu0 0
    %1571 = vmatmul.mubr.bf16.gmra.mrb[0].mxu0 %v1121
    %v1572 = vpop.f32.mrb[0].mxu0
    %v1573 = vadd.f32 %v459, %v1572
    %v1574 = vpop.f32.mrb[0].mxu0
    %v1575 = vpop.f32.mrb[0].mxu0
    %v1576 = vadd.f32 %v459, %v1575
    %v1577 = vpop.f32.mrb[0].mxu0
    %1578 = vmatprep.mubr.bf16.mxu0 0
    %1579 = vmatmul.mubr.bf16.gmra.mrb[0].mxu0 %v1124
    %v1580 = vpop.f32.mrb[0].mxu0
    %v1581 = vadd.f32 %v459, %v1580
    %v1582 = vpop.f32.mrb[0].mxu0
    %v1583 = vpop.f32.mrb[0].mxu0
    %v1584 = vadd.f32 %v459, %v1583
    %v1585 = vpop.f32.mrb[0].mxu0
    %1586 = vmatprep.mubr.bf16.mxu0 0
    %1587 = vmatmul.mubr.bf16.gmra.mrb[0].mxu0 %v1127
    %v1588 = vpop.f32.mrb[0].mxu0
    %v1589 = vadd.f32 %v459, %v1588
    %v1590 = vpop.f32.mrb[0].mxu0
    %v1591 = vpop.f32.mrb[0].mxu0
    %v1592 = vadd.f32 %v459, %v1591
    %v1593 = vpop.f32.mrb[0].mxu0
    %1594 = vmatprep.mubr.bf16.mxu0 0
    %1595 = vmatmul.mubr.bf16.gmra.mrb[0].mxu0 %v1130
    %v1596 = vpop.f32.mrb[0].mxu0
    %v1597 = vadd.f32 %v459, %v1596
    %v1598 = vpop.f32.mrb[0].mxu0
    %v1599 = vpop.f32.mrb[0].mxu0
    %v1600 = vadd.f32 %v459, %v1599
    %v1601 = vpop.f32.mrb[0].mxu0
    %1602 = vmatprep.mubr.bf16.mxu0 0
    %1603 = vmatmul.mubr.bf16.gmra.mrb[0].mxu0 %v1133
    %v1604 = vpop.f32.mrb[0].mxu0
    %v1605 = vadd.f32 %v459, %v1604
    %v1606 = vpop.f32.mrb[0].mxu0
    %v1607 = vpop.f32.mrb[0].mxu0
    %v1608 = vadd.f32 %v459, %v1607
    %v1609 = vpop.f32.mrb[0].mxu0
    %1610 = vmatprep.mubr.bf16.mxu0 0
    %1611 = vmatmul.mubr.bf16.gmra.mrb[0].mxu0 %v1136
    %v1612 = vpop.f32.mrb[0].mxu0
    %v1613 = vadd.f32 %v459, %v1612
    %v1614 = vpop.f32.mrb[0].mxu0
    %v1615 = vpop.f32.mrb[0].mxu0
    %v1616 = vadd.f32 %v459, %v1615
    %v1617 = vpop.f32.mrb[0].mxu0
    %1618 = vmatprep.mubr.bf16.mxu0 0
    %1619 = vmatmul.mubr.bf16.gmra.mrb[0].mxu0 %v1139
    %v1620 = vpop.f32.mrb[0].mxu0
    %v1621 = vadd.f32 %v459, %v1620
    %v1622 = vpop.f32.mrb[0].mxu0
    %v1623 = vpop.f32.mrb[0].mxu0
    %v1624 = vadd.f32 %v459, %v1623
    %v1625 = vpop.f32.mrb[0].mxu0
    %1626 = vmatprep.mubr.bf16.mxu0 0
    %1627 = vmatmul.mubr.bf16.gmra.mrb[0].mxu0 %v1142
    %v1628 = vpop.f32.mrb[0].mxu0
    %v1629 = vadd.f32 %v459, %v1628
    %v1630 = vpop.f32.mrb[0].mxu0
    %v1631 = vpop.f32.mrb[0].mxu0
    %v1632 = vadd.f32 %v459, %v1631
    %v1633 = vpop.f32.mrb[0].mxu0
    %1634 = vmatprep.mubr.bf16.mxu0 0
    %1635 = vmatmul.mubr.bf16.gmra.mrb[0].mxu0 %v1145
    %v1636 = vpop.f32.mrb[0].mxu0
    %v1637 = vadd.f32 %v459, %v1636
    %v1638 = vpop.f32.mrb[0].mxu0
    %v1639 = vpop.f32.mrb[0].mxu0
    %v1640 = vadd.f32 %v459, %v1639
    %v1641 = vpop.f32.mrb[0].mxu0
    %1642 = vmatprep.mubr.bf16.mxu0 0
    %1643 = vmatmul.mubr.bf16.gmra.mrb[0].mxu0 %v1148
    %v1644 = vpop.f32.mrb[0].mxu0
    %v1645 = vadd.f32 %v459, %v1644
    %v1646 = vpop.f32.mrb[0].mxu0
    %v1647 = vpop.f32.mrb[0].mxu0
    %v1648 = vadd.f32 %v459, %v1647
    %v1649 = vpop.f32.mrb[0].mxu0
    %1650 = vmatprep.mubr.bf16.mxu0 0
    %1651 = vmatmul.mubr.bf16.gmra.mrb[0].mxu0 %v1151
    %v1652 = vpop.f32.mrb[0].mxu0
    %v1653 = vadd.f32 %v459, %v1652
    %v1654 = vpop.f32.mrb[0].mxu0
    %v1655 = vpop.f32.mrb[0].mxu0
    %v1656 = vadd.f32 %v459, %v1655
    %v1657 = vpop.f32.mrb[0].mxu0
    %1658 = vmatprep.mubr.bf16.mxu0 0
    %1659 = vmatmul.mubr.bf16.gmra.mrb[0].mxu0 %v1154
    %v1660 = vpop.f32.mrb[0].mxu0
    %v1661 = vadd.f32 %v459, %v1660
    %v1662 = vpop.f32.mrb[0].mxu0
    %v1663 = vpop.f32.mrb[0].mxu0
    %v1664 = vadd.f32 %v459, %v1663
    %v1665 = vpop.f32.mrb[0].mxu0
    %1666 = vmatprep.mubr.bf16.mxu0 0
    %1667 = vmatmul.mubr.bf16.gmra.mrb[0].mxu0 %v1157
    %v1668 = vpop.f32.mrb[0].mxu0
    %v1669 = vadd.f32 %v459, %v1668
    %v1670 = vpop.f32.mrb[0].mxu0
    %v1671 = vpop.f32.mrb[0].mxu0
    %v1672 = vadd.f32 %v459, %v1671
    %v1673 = vpop.f32.mrb[0].mxu0
    %1674 = vmatprep.mubr.bf16.mxu0 0
    %1675 = vmatmul.mubr.bf16.gmra.mrb[0].mxu0 %v1160
    %v1676 = vpop.f32.mrb[0].mxu0
    %v1677 = vadd.f32 %v459, %v1676
    %v1678 = vpop.f32.mrb[0].mxu0
    %v1679 = vpop.f32.mrb[0].mxu0
    %v1680 = vadd.f32 %v459, %v1679
    %v1681 = vpop.f32.mrb[0].mxu0
    %1682 = vmatprep.mubr.bf16.mxu0 0
    %1683 = vmatmul.mubr.bf16.gmra.mrb[0].mxu0 %v1163
    %v1684 = vpop.f32.mrb[0].mxu0
    %v1685 = vadd.f32 %v459, %v1684
    %v1686 = vpop.f32.mrb[0].mxu0
    %v1687 = vpop.f32.mrb[0].mxu0
    %v1688 = vadd.f32 %v459, %v1687
    %v1689 = vpop.f32.mrb[0].mxu0
    %1690 = vmatprep.mubr.bf16.mxu0 0
    %1691 = vmatmul.mubr.bf16.gmra.mrb[0].mxu0 %v1166
    %v1692 = vpop.f32.mrb[0].mxu0
    %v1693 = vadd.f32 %v459, %v1692
    %v1694 = vpop.f32.mrb[0].mxu0
    %v1695 = vpop.f32.mrb[0].mxu0
    %v1696 = vadd.f32 %v459, %v1695
    %v1697 = vpop.f32.mrb[0].mxu0
    %1698 = vmatprep.mubr.bf16.mxu0 0
    %1699 = vmatmul.mubr.bf16.gmra.mrb[0].mxu0 %v1169
    %v1700 = vpop.f32.mrb[0].mxu0
    %v1701 = vadd.f32 %v459, %v1700
    %v1702 = vpop.f32.mrb[0].mxu0
    %v1703 = vpop.f32.mrb[0].mxu0
    %v1704 = vadd.f32 %v459, %v1703
    %v1705 = vpop.f32.mrb[0].mxu0
    %1706 = vmatprep.mubr.bf16.mxu0 0
    %1707 = vmatmul.mubr.bf16.gmra.mrb[0].mxu0 %v1172
    %v1708 = vpop.f32.mrb[0].mxu0
    %v1709 = vadd.f32 %v459, %v1708
    %v1710 = vpop.f32.mrb[0].mxu0
    %v1711 = vpop.f32.mrb[0].mxu0
    %v1712 = vadd.f32 %v459, %v1711
    %v1713 = vpop.f32.mrb[0].mxu0
    %1714 = vmatprep.mubr.bf16.mxu0 0
    %1715 = vmatmul.mubr.bf16.gmra.mrb[0].mxu0 %v1175
    %v1716 = vpop.f32.mrb[0].mxu0
    %v1717 = vadd.f32 %v459, %v1716
    %v1718 = vpop.f32.mrb[0].mxu0
    %v1719 = vpop.f32.mrb[0].mxu0
    %v1720 = vadd.f32 %v459, %v1719
    %v1721 = vpop.f32.mrb[0].mxu0
    %1722 = vmatprep.mubr.bf16.mxu0 0
    %1723 = vmatmul.mubr.bf16.gmra.mrb[0].mxu0 %v1178
    %v1724 = vpop.f32.mrb[0].mxu0
    %v1725 = vadd.f32 %v459, %v1724
    %v1726 = vpop.f32.mrb[0].mxu0
    %v1727 = vpop.f32.mrb[0].mxu0
    %v1728 = vadd.f32 %v459, %v1727
    %v1729 = vpop.f32.mrb[0].mxu0
    %1730 = vmatprep.mubr.bf16.mxu0 0
    %1731 = vmatmul.mubr.bf16.gmra.mrb[0].mxu0 %v1181
    %v1732 = vpop.f32.mrb[0].mxu0
    %v1733 = vadd.f32 %v459, %v1732
    %v1734 = vpop.f32.mrb[0].mxu0
    %v1735 = vpop.f32.mrb[0].mxu0
    %v1736 = vadd.f32 %v459, %v1735
    %v1737 = vpop.f32.mrb[0].mxu0
    %1738 = vmatprep.mubr.bf16.mxu0 0
    %1739 = vmatmul.mubr.bf16.gmra.mrb[0].mxu0 %v1184
    %v1740 = vpop.f32.mrb[0].mxu0
    %v1741 = vadd.f32 %v459, %v1740
    %v1742 = vpop.f32.mrb[0].mxu0
    %v1743 = vpop.f32.mrb[0].mxu0
    %v1744 = vadd.f32 %v459, %v1743
    %v1745 = vpop.f32.mrb[0].mxu0
    %1746 = vmatprep.mubr.bf16.mxu0 0
    %1747 = vmatmul.mubr.bf16.gmra.mrb[0].mxu0 %v1187
    %v1748 = vpop.f32.mrb[0].mxu0
    %v1749 = vadd.f32 %v459, %v1748
    %v1750 = vpop.f32.mrb[0].mxu0
    %v1751 = vpop.f32.mrb[0].mxu0
    %v1752 = vadd.f32 %v459, %v1751
    %v1753 = vpop.f32.mrb[0].mxu0
    %1754 = vmatprep.mubr.bf16.mxu0 0
    %1755 = vmatmul.mubr.bf16.gmra.mrb[0].mxu0 %v1190
    %v1756 = vpop.f32.mrb[0].mxu0
    %v1757 = vadd.f32 %v459, %v1756
    %v1758 = vpop.f32.mrb[0].mxu0
    %v1759 = vpop.f32.mrb[0].mxu0
    %v1760 = vadd.f32 %v459, %v1759
    %v1761 = vpop.f32.mrb[0].mxu0
    %1762 = vmatprep.mubr.bf16.mxu0 0
    %1763 = vmatmul.mubr.bf16.gmra.mrb[0].mxu0 %v1193
    %v1764 = vpop.f32.mrb[0].mxu0
    %v1765 = vadd.f32 %v459, %v1764
    %v1766 = vpop.f32.mrb[0].mxu0
    %v1767 = vpop.f32.mrb[0].mxu0
    %v1768 = vadd.f32 %v459, %v1767
    %v1769 = vpop.f32.mrb[0].mxu0
    %1770 = vmatprep.mubr.bf16.mxu0 0
    %1771 = vmatmul.mubr.bf16.gmra.mrb[0].mxu0 %v1196
    %v1772 = vpop.f32.mrb[0].mxu0
    %v1773 = vadd.f32 %v459, %v1772
    %v1774 = vpop.f32.mrb[0].mxu0
    %v1775 = vpop.f32.mrb[0].mxu0
    %v1776 = vadd.f32 %v459, %v1775
    %v1777 = vpop.f32.mrb[0].mxu0
    %1778 = vmatprep.mubr.bf16.mxu0 0
    %1779 = vmatmul.mubr.bf16.gmra.mrb[0].mxu0 %v1199
    %v1780 = vpop.f32.mrb[0].mxu0
    %v1781 = vpop.f32.mrb[0].mxu0
    %v1782 = vpop.f32.mrb[0].mxu0
    %v1783 = vpop.f32.mrb[0].mxu0
    %1784 = vmatprep.mubr.bf16.mxu0 0
    %1785 = vmatmul.mubr.bf16.gmra.mrb[0].mxu0 %v1202
    %v1786 = vpop.f32.mrb[0].mxu0
    %v1787 = vpop.f32.mrb[0].mxu0
    %v1788 = vpop.f32.mrb[0].mxu0
    %v1789 = vpop.f32.mrb[0].mxu0
    %1790 = vmatprep.mubr.bf16.mxu0 0
    %1791 = vmatmul.mubr.bf16.gmra.mrb[0].mxu0 %v1205
    %v1792 = vpop.f32.mrb[0].mxu0
    %v1793 = vpop.f32.mrb[0].mxu0
    %v1794 = vpop.f32.mrb[0].mxu0
    %v1795 = vpop.f32.mrb[0].mxu0
    %1796 = vmatprep.mubr.bf16.mxu0 0
    %1797 = vmatmul.mubr.bf16.gmra.mrb[0].mxu0 %v1208
    %v1798 = vpop.f32.mrb[0].mxu0
    %v1799 = vpop.f32.mrb[0].mxu0
    %v1800 = vpop.f32.mrb[0].mxu0
    %v1801 = vpop.f32.mrb[0].mxu0
    %1802 = vmatprep.mubr.bf16.mxu0 0
    %1803 = vmatmul.mubr.bf16.gmra.mrb[0].mxu0 %v1211
    %v1804 = vpop.f32.mrb[0].mxu0
    %v1805 = vpop.f32.mrb[0].mxu0
    %v1806 = vpop.f32.mrb[0].mxu0
    %v1807 = vpop.f32.mrb[0].mxu0
    %1808 = vmatprep.mubr.bf16.mxu0 0
    %1809 = vmatmul.mubr.bf16.gmra.mrb[0].mxu0 %v1214
    %v1810 = vpop.f32.mrb[0].mxu0
    %v1811 = vpop.f32.mrb[0].mxu0
    %v1812 = vpop.f32.mrb[0].mxu0
    %v1813 = vpop.f32.mrb[0].mxu0
    %1814 = vmatprep.mubr.bf16.mxu0 0
    %1815 = vmatmul.mubr.bf16.gmra.mrb[0].mxu0 %v1217
    %v1816 = vpop.f32.mrb[0].mxu0
    %v1817 = vpop.f32.mrb[0].mxu0
    %v1818 = vpop.f32.mrb[0].mxu0
    %v1819 = vpop.f32.mrb[0].mxu0
    %1820 = vmatprep.mubr.bf16.mxu0 0
    %1821 = vmatmul.mubr.bf16.gmra.mrb[0].mxu0 %v1220
    %v1822 = vpop.f32.mrb[0].mxu0
    %v1823 = vpop.f32.mrb[0].mxu0
    %v1824 = vpop.f32.mrb[0].mxu0
    %v1825 = vpop.f32.mrb[0].mxu0
    %1826 = vmatprep.mubr.bf16.mxu0 0
    %1827 = vmatmul.mubr.bf16.gmra.mrb[0].mxu0 %v1223
    %v1828 = vpop.f32.mrb[0].mxu0
    %v1829 = vpop.f32.mrb[0].mxu0
    %v1830 = vpop.f32.mrb[0].mxu0
    %v1831 = vpop.f32.mrb[0].mxu0
    %1832 = vmatprep.mubr.bf16.mxu0 0
    %1833 = vmatmul.mubr.bf16.gmra.mrb[0].mxu0 %v1226
    %v1834 = vpop.f32.mrb[0].mxu0
    %v1835 = vpop.f32.mrb[0].mxu0
    %v1836 = vpop.f32.mrb[0].mxu0
    %v1837 = vpop.f32.mrb[0].mxu0
    %1838 = vmatprep.mubr.bf16.mxu0 0
    %1839 = vmatmul.mubr.bf16.gmra.mrb[0].mxu0 %v1229
    %v1840 = vpop.f32.mrb[0].mxu0
    %v1841 = vpop.f32.mrb[0].mxu0
    %v1842 = vpop.f32.mrb[0].mxu0
    %v1843 = vpop.f32.mrb[0].mxu0
    %1844 = vmatprep.mubr.bf16.mxu0 0
    %1845 = vmatmul.mubr.bf16.gmra.mrb[0].mxu0 %v1232
    %v1846 = vpop.f32.mrb[0].mxu0
    %v1847 = vpop.f32.mrb[0].mxu0
    %v1848 = vpop.f32.mrb[0].mxu0
    %v1849 = vpop.f32.mrb[0].mxu0
    %1850 = vmatprep.mubr.bf16.mxu0 0
    %1851 = vmatmul.mubr.bf16.gmra.mrb[0].mxu0 %v1235
    %v1852 = vpop.f32.mrb[0].mxu0
    %v1853 = vpop.f32.mrb[0].mxu0
    %v1854 = vpop.f32.mrb[0].mxu0
    %v1855 = vpop.f32.mrb[0].mxu0
    %1856 = vmatprep.mubr.bf16.mxu0 0
    %1857 = vmatmul.mubr.bf16.gmra.mrb[0].mxu0 %v1238
    %v1858 = vpop.f32.mrb[0].mxu0
    %v1859 = vpop.f32.mrb[0].mxu0
    %v1860 = vpop.f32.mrb[0].mxu0
    %v1861 = vpop.f32.mrb[0].mxu0
    %1862 = vmatprep.mubr.bf16.mxu0 0
    %1863 = vmatmul.mubr.bf16.gmra.mrb[0].mxu0 %v1241
    %v1864 = vpop.f32.mrb[0].mxu0
    %v1865 = vpop.f32.mrb[0].mxu0
    %v1866 = vpop.f32.mrb[0].mxu0
    %v1867 = vpop.f32.mrb[0].mxu0
    %1868 = vmatprep.mubr.bf16.mxu0 0
    %1869 = vmatmul.mubr.bf16.gmra.mrb[0].mxu0 %v1244
    %v1870 = vpop.f32.mrb[0].mxu0
    %v1871 = vpop.f32.mrb[0].mxu0
    %v1872 = vpop.f32.mrb[0].mxu0
    %v1873 = vpop.f32.mrb[0].mxu0
    %1874 = vmatprep.mubr.bf16.mxu0 0
    %1875 = vmatmul.mubr.bf16.gmra.mrb[0].mxu0 %v1247
    %v1876 = vpop.f32.mrb[0].mxu0
    %v1877 = vpop.f32.mrb[0].mxu0
    %v1878 = vpop.f32.mrb[0].mxu0
    %v1879 = vpop.f32.mrb[0].mxu0
    %1880 = vmatprep.mubr.bf16.mxu0 0
    %1881 = vmatmul.mubr.bf16.gmra.mrb[0].mxu0 %v1250
    %v1882 = vpop.f32.mrb[0].mxu0
    %v1883 = vpop.f32.mrb[0].mxu0
    %v1884 = vpop.f32.mrb[0].mxu0
    %v1885 = vpop.f32.mrb[0].mxu0
    %1886 = vmatprep.mubr.bf16.mxu0 0
    %1887 = vmatmul.mubr.bf16.gmra.mrb[0].mxu0 %v1253
    %v1888 = vpop.f32.mrb[0].mxu0
    %v1889 = vpop.f32.mrb[0].mxu0
    %v1890 = vpop.f32.mrb[0].mxu0
    %v1891 = vpop.f32.mrb[0].mxu0
    %1892 = vmatprep.mubr.bf16.mxu0 0
    %1893 = vmatmul.mubr.bf16.gmra.mrb[0].mxu0 %v1256
    %v1894 = vpop.f32.mrb[0].mxu0
    %v1895 = vpop.f32.mrb[0].mxu0
    %v1896 = vpop.f32.mrb[0].mxu0
    %v1897 = vpop.f32.mrb[0].mxu0
    %1898 = vmatprep.mubr.bf16.mxu0 0
    %1899 = vmatmul.mubr.bf16.gmra.mrb[0].mxu0 %v1259
    %v1900 = vpop.f32.mrb[0].mxu0
    %v1901 = vpop.f32.mrb[0].mxu0
    %v1902 = vpop.f32.mrb[0].mxu0
    %v1903 = vpop.f32.mrb[0].mxu0
    %1904 = vmatprep.mubr.bf16.mxu0 0
    %1905 = vmatmul.mubr.bf16.gmra.mrb[0].mxu0 %v1262
    %v1906 = vpop.f32.mrb[0].mxu0
    %v1907 = vpop.f32.mrb[0].mxu0
    %v1908 = vpop.f32.mrb[0].mxu0
    %v1909 = vpop.f32.mrb[0].mxu0
    %1910 = vmatprep.mubr.bf16.mxu0 0
    %1911 = vmatmul.mubr.bf16.gmra.mrb[0].mxu0 %v1265
    %v1912 = vpop.f32.mrb[0].mxu0
    %v1913 = vpop.f32.mrb[0].mxu0
    %v1914 = vpop.f32.mrb[0].mxu0
    %v1915 = vpop.f32.mrb[0].mxu0
    %1916 = vmatprep.mubr.bf16.mxu0 0
    %1917 = vmatmul.mubr.bf16.gmra.mrb[0].mxu0 %v1268
    %v1918 = vpop.f32.mrb[0].mxu0
    %v1919 = vpop.f32.mrb[0].mxu0
    %v1920 = vpop.f32.mrb[0].mxu0
    %v1921 = vpop.f32.mrb[0].mxu0
    %1922 = vmatprep.mubr.bf16.mxu0 0
    %1923 = vmatmul.mubr.bf16.gmra.mrb[0].mxu0 %v1271
    %v1924 = vpop.f32.mrb[0].mxu0
    %v1925 = vpop.f32.mrb[0].mxu0
    %v1926 = vpop.f32.mrb[0].mxu0
    %v1927 = vpop.f32.mrb[0].mxu0
    %1928 = vmatprep.mubr.bf16.mxu0 0
    %1929 = vmatmul.mubr.bf16.gmra.mrb[0].mxu0 %v1274
    %v1930 = vpop.f32.mrb[0].mxu0
    %v1931 = vpop.f32.mrb[0].mxu0
    %v1932 = vpop.f32.mrb[0].mxu0
    %v1933 = vpop.f32.mrb[0].mxu0
    %1934 = vmatprep.mubr.bf16.mxu0 0
    %1935 = vmatmul.mubr.bf16.gmra.mrb[0].mxu0 %v1277
    %v1936 = vpop.f32.mrb[0].mxu0
    %v1937 = vpop.f32.mrb[0].mxu0
    %v1938 = vpop.f32.mrb[0].mxu0
    %v1939 = vpop.f32.mrb[0].mxu0
    %1940 = vmatprep.mubr.bf16.mxu0 0
    %1941 = vmatmul.mubr.bf16.gmra.mrb[0].mxu0 %v1280
    %v1942 = vpop.f32.mrb[0].mxu0
    %v1943 = vpop.f32.mrb[0].mxu0
    %v1944 = vpop.f32.mrb[0].mxu0
    %v1945 = vpop.f32.mrb[0].mxu0
    %1946 = vmatprep.mubr.bf16.mxu0 0
    %1947 = vmatmul.mubr.bf16.gmra.mrb[0].mxu0 %v1283
    %v1948 = vpop.f32.mrb[0].mxu0
    %v1949 = vpop.f32.mrb[0].mxu0
    %v1950 = vpop.f32.mrb[0].mxu0
    %v1951 = vpop.f32.mrb[0].mxu0
    %1952 = vmatprep.mubr.bf16.mxu0 0
    %1953 = vmatmul.mubr.bf16.gmra.mrb[0].mxu0 %v1286
    %v1954 = vpop.f32.mrb[0].mxu0
    %v1955 = vpop.f32.mrb[0].mxu0
    %v1956 = vpop.f32.mrb[0].mxu0
    %v1957 = vpop.f32.mrb[0].mxu0
    %1958 = vmatprep.mubr.bf16.mxu0 0
    %1959 = vmatmul.mubr.bf16.gmra.mrb[0].mxu0 %v1289
    %v1960 = vpop.f32.mrb[0].mxu0
    %v1961 = vpop.f32.mrb[0].mxu0
    %v1962 = vpop.f32.mrb[0].mxu0
    %v1963 = vpop.f32.mrb[0].mxu0
    %1964 = vmatprep.mubr.bf16.mxu0 0
    %1965 = vmatmul.mubr.bf16.gmra.mrb[0].mxu0 %v1292
    %v1966 = vpop.f32.mrb[0].mxu0
    %v1967 = vpop.f32.mrb[0].mxu0
    %v1968 = vpop.f32.mrb[0].mxu0
    %v1969 = vpop.f32.mrb[0].mxu0
    %1970 = vmatprep.mubr.bf16.mxu0 0
    %1971 = vmatmul.mubr.bf16.gmra.mrb[0].mxu0 %v1295
    %v1972 = vpop.f32.mrb[0].mxu0
    %v1973 = vpop.f32.mrb[0].mxu0
    %v1974 = vpop.f32.mrb[0].mxu0
    %v1975 = vpop.f32.mrb[0].mxu0
    %1976 = vmatprep.mubr.bf16.mxu0 0
    %1977 = vmatmul.mubr.bf16.gmra.mrb[0].mxu0 %v1298
    %v1978 = vpop.f32.mrb[0].mxu0
    %v1979 = vpop.f32.mrb[0].mxu0
    %v1980 = vpop.f32.mrb[0].mxu0
    %v1981 = vpop.f32.mrb[0].mxu0
    %1982 = vmatprep.mubr.bf16.mxu0 0
    %1983 = vmatmul.mubr.bf16.gmra.mrb[0].mxu0 %v1301
    %v1984 = vpop.f32.mrb[0].mxu0
    %v1985 = vpop.f32.mrb[0].mxu0
    %v1986 = vpop.f32.mrb[0].mxu0
    %v1987 = vpop.f32.mrb[0].mxu0
    %1988 = vmatprep.mubr.bf16.mxu0 0
    %1989 = vmatmul.mubr.bf16.gmra.mrb[0].mxu0 %v1304
    %v1990 = vpop.f32.mrb[0].mxu0
    %v1991 = vpop.f32.mrb[0].mxu0
    %v1992 = vpop.f32.mrb[0].mxu0
    %v1993 = vpop.f32.mrb[0].mxu0
    %1994 = vmatprep.mubr.bf16.mxu0 0
    %1995 = vmatmul.mubr.bf16.gmra.mrb[0].mxu0 %v1307
    %v1996 = vpop.f32.mrb[0].mxu0
    %v1997 = vpop.f32.mrb[0].mxu0
    %v1998 = vpop.f32.mrb[0].mxu0
    %v1999 = vpop.f32.mrb[0].mxu0
    %2000 = vmatprep.mubr.bf16.mxu0 0
    %2001 = vmatmul.mubr.bf16.gmra.mrb[0].mxu0 %v1310
    %v2002 = vpop.f32.mrb[0].mxu0
    %v2003 = vpop.f32.mrb[0].mxu0
    %v2004 = vpop.f32.mrb[0].mxu0
    %v2005 = vpop.f32.mrb[0].mxu0
    %2006 = vmatprep.mubr.bf16.mxu0 0
    %2007 = vmatmul.mubr.bf16.gmra.mrb[0].mxu0 %v1313
    %v2008 = vpop.f32.mrb[0].mxu0
    %v2009 = vpop.f32.mrb[0].mxu0
    %v2010 = vpop.f32.mrb[0].mxu0
    %v2011 = vpop.f32.mrb[0].mxu0
    %2012 = vmatprep.mubr.bf16.mxu0 0
    %2013 = vmatmul.mubr.bf16.gmra.mrb[0].mxu0 %v1316
    %v2014 = vpop.f32.mrb[0].mxu0
    %v2015 = vpop.f32.mrb[0].mxu0
    %v2016 = vpop.f32.mrb[0].mxu0
    %v2017 = vpop.f32.mrb[0].mxu0
    %2018 = vmatprep.mubr.bf16.mxu0 0
    %2019 = vmatmul.mubr.bf16.gmra.mrb[0].mxu0 %v1319
    %v2020 = vpop.f32.mrb[0].mxu0
    %v2021 = vpop.f32.mrb[0].mxu0
    %v2022 = vpop.f32.mrb[0].mxu0
    %v2023 = vpop.f32.mrb[0].mxu0
    %2024 = vmatprep.mubr.bf16.mxu0 0
    %2025 = vmatmul.mubr.bf16.gmra.mrb[0].mxu0 %v1322
    %v2026 = vpop.f32.mrb[0].mxu0
    %v2027 = vpop.f32.mrb[0].mxu0
    %v2028 = vpop.f32.mrb[0].mxu0
    %v2029 = vpop.f32.mrb[0].mxu0
    %2030 = vmatprep.mubr.bf16.mxu0 0
    %2031 = vmatmul.mubr.bf16.gmra.mrb[0].mxu0 %v1325
    %v2032 = vpop.f32.mrb[0].mxu0
    %v2033 = vpop.f32.mrb[0].mxu0
    %v2034 = vpop.f32.mrb[0].mxu0
    %v2035 = vpop.f32.mrb[0].mxu0
    %2036 = vmatprep.mubr.bf16.mxu0 0
    %2037 = vmatmul.mubr.bf16.gmra.mrb[0].mxu0 %v1328
    %v2038 = vpop.f32.mrb[0].mxu0
    %v2039 = vpop.f32.mrb[0].mxu0
    %v2040 = vpop.f32.mrb[0].mxu0
    %v2041 = vpop.f32.mrb[0].mxu0
    %2042 = vmatprep.mubr.bf16.mxu0 0
    %2043 = vmatmul.mubr.bf16.gmra.mrb[0].mxu0 %v1331
    %v2044 = vpop.f32.mrb[0].mxu0
    %v2045 = vpop.f32.mrb[0].mxu0
    %v2046 = vpop.f32.mrb[0].mxu0
    %v2047 = vpop.f32.mrb[0].mxu0
    %2048 = vmatprep.mubr.bf16.mxu0 0
    %2049 = vmatmul.mubr.bf16.gmra.mrb[0].mxu0 %v1334
    %v2050 = vpop.f32.mrb[0].mxu0
    %v2051 = vpop.f32.mrb[0].mxu0
    %v2052 = vpop.f32.mrb[0].mxu0
    %v2053 = vpop.f32.mrb[0].mxu0
    %2054 = vmatprep.mubr.bf16.mxu0 0
    %2055 = vmatmul.mubr.bf16.gmra.mrb[0].mxu0 %v1337
    %v2056 = vpop.f32.mrb[0].mxu0
    %v2057 = vpop.f32.mrb[0].mxu0
    %v2058 = vpop.f32.mrb[0].mxu0
    %v2059 = vpop.f32.mrb[0].mxu0
    %2060 = vmatprep.mubr.bf16.mxu0 0
    %2061 = vmatmul.mubr.bf16.gmra.mrb[0].mxu0 %v1340
    %v2062 = vpop.f32.mrb[0].mxu0
    %v2063 = vpop.f32.mrb[0].mxu0
    %v2064 = vpop.f32.mrb[0].mxu0
    %v2065 = vpop.f32.mrb[0].mxu0
    %2066 = vmatprep.mubr.bf16.mxu0 0
    %2067 = vmatmul.mubr.bf16.gmra.mrb[0].mxu0 %v1343
    %v2068 = vpop.f32.mrb[0].mxu0
    %v2069 = vpop.f32.mrb[0].mxu0
    %v2070 = vpop.f32.mrb[0].mxu0
    %v2071 = vpop.f32.mrb[0].mxu0
    %2072 = vmatprep.mubr.bf16.mxu0 0
    %2073 = vmatmul.mubr.bf16.gmra.mrb[0].mxu0 %v1346
    %v2074 = vpop.f32.mrb[0].mxu0
    %v2075 = vpop.f32.mrb[0].mxu0
    %v2076 = vpop.f32.mrb[0].mxu0
    %v2077 = vpop.f32.mrb[0].mxu0
    %2078 = vmatprep.mubr.bf16.mxu0 0
    %2079 = vmatmul.mubr.bf16.gmra.mrb[0].mxu0 %v1349
    %v2080 = vpop.f32.mrb[0].mxu0
    %v2081 = vpop.f32.mrb[0].mxu0
    %v2082 = vpop.f32.mrb[0].mxu0
    %v2083 = vpop.f32.mrb[0].mxu0
    %2084 = vmatprep.mubr.bf16.mxu0 0
    %2085 = vmatmul.mubr.bf16.gmra.mrb[0].mxu0 %v1352
    %v2086 = vpop.f32.mrb[0].mxu0
    %v2087 = vpop.f32.mrb[0].mxu0
    %v2088 = vpop.f32.mrb[0].mxu0
    %v2089 = vpop.f32.mrb[0].mxu0
    %2090 = vmatprep.mubr.bf16.mxu0 0
    %2091 = vmatmul.mubr.bf16.gmra.mrb[0].mxu0 %v1355
    %v2092 = vpop.f32.mrb[0].mxu0
    %v2093 = vpop.f32.mrb[0].mxu0
    %v2094 = vpop.f32.mrb[0].mxu0
    %v2095 = vpop.f32.mrb[0].mxu0
    %2096 = vmatprep.mubr.bf16.mxu0 0
    %2097 = vmatmul.mubr.bf16.gmra.mrb[0].mxu0 %v1358
    %v2098 = vpop.f32.mrb[0].mxu0
    %v2099 = vpop.f32.mrb[0].mxu0
    %v2100 = vpop.f32.mrb[0].mxu0
    %v2101 = vpop.f32.mrb[0].mxu0
    %2102 = vmatprep.mubr.bf16.mxu0 0
    %2103 = vmatmul.mubr.bf16.gmra.mrb[0].mxu0 %v1361
    %v2104 = vpop.f32.mrb[0].mxu0
    %v2105 = vpop.f32.mrb[0].mxu0
    %v2106 = vpop.f32.mrb[0].mxu0
    %v2107 = vpop.f32.mrb[0].mxu0
    %2108 = vmatprep.mubr.bf16.mxu0 0
    %2109 = vmatmul.mubr.bf16.gmra.mrb[0].mxu0 %v1364
    %v2110 = vpop.f32.mrb[0].mxu0
    %v2111 = vpop.f32.mrb[0].mxu0
    %v2112 = vpop.f32.mrb[0].mxu0
    %v2113 = vpop.f32.mrb[0].mxu0
    %2114 = vmatprep.mubr.bf16.mxu0 0
    %2115 = vmatmul.mubr.bf16.gmra.mrb[0].mxu0 %v1367
    %v2116 = vpop.f32.mrb[0].mxu0
    %v2117 = vpop.f32.mrb[0].mxu0
    %v2118 = vpop.f32.mrb[0].mxu0
    %v2119 = vpop.f32.mrb[0].mxu0
    %2120 = vmatprep.mubr.bf16.mxu0 0
    %2121 = vmatmul.mubr.bf16.gmra.mrb[0].mxu0 %v1370
    %v2122 = vpop.f32.mrb[0].mxu0
    %v2123 = vpop.f32.mrb[0].mxu0
    %v2124 = vpop.f32.mrb[0].mxu0
    %v2125 = vpop.f32.mrb[0].mxu0
    %2126 = vmatprep.mubr.bf16.mxu0 0
    %2127 = vmatmul.mubr.bf16.gmra.mrb[0].mxu0 %v1373
    %v2128 = vpop.f32.mrb[0].mxu0
    %v2129 = vpop.f32.mrb[0].mxu0
    %v2130 = vpop.f32.mrb[0].mxu0
    %v2131 = vpop.f32.mrb[0].mxu0
    %2132 = vmatprep.mubr.bf16.mxu0 0
    %2133 = vmatmul.mubr.bf16.gmra.mrb[0].mxu0 %v1376
    %v2134 = vpop.f32.mrb[0].mxu0
    %v2135 = vpop.f32.mrb[0].mxu0
    %v2136 = vpop.f32.mrb[0].mxu0
    %v2137 = vpop.f32.mrb[0].mxu0
    %2138 = vmatprep.mubr.bf16.mxu0 0
    %2139 = vmatmul.mubr.bf16.gmra.mrb[0].mxu0 %v1379
    %v2140 = vpop.f32.mrb[0].mxu0
    %v2141 = vpop.f32.mrb[0].mxu0
    %v2142 = vpop.f32.mrb[0].mxu0
    %v2143 = vpop.f32.mrb[0].mxu0
    %2144 = vmatprep.mubr.bf16.mxu0 0
    %2145 = vmatmul.mubr.bf16.gmra.mrb[0].mxu0 %v1382
    %v2146 = vpop.f32.mrb[0].mxu0
    %v2147 = vpop.f32.mrb[0].mxu0
    %v2148 = vpop.f32.mrb[0].mxu0
    %v2149 = vpop.f32.mrb[0].mxu0
    %2150 = vmatprep.mubr.bf16.mxu0 0
    %2151 = vmatmul.mubr.bf16.gmra.mrb[0].mxu0 %v1385
    %v2152 = vpop.f32.mrb[0].mxu0
    %v2153 = vpop.f32.mrb[0].mxu0
    %v2154 = vpop.f32.mrb[0].mxu0
    %v2155 = vpop.f32.mrb[0].mxu0
    %2156 = vmatprep.mubr.bf16.mxu0 0
    %2157 = vmatmul.mubr.bf16.gmra.mrb[0].mxu0 %v1388
    %v2158 = vpop.f32.mrb[0].mxu0
    %v2159 = vpop.f32.mrb[0].mxu0
    %v2160 = vpop.f32.mrb[0].mxu0
    %v2161 = vpop.f32.mrb[0].mxu0
    %2162 = vmatprep.mubr.bf16.mxu0 0
    %2163 = vmatmul.mubr.bf16.gmra.mrb[0].mxu0 %v1391
    %v2164 = vpop.f32.mrb[0].mxu0
    %v2165 = vpop.f32.mrb[0].mxu0
    %v2166 = vpop.f32.mrb[0].mxu0
    %v2167 = vpop.f32.mrb[0].mxu0
    %2168 = vmatprep.mubr.bf16.mxu0 0
    %2169 = vmatmul.mubr.bf16.gmra.mrb[0].mxu0 %v1394
    %v2170 = vpop.f32.mrb[0].mxu0
    %v2171 = vpop.f32.mrb[0].mxu0
    %v2172 = vpop.f32.mrb[0].mxu0
    %v2173 = vpop.f32.mrb[0].mxu0
    %2174 = vmatprep.mubr.bf16.mxu0 0
    %2175 = vmatmul.mubr.bf16.gmra.mrb[0].mxu0 %v1397
    %v2176 = vpop.f32.mrb[0].mxu0
    %v2177 = vpop.f32.mrb[0].mxu0
    %v2178 = vpop.f32.mrb[0].mxu0
    %v2179 = vpop.f32.mrb[0].mxu0
    %2180 = vmatprep.mubr.bf16.mxu0 0
    %2181 = vmatmul.mubr.bf16.gmra.mrb[0].mxu0 %v1400
    %v2182 = vpop.f32.mrb[0].mxu0
    %v2183 = vpop.f32.mrb[0].mxu0
    %v2184 = vpop.f32.mrb[0].mxu0
    %v2185 = vpop.f32.mrb[0].mxu0
    %2186 = vmatprep.mubr.bf16.mxu0 0
    %2187 = vmatmul.mubr.bf16.gmra.mrb[0].mxu0 %v1403
    %v2188 = vpop.f32.mrb[0].mxu0
    %v2189 = vpop.f32.mrb[0].mxu0
    %v2190 = vpop.f32.mrb[0].mxu0
    %v2191 = vpop.f32.mrb[0].mxu0
    %2192 = vmatprep.mubr.bf16.mxu0 0
    %2193 = vmatmul.mubr.bf16.gmra.mrb[0].mxu0 %v1406
    %v2194 = vpop.f32.mrb[0].mxu0
    %v2195 = vpop.f32.mrb[0].mxu0
    %v2196 = vpop.f32.mrb[0].mxu0
    %v2197 = vpop.f32.mrb[0].mxu0
    %2198 = vmatprep.mubr.bf16.mxu0 0
    %2199 = vmatmul.mubr.bf16.gmra.mrb[0].mxu0 %v1409
    %v2200 = vpop.f32.mrb[0].mxu0
    %v2201 = vpop.f32.mrb[0].mxu0
    %v2202 = vpop.f32.mrb[0].mxu0
    %v2203 = vpop.f32.mrb[0].mxu0
    %2204 = vmatprep.mubr.bf16.mxu0 0
    %2205 = vmatmul.mubr.bf16.gmra.mrb[0].mxu0 %v1412
    %v2206 = vpop.f32.mrb[0].mxu0
    %v2207 = vpop.f32.mrb[0].mxu0
    %v2208 = vpop.f32.mrb[0].mxu0
    %v2209 = vpop.f32.mrb[0].mxu0
    %2210 = vmatprep.mubr.bf16.mxu0 0
    %2211 = vmatmul.mubr.bf16.gmra.mrb[0].mxu0 %v1415
    %v2212 = vpop.f32.mrb[0].mxu0
    %v2213 = vpop.f32.mrb[0].mxu0
    %v2214 = vpop.f32.mrb[0].mxu0
    %v2215 = vpop.f32.mrb[0].mxu0
    %2216 = vmatprep.mubr.bf16.mxu0 0
    %2217 = vmatmul.mubr.bf16.gmra.mrb[0].mxu0 %v1418
    %v2218 = vpop.f32.mrb[0].mxu0
    %v2219 = vpop.f32.mrb[0].mxu0
    %v2220 = vpop.f32.mrb[0].mxu0
    %v2221 = vpop.f32.mrb[0].mxu0
    %2222 = vmatprep.mubr.bf16.mxu0 0
    %2223 = vmatmul.mubr.bf16.gmra.mrb[0].mxu0 %v1421
    %v2224 = vpop.f32.mrb[0].mxu0
    %v2225 = vpop.f32.mrb[0].mxu0
    %v2226 = vpop.f32.mrb[0].mxu0
    %v2227 = vpop.f32.mrb[0].mxu0
    %2228 = vmatprep.mubr.bf16.mxu0 0
    %2229 = vmatmul.mubr.bf16.gmra.mrb[0].mxu0 %v1424
    %v2230 = vpop.f32.mrb[0].mxu0
    %v2231 = vpop.f32.mrb[0].mxu0
    %v2232 = vpop.f32.mrb[0].mxu0
    %v2233 = vpop.f32.mrb[0].mxu0
    %2234 = vmatprep.mubr.bf16.mxu0 0
    %2235 = vmatmul.mubr.bf16.gmra.mrb[0].mxu0 %v1427
    %v2236 = vpop.f32.mrb[0].mxu0
    %v2237 = vpop.f32.mrb[0].mxu0
    %v2238 = vpop.f32.mrb[0].mxu0
    %v2239 = vpop.f32.mrb[0].mxu0
    %2240 = vmatprep.mubr.bf16.mxu0 0
    %2241 = vmatmul.mubr.bf16.gmra.mrb[0].mxu0 %v1430
    %v2242 = vpop.f32.mrb[0].mxu0
    %v2243 = vpop.f32.mrb[0].mxu0
    %v2244 = vpop.f32.mrb[0].mxu0
    %v2245 = vpop.f32.mrb[0].mxu0
    %2246 = vmatprep.mubr.bf16.mxu0 0
    %2247 = vmatmul.mubr.bf16.gmra.mrb[0].mxu0 %v1433
    %v2248 = vpop.f32.mrb[0].mxu0
    %v2249 = vpop.f32.mrb[0].mxu0
    %v2250 = vpop.f32.mrb[0].mxu0
    %v2251 = vpop.f32.mrb[0].mxu0
    %2252 = vmatprep.mubr.bf16.mxu0 0
    %2253 = vmatmul.mubr.bf16.gmra.mrb[0].mxu0 %v1436
    %v2254 = vpop.f32.mrb[0].mxu0
    %v2255 = vpop.f32.mrb[0].mxu0
    %v2256 = vpop.f32.mrb[0].mxu0
    %v2257 = vpop.f32.mrb[0].mxu0
    %2258 = vmatprep.mubr.bf16.mxu0 0
    %2259 = vmatmul.mubr.bf16.gmra.mrb[0].mxu0 %v1439
    %v2260 = vpop.f32.mrb[0].mxu0
    %v2261 = vpop.f32.mrb[0].mxu0
    %v2262 = vpop.f32.mrb[0].mxu0
    %v2263 = vpop.f32.mrb[0].mxu0
    %2264 = vmatprep.mubr.bf16.mxu0 0
    %2265 = vmatmul.mubr.bf16.gmra.mrb[0].mxu0 %v1442
    %v2266 = vpop.f32.mrb[0].mxu0
    %v2267 = vpop.f32.mrb[0].mxu0
    %v2268 = vpop.f32.mrb[0].mxu0
    %v2269 = vpop.f32.mrb[0].mxu0
    %2270 = vmatprep.mubr.bf16.mxu0 0
    %2271 = vmatmul.mubr.bf16.gmra.mrb[0].mxu0 %v1445
    %v2272 = vpop.f32.mrb[0].mxu0
    %v2273 = vpop.f32.mrb[0].mxu0
    %v2274 = vpop.f32.mrb[0].mxu0
    %v2275 = vpop.f32.mrb[0].mxu0
    %2276 = vmatprep.mubr.bf16.mxu0 0
    %2277 = vmatmul.mubr.bf16.gmra.mrb[0].mxu0 %v1448
    %v2278 = vpop.f32.mrb[0].mxu0
    %v2279 = vpop.f32.mrb[0].mxu0
    %v2280 = vpop.f32.mrb[0].mxu0
    %v2281 = vpop.f32.mrb[0].mxu0
    %2282 = vmatprep.mubr.bf16.mxu0 0
    %2283 = vmatmul.mubr.bf16.gmra.mrb[0].mxu0 %v1451
    %v2284 = vpop.f32.mrb[0].mxu0
    %v2285 = vpop.f32.mrb[0].mxu0
    %v2286 = vpop.f32.mrb[0].mxu0
    %v2287 = vpop.f32.mrb[0].mxu0
    %2288 = vmatprep.mubr.bf16.mxu0 0
    %2289 = vmatmul.mubr.bf16.gmra.mrb[0].mxu0 %v1454
    %v2290 = vpop.f32.mrb[0].mxu0
    %v2291 = vpop.f32.mrb[0].mxu0
    %v2292 = vpop.f32.mrb[0].mxu0
    %v2293 = vpop.f32.mrb[0].mxu0
    %2294 = vmatprep.mubr.bf16.mxu0 0
    %2295 = vmatmul.mubr.bf16.gmra.mrb[0].mxu0 %v1457
    %v2296 = vpop.f32.mrb[0].mxu0
    %v2297 = vpop.f32.mrb[0].mxu0
    %v2298 = vpop.f32.mrb[0].mxu0
    %v2299 = vpop.f32.mrb[0].mxu0
    %2300 = vmatprep.mubr.bf16.mxu0 0
    %2301 = vmatmul.mubr.bf16.gmra.mrb[0].mxu0 %v1460
    %v2302 = vpop.f32.mrb[0].mxu0
    %v2303 = vpop.f32.mrb[0].mxu0
    %v2304 = vpop.f32.mrb[0].mxu0
    %v2305 = vpop.f32.mrb[0].mxu0
    %2306 = vmatprep.mubr.bf16.mxu0 0
    %2307 = vmatmul.mubr.bf16.gmra.mrb[0].mxu0 %v1463
    %v2308 = vpop.f32.mrb[0].mxu0
    %v2309 = vpop.f32.mrb[0].mxu0
    %v2310 = vpop.f32.mrb[0].mxu0
    %v2311 = vpop.f32.mrb[0].mxu0
    %2312 = vmatprep.mubr.bf16.mxu0 0
    %2313 = vmatmul.mubr.bf16.gmra.mrb[0].mxu0 %v1466
    %v2314 = vpop.f32.mrb[0].mxu0
    %v2315 = vpop.f32.mrb[0].mxu0
    %v2316 = vpop.f32.mrb[0].mxu0
    %v2317 = vpop.f32.mrb[0].mxu0
    %2318 = vmatprep.mubr.bf16.mxu0 0
    %2319 = vmatmul.mubr.bf16.gmra.mrb[0].mxu0 %v1469
    %v2320 = vpop.f32.mrb[0].mxu0
    %v2321 = vpop.f32.mrb[0].mxu0
    %v2322 = vpop.f32.mrb[0].mxu0
    %v2323 = vpop.f32.mrb[0].mxu0
    %2324 = vmatprep.mubr.bf16.mxu0 0
    %2325 = vmatmul.mubr.bf16.gmra.mrb[0].mxu0 %v1472
    %v2326 = vpop.f32.mrb[0].mxu0
    %v2327 = vpop.f32.mrb[0].mxu0
    %v2328 = vpop.f32.mrb[0].mxu0
    %v2329 = vpop.f32.mrb[0].mxu0
    %2330 = vmatprep.mubr.bf16.mxu0 0
    %2331 = vmatmul.mubr.bf16.gmra.mrb[0].mxu0 %v1475
    %v2332 = vpop.f32.mrb[0].mxu0
    %v2333 = vpop.f32.mrb[0].mxu0
    %v2334 = vpop.f32.mrb[0].mxu0
    %v2335 = vpop.f32.mrb[0].mxu0
    %2336 = vmatprep.mubr.bf16.mxu0 0
    %2337 = vmatmul.mubr.bf16.gmra.mrb[0].mxu0 %v1478
    %v2338 = vpop.f32.mrb[0].mxu0
    %v2339 = vpop.f32.mrb[0].mxu0
    %v2340 = vpop.f32.mrb[0].mxu0
    %v2341 = vpop.f32.mrb[0].mxu0
    %2342 = vmatprep.mubr.bf16.mxu0 0
    %2343 = vmatmul.mubr.bf16.gmra.mrb[0].mxu0 %v1481
    %v2344 = vpop.f32.mrb[0].mxu0
    %v2345 = vpop.f32.mrb[0].mxu0
    %v2346 = vpop.f32.mrb[0].mxu0
    %v2347 = vpop.f32.mrb[0].mxu0
    %2348 = vmatprep.mubr.bf16.mxu0 0
    %2349 = vmatmul.mubr.bf16.gmra.mrb[0].mxu0 %v1484
    %v2350 = vpop.f32.mrb[0].mxu0
    %v2351 = vpop.f32.mrb[0].mxu0
    %v2352 = vpop.f32.mrb[0].mxu0
    %v2353 = vpop.f32.mrb[0].mxu0
    %2354 = vdwg.mxu0
    %v2355 = vpack.c.bf16 %v1528, %v1525
    %v2356 = vpack.c.bf16 %v1536, %v1533
    %v2357 = vpack.c.bf16 %v1544, %v1541
    %v2358 = vpack.c.bf16 %v1552, %v1549
    %v2359 = vpack.c.bf16 %v1560, %v1557
    %v2360 = vpack.c.bf16 %v1568, %v1565
    %v2361 = vpack.c.bf16 %v1576, %v1573
    %v2362 = vpack.c.bf16 %v1584, %v1581
    %v2363 = vpack.c.bf16 %v1592, %v1589
    %v2364 = vpack.c.bf16 %v1600, %v1597
    %v2365 = vpack.c.bf16 %v1608, %v1605
    %v2366 = vpack.c.bf16 %v1616, %v1613
    %v2367 = vpack.c.bf16 %v1624, %v1621
    %v2368 = vpack.c.bf16 %v1632, %v1629
    %v2369 = vpack.c.bf16 %v1640, %v1637
    %v2370 = vpack.c.bf16 %v1648, %v1645
    %v2371 = vpack.c.bf16 %v1656, %v1653
    %v2372 = vpack.c.bf16 %v1664, %v1661
    %v2373 = vpack.c.bf16 %v1672, %v1669
    %v2374 = vpack.c.bf16 %v1680, %v1677
    %v2375 = vpack.c.bf16 %v1688, %v1685
    %v2376 = vpack.c.bf16 %v1696, %v1693
    %v2377 = vpack.c.bf16 %v1704, %v1701
    %v2378 = vpack.c.bf16 %v1712, %v1709
    %v2379 = vpack.c.bf16 %v1720, %v1717
    %v2380 = vpack.c.bf16 %v1728, %v1725
    %v2381 = vpack.c.bf16 %v1736, %v1733
    %v2382 = vpack.c.bf16 %v1744, %v1741
    %v2383 = vpack.c.bf16 %v1752, %v1749
    %v2384 = vpack.c.bf16 %v1760, %v1757
    %v2385 = vpack.c.bf16 %v1768, %v1765
    %v2386 = vpack.c.bf16 %v1776, %v1773
    %v2387 = vld [vmem:[#allocation6] sm:$0x3]
    %v2388 = vld [vmem:[#allocation7] sm:$0x1]
    %v2390 = vlaneseq
    %v2391 = vshrl.u32 %v2390, 7
    %v2392 = vsub.s32 0, %v2391
    %v2393 = vrot.slane %v2388, %v2392
    %vm2395 = vcmask 23552
    %v2397 = vsel %vm2395, %v2355, 0
    %v2400 = vsel %vm2395, %v2356, 0
    %v2403 = vsel %vm2395, %v2357, 0
    %v2406 = vsel %vm2395, %v2358, 0
    %v2409 = vsel %vm2395, %v2359, 0
    %v2412 = vsel %vm2395, %v2360, 0
    %v2415 = vsel %vm2395, %v2361, 0
    %v2418 = vsel %vm2395, %v2362, 0
    %v2421 = vsel %vm2395, %v2363, 0
    %v2424 = vsel %vm2395, %v2364, 0
    %v2427 = vsel %vm2395, %v2365, 0
    %v2430 = vsel %vm2395, %v2366, 0
    %v2433 = vsel %vm2395, %v2367, 0
    %v2436 = vsel %vm2395, %v2368, 0
    %v2439 = vsel %vm2395, %v2369, 0
    %v2442 = vsel %vm2395, %v2370, 0
    %v2445 = vsel %vm2395, %v2371, 0
    %v2448 = vsel %vm2395, %v2372, 0
    %v2451 = vsel %vm2395, %v2373, 0
    %v2454 = vsel %vm2395, %v2374, 0
    %v2457 = vsel %vm2395, %v2375, 0
    %v2460 = vsel %vm2395, %v2376, 0
    %v2463 = vsel %vm2395, %v2377, 0
    %v2466 = vsel %vm2395, %v2378, 0
    %v2469 = vsel %vm2395, %v2379, 0
    %v2472 = vsel %vm2395, %v2380, 0
    %v2475 = vsel %vm2395, %v2381, 0
    %v2478 = vsel %vm2395, %v2382, 0
    %v2481 = vsel %vm2395, %v2383, 0
    %v2484 = vsel %vm2395, %v2384, 0
    %v2487 = vsel %vm2395, %v2385, 0
    %v2490 = vsel %vm2395, %v2386, 0
    %vm2492 = vcmask 1040384
    %v2493 = vsel %vm2492, 4294967295, 65535
    %v2494 = vsel %vm1486, %v2493, 0
    %v2496 = vand.u32 %v2387, %v2494
    %2498 = vmatprep.subr.bf16.mxu0 0
    %2499 = vmatpush1.bf16.msra.mxu0 %v2496
    %2500 = vmatprep.subr.bf16.mxu0 0
    %2501 = vmatpush1.bf16.msra.mxu0 0
    %2502 = vmatprep.subr.bf16.mxu0 0
    %2503 = vmatpush1.bf16.msra.mxu0 0
    %2504 = vmatprep.subr.bf16.mxu0 0
    %2505 = vmatpush1.bf16.msra.mxu0 0
    %2506 = vmatprep.subr.bf16.mxu0 0
    %2507 = vmatpush1.bf16.msra.mxu0 0
    %2508 = vmatprep.subr.bf16.mxu0 0
    %2509 = vmatpush1.bf16.msra.mxu0 0
    %2510 = vmatprep.subr.bf16.mxu0 0
    %2511 = vmatpush1.bf16.msra.mxu0 0
    %2512 = vmatprep.subr.bf16.mxu0 0
    %2513 = vmatpush1.bf16.msra.mxu0 0
    %2514 = vmatprep.subr.bf16.mxu0 0
    %2515 = vmatpush1.bf16.msra.mxu0 0
    %2516 = vmatprep.subr.bf16.mxu0 0
    %2517 = vmatpush1.bf16.msra.mxu0 0
    %2518 = vmatprep.subr.bf16.mxu0 0
    %2519 = vmatpush1.bf16.msra.mxu0 0
    %2520 = vmatprep.subr.bf16.mxu0 0
    %2521 = vmatpush1.bf16.msra.mxu0 0
    %2522 = vmatprep.subr.bf16.mxu0 0
    %2523 = vmatpush1.bf16.msra.mxu0 0
    %2524 = vmatprep.subr.bf16.mxu0 0
    %2525 = vmatpush1.bf16.msra.mxu0 0
    %2526 = vmatprep.subr.bf16.mxu0 0
    %2527 = vmatpush1.bf16.msra.mxu0 0
    %2528 = vmatprep.subr.bf16.mxu0 0
    %2529 = vmatpush1.bf16.msra.mxu0 0
    %2530 = vmatprep.mubr.bf16.mxu0 0
    %2531 = vmatmul.mubr.bf16.gmra.mrb[0].mxu0 %v2397
    %v2532 = vpop.f32.mrb[0].mxu0
    %v2533 = vadd.f32 %v2393, %v2532
    %v2534 = vpop.f32.mrb[0].mxu0
    %v2535 = vpop.f32.mrb[0].mxu0
    %v2536 = vadd.f32 %v2393, %v2535
    %v2537 = vpop.f32.mrb[0].mxu0
    %2538 = vmatprep.mubr.bf16.mxu0 0
    %2539 = vmatmul.mubr.bf16.gmra.mrb[0].mxu0 %v2400
    %v2540 = vpop.f32.mrb[0].mxu0
    %v2541 = vadd.f32 %v2393, %v2540
    %v2542 = vpop.f32.mrb[0].mxu0
    %v2543 = vpop.f32.mrb[0].mxu0
    %v2544 = vadd.f32 %v2393, %v2543
    %v2545 = vpop.f32.mrb[0].mxu0
    %2546 = vmatprep.mubr.bf16.mxu0 0
    %2547 = vmatmul.mubr.bf16.gmra.mrb[0].mxu0 %v2403
    %v2548 = vpop.f32.mrb[0].mxu0
    %v2549 = vadd.f32 %v2393, %v2548
    %v2550 = vpop.f32.mrb[0].mxu0
    %v2551 = vpop.f32.mrb[0].mxu0
    %v2552 = vadd.f32 %v2393, %v2551
    %v2553 = vpop.f32.mrb[0].mxu0
    %2554 = vmatprep.mubr.bf16.mxu0 0
    %2555 = vmatmul.mubr.bf16.gmra.mrb[0].mxu0 %v2406
    %v2556 = vpop.f32.mrb[0].mxu0
    %v2557 = vadd.f32 %v2393, %v2556
    %v2558 = vpop.f32.mrb[0].mxu0
    %v2559 = vpop.f32.mrb[0].mxu0
    %v2560 = vadd.f32 %v2393, %v2559
    %v2561 = vpop.f32.mrb[0].mxu0
    %2562 = vmatprep.mubr.bf16.mxu0 0
    %2563 = vmatmul.mubr.bf16.gmra.mrb[0].mxu0 %v2409
    %v2564 = vpop.f32.mrb[0].mxu0
    %v2565 = vadd.f32 %v2393, %v2564
    %v2566 = vpop.f32.mrb[0].mxu0
    %v2567 = vpop.f32.mrb[0].mxu0
    %v2568 = vadd.f32 %v2393, %v2567
    %v2569 = vpop.f32.mrb[0].mxu0
    %2570 = vmatprep.mubr.bf16.mxu0 0
    %2571 = vmatmul.mubr.bf16.gmra.mrb[0].mxu0 %v2412
    %v2572 = vpop.f32.mrb[0].mxu0
    %v2573 = vadd.f32 %v2393, %v2572
    %v2574 = vpop.f32.mrb[0].mxu0
    %v2575 = vpop.f32.mrb[0].mxu0
    %v2576 = vadd.f32 %v2393, %v2575
    %v2577 = vpop.f32.mrb[0].mxu0
    %2578 = vmatprep.mubr.bf16.mxu0 0
    %2579 = vmatmul.mubr.bf16.gmra.mrb[0].mxu0 %v2415
    %v2580 = vpop.f32.mrb[0].mxu0
    %v2581 = vadd.f32 %v2393, %v2580
    %v2582 = vpop.f32.mrb[0].mxu0
    %v2583 = vpop.f32.mrb[0].mxu0
    %v2584 = vadd.f32 %v2393, %v2583
    %v2585 = vpop.f32.mrb[0].mxu0
    %2586 = vmatprep.mubr.bf16.mxu0 0
    %2587 = vmatmul.mubr.bf16.gmra.mrb[0].mxu0 %v2418
    %v2588 = vpop.f32.mrb[0].mxu0
    %v2589 = vadd.f32 %v2393, %v2588
    %v2590 = vpop.f32.mrb[0].mxu0
    %v2591 = vpop.f32.mrb[0].mxu0
    %v2592 = vadd.f32 %v2393, %v2591
    %v2593 = vpop.f32.mrb[0].mxu0
    %2594 = vmatprep.mubr.bf16.mxu0 0
    %2595 = vmatmul.mubr.bf16.gmra.mrb[0].mxu0 %v2421
    %v2596 = vpop.f32.mrb[0].mxu0
    %v2597 = vadd.f32 %v2393, %v2596
    %v2598 = vpop.f32.mrb[0].mxu0
    %v2599 = vpop.f32.mrb[0].mxu0
    %v2600 = vadd.f32 %v2393, %v2599
    %v2601 = vpop.f32.mrb[0].mxu0
    %2602 = vmatprep.mubr.bf16.mxu0 0
    %2603 = vmatmul.mubr.bf16.gmra.mrb[0].mxu0 %v2424
    %v2604 = vpop.f32.mrb[0].mxu0
    %v2605 = vadd.f32 %v2393, %v2604
    %v2606 = vpop.f32.mrb[0].mxu0
    %v2607 = vpop.f32.mrb[0].mxu0
    %v2608 = vadd.f32 %v2393, %v2607
    %v2609 = vpop.f32.mrb[0].mxu0
    %2610 = vmatprep.mubr.bf16.mxu0 0
    %2611 = vmatmul.mubr.bf16.gmra.mrb[0].mxu0 %v2427
    %v2612 = vpop.f32.mrb[0].mxu0
    %v2613 = vadd.f32 %v2393, %v2612
    %v2614 = vpop.f32.mrb[0].mxu0
    %v2615 = vpop.f32.mrb[0].mxu0
    %v2616 = vadd.f32 %v2393, %v2615
    %v2617 = vpop.f32.mrb[0].mxu0
    %2618 = vmatprep.mubr.bf16.mxu0 0
    %2619 = vmatmul.mubr.bf16.gmra.mrb[0].mxu0 %v2430
    %v2620 = vpop.f32.mrb[0].mxu0
    %v2621 = vadd.f32 %v2393, %v2620
    %v2622 = vpop.f32.mrb[0].mxu0
    %v2623 = vpop.f32.mrb[0].mxu0
    %v2624 = vadd.f32 %v2393, %v2623
    %v2625 = vpop.f32.mrb[0].mxu0
    %2626 = vmatprep.mubr.bf16.mxu0 0
    %2627 = vmatmul.mubr.bf16.gmra.mrb[0].mxu0 %v2433
    %v2628 = vpop.f32.mrb[0].mxu0
    %v2629 = vadd.f32 %v2393, %v2628
    %v2630 = vpop.f32.mrb[0].mxu0
    %v2631 = vpop.f32.mrb[0].mxu0
    %v2632 = vadd.f32 %v2393, %v2631
    %v2633 = vpop.f32.mrb[0].mxu0
    %2634 = vmatprep.mubr.bf16.mxu0 0
    %2635 = vmatmul.mubr.bf16.gmra.mrb[0].mxu0 %v2436
    %v2636 = vpop.f32.mrb[0].mxu0
    %v2637 = vadd.f32 %v2393, %v2636
    %v2638 = vpop.f32.mrb[0].mxu0
    %v2639 = vpop.f32.mrb[0].mxu0
    %v2640 = vadd.f32 %v2393, %v2639
    %v2641 = vpop.f32.mrb[0].mxu0
    %2642 = vmatprep.mubr.bf16.mxu0 0
    %2643 = vmatmul.mubr.bf16.gmra.mrb[0].mxu0 %v2439
    %v2644 = vpop.f32.mrb[0].mxu0
    %v2645 = vadd.f32 %v2393, %v2644
    %v2646 = vpop.f32.mrb[0].mxu0
    %v2647 = vpop.f32.mrb[0].mxu0
    %v2648 = vadd.f32 %v2393, %v2647
    %v2649 = vpop.f32.mrb[0].mxu0
    %2650 = vmatprep.mubr.bf16.mxu0 0
    %2651 = vmatmul.mubr.bf16.gmra.mrb[0].mxu0 %v2442
    %v2652 = vpop.f32.mrb[0].mxu0
    %v2653 = vadd.f32 %v2393, %v2652
    %v2654 = vpop.f32.mrb[0].mxu0
    %v2655 = vpop.f32.mrb[0].mxu0
    %v2656 = vadd.f32 %v2393, %v2655
    %v2657 = vpop.f32.mrb[0].mxu0
    %2658 = vmatprep.mubr.bf16.mxu0 0
    %2659 = vmatmul.mubr.bf16.gmra.mrb[0].mxu0 %v2445
    %v2660 = vpop.f32.mrb[0].mxu0
    %v2661 = vadd.f32 %v2393, %v2660
    %v2662 = vpop.f32.mrb[0].mxu0
    %v2663 = vpop.f32.mrb[0].mxu0
    %v2664 = vadd.f32 %v2393, %v2663
    %v2665 = vpop.f32.mrb[0].mxu0
    %2666 = vmatprep.mubr.bf16.mxu0 0
    %2667 = vmatmul.mubr.bf16.gmra.mrb[0].mxu0 %v2448
    %v2668 = vpop.f32.mrb[0].mxu0
    %v2669 = vadd.f32 %v2393, %v2668
    %v2670 = vpop.f32.mrb[0].mxu0
    %v2671 = vpop.f32.mrb[0].mxu0
    %v2672 = vadd.f32 %v2393, %v2671
    %v2673 = vpop.f32.mrb[0].mxu0
    %2674 = vmatprep.mubr.bf16.mxu0 0
    %2675 = vmatmul.mubr.bf16.gmra.mrb[0].mxu0 %v2451
    %v2676 = vpop.f32.mrb[0].mxu0
    %v2677 = vadd.f32 %v2393, %v2676
    %v2678 = vpop.f32.mrb[0].mxu0
    %v2679 = vpop.f32.mrb[0].mxu0
    %v2680 = vadd.f32 %v2393, %v2679
    %v2681 = vpop.f32.mrb[0].mxu0
    %2682 = vmatprep.mubr.bf16.mxu0 0
    %2683 = vmatmul.mubr.bf16.gmra.mrb[0].mxu0 %v2454
    %v2684 = vpop.f32.mrb[0].mxu0
    %v2685 = vadd.f32 %v2393, %v2684
    %v2686 = vpop.f32.mrb[0].mxu0
    %v2687 = vpop.f32.mrb[0].mxu0
    %v2688 = vadd.f32 %v2393, %v2687
    %v2689 = vpop.f32.mrb[0].mxu0
    %2690 = vmatprep.mubr.bf16.mxu0 0
    %2691 = vmatmul.mubr.bf16.gmra.mrb[0].mxu0 %v2457
    %v2692 = vpop.f32.mrb[0].mxu0
    %v2693 = vadd.f32 %v2393, %v2692
    %v2694 = vpop.f32.mrb[0].mxu0
    %v2695 = vpop.f32.mrb[0].mxu0
    %v2696 = vadd.f32 %v2393, %v2695
    %v2697 = vpop.f32.mrb[0].mxu0
    %2698 = vmatprep.mubr.bf16.mxu0 0
    %2699 = vmatmul.mubr.bf16.gmra.mrb[0].mxu0 %v2460
    %v2700 = vpop.f32.mrb[0].mxu0
    %v2701 = vadd.f32 %v2393, %v2700
    %v2702 = vpop.f32.mrb[0].mxu0
    %v2703 = vpop.f32.mrb[0].mxu0
    %v2704 = vadd.f32 %v2393, %v2703
    %v2705 = vpop.f32.mrb[0].mxu0
    %2706 = vmatprep.mubr.bf16.mxu0 0
    %2707 = vmatmul.mubr.bf16.gmra.mrb[0].mxu0 %v2463
    %v2708 = vpop.f32.mrb[0].mxu0
    %v2709 = vadd.f32 %v2393, %v2708
    %v2710 = vpop.f32.mrb[0].mxu0
    %v2711 = vpop.f32.mrb[0].mxu0
    %v2712 = vadd.f32 %v2393, %v2711
    %v2713 = vpop.f32.mrb[0].mxu0
    %2714 = vmatprep.mubr.bf16.mxu0 0
    %2715 = vmatmul.mubr.bf16.gmra.mrb[0].mxu0 %v2466
    %v2716 = vpop.f32.mrb[0].mxu0
    %v2717 = vadd.f32 %v2393, %v2716
    %v2718 = vpop.f32.mrb[0].mxu0
    %v2719 = vpop.f32.mrb[0].mxu0
    %v2720 = vadd.f32 %v2393, %v2719
    %v2721 = vpop.f32.mrb[0].mxu0
    %2722 = vmatprep.mubr.bf16.mxu0 0
    %2723 = vmatmul.mubr.bf16.gmra.mrb[0].mxu0 %v2469
    %v2724 = vpop.f32.mrb[0].mxu0
    %v2725 = vadd.f32 %v2393, %v2724
    %v2726 = vpop.f32.mrb[0].mxu0
    %v2727 = vpop.f32.mrb[0].mxu0
    %v2728 = vadd.f32 %v2393, %v2727
    %v2729 = vpop.f32.mrb[0].mxu0
    %2730 = vmatprep.mubr.bf16.mxu0 0
    %2731 = vmatmul.mubr.bf16.gmra.mrb[0].mxu0 %v2472
    %v2732 = vpop.f32.mrb[0].mxu0
    %v2733 = vadd.f32 %v2393, %v2732
    %v2734 = vpop.f32.mrb[0].mxu0
    %v2735 = vpop.f32.mrb[0].mxu0
    %v2736 = vadd.f32 %v2393, %v2735
    %v2737 = vpop.f32.mrb[0].mxu0
    %2738 = vmatprep.mubr.bf16.mxu0 0
    %2739 = vmatmul.mubr.bf16.gmra.mrb[0].mxu0 %v2475
    %v2740 = vpop.f32.mrb[0].mxu0
    %v2741 = vadd.f32 %v2393, %v2740
    %v2742 = vpop.f32.mrb[0].mxu0
    %v2743 = vpop.f32.mrb[0].mxu0
    %v2744 = vadd.f32 %v2393, %v2743
    %v2745 = vpop.f32.mrb[0].mxu0
    %2746 = vmatprep.mubr.bf16.mxu0 0
    %2747 = vmatmul.mubr.bf16.gmra.mrb[0].mxu0 %v2478
    %v2748 = vpop.f32.mrb[0].mxu0
    %v2749 = vadd.f32 %v2393, %v2748
    %v2750 = vpop.f32.mrb[0].mxu0
    %v2751 = vpop.f32.mrb[0].mxu0
    %v2752 = vadd.f32 %v2393, %v2751
    %v2753 = vpop.f32.mrb[0].mxu0
    %2754 = vmatprep.mubr.bf16.mxu0 0
    %2755 = vmatmul.mubr.bf16.gmra.mrb[0].mxu0 %v2481
    %v2756 = vpop.f32.mrb[0].mxu0
    %v2757 = vadd.f32 %v2393, %v2756
    %v2758 = vpop.f32.mrb[0].mxu0
    %v2759 = vpop.f32.mrb[0].mxu0
    %v2760 = vadd.f32 %v2393, %v2759
    %v2761 = vpop.f32.mrb[0].mxu0
    %2762 = vmatprep.mubr.bf16.mxu0 0
    %2763 = vmatmul.mubr.bf16.gmra.mrb[0].mxu0 %v2484
    %v2764 = vpop.f32.mrb[0].mxu0
    %v2765 = vadd.f32 %v2393, %v2764
    %v2766 = vpop.f32.mrb[0].mxu0
    %v2767 = vpop.f32.mrb[0].mxu0
    %v2768 = vadd.f32 %v2393, %v2767
    %v2769 = vpop.f32.mrb[0].mxu0
    %2770 = vmatprep.mubr.bf16.mxu0 0
    %2771 = vmatmul.mubr.bf16.gmra.mrb[0].mxu0 %v2487
    %v2772 = vpop.f32.mrb[0].mxu0
    %v2773 = vadd.f32 %v2393, %v2772
    %v2774 = vpop.f32.mrb[0].mxu0
    %v2775 = vpop.f32.mrb[0].mxu0
    %v2776 = vadd.f32 %v2393, %v2775
    %v2777 = vpop.f32.mrb[0].mxu0
    %2778 = vmatprep.mubr.bf16.mxu0 0
    %2779 = vmatmul.mubr.bf16.gmra.mrb[0].mxu0 %v2490
    %v2780 = vpop.f32.mrb[0].mxu0
    %v2781 = vadd.f32 %v2393, %v2780
    %v2782 = vpop.f32.mrb[0].mxu0
    %v2783 = vpop.f32.mrb[0].mxu0
    %v2784 = vadd.f32 %v2393, %v2783
    %v2785 = vpop.f32.mrb[0].mxu0
    %2786 = vdwg.mxu0
    %v2787 = vmax.f32 %v2533, 0.0
    %v2788 = vmax.f32 %v2536, 0.0
    %v2789 = vmax.f32 %v2541, 0.0
    %v2790 = vmax.f32 %v2544, 0.0
    %v2791 = vmax.f32 %v2549, 0.0
    %v2792 = vmax.f32 %v2552, 0.0
    %v2793 = vmax.f32 %v2557, 0.0
    %v2794 = vmax.f32 %v2560, 0.0
    %v2795 = vmax.f32 %v2565, 0.0
    %v2796 = vmax.f32 %v2568, 0.0
    %v2797 = vmax.f32 %v2573, 0.0
    %v2798 = vmax.f32 %v2576, 0.0
    %v2799 = vmax.f32 %v2581, 0.0
    %v2800 = vmax.f32 %v2584, 0.0
    %v2801 = vmax.f32 %v2589, 0.0
    %v2802 = vmax.f32 %v2592, 0.0
    %v2803 = vmax.f32 %v2597, 0.0
    %v2804 = vmax.f32 %v2600, 0.0
    %v2805 = vmax.f32 %v2605, 0.0
    %v2806 = vmax.f32 %v2608, 0.0
    %v2807 = vmax.f32 %v2613, 0.0
    %v2808 = vmax.f32 %v2616, 0.0
    %v2809 = vmax.f32 %v2621, 0.0
    %v2810 = vmax.f32 %v2624, 0.0
    %v2811 = vmax.f32 %v2629, 0.0
    %v2812 = vmax.f32 %v2632, 0.0
    %v2813 = vmax.f32 %v2637, 0.0
    %v2814 = vmax.f32 %v2640, 0.0
    %v2815 = vmax.f32 %v2645, 0.0
    %v2816 = vmax.f32 %v2648, 0.0
    %v2817 = vmax.f32 %v2653, 0.0
    %v2818 = vmax.f32 %v2656, 0.0
    %v2819 = vmax.f32 %v2661, 0.0
    %v2820 = vmax.f32 %v2664, 0.0
    %v2821 = vmax.f32 %v2669, 0.0
    %v2822 = vmax.f32 %v2672, 0.0
    %v2823 = vmax.f32 %v2677, 0.0
    %v2824 = vmax.f32 %v2680, 0.0
    %v2825 = vmax.f32 %v2685, 0.0
    %v2826 = vmax.f32 %v2688, 0.0
    %v2827 = vmax.f32 %v2693, 0.0
    %v2828 = vmax.f32 %v2696, 0.0
    %v2829 = vmax.f32 %v2701, 0.0
    %v2830 = vmax.f32 %v2704, 0.0
    %v2831 = vmax.f32 %v2709, 0.0
    %v2832 = vmax.f32 %v2712, 0.0
    %v2833 = vmax.f32 %v2717, 0.0
    %v2834 = vmax.f32 %v2720, 0.0
    %v2835 = vmax.f32 %v2725, 0.0
    %v2836 = vmax.f32 %v2728, 0.0
    %v2837 = vmax.f32 %v2733, 0.0
    %v2838 = vmax.f32 %v2736, 0.0
    %v2839 = vmax.f32 %v2741, 0.0
    %v2840 = vmax.f32 %v2744, 0.0
    %v2841 = vmax.f32 %v2749, 0.0
    %v2842 = vmax.f32 %v2752, 0.0
    %v2843 = vmax.f32 %v2757, 0.0
    %v2844 = vmax.f32 %v2760, 0.0
    %v2845 = vmax.f32 %v2765, 0.0
    %v2846 = vmax.f32 %v2768, 0.0
    %v2847 = vmax.f32 %v2773, 0.0
    %v2848 = vmax.f32 %v2776, 0.0
    %v2849 = vmax.f32 %v2781, 0.0
    %v2850 = vmax.f32 %v2784, 0.0
    %vm2851 = vcmask 523264
    %2852 = vst.msk [vmem:[%s13] sm:$0xff] %vm2851, %v2787
    %2853 = vst.msk [vmem:[%s13 + $0x8] sm:$0xff] %vm2851, %v2788
    %2854 = vst.msk [vmem:[%s13 + $0x10] sm:$0xff] %vm2851, %v2789
    %2855 = vst.msk [vmem:[%s13 + $0x18] sm:$0xff] %vm2851, %v2790
    %2856 = vst.msk [vmem:[%s13 + $0x20] sm:$0xff] %vm2851, %v2791
    %2857 = vst.msk [vmem:[%s13 + $0x28] sm:$0xff] %vm2851, %v2792
    %2858 = vst.msk [vmem:[%s13 + $0x30] sm:$0xff] %vm2851, %v2793
    %2859 = vst.msk [vmem:[%s13 + $0x38] sm:$0xff] %vm2851, %v2794
    %2860 = vst.msk [vmem:[%s13 + $0x40] sm:$0xff] %vm2851, %v2795
    %2861 = vst.msk [vmem:[%s13 + $0x48] sm:$0xff] %vm2851, %v2796
    %2862 = vst.msk [vmem:[%s13 + $0x50] sm:$0xff] %vm2851, %v2797
    %2863 = vst.msk [vmem:[%s13 + $0x58] sm:$0xff] %vm2851, %v2798
    %2864 = vst.msk [vmem:[%s13 + $0x60] sm:$0xff] %vm2851, %v2799
    %2865 = vst.msk [vmem:[%s13 + $0x68] sm:$0xff] %vm2851, %v2800
    %2866 = vst.msk [vmem:[%s13 + $0x70] sm:$0xff] %vm2851, %v2801
    %2867 = vst.msk [vmem:[%s13 + $0x78] sm:$0xff] %vm2851, %v2802
    %2868 = vst.msk [vmem:[%s13 + $0x80] sm:$0xff] %vm2851, %v2803
    %2869 = vst.msk [vmem:[%s13 + $0x88] sm:$0xff] %vm2851, %v2804
    %2870 = vst.msk [vmem:[%s13 + $0x90] sm:$0xff] %vm2851, %v2805
    %2871 = vst.msk [vmem:[%s13 + $0x98] sm:$0xff] %vm2851, %v2806
    %2872 = vst.msk [vmem:[%s13 + $0xa0] sm:$0xff] %vm2851, %v2807
    %2873 = vst.msk [vmem:[%s13 + $0xa8] sm:$0xff] %vm2851, %v2808
    %2874 = vst.msk [vmem:[%s13 + $0xb0] sm:$0xff] %vm2851, %v2809
    %2875 = vst.msk [vmem:[%s13 + $0xb8] sm:$0xff] %vm2851, %v2810
    %2876 = vst.msk [vmem:[%s13 + $0xc0] sm:$0xff] %vm2851, %v2811
    %2877 = vst.msk [vmem:[%s13 + $0xc8] sm:$0xff] %vm2851, %v2812
    %2878 = vst.msk [vmem:[%s13 + $0xd0] sm:$0xff] %vm2851, %v2813
    %2879 = vst.msk [vmem:[%s13 + $0xd8] sm:$0xff] %vm2851, %v2814
    %2880 = vst.msk [vmem:[%s13 + $0xe0] sm:$0xff] %vm2851, %v2815
    %2881 = vst.msk [vmem:[%s13 + $0xe8] sm:$0xff] %vm2851, %v2816
    %2882 = vst.msk [vmem:[%s13 + $0xf0] sm:$0xff] %vm2851, %v2817
    %2883 = vst.msk [vmem:[%s13 + $0xf8] sm:$0xff] %vm2851, %v2818
    %2884 = vst.msk [vmem:[%s13 + $0x100] sm:$0xff] %vm2851, %v2819
    %2885 = vst.msk [vmem:[%s13 + $0x108] sm:$0xff] %vm2851, %v2820
    %2886 = vst.msk [vmem:[%s13 + $0x110] sm:$0xff] %vm2851, %v2821
    %2887 = vst.msk [vmem:[%s13 + $0x118] sm:$0xff] %vm2851, %v2822
    %2888 = vst.msk [vmem:[%s13 + $0x120] sm:$0xff] %vm2851, %v2823
    %2889 = vst.msk [vmem:[%s13 + $0x128] sm:$0xff] %vm2851, %v2824
    %2890 = vst.msk [vmem:[%s13 + $0x130] sm:$0xff] %vm2851, %v2825
    %2891 = vst.msk [vmem:[%s13 + $0x138] sm:$0xff] %vm2851, %v2826
    %2892 = vst.msk [vmem:[%s13 + $0x140] sm:$0xff] %vm2851, %v2827
    %2893 = vst.msk [vmem:[%s13 + $0x148] sm:$0xff] %vm2851, %v2828
    %2894 = vst.msk [vmem:[%s13 + $0x150] sm:$0xff] %vm2851, %v2829
    %2895 = vst.msk [vmem:[%s13 + $0x158] sm:$0xff] %vm2851, %v2830
    %2896 = vst.msk [vmem:[%s13 + $0x160] sm:$0xff] %vm2851, %v2831
    %2897 = vst.msk [vmem:[%s13 + $0x168] sm:$0xff] %vm2851, %v2832
    %2898 = vst.msk [vmem:[%s13 + $0x170] sm:$0xff] %vm2851, %v2833
    %2899 = vst.msk [vmem:[%s13 + $0x178] sm:$0xff] %vm2851, %v2834
    %2900 = vst.msk [vmem:[%s13 + $0x180] sm:$0xff] %vm2851, %v2835
    %2901 = vst.msk [vmem:[%s13 + $0x188] sm:$0xff] %vm2851, %v2836
    %2902 = vst.msk [vmem:[%s13 + $0x190] sm:$0xff] %vm2851, %v2837
    %2903 = vst.msk [vmem:[%s13 + $0x198] sm:$0xff] %vm2851, %v2838
    %2904 = vst.msk [vmem:[%s13 + $0x1a0] sm:$0xff] %vm2851, %v2839
    %2905 = vst.msk [vmem:[%s13 + $0x1a8] sm:$0xff] %vm2851, %v2840
    %2906 = vst.msk [vmem:[%s13 + $0x1b0] sm:$0xff] %vm2851, %v2841
    %2907 = vst.msk [vmem:[%s13 + $0x1b8] sm:$0xff] %vm2851, %v2842
    %2908 = vst.msk [vmem:[%s13 + $0x1c0] sm:$0xff] %vm2851, %v2843
    %2909 = vst.msk [vmem:[%s13 + $0x1c8] sm:$0xff] %vm2851, %v2844
    %2910 = vst.msk [vmem:[%s13 + $0x1d0] sm:$0xff] %vm2851, %v2845
    %2911 = vst.msk [vmem:[%s13 + $0x1d8] sm:$0xff] %vm2851, %v2846
    %2912 = vst.msk [vmem:[%s13 + $0x1e0] sm:$0xff] %vm2851, %v2847
    %2913 = vst.msk [vmem:[%s13 + $0x1e8] sm:$0xff] %vm2851, %v2848
    %2914 = vst.msk [vmem:[%s13 + $0x1f0] sm:$0xff] %vm2851, %v2849
    %2915 = vst.msk [vmem:[%s13 + $0x1f8] sm:$0xff] %vm2851, %v2850
    %v2916 = vpack.c.bf16 %v2788, %v2787
    %v2917 = vpack.c.bf16 %v2790, %v2789
    %v2918 = vpack.c.bf16 %v2792, %v2791
    %v2919 = vpack.c.bf16 %v2794, %v2793
    %v2920 = vpack.c.bf16 %v2796, %v2795
    %v2921 = vpack.c.bf16 %v2798, %v2797
    %v2922 = vpack.c.bf16 %v2800, %v2799
    %v2923 = vpack.c.bf16 %v2802, %v2801
    %v2924 = vld [vmem:[#allocation9] sm:$0xff]
    %v2925 = vld [vmem:[#allocation9 + $0x8] sm:$0xff]
    %v2926 = vld [vmem:[#allocation9 + $0x10] sm:$0xff]
    %v2927 = vld [vmem:[#allocation9 + $0x18] sm:$0xff]
    %v2928 = vld [vmem:[#allocation9 + $0x20] sm:$0xff]
    %v2929 = vld [vmem:[#allocation9 + $0x28] sm:$0xff]
    %v2930 = vld [vmem:[#allocation9 + $0x30] sm:$0xff]
    %v2931 = vld [vmem:[#allocation9 + $0x38] sm:$0xff]
    %v2932 = vld [vmem:[#allocation10] sm:$0x3]
    %v2934 = vlaneseq
    %v2935 = vshrl.u32 %v2934, 7
    %v2936 = vsub.s32 0, %v2935
    %v2937 = vrot.slane %v2932, %v2936
    %v2938 = vlaneseq
    %v2939 = vshrl.u32 %v2938, 7
    %v2940 = vsub.s32 1, %v2939
    %v2941 = vrot.slane %v2932, %v2940
    %v2952 = vunpack.c.l.b16 %v2924
    %v2953 = vunpack.c.h.b16 %v2924
    %v2954 = vunpack.c.l.b16 %v2925
    %v2955 = vunpack.c.h.b16 %v2925
    %v2956 = vunpack.c.l.b16 %v2926
    %v2957 = vunpack.c.h.b16 %v2926
    %v2958 = vunpack.c.l.b16 %v2927
    %v2959 = vunpack.c.h.b16 %v2927
    %v2960 = vunpack.c.l.b16 %v2928
    %v2961 = vunpack.c.h.b16 %v2928
    %v2962 = vunpack.c.l.b16 %v2929
    %v2963 = vunpack.c.h.b16 %v2929
    %v2964 = vunpack.c.l.b16 %v2930
    %v2965 = vunpack.c.h.b16 %v2930
    %v2966 = vunpack.c.l.b16 %v2931
    %v2967 = vunpack.c.h.b16 %v2931
    %v2968 = vpack.c.b16 %v2954, %v2952
    %v2969 = vpack.c.b16 %v2955, %v2953
    %v2970 = vpack.c.b16 %v2958, %v2956
    %v2971 = vpack.c.b16 %v2959, %v2957
    %v2972 = vpack.c.b16 %v2962, %v2960
    %v2973 = vpack.c.b16 %v2963, %v2961
    %v2974 = vpack.c.b16 %v2966, %v2964
    %v2975 = vpack.c.b16 %v2967, %v2965
    %v2985 = vsel %vm2851, %v2916, 0
    %v2988 = vsel %vm2851, %v2917, 0
    %v2991 = vsel %vm2851, %v2918, 0
    %v2994 = vsel %vm2851, %v2919, 0
    %v2997 = vsel %vm2851, %v2920, 0
    %v3000 = vsel %vm2851, %v2921, 0
    %v3003 = vsel %vm2851, %v2922, 0
    %v3006 = vsel %vm2851, %v2923, 0
    %3008 = vmatprep.subr.bf16.mxu0 %v2969
    %3009 = vmatpush1.bf16.msra.mxu0 %v2968
    %3010 = vmatprep.subr.bf16.mxu0 %v2971
    %3011 = vmatpush1.bf16.msra.mxu0 %v2970
    %3012 = vmatprep.subr.bf16.mxu0 %v2973
    %3013 = vmatpush1.bf16.msra.mxu0 %v2972
    %3014 = vmatprep.subr.bf16.mxu0 %v2975
    %3015 = vmatpush1.bf16.msra.mxu0 %v2974
    %3016 = vmatprep.subr.bf16.mxu0 0
    %3017 = vmatpush1.bf16.msra.mxu0 0
    %3018 = vmatprep.subr.bf16.mxu0 0
    %3019 = vmatpush1.bf16.msra.mxu0 0
    %3020 = vmatprep.subr.bf16.mxu0 0
    %3021 = vmatpush1.bf16.msra.mxu0 0
    %3022 = vmatprep.subr.bf16.mxu0 0
    %3023 = vmatpush1.bf16.msra.mxu0 0
    %3024 = vmatprep.subr.bf16.mxu0 0
    %3025 = vmatpush1.bf16.msra.mxu0 0
    %3026 = vmatprep.subr.bf16.mxu0 0
    %3027 = vmatpush1.bf16.msra.mxu0 0
    %3028 = vmatprep.subr.bf16.mxu0 0
    %3029 = vmatpush1.bf16.msra.mxu0 0
    %3030 = vmatprep.subr.bf16.mxu0 0
    %3031 = vmatpush1.bf16.msra.mxu0 0
    %3032 = vmatprep.subr.bf16.mxu0 0
    %3033 = vmatpush1.bf16.msra.mxu0 0
    %3034 = vmatprep.subr.bf16.mxu0 0
    %3035 = vmatpush1.bf16.msra.mxu0 0
    %3036 = vmatprep.subr.bf16.mxu0 0
    %3037 = vmatpush1.bf16.msra.mxu0 0
    %3038 = vmatprep.subr.bf16.mxu0 0
    %3039 = vmatpush1.bf16.msra.mxu0 0
    %3040 = vmatprep.mubr.bf16.mxu0 0
    %3041 = vmatmul.mubr.bf16.gmra.mrb[0].mxu0 %v2985
    %v3042 = vpop.f32.mrb[0].mxu0
    %v3043 = vadd.f32 %v2937, %v3042
    %v3044 = vpop.f32.mrb[0].mxu0
    %v3045 = vadd.f32 %v2941, %v3044
    %v3046 = vpop.f32.mrb[0].mxu0
    %v3047 = vadd.f32 %v2937, %v3046
    %v3048 = vpop.f32.mrb[0].mxu0
    %v3049 = vadd.f32 %v2941, %v3048
    %3050 = vmatprep.mubr.bf16.mxu0 0
    %3051 = vmatmul.mubr.bf16.gmra.mrb[0].mxu0 %v2988
    %v3052 = vpop.f32.mrb[0].mxu0
    %v3053 = vadd.f32 %v2937, %v3052
    %v3054 = vpop.f32.mrb[0].mxu0
    %v3055 = vadd.f32 %v2941, %v3054
    %v3056 = vpop.f32.mrb[0].mxu0
    %v3057 = vadd.f32 %v2937, %v3056
    %v3058 = vpop.f32.mrb[0].mxu0
    %v3059 = vadd.f32 %v2941, %v3058
    %3060 = vmatprep.mubr.bf16.mxu0 0
    %3061 = vmatmul.mubr.bf16.gmra.mrb[0].mxu0 %v2991
    %v3062 = vpop.f32.mrb[0].mxu0
    %v3063 = vadd.f32 %v2937, %v3062
    %v3064 = vpop.f32.mrb[0].mxu0
    %v3065 = vadd.f32 %v2941, %v3064
    %v3066 = vpop.f32.mrb[0].mxu0
    %v3067 = vadd.f32 %v2937, %v3066
    %v3068 = vpop.f32.mrb[0].mxu0
    %v3069 = vadd.f32 %v2941, %v3068
    %3070 = vmatprep.mubr.bf16.mxu0 0
    %3071 = vmatmul.mubr.bf16.gmra.mrb[0].mxu0 %v2994
    %v3072 = vpop.f32.mrb[0].mxu0
    %v3073 = vadd.f32 %v2937, %v3072
    %v3074 = vpop.f32.mrb[0].mxu0
    %v3075 = vadd.f32 %v2941, %v3074
    %v3076 = vpop.f32.mrb[0].mxu0
    %v3077 = vadd.f32 %v2937, %v3076
    %v3078 = vpop.f32.mrb[0].mxu0
    %v3079 = vadd.f32 %v2941, %v3078
    %3080 = vmatprep.mubr.bf16.mxu0 0
    %3081 = vmatmul.mubr.bf16.gmra.mrb[0].mxu0 %v2997
    %v3082 = vpop.f32.mrb[0].mxu0
    %v3083 = vadd.f32 %v2937, %v3082
    %v3084 = vpop.f32.mrb[0].mxu0
    %v3085 = vadd.f32 %v2941, %v3084
    %v3086 = vpop.f32.mrb[0].mxu0
    %v3087 = vadd.f32 %v2937, %v3086
    %v3088 = vpop.f32.mrb[0].mxu0
    %v3089 = vadd.f32 %v2941, %v3088
    %3090 = vmatprep.mubr.bf16.mxu0 0
    %3091 = vmatmul.mubr.bf16.gmra.mrb[0].mxu0 %v3000
    %v3092 = vpop.f32.mrb[0].mxu0
    %v3093 = vadd.f32 %v2937, %v3092
    %v3094 = vpop.f32.mrb[0].mxu0
    %v3095 = vadd.f32 %v2941, %v3094
    %v3096 = vpop.f32.mrb[0].mxu0
    %v3097 = vadd.f32 %v2937, %v3096
    %v3098 = vpop.f32.mrb[0].mxu0
    %v3099 = vadd.f32 %v2941, %v3098
    %3100 = vmatprep.mubr.bf16.mxu0 0
    %3101 = vmatmul.mubr.bf16.gmra.mrb[0].mxu0 %v3003
    %v3102 = vpop.f32.mrb[0].mxu0
    %v3103 = vadd.f32 %v2937, %v3102
    %v3104 = vpop.f32.mrb[0].mxu0
    %v3105 = vadd.f32 %v2941, %v3104
    %v3106 = vpop.f32.mrb[0].mxu0
    %v3107 = vadd.f32 %v2937, %v3106
    %v3108 = vpop.f32.mrb[0].mxu0
    %v3109 = vadd.f32 %v2941, %v3108
    %3110 = vmatprep.mubr.bf16.mxu0 0
    %3111 = vmatmul.mubr.bf16.gmra.mrb[0].mxu0 %v3006
    %v3112 = vpop.f32.mrb[0].mxu0
    %v3113 = vadd.f32 %v2937, %v3112
    %v3114 = vpop.f32.mrb[0].mxu0
    %v3115 = vadd.f32 %v2941, %v3114
    %v3116 = vpop.f32.mrb[0].mxu0
    %v3117 = vadd.f32 %v2937, %v3116
    %v3118 = vpop.f32.mrb[0].mxu0
    %v3119 = vadd.f32 %v2941, %v3118
    %3120 = vdwg.mxu0
    %v3121 = vmax.f32 %v3043, 0.0
    %v3122 = vmax.f32 %v3045, 0.0
    %v3123 = vmax.f32 %v3047, 0.0
    %v3124 = vmax.f32 %v3049, 0.0
    %v3125 = vmax.f32 %v3053, 0.0
    %v3126 = vmax.f32 %v3055, 0.0
    %v3127 = vmax.f32 %v3057, 0.0
    %v3128 = vmax.f32 %v3059, 0.0
    %v3129 = vmax.f32 %v3063, 0.0
    %v3130 = vmax.f32 %v3065, 0.0
    %v3131 = vmax.f32 %v3067, 0.0
    %v3132 = vmax.f32 %v3069, 0.0
    %v3133 = vmax.f32 %v3073, 0.0
    %v3134 = vmax.f32 %v3075, 0.0
    %v3135 = vmax.f32 %v3077, 0.0
    %v3136 = vmax.f32 %v3079, 0.0
    %v3137 = vmax.f32 %v3083, 0.0
    %v3138 = vmax.f32 %v3085, 0.0
    %v3139 = vmax.f32 %v3087, 0.0
    %v3140 = vmax.f32 %v3089, 0.0
    %v3141 = vmax.f32 %v3093, 0.0
    %v3142 = vmax.f32 %v3095, 0.0
    %v3143 = vmax.f32 %v3097, 0.0
    %v3144 = vmax.f32 %v3099, 0.0
    %v3145 = vmax.f32 %v3103, 0.0
    %v3146 = vmax.f32 %v3105, 0.0
    %v3147 = vmax.f32 %v3107, 0.0
    %v3148 = vmax.f32 %v3109, 0.0
    %v3149 = vmax.f32 %v3113, 0.0
    %v3150 = vmax.f32 %v3115, 0.0
    %v3151 = vmax.f32 %v3117, 0.0
    %v3152 = vmax.f32 %v3119, 0.0
    %3153 = vst [vmem:[%s14] sm:$0xff] %v3121
    %3154 = vst [vmem:[%s14 + $0x8] sm:$0xff] %v3122
    %3155 = vst [vmem:[%s14 + $0x10] sm:$0xff] %v3123
    %3156 = vst [vmem:[%s14 + $0x18] sm:$0xff] %v3124
    %3157 = vst [vmem:[%s14 + $0x20] sm:$0xff] %v3125
    %3158 = vst [vmem:[%s14 + $0x28] sm:$0xff] %v3126
    %3159 = vst [vmem:[%s14 + $0x30] sm:$0xff] %v3127
    %3160 = vst [vmem:[%s14 + $0x38] sm:$0xff] %v3128
    %3161 = vst [vmem:[%s14 + $0x40] sm:$0xff] %v3129
    %3162 = vst [vmem:[%s14 + $0x48] sm:$0xff] %v3130
    %3163 = vst [vmem:[%s14 + $0x50] sm:$0xff] %v3131
    %3164 = vst [vmem:[%s14 + $0x58] sm:$0xff] %v3132
    %3165 = vst [vmem:[%s14 + $0x60] sm:$0xff] %v3133
    %3166 = vst [vmem:[%s14 + $0x68] sm:$0xff] %v3134
    %3167 = vst [vmem:[%s14 + $0x70] sm:$0xff] %v3135
    %3168 = vst [vmem:[%s14 + $0x78] sm:$0xff] %v3136
    %3169 = vst [vmem:[%s14 + $0x80] sm:$0xff] %v3137
    %3170 = vst [vmem:[%s14 + $0x88] sm:$0xff] %v3138
    %3171 = vst [vmem:[%s14 + $0x90] sm:$0xff] %v3139
    %3172 = vst [vmem:[%s14 + $0x98] sm:$0xff] %v3140
    %3173 = vst [vmem:[%s14 + $0xa0] sm:$0xff] %v3141
    %3174 = vst [vmem:[%s14 + $0xa8] sm:$0xff] %v3142
    %3175 = vst [vmem:[%s14 + $0xb0] sm:$0xff] %v3143
    %3176 = vst [vmem:[%s14 + $0xb8] sm:$0xff] %v3144
    %3177 = vst [vmem:[%s14 + $0xc0] sm:$0xff] %v3145
    %3178 = vst [vmem:[%s14 + $0xc8] sm:$0xff] %v3146
    %3179 = vst [vmem:[%s14 + $0xd0] sm:$0xff] %v3147
    %3180 = vst [vmem:[%s14 + $0xd8] sm:$0xff] %v3148
    %3181 = vst [vmem:[%s14 + $0xe0] sm:$0xff] %v3149
    %3182 = vst [vmem:[%s14 + $0xe8] sm:$0xff] %v3150
    %3183 = vst [vmem:[%s14 + $0xf0] sm:$0xff] %v3151
    %3184 = vst [vmem:[%s14 + $0xf8] sm:$0xff] %v3152
    %v3185 = vpack.c.bf16 %v3123, %v3121
    %v3186 = vpack.c.bf16 %v3124, %v3122
    %v3187 = vpack.c.bf16 %v3127, %v3125
    %v3188 = vpack.c.bf16 %v3128, %v3126
    %v3189 = vld [vmem:[#allocation12] sm:$0xff]
    %v3190 = vld [vmem:[#allocation12 + $0x8] sm:$0xff]
    %v3191 = vld [vmem:[#allocation12 + $0x10] sm:$0xff]
    %v3192 = vld [vmem:[#allocation12 + $0x18] sm:$0xff]
    %v3193 = vld [vmem:[#allocation12 + $0x20] sm:$0xff]
    %v3194 = vld [vmem:[#allocation12 + $0x28] sm:$0xff]
    %v3195 = vld [vmem:[#allocation12 + $0x30] sm:$0xff]
    %v3196 = vld [vmem:[#allocation12 + $0x38] sm:$0xff]
    %v3197 = vld [vmem:[#allocation12 + $0x40] sm:$0xff]
    %v3198 = vld [vmem:[#allocation12 + $0x48] sm:$0xff]
    %v3199 = vld [vmem:[#allocation12 + $0x50] sm:$0xff]
    %v3200 = vld [vmem:[#allocation12 + $0x58] sm:$0xff]
    %v3201 = vld [vmem:[#allocation12 + $0x60] sm:$0xff]
    %v3202 = vld [vmem:[#allocation12 + $0x68] sm:$0xff]
    %v3203 = vld [vmem:[#allocation12 + $0x70] sm:$0xff]
    %v3204 = vld [vmem:[#allocation12 + $0x78] sm:$0xff]
    %v3205 = vld [vmem:[#allocation12 + $0x80] sm:$0xff]
    %v3206 = vld [vmem:[#allocation12 + $0x88] sm:$0xff]
    %v3207 = vld [vmem:[#allocation12 + $0x90] sm:$0xff]
    %v3208 = vld [vmem:[#allocation12 + $0x98] sm:$0xff]
    %v3209 = vld [vmem:[#allocation12 + $0xa0] sm:$0xff]
    %v3210 = vld [vmem:[#allocation12 + $0xa8] sm:$0xff]
    %v3211 = vld [vmem:[#allocation12 + $0xb0] sm:$0xff]
    %v3212 = vld [vmem:[#allocation12 + $0xb8] sm:$0xff]
    %v3213 = vld [vmem:[#allocation12 + $0xc0] sm:$0xff]
    %v3214 = vld [vmem:[#allocation12 + $0xc8] sm:$0xff]
    %v3215 = vld [vmem:[#allocation12 + $0xd0] sm:$0xff]
    %v3216 = vld [vmem:[#allocation12 + $0xd8] sm:$0xff]
    %v3217 = vld [vmem:[#allocation12 + $0xe0] sm:$0xff]
    %v3218 = vld [vmem:[#allocation12 + $0xe8] sm:$0xff]
    %v3219 = vld [vmem:[#allocation12 + $0xf0] sm:$0xff]
    %v3220 = vld [vmem:[#allocation12 + $0xf8] sm:$0xff]
    %v3221 = vld [vmem:[#allocation12 + $0x100] sm:$0xff]
    %v3222 = vld [vmem:[#allocation12 + $0x108] sm:$0xff]
    %v3223 = vld [vmem:[#allocation12 + $0x110] sm:$0xff]
    %v3224 = vld [vmem:[#allocation12 + $0x118] sm:$0xff]
    %v3225 = vld [vmem:[#allocation12 + $0x120] sm:$0xff]
    %v3226 = vld [vmem:[#allocation12 + $0x128] sm:$0xff]
    %v3227 = vld [vmem:[#allocation12 + $0x130] sm:$0xff]
    %v3228 = vld [vmem:[#allocation12 + $0x138] sm:$0xff]
    %v3229 = vld [vmem:[#allocation12 + $0x140] sm:$0xff]
    %v3230 = vld [vmem:[#allocation12 + $0x148] sm:$0xff]
    %v3231 = vld [vmem:[#allocation12 + $0x150] sm:$0xff]
    %v3232 = vld [vmem:[#allocation12 + $0x158] sm:$0xff]
    %v3233 = vld [vmem:[#allocation12 + $0x160] sm:$0xff]
    %v3234 = vld [vmem:[#allocation12 + $0x168] sm:$0xff]
    %v3235 = vld [vmem:[#allocation12 + $0x170] sm:$0xff]
    %v3236 = vld [vmem:[#allocation12 + $0x178] sm:$0xff]
    %v3237 = vld [vmem:[#allocation12 + $0x180] sm:$0xff]
    %v3238 = vld [vmem:[#allocation12 + $0x188] sm:$0xff]
    %v3239 = vld [vmem:[#allocation12 + $0x190] sm:$0xff]
    %v3240 = vld [vmem:[#allocation12 + $0x198] sm:$0xff]
    %v3241 = vld [vmem:[#allocation12 + $0x1a0] sm:$0xff]
    %v3242 = vld [vmem:[#allocation12 + $0x1a8] sm:$0xff]
    %v3243 = vld [vmem:[#allocation12 + $0x1b0] sm:$0xff]
    %v3244 = vld [vmem:[#allocation12 + $0x1b8] sm:$0xff]
    %v3245 = vld [vmem:[#allocation12 + $0x1c0] sm:$0xff]
    %v3246 = vld [vmem:[#allocation12 + $0x1c8] sm:$0xff]
    %v3247 = vld [vmem:[#allocation12 + $0x1d0] sm:$0xff]
    %v3248 = vld [vmem:[#allocation12 + $0x1d8] sm:$0xff]
    %v3249 = vld [vmem:[#allocation12 + $0x1e0] sm:$0xff]
    %v3250 = vld [vmem:[#allocation12 + $0x1e8] sm:$0xff]
    %v3251 = vld [vmem:[#allocation12 + $0x1f0] sm:$0xff]
    %v3252 = vld [vmem:[#allocation12 + $0x1f8] sm:$0xff]
    %v3253 = vld [vmem:[#allocation13] sm:$0xf]
    %v3255 = vlaneseq
    %v3256 = vshrl.u32 %v3255, 7
    %v3257 = vsub.s32 0, %v3256
    %v3258 = vrot.slane %v3253, %v3257
    %v3259 = vlaneseq
    %v3260 = vshrl.u32 %v3259, 7
    %v3261 = vsub.s32 1, %v3260
    %v3262 = vrot.slane %v3253, %v3261
    %v3263 = vlaneseq
    %v3264 = vshrl.u32 %v3263, 7
    %v3265 = vsub.s32 2, %v3264
    %v3266 = vrot.slane %v3253, %v3265
    %v3267 = vlaneseq
    %v3268 = vshrl.u32 %v3267, 7
    %v3269 = vsub.s32 3, %v3268
    %v3270 = vrot.slane %v3253, %v3269
    %v3339 = vunpack.c.l.b16 %v3189
    %v3340 = vunpack.c.h.b16 %v3189
    %v3341 = vunpack.c.l.b16 %v3190
    %v3342 = vunpack.c.h.b16 %v3190
    %v3343 = vunpack.c.l.b16 %v3191
    %v3344 = vunpack.c.h.b16 %v3191
    %v3345 = vunpack.c.l.b16 %v3192
    %v3346 = vunpack.c.h.b16 %v3192
    %v3347 = vunpack.c.l.b16 %v3193
    %v3348 = vunpack.c.h.b16 %v3193
    %v3349 = vunpack.c.l.b16 %v3194
    %v3350 = vunpack.c.h.b16 %v3194
    %v3351 = vunpack.c.l.b16 %v3195
    %v3352 = vunpack.c.h.b16 %v3195
    %v3353 = vunpack.c.l.b16 %v3196
    %v3354 = vunpack.c.h.b16 %v3196
    %v3355 = vunpack.c.l.b16 %v3197
    %v3356 = vunpack.c.h.b16 %v3197
    %v3357 = vunpack.c.l.b16 %v3198
    %v3358 = vunpack.c.h.b16 %v3198
    %v3359 = vunpack.c.l.b16 %v3199
    %v3360 = vunpack.c.h.b16 %v3199
    %v3361 = vunpack.c.l.b16 %v3200
    %v3362 = vunpack.c.h.b16 %v3200
    %v3363 = vunpack.c.l.b16 %v3201
    %v3364 = vunpack.c.h.b16 %v3201
    %v3365 = vunpack.c.l.b16 %v3202
    %v3366 = vunpack.c.h.b16 %v3202
    %v3367 = vunpack.c.l.b16 %v3203
    %v3368 = vunpack.c.h.b16 %v3203
    %v3369 = vunpack.c.l.b16 %v3204
    %v3370 = vunpack.c.h.b16 %v3204
    %v3371 = vunpack.c.l.b16 %v3205
    %v3372 = vunpack.c.h.b16 %v3205
    %v3373 = vunpack.c.l.b16 %v3206
    %v3374 = vunpack.c.h.b16 %v3206
    %v3375 = vunpack.c.l.b16 %v3207
    %v3376 = vunpack.c.h.b16 %v3207
    %v3377 = vunpack.c.l.b16 %v3208
    %v3378 = vunpack.c.h.b16 %v3208
    %v3379 = vunpack.c.l.b16 %v3209
    %v3380 = vunpack.c.h.b16 %v3209
    %v3381 = vunpack.c.l.b16 %v3210
    %v3382 = vunpack.c.h.b16 %v3210
    %v3383 = vunpack.c.l.b16 %v3211
    %v3384 = vunpack.c.h.b16 %v3211
    %v3385 = vunpack.c.l.b16 %v3212
    %v3386 = vunpack.c.h.b16 %v3212
    %v3387 = vunpack.c.l.b16 %v3213
    %v3388 = vunpack.c.h.b16 %v3213
    %v3389 = vunpack.c.l.b16 %v3214
    %v3390 = vunpack.c.h.b16 %v3214
    %v3391 = vunpack.c.l.b16 %v3215
    %v3392 = vunpack.c.h.b16 %v3215
    %v3393 = vunpack.c.l.b16 %v3216
    %v3394 = vunpack.c.h.b16 %v3216
    %v3395 = vunpack.c.l.b16 %v3217
    %v3396 = vunpack.c.h.b16 %v3217
    %v3397 = vunpack.c.l.b16 %v3218
    %v3398 = vunpack.c.h.b16 %v3218
    %v3399 = vunpack.c.l.b16 %v3219
    %v3400 = vunpack.c.h.b16 %v3219
    %v3401 = vunpack.c.l.b16 %v3220
    %v3402 = vunpack.c.h.b16 %v3220
    %v3403 = vunpack.c.l.b16 %v3221
    %v3404 = vunpack.c.h.b16 %v3221
    %v3405 = vunpack.c.l.b16 %v3222
    %v3406 = vunpack.c.h.b16 %v3222
    %v3407 = vunpack.c.l.b16 %v3223
    %v3408 = vunpack.c.h.b16 %v3223
    %v3409 = vunpack.c.l.b16 %v3224
    %v3410 = vunpack.c.h.b16 %v3224
    %v3411 = vunpack.c.l.b16 %v3225
    %v3412 = vunpack.c.h.b16 %v3225
    %v3413 = vunpack.c.l.b16 %v3226
    %v3414 = vunpack.c.h.b16 %v3226
    %v3415 = vunpack.c.l.b16 %v3227
    %v3416 = vunpack.c.h.b16 %v3227
    %v3417 = vunpack.c.l.b16 %v3228
    %v3418 = vunpack.c.h.b16 %v3228
    %v3419 = vunpack.c.l.b16 %v3229
    %v3420 = vunpack.c.h.b16 %v3229
    %v3421 = vunpack.c.l.b16 %v3230
    %v3422 = vunpack.c.h.b16 %v3230
    %v3423 = vunpack.c.l.b16 %v3231
    %v3424 = vunpack.c.h.b16 %v3231
    %v3425 = vunpack.c.l.b16 %v3232
    %v3426 = vunpack.c.h.b16 %v3232
    %v3427 = vunpack.c.l.b16 %v3233
    %v3428 = vunpack.c.h.b16 %v3233
    %v3429 = vunpack.c.l.b16 %v3234
    %v3430 = vunpack.c.h.b16 %v3234
    %v3431 = vunpack.c.l.b16 %v3235
    %v3432 = vunpack.c.h.b16 %v3235
    %v3433 = vunpack.c.l.b16 %v3236
    %v3434 = vunpack.c.h.b16 %v3236
    %v3435 = vunpack.c.l.b16 %v3237
    %v3436 = vunpack.c.h.b16 %v3237
    %v3437 = vunpack.c.l.b16 %v3238
    %v3438 = vunpack.c.h.b16 %v3238
    %v3439 = vunpack.c.l.b16 %v3239
    %v3440 = vunpack.c.h.b16 %v3239
    %v3441 = vunpack.c.l.b16 %v3240
    %v3442 = vunpack.c.h.b16 %v3240
    %v3443 = vunpack.c.l.b16 %v3241
    %v3444 = vunpack.c.h.b16 %v3241
    %v3445 = vunpack.c.l.b16 %v3242
    %v3446 = vunpack.c.h.b16 %v3242
    %v3447 = vunpack.c.l.b16 %v3243
    %v3448 = vunpack.c.h.b16 %v3243
    %v3449 = vunpack.c.l.b16 %v3244
    %v3450 = vunpack.c.h.b16 %v3244
    %v3451 = vunpack.c.l.b16 %v3245
    %v3452 = vunpack.c.h.b16 %v3245
    %v3453 = vunpack.c.l.b16 %v3246
    %v3454 = vunpack.c.h.b16 %v3246
    %v3455 = vunpack.c.l.b16 %v3247
    %v3456 = vunpack.c.h.b16 %v3247
    %v3457 = vunpack.c.l.b16 %v3248
    %v3458 = vunpack.c.h.b16 %v3248
    %v3459 = vunpack.c.l.b16 %v3249
    %v3460 = vunpack.c.h.b16 %v3249
    %v3461 = vunpack.c.l.b16 %v3250
    %v3462 = vunpack.c.h.b16 %v3250
    %v3463 = vunpack.c.l.b16 %v3251
    %v3464 = vunpack.c.h.b16 %v3251
    %v3465 = vunpack.c.l.b16 %v3252
    %v3466 = vunpack.c.h.b16 %v3252
    %v3467 = vpack.c.b16 %v3343, %v3339
    %v3468 = vpack.c.b16 %v3344, %v3340
    %v3469 = vpack.c.b16 %v3345, %v3341
    %v3470 = vpack.c.b16 %v3346, %v3342
    %v3471 = vpack.c.b16 %v3351, %v3347
    %v3472 = vpack.c.b16 %v3352, %v3348
    %v3473 = vpack.c.b16 %v3353, %v3349
    %v3474 = vpack.c.b16 %v3354, %v3350
    %v3475 = vpack.c.b16 %v3359, %v3355
    %v3476 = vpack.c.b16 %v3360, %v3356
    %v3477 = vpack.c.b16 %v3361, %v3357
    %v3478 = vpack.c.b16 %v3362, %v3358
    %v3479 = vpack.c.b16 %v3367, %v3363
    %v3480 = vpack.c.b16 %v3368, %v3364
    %v3481 = vpack.c.b16 %v3369, %v3365
    %v3482 = vpack.c.b16 %v3370, %v3366
    %v3483 = vpack.c.b16 %v3375, %v3371
    %v3484 = vpack.c.b16 %v3376, %v3372
    %v3485 = vpack.c.b16 %v3377, %v3373
    %v3486 = vpack.c.b16 %v3378, %v3374
    %v3487 = vpack.c.b16 %v3383, %v3379
    %v3488 = vpack.c.b16 %v3384, %v3380
    %v3489 = vpack.c.b16 %v3385, %v3381
    %v3490 = vpack.c.b16 %v3386, %v3382
    %v3491 = vpack.c.b16 %v3391, %v3387
    %v3492 = vpack.c.b16 %v3392, %v3388
    %v3493 = vpack.c.b16 %v3393, %v3389
    %v3494 = vpack.c.b16 %v3394, %v3390
    %v3495 = vpack.c.b16 %v3399, %v3395
    %v3496 = vpack.c.b16 %v3400, %v3396
    %v3497 = vpack.c.b16 %v3401, %v3397
    %v3498 = vpack.c.b16 %v3402, %v3398
    %v3499 = vpack.c.b16 %v3407, %v3403
    %v3500 = vpack.c.b16 %v3408, %v3404
    %v3501 = vpack.c.b16 %v3409, %v3405
    %v3502 = vpack.c.b16 %v3410, %v3406
    %v3503 = vpack.c.b16 %v3415, %v3411
    %v3504 = vpack.c.b16 %v3416, %v3412
    %v3505 = vpack.c.b16 %v3417, %v3413
    %v3506 = vpack.c.b16 %v3418, %v3414
    %v3507 = vpack.c.b16 %v3423, %v3419
    %v3508 = vpack.c.b16 %v3424, %v3420
    %v3509 = vpack.c.b16 %v3425, %v3421
    %v3510 = vpack.c.b16 %v3426, %v3422
    %v3511 = vpack.c.b16 %v3431, %v3427
    %v3512 = vpack.c.b16 %v3432, %v3428
    %v3513 = vpack.c.b16 %v3433, %v3429
    %v3514 = vpack.c.b16 %v3434, %v3430
    %v3515 = vpack.c.b16 %v3439, %v3435
    %v3516 = vpack.c.b16 %v3440, %v3436
    %v3517 = vpack.c.b16 %v3441, %v3437
    %v3518 = vpack.c.b16 %v3442, %v3438
    %v3519 = vpack.c.b16 %v3447, %v3443
    %v3520 = vpack.c.b16 %v3448, %v3444
    %v3521 = vpack.c.b16 %v3449, %v3445
    %v3522 = vpack.c.b16 %v3450, %v3446
    %v3523 = vpack.c.b16 %v3455, %v3451
    %v3524 = vpack.c.b16 %v3456, %v3452
    %v3525 = vpack.c.b16 %v3457, %v3453
    %v3526 = vpack.c.b16 %v3458, %v3454
    %v3527 = vpack.c.b16 %v3463, %v3459
    %v3528 = vpack.c.b16 %v3464, %v3460
    %v3529 = vpack.c.b16 %v3465, %v3461
    %v3530 = vpack.c.b16 %v3466, %v3462
    %3595 = vmatprep.subr.bf16.mxu0 %v3468
    %3596 = vmatpush1.bf16.msra.mxu0 %v3467
    %3597 = vmatprep.subr.bf16.mxu0 %v3472
    %3598 = vmatpush1.bf16.msra.mxu0 %v3471
    %3599 = vmatprep.subr.bf16.mxu0 %v3476
    %3600 = vmatpush1.bf16.msra.mxu0 %v3475
    %3601 = vmatprep.subr.bf16.mxu0 %v3480
    %3602 = vmatpush1.bf16.msra.mxu0 %v3479
    %3603 = vmatprep.subr.bf16.mxu0 %v3484
    %3604 = vmatpush1.bf16.msra.mxu0 %v3483
    %3605 = vmatprep.subr.bf16.mxu0 %v3488
    %3606 = vmatpush1.bf16.msra.mxu0 %v3487
    %3607 = vmatprep.subr.bf16.mxu0 %v3492
    %3608 = vmatpush1.bf16.msra.mxu0 %v3491
    %3609 = vmatprep.subr.bf16.mxu0 %v3496
    %3610 = vmatpush1.bf16.msra.mxu0 %v3495
    %3611 = vmatprep.subr.bf16.mxu0 %v3500
    %3612 = vmatpush1.bf16.msra.mxu0 %v3499
    %3613 = vmatprep.subr.bf16.mxu0 %v3504
    %3614 = vmatpush1.bf16.msra.mxu0 %v3503
    %3615 = vmatprep.subr.bf16.mxu0 %v3508
    %3616 = vmatpush1.bf16.msra.mxu0 %v3507
    %3617 = vmatprep.subr.bf16.mxu0 %v3512
    %3618 = vmatpush1.bf16.msra.mxu0 %v3511
    %3619 = vmatprep.subr.bf16.mxu0 %v3516
    %3620 = vmatpush1.bf16.msra.mxu0 %v3515
    %3621 = vmatprep.subr.bf16.mxu0 %v3520
    %3622 = vmatpush1.bf16.msra.mxu0 %v3519
    %3623 = vmatprep.subr.bf16.mxu0 %v3524
    %3624 = vmatpush1.bf16.msra.mxu0 %v3523
    %3625 = vmatprep.subr.bf16.mxu0 %v3528
    %3626 = vmatpush1.bf16.msra.mxu0 %v3527
    %3627 = vmatprep.mubr.bf16.mxu0 %v3186
    %3628 = vmatmul.mubr.bf16.gmra.mrb[0].mxu0 %v3185
    %v3629 = vpop.f32.mrb[0].mxu0
    %v3630 = vadd.f32 %v3258, %v3629
    %v3631 = vpop.f32.mrb[0].mxu0
    %v3632 = vadd.f32 %v3262, %v3631
    %v3633 = vpop.f32.mrb[0].mxu0
    %v3634 = vadd.f32 %v3258, %v3633
    %v3635 = vpop.f32.mrb[0].mxu0
    %v3636 = vadd.f32 %v3262, %v3635
    %3637 = vmatprep.mubr.bf16.mxu0 %v3188
    %3638 = vmatmul.mubr.bf16.gmra.mrb[0].mxu0 %v3187
    %v3639 = vpop.f32.mrb[0].mxu0
    %v3640 = vadd.f32 %v3258, %v3639
    %v3641 = vpop.f32.mrb[0].mxu0
    %v3642 = vadd.f32 %v3262, %v3641
    %v3643 = vpop.f32.mrb[0].mxu0
    %v3644 = vadd.f32 %v3258, %v3643
    %v3645 = vpop.f32.mrb[0].mxu0
    %v3646 = vadd.f32 %v3262, %v3645
    %3647 = vdwg.mxu0
    %3648 = vmatprep.subr.bf16.mxu0 %v3470
    %3649 = vmatpush1.bf16.msra.mxu0 %v3469
    %3650 = vmatprep.subr.bf16.mxu0 %v3474
    %3651 = vmatpush1.bf16.msra.mxu0 %v3473
    %3652 = vmatprep.subr.bf16.mxu0 %v3478
    %3653 = vmatpush1.bf16.msra.mxu0 %v3477
    %3654 = vmatprep.subr.bf16.mxu0 %v3482
    %3655 = vmatpush1.bf16.msra.mxu0 %v3481
    %3656 = vmatprep.subr.bf16.mxu0 %v3486
    %3657 = vmatpush1.bf16.msra.mxu0 %v3485
    %3658 = vmatprep.subr.bf16.mxu0 %v3490
    %3659 = vmatpush1.bf16.msra.mxu0 %v3489
    %3660 = vmatprep.subr.bf16.mxu0 %v3494
    %3661 = vmatpush1.bf16.msra.mxu0 %v3493
    %3662 = vmatprep.subr.bf16.mxu0 %v3498
    %3663 = vmatpush1.bf16.msra.mxu0 %v3497
    %3664 = vmatprep.subr.bf16.mxu0 %v3502
    %3665 = vmatpush1.bf16.msra.mxu0 %v3501
    %3666 = vmatprep.subr.bf16.mxu0 %v3506
    %3667 = vmatpush1.bf16.msra.mxu0 %v3505
    %3668 = vmatprep.subr.bf16.mxu0 %v3510
    %3669 = vmatpush1.bf16.msra.mxu0 %v3509
    %3670 = vmatprep.subr.bf16.mxu0 %v3514
    %3671 = vmatpush1.bf16.msra.mxu0 %v3513
    %3672 = vmatprep.subr.bf16.mxu0 %v3518
    %3673 = vmatpush1.bf16.msra.mxu0 %v3517
    %3674 = vmatprep.subr.bf16.mxu0 %v3522
    %3675 = vmatpush1.bf16.msra.mxu0 %v3521
    %3676 = vmatprep.subr.bf16.mxu0 %v3526
    %3677 = vmatpush1.bf16.msra.mxu0 %v3525
    %3678 = vmatprep.subr.bf16.mxu0 %v3530
    %3679 = vmatpush1.bf16.msra.mxu0 %v3529
    %3680 = vmatprep.mubr.bf16.mxu0 %v3186
    %3681 = vmatmul.mubr.bf16.gmra.mrb[0].mxu0 %v3185
    %v3682 = vpop.f32.mrb[0].mxu0
    %v3683 = vadd.f32 %v3266, %v3682
    %v3684 = vpop.f32.mrb[0].mxu0
    %v3685 = vadd.f32 %v3270, %v3684
    %v3686 = vpop.f32.mrb[0].mxu0
    %v3687 = vadd.f32 %v3266, %v3686
    %v3688 = vpop.f32.mrb[0].mxu0
    %v3689 = vadd.f32 %v3270, %v3688
    %3690 = vmatprep.mubr.bf16.mxu0 %v3188
    %3691 = vmatmul.mubr.bf16.gmra.mrb[0].mxu0 %v3187
    %v3692 = vpop.f32.mrb[0].mxu0
    %v3693 = vadd.f32 %v3266, %v3692
    %v3694 = vpop.f32.mrb[0].mxu0
    %v3695 = vadd.f32 %v3270, %v3694
    %v3696 = vpop.f32.mrb[0].mxu0
    %v3697 = vadd.f32 %v3266, %v3696
    %v3698 = vpop.f32.mrb[0].mxu0
    %v3699 = vadd.f32 %v3270, %v3698
    %3700 = vdwg.mxu0
    %v3701 = vmax.f32 %v3630, 0.0
    %v3702 = vmax.f32 %v3632, 0.0
    %v3703 = vmax.f32 %v3683, 0.0
    %v3704 = vmax.f32 %v3685, 0.0
    %v3705 = vmax.f32 %v3634, 0.0
    %v3706 = vmax.f32 %v3636, 0.0
    %v3707 = vmax.f32 %v3687, 0.0
    %v3708 = vmax.f32 %v3689, 0.0
    %v3709 = vmax.f32 %v3640, 0.0
    %v3710 = vmax.f32 %v3642, 0.0
    %v3711 = vmax.f32 %v3693, 0.0
    %v3712 = vmax.f32 %v3695, 0.0
    %v3713 = vmax.f32 %v3644, 0.0
    %v3714 = vmax.f32 %v3646, 0.0
    %v3715 = vmax.f32 %v3697, 0.0
    %v3716 = vmax.f32 %v3699, 0.0
    %3717 = vst [vmem:[%s15] sm:$0xff] %v3701
    %3718 = vst [vmem:[%s15 + $0x8] sm:$0xff] %v3702
    %3719 = vst [vmem:[%s15 + $0x10] sm:$0xff] %v3703
    %3720 = vst [vmem:[%s15 + $0x18] sm:$0xff] %v3704
    %3721 = vst [vmem:[%s15 + $0x20] sm:$0xff] %v3705
    %3722 = vst [vmem:[%s15 + $0x28] sm:$0xff] %v3706
    %3723 = vst [vmem:[%s15 + $0x30] sm:$0xff] %v3707
    %3724 = vst [vmem:[%s15 + $0x38] sm:$0xff] %v3708
    %3725 = vst [vmem:[%s15 + $0x40] sm:$0xff] %v3709
    %3726 = vst [vmem:[%s15 + $0x48] sm:$0xff] %v3710
    %3727 = vst [vmem:[%s15 + $0x50] sm:$0xff] %v3711
    %3728 = vst [vmem:[%s15 + $0x58] sm:$0xff] %v3712
    %3729 = vst [vmem:[%s15 + $0x60] sm:$0xff] %v3713
    %3730 = vst [vmem:[%s15 + $0x68] sm:$0xff] %v3714
    %3731 = vst [vmem:[%s15 + $0x70] sm:$0xff] %v3715
    %3732 = vst [vmem:[%s15 + $0x78] sm:$0xff] %v3716
    %v3733 = vpack.c.bf16 %v3705, %v3701
    %v3734 = vpack.c.bf16 %v3706, %v3702
    %v3735 = vpack.c.bf16 %v3707, %v3703
    %v3736 = vpack.c.bf16 %v3708, %v3704
    %v3737 = vld [vmem:[#allocation15] sm:$0xff]
    %v3738 = vld [vmem:[#allocation15 + $0x8] sm:$0xff]
    %v3739 = vld [vmem:[#allocation15 + $0x10] sm:$0xff]
    %v3740 = vld [vmem:[#allocation15 + $0x18] sm:$0xff]
    %v3741 = vld [vmem:[#allocation15 + $0x20] sm:$0xff]
    %v3742 = vld [vmem:[#allocation15 + $0x28] sm:$0xff]
    %v3743 = vld [vmem:[#allocation15 + $0x30] sm:$0xff]
    %v3744 = vld [vmem:[#allocation15 + $0x38] sm:$0xff]
    %v3745 = vld [vmem:[#allocation15 + $0x40] sm:$0xff]
    %v3746 = vld [vmem:[#allocation15 + $0x48] sm:$0xff]
    %v3747 = vld [vmem:[#allocation15 + $0x50] sm:$0xff]
    %v3748 = vld [vmem:[#allocation15 + $0x58] sm:$0xff]
    %v3749 = vld [vmem:[#allocation15 + $0x60] sm:$0xff]
    %v3750 = vld [vmem:[#allocation15 + $0x68] sm:$0xff]
    %v3751 = vld [vmem:[#allocation15 + $0x70] sm:$0xff]
    %v3752 = vld [vmem:[#allocation15 + $0x78] sm:$0xff]
    %v3753 = vld [vmem:[#allocation15 + $0x80] sm:$0xff]
    %v3754 = vld [vmem:[#allocation15 + $0x88] sm:$0xff]
    %v3755 = vld [vmem:[#allocation15 + $0x90] sm:$0xff]
    %v3756 = vld [vmem:[#allocation15 + $0x98] sm:$0xff]
    %v3757 = vld [vmem:[#allocation15 + $0xa0] sm:$0xff]
    %v3758 = vld [vmem:[#allocation15 + $0xa8] sm:$0xff]
    %v3759 = vld [vmem:[#allocation15 + $0xb0] sm:$0xff]
    %v3760 = vld [vmem:[#allocation15 + $0xb8] sm:$0xff]
    %v3761 = vld [vmem:[#allocation15 + $0xc0] sm:$0xff]
    %v3762 = vld [vmem:[#allocation15 + $0xc8] sm:$0xff]
    %v3763 = vld [vmem:[#allocation15 + $0xd0] sm:$0xff]
    %v3764 = vld [vmem:[#allocation15 + $0xd8] sm:$0xff]
    %v3765 = vld [vmem:[#allocation15 + $0xe0] sm:$0xff]
    %v3766 = vld [vmem:[#allocation15 + $0xe8] sm:$0xff]
    %v3767 = vld [vmem:[#allocation15 + $0xf0] sm:$0xff]
    %v3768 = vld [vmem:[#allocation15 + $0xf8] sm:$0xff]
    %v3769 = vld [vmem:[#allocation15 + $0x100] sm:$0xff]
    %v3770 = vld [vmem:[#allocation15 + $0x108] sm:$0xff]
    %v3771 = vld [vmem:[#allocation15 + $0x110] sm:$0xff]
    %v3772 = vld [vmem:[#allocation15 + $0x118] sm:$0xff]
    %v3773 = vld [vmem:[#allocation15 + $0x120] sm:$0xff]
    %v3774 = vld [vmem:[#allocation15 + $0x128] sm:$0xff]
    %v3775 = vld [vmem:[#allocation15 + $0x130] sm:$0xff]
    %v3776 = vld [vmem:[#allocation15 + $0x138] sm:$0xff]
    %v3777 = vld [vmem:[#allocation15 + $0x140] sm:$0xff]
    %v3778 = vld [vmem:[#allocation15 + $0x148] sm:$0xff]
    %v3779 = vld [vmem:[#allocation15 + $0x150] sm:$0xff]
    %v3780 = vld [vmem:[#allocation15 + $0x158] sm:$0xff]
    %v3781 = vld [vmem:[#allocation15 + $0x160] sm:$0xff]
    %v3782 = vld [vmem:[#allocation15 + $0x168] sm:$0xff]
    %v3783 = vld [vmem:[#allocation15 + $0x170] sm:$0xff]
    %v3784 = vld [vmem:[#allocation15 + $0x178] sm:$0xff]
    %v3785 = vld [vmem:[#allocation15 + $0x180] sm:$0xff]
    %v3786 = vld [vmem:[#allocation15 + $0x188] sm:$0xff]
    %v3787 = vld [vmem:[#allocation15 + $0x190] sm:$0xff]
    %v3788 = vld [vmem:[#allocation15 + $0x198] sm:$0xff]
    %v3789 = vld [vmem:[#allocation15 + $0x1a0] sm:$0xff]
    %v3790 = vld [vmem:[#allocation15 + $0x1a8] sm:$0xff]
    %v3791 = vld [vmem:[#allocation15 + $0x1b0] sm:$0xff]
    %v3792 = vld [vmem:[#allocation15 + $0x1b8] sm:$0xff]
    %v3793 = vld [vmem:[#allocation15 + $0x1c0] sm:$0xff]
    %v3794 = vld [vmem:[#allocation15 + $0x1c8] sm:$0xff]
    %v3795 = vld [vmem:[#allocation15 + $0x1d0] sm:$0xff]
    %v3796 = vld [vmem:[#allocation15 + $0x1d8] sm:$0xff]
    %v3797 = vld [vmem:[#allocation15 + $0x1e0] sm:$0xff]
    %v3798 = vld [vmem:[#allocation15 + $0x1e8] sm:$0xff]
    %v3799 = vld [vmem:[#allocation15 + $0x1f0] sm:$0xff]
    %v3800 = vld [vmem:[#allocation15 + $0x1f8] sm:$0xff]
    %v3801 = vld [vmem:[#allocation15 + $0x200] sm:$0xff]
    %v3802 = vld [vmem:[#allocation15 + $0x208] sm:$0xff]
    %v3803 = vld [vmem:[#allocation15 + $0x210] sm:$0xff]
    %v3804 = vld [vmem:[#allocation15 + $0x218] sm:$0xff]
    %v3805 = vld [vmem:[#allocation15 + $0x220] sm:$0xff]
    %v3806 = vld [vmem:[#allocation15 + $0x228] sm:$0xff]
    %v3807 = vld [vmem:[#allocation15 + $0x230] sm:$0xff]
    %v3808 = vld [vmem:[#allocation15 + $0x238] sm:$0xff]
    %v3809 = vld [vmem:[#allocation15 + $0x240] sm:$0xff]
    %v3810 = vld [vmem:[#allocation15 + $0x248] sm:$0xff]
    %v3811 = vld [vmem:[#allocation15 + $0x250] sm:$0xff]
    %v3812 = vld [vmem:[#allocation15 + $0x258] sm:$0xff]
    %v3813 = vld [vmem:[#allocation15 + $0x260] sm:$0xff]
    %v3814 = vld [vmem:[#allocation15 + $0x268] sm:$0xff]
    %v3815 = vld [vmem:[#allocation15 + $0x270] sm:$0xff]
    %v3816 = vld [vmem:[#allocation15 + $0x278] sm:$0xff]
    %v3817 = vld [vmem:[#allocation15 + $0x280] sm:$0xff]
    %v3818 = vld [vmem:[#allocation15 + $0x288] sm:$0xff]
    %v3819 = vld [vmem:[#allocation15 + $0x290] sm:$0xff]
    %v3820 = vld [vmem:[#allocation15 + $0x298] sm:$0xff]
    %v3821 = vld [vmem:[#allocation15 + $0x2a0] sm:$0xff]
    %v3822 = vld [vmem:[#allocation15 + $0x2a8] sm:$0xff]
    %v3823 = vld [vmem:[#allocation15 + $0x2b0] sm:$0xff]
    %v3824 = vld [vmem:[#allocation15 + $0x2b8] sm:$0xff]
    %v3825 = vld [vmem:[#allocation15 + $0x2c0] sm:$0xff]
    %v3826 = vld [vmem:[#allocation15 + $0x2c8] sm:$0xff]
    %v3827 = vld [vmem:[#allocation15 + $0x2d0] sm:$0xff]
    %v3828 = vld [vmem:[#allocation15 + $0x2d8] sm:$0xff]
    %v3829 = vld [vmem:[#allocation15 + $0x2e0] sm:$0xff]
    %v3830 = vld [vmem:[#allocation15 + $0x2e8] sm:$0xff]
    %v3831 = vld [vmem:[#allocation15 + $0x2f0] sm:$0xff]
    %v3832 = vld [vmem:[#allocation15 + $0x2f8] sm:$0xff]
    %v3833 = vld [vmem:[#allocation15 + $0x300] sm:$0xff]
    %v3834 = vld [vmem:[#allocation15 + $0x308] sm:$0xff]
    %v3835 = vld [vmem:[#allocation15 + $0x310] sm:$0xff]
    %v3836 = vld [vmem:[#allocation15 + $0x318] sm:$0xff]
    %v3837 = vld [vmem:[#allocation15 + $0x320] sm:$0xff]
    %v3838 = vld [vmem:[#allocation15 + $0x328] sm:$0xff]
    %v3839 = vld [vmem:[#allocation15 + $0x330] sm:$0xff]
    %v3840 = vld [vmem:[#allocation15 + $0x338] sm:$0xff]
    %v3841 = vld [vmem:[#allocation15 + $0x340] sm:$0xff]
    %v3842 = vld [vmem:[#allocation15 + $0x348] sm:$0xff]
    %v3843 = vld [vmem:[#allocation15 + $0x350] sm:$0xff]
    %v3844 = vld [vmem:[#allocation15 + $0x358] sm:$0xff]
    %v3845 = vld [vmem:[#allocation15 + $0x360] sm:$0xff]
    %v3846 = vld [vmem:[#allocation15 + $0x368] sm:$0xff]
    %v3847 = vld [vmem:[#allocation15 + $0x370] sm:$0xff]
    %v3848 = vld [vmem:[#allocation15 + $0x378] sm:$0xff]
    %v3849 = vld [vmem:[#allocation15 + $0x380] sm:$0xff]
    %v3850 = vld [vmem:[#allocation15 + $0x388] sm:$0xff]
    %v3851 = vld [vmem:[#allocation15 + $0x390] sm:$0xff]
    %v3852 = vld [vmem:[#allocation15 + $0x398] sm:$0xff]
    %v3853 = vld [vmem:[#allocation15 + $0x3a0] sm:$0xff]
    %v3854 = vld [vmem:[#allocation15 + $0x3a8] sm:$0xff]
    %v3855 = vld [vmem:[#allocation15 + $0x3b0] sm:$0xff]
    %v3856 = vld [vmem:[#allocation15 + $0x3b8] sm:$0xff]
    %v3857 = vld [vmem:[#allocation15 + $0x3c0] sm:$0xff]
    %v3858 = vld [vmem:[#allocation15 + $0x3c8] sm:$0xff]
    %v3859 = vld [vmem:[#allocation15 + $0x3d0] sm:$0xff]
    %v3860 = vld [vmem:[#allocation15 + $0x3d8] sm:$0xff]
    %v3861 = vld [vmem:[#allocation15 + $0x3e0] sm:$0xff]
    %v3862 = vld [vmem:[#allocation15 + $0x3e8] sm:$0xff]
    %v3863 = vld [vmem:[#allocation15 + $0x3f0] sm:$0xff]
    %v3864 = vld [vmem:[#allocation15 + $0x3f8] sm:$0xff]
    %v3865 = vld [vmem:[#allocation15 + $0x400] sm:$0xff]
    %v3866 = vld [vmem:[#allocation15 + $0x408] sm:$0xff]
    %v3867 = vld [vmem:[#allocation15 + $0x410] sm:$0xff]
    %v3868 = vld [vmem:[#allocation15 + $0x418] sm:$0xff]
    %v3869 = vld [vmem:[#allocation15 + $0x420] sm:$0xff]
    %v3870 = vld [vmem:[#allocation15 + $0x428] sm:$0xff]
    %v3871 = vld [vmem:[#allocation15 + $0x430] sm:$0xff]
    %v3872 = vld [vmem:[#allocation15 + $0x438] sm:$0xff]
    %v3873 = vld [vmem:[#allocation15 + $0x440] sm:$0xff]
    %v3874 = vld [vmem:[#allocation15 + $0x448] sm:$0xff]
    %v3875 = vld [vmem:[#allocation15 + $0x450] sm:$0xff]
    %v3876 = vld [vmem:[#allocation15 + $0x458] sm:$0xff]
    %v3877 = vld [vmem:[#allocation15 + $0x460] sm:$0xff]
    %v3878 = vld [vmem:[#allocation15 + $0x468] sm:$0xff]
    %v3879 = vld [vmem:[#allocation15 + $0x470] sm:$0xff]
    %v3880 = vld [vmem:[#allocation15 + $0x478] sm:$0xff]
    %v3881 = vld [vmem:[#allocation15 + $0x480] sm:$0xff]
    %v3882 = vld [vmem:[#allocation15 + $0x488] sm:$0xff]
    %v3883 = vld [vmem:[#allocation15 + $0x490] sm:$0xff]
    %v3884 = vld [vmem:[#allocation15 + $0x498] sm:$0xff]
    %v3885 = vld [vmem:[#allocation15 + $0x4a0] sm:$0xff]
    %v3886 = vld [vmem:[#allocation15 + $0x4a8] sm:$0xff]
    %v3887 = vld [vmem:[#allocation15 + $0x4b0] sm:$0xff]
    %v3888 = vld [vmem:[#allocation15 + $0x4b8] sm:$0xff]
    %v3889 = vld [vmem:[#allocation15 + $0x4c0] sm:$0xff]
    %v3890 = vld [vmem:[#allocation15 + $0x4c8] sm:$0xff]
    %v3891 = vld [vmem:[#allocation15 + $0x4d0] sm:$0xff]
    %v3892 = vld [vmem:[#allocation15 + $0x4d8] sm:$0xff]
    %v3893 = vld [vmem:[#allocation15 + $0x4e0] sm:$0xff]
    %v3894 = vld [vmem:[#allocation15 + $0x4e8] sm:$0xff]
    %v3895 = vld [vmem:[#allocation15 + $0x4f0] sm:$0xff]
    %v3896 = vld [vmem:[#allocation15 + $0x4f8] sm:$0xff]
    %v3897 = vld [vmem:[#allocation15 + $0x500] sm:$0xff]
    %v3898 = vld [vmem:[#allocation15 + $0x508] sm:$0xff]
    %v3899 = vld [vmem:[#allocation15 + $0x510] sm:$0xff]
    %v3900 = vld [vmem:[#allocation15 + $0x518] sm:$0xff]
    %v3901 = vld [vmem:[#allocation15 + $0x520] sm:$0xff]
    %v3902 = vld [vmem:[#allocation15 + $0x528] sm:$0xff]
    %v3903 = vld [vmem:[#allocation15 + $0x530] sm:$0xff]
    %v3904 = vld [vmem:[#allocation15 + $0x538] sm:$0xff]
    %v3905 = vld [vmem:[#allocation15 + $0x540] sm:$0xff]
    %v3906 = vld [vmem:[#allocation15 + $0x548] sm:$0xff]
    %v3907 = vld [vmem:[#allocation15 + $0x550] sm:$0xff]
    %v3908 = vld [vmem:[#allocation15 + $0x558] sm:$0xff]
    %v3909 = vld [vmem:[#allocation15 + $0x560] sm:$0xff]
    %v3910 = vld [vmem:[#allocation15 + $0x568] sm:$0xff]
    %v3911 = vld [vmem:[#allocation15 + $0x570] sm:$0xff]
    %v3912 = vld [vmem:[#allocation15 + $0x578] sm:$0xff]
    %v3913 = vld [vmem:[#allocation15 + $0x580] sm:$0xff]
    %v3914 = vld [vmem:[#allocation15 + $0x588] sm:$0xff]
    %v3915 = vld [vmem:[#allocation15 + $0x590] sm:$0xff]
    %v3916 = vld [vmem:[#allocation15 + $0x598] sm:$0xff]
    %v3917 = vld [vmem:[#allocation15 + $0x5a0] sm:$0xff]
    %v3918 = vld [vmem:[#allocation15 + $0x5a8] sm:$0xff]
    %v3919 = vld [vmem:[#allocation15 + $0x5b0] sm:$0xff]
    %v3920 = vld [vmem:[#allocation15 + $0x5b8] sm:$0xff]
    %v3921 = vld [vmem:[#allocation15 + $0x5c0] sm:$0xff]
    %v3922 = vld [vmem:[#allocation15 + $0x5c8] sm:$0xff]
    %v3923 = vld [vmem:[#allocation15 + $0x5d0] sm:$0xff]
    %v3924 = vld [vmem:[#allocation15 + $0x5d8] sm:$0xff]
    %v3925 = vld [vmem:[#allocation15 + $0x5e0] sm:$0xff]
    %v3926 = vld [vmem:[#allocation15 + $0x5e8] sm:$0xff]
    %v3927 = vld [vmem:[#allocation15 + $0x5f0] sm:$0xff]
    %v3928 = vld [vmem:[#allocation15 + $0x5f8] sm:$0xff]
    %v3929 = vld [vmem:[#allocation15 + $0x600] sm:$0xff]
    %v3930 = vld [vmem:[#allocation15 + $0x608] sm:$0xff]
    %v3931 = vld [vmem:[#allocation15 + $0x610] sm:$0xff]
    %v3932 = vld [vmem:[#allocation15 + $0x618] sm:$0xff]
    %v3933 = vld [vmem:[#allocation15 + $0x620] sm:$0xff]
    %v3934 = vld [vmem:[#allocation15 + $0x628] sm:$0xff]
    %v3935 = vld [vmem:[#allocation15 + $0x630] sm:$0xff]
    %v3936 = vld [vmem:[#allocation15 + $0x638] sm:$0xff]
    %v3937 = vld [vmem:[#allocation15 + $0x640] sm:$0xff]
    %v3938 = vld [vmem:[#allocation15 + $0x648] sm:$0xff]
    %v3939 = vld [vmem:[#allocation15 + $0x650] sm:$0xff]
    %v3940 = vld [vmem:[#allocation15 + $0x658] sm:$0xff]
    %v3941 = vld [vmem:[#allocation15 + $0x660] sm:$0xff]
    %v3942 = vld [vmem:[#allocation15 + $0x668] sm:$0xff]
    %v3943 = vld [vmem:[#allocation15 + $0x670] sm:$0xff]
    %v3944 = vld [vmem:[#allocation15 + $0x678] sm:$0xff]
    %v3945 = vld [vmem:[#allocation15 + $0x680] sm:$0xff]
    %v3946 = vld [vmem:[#allocation15 + $0x688] sm:$0xff]
    %v3947 = vld [vmem:[#allocation15 + $0x690] sm:$0xff]
    %v3948 = vld [vmem:[#allocation15 + $0x698] sm:$0xff]
    %v3949 = vld [vmem:[#allocation15 + $0x6a0] sm:$0xff]
    %v3950 = vld [vmem:[#allocation15 + $0x6a8] sm:$0xff]
    %v3951 = vld [vmem:[#allocation15 + $0x6b0] sm:$0xff]
    %v3952 = vld [vmem:[#allocation15 + $0x6b8] sm:$0xff]
    %v3953 = vld [vmem:[#allocation15 + $0x6c0] sm:$0xff]
    %v3954 = vld [vmem:[#allocation15 + $0x6c8] sm:$0xff]
    %v3955 = vld [vmem:[#allocation15 + $0x6d0] sm:$0xff]
    %v3956 = vld [vmem:[#allocation15 + $0x6d8] sm:$0xff]
    %v3957 = vld [vmem:[#allocation15 + $0x6e0] sm:$0xff]
    %v3958 = vld [vmem:[#allocation15 + $0x6e8] sm:$0xff]
    %v3959 = vld [vmem:[#allocation15 + $0x6f0] sm:$0xff]
    %v3960 = vld [vmem:[#allocation15 + $0x6f8] sm:$0xff]
    %v3961 = vld [vmem:[#allocation15 + $0x700] sm:$0xff]
    %v3962 = vld [vmem:[#allocation15 + $0x708] sm:$0xff]
    %v3963 = vld [vmem:[#allocation15 + $0x710] sm:$0xff]
    %v3964 = vld [vmem:[#allocation15 + $0x718] sm:$0xff]
    %v3965 = vld [vmem:[#allocation15 + $0x720] sm:$0xff]
    %v3966 = vld [vmem:[#allocation15 + $0x728] sm:$0xff]
    %v3967 = vld [vmem:[#allocation15 + $0x730] sm:$0xff]
    %v3968 = vld [vmem:[#allocation15 + $0x738] sm:$0xff]
    %v3969 = vld [vmem:[#allocation15 + $0x740] sm:$0xff]
    %v3970 = vld [vmem:[#allocation15 + $0x748] sm:$0xff]
    %v3971 = vld [vmem:[#allocation15 + $0x750] sm:$0xff]
    %v3972 = vld [vmem:[#allocation15 + $0x758] sm:$0xff]
    %v3973 = vld [vmem:[#allocation15 + $0x760] sm:$0xff]
    %v3974 = vld [vmem:[#allocation15 + $0x768] sm:$0xff]
    %v3975 = vld [vmem:[#allocation15 + $0x770] sm:$0xff]
    %v3976 = vld [vmem:[#allocation15 + $0x778] sm:$0xff]
    %v3977 = vld [vmem:[#allocation15 + $0x780] sm:$0xff]
    %v3978 = vld [vmem:[#allocation15 + $0x788] sm:$0xff]
    %v3979 = vld [vmem:[#allocation15 + $0x790] sm:$0xff]
    %v3980 = vld [vmem:[#allocation15 + $0x798] sm:$0xff]
    %v3981 = vld [vmem:[#allocation15 + $0x7a0] sm:$0xff]
    %v3982 = vld [vmem:[#allocation15 + $0x7a8] sm:$0xff]
    %v3983 = vld [vmem:[#allocation15 + $0x7b0] sm:$0xff]
    %v3984 = vld [vmem:[#allocation15 + $0x7b8] sm:$0xff]
    %v3985 = vld [vmem:[#allocation15 + $0x7c0] sm:$0xff]
    %v3986 = vld [vmem:[#allocation15 + $0x7c8] sm:$0xff]
    %v3987 = vld [vmem:[#allocation15 + $0x7d0] sm:$0xff]
    %v3988 = vld [vmem:[#allocation15 + $0x7d8] sm:$0xff]
    %v3989 = vld [vmem:[#allocation15 + $0x7e0] sm:$0xff]
    %v3990 = vld [vmem:[#allocation15 + $0x7e8] sm:$0xff]
    %v3991 = vld [vmem:[#allocation15 + $0x7f0] sm:$0xff]
    %v3992 = vld [vmem:[#allocation15 + $0x7f8] sm:$0xff]
    %v3993 = vld [vmem:[#allocation16] sm:$0xff]
    %v3995 = vlaneseq
    %v3996 = vshrl.u32 %v3995, 7
    %v3997 = vsub.s32 0, %v3996
    %v3998 = vrot.slane %v3993, %v3997
    %v3999 = vlaneseq
    %v4000 = vshrl.u32 %v3999, 7
    %v4001 = vsub.s32 1, %v4000
    %v4002 = vrot.slane %v3993, %v4001
    %v4003 = vlaneseq
    %v4004 = vshrl.u32 %v4003, 7
    %v4005 = vsub.s32 2, %v4004
    %v4006 = vrot.slane %v3993, %v4005
    %v4007 = vlaneseq
    %v4008 = vshrl.u32 %v4007, 7
    %v4009 = vsub.s32 3, %v4008
    %v4010 = vrot.slane %v3993, %v4009
    %v4011 = vlaneseq
    %v4012 = vshrl.u32 %v4011, 7
    %v4013 = vsub.s32 4, %v4012
    %v4014 = vrot.slane %v3993, %v4013
    %v4015 = vlaneseq
    %v4016 = vshrl.u32 %v4015, 7
    %v4017 = vsub.s32 5, %v4016
    %v4018 = vrot.slane %v3993, %v4017
    %v4019 = vlaneseq
    %v4020 = vshrl.u32 %v4019, 7
    %v4021 = vsub.s32 6, %v4020
    %v4022 = vrot.slane %v3993, %v4021
    %v4023 = vlaneseq
    %v4024 = vshrl.u32 %v4023, 7
    %v4025 = vsub.s32 7, %v4024
    %v4026 = vrot.slane %v3993, %v4025
    %v4291 = vunpack.c.l.b16 %v3737
    %v4292 = vunpack.c.h.b16 %v3737
    %v4293 = vunpack.c.l.b16 %v3738
    %v4294 = vunpack.c.h.b16 %v3738
    %v4295 = vunpack.c.l.b16 %v3739
    %v4296 = vunpack.c.h.b16 %v3739
    %v4297 = vunpack.c.l.b16 %v3740
    %v4298 = vunpack.c.h.b16 %v3740
    %v4299 = vunpack.c.l.b16 %v3741
    %v4300 = vunpack.c.h.b16 %v3741
    %v4301 = vunpack.c.l.b16 %v3742
    %v4302 = vunpack.c.h.b16 %v3742
    %v4303 = vunpack.c.l.b16 %v3743
    %v4304 = vunpack.c.h.b16 %v3743
    %v4305 = vunpack.c.l.b16 %v3744
    %v4306 = vunpack.c.h.b16 %v3744
    %v4307 = vunpack.c.l.b16 %v3745
    %v4308 = vunpack.c.h.b16 %v3745
    %v4309 = vunpack.c.l.b16 %v3746
    %v4310 = vunpack.c.h.b16 %v3746
    %v4311 = vunpack.c.l.b16 %v3747
    %v4312 = vunpack.c.h.b16 %v3747
    %v4313 = vunpack.c.l.b16 %v3748
    %v4314 = vunpack.c.h.b16 %v3748
    %v4315 = vunpack.c.l.b16 %v3749
    %v4316 = vunpack.c.h.b16 %v3749
    %v4317 = vunpack.c.l.b16 %v3750
    %v4318 = vunpack.c.h.b16 %v3750
    %v4319 = vunpack.c.l.b16 %v3751
    %v4320 = vunpack.c.h.b16 %v3751
    %v4321 = vunpack.c.l.b16 %v3752
    %v4322 = vunpack.c.h.b16 %v3752
    %v4323 = vunpack.c.l.b16 %v3753
    %v4324 = vunpack.c.h.b16 %v3753
    %v4325 = vunpack.c.l.b16 %v3754
    %v4326 = vunpack.c.h.b16 %v3754
    %v4327 = vunpack.c.l.b16 %v3755
    %v4328 = vunpack.c.h.b16 %v3755
    %v4329 = vunpack.c.l.b16 %v3756
    %v4330 = vunpack.c.h.b16 %v3756
    %v4331 = vunpack.c.l.b16 %v3757
    %v4332 = vunpack.c.h.b16 %v3757
    %v4333 = vunpack.c.l.b16 %v3758
    %v4334 = vunpack.c.h.b16 %v3758
    %v4335 = vunpack.c.l.b16 %v3759
    %v4336 = vunpack.c.h.b16 %v3759
    %v4337 = vunpack.c.l.b16 %v3760
    %v4338 = vunpack.c.h.b16 %v3760
    %v4339 = vunpack.c.l.b16 %v3761
    %v4340 = vunpack.c.h.b16 %v3761
    %v4341 = vunpack.c.l.b16 %v3762
    %v4342 = vunpack.c.h.b16 %v3762
    %v4343 = vunpack.c.l.b16 %v3763
    %v4344 = vunpack.c.h.b16 %v3763
    %v4345 = vunpack.c.l.b16 %v3764
    %v4346 = vunpack.c.h.b16 %v3764
    %v4347 = vunpack.c.l.b16 %v3765
    %v4348 = vunpack.c.h.b16 %v3765
    %v4349 = vunpack.c.l.b16 %v3766
    %v4350 = vunpack.c.h.b16 %v3766
    %v4351 = vunpack.c.l.b16 %v3767
    %v4352 = vunpack.c.h.b16 %v3767
    %v4353 = vunpack.c.l.b16 %v3768
    %v4354 = vunpack.c.h.b16 %v3768
    %v4355 = vunpack.c.l.b16 %v3769
    %v4356 = vunpack.c.h.b16 %v3769
    %v4357 = vunpack.c.l.b16 %v3770
    %v4358 = vunpack.c.h.b16 %v3770
    %v4359 = vunpack.c.l.b16 %v3771
    %v4360 = vunpack.c.h.b16 %v3771
    %v4361 = vunpack.c.l.b16 %v3772
    %v4362 = vunpack.c.h.b16 %v3772
    %v4363 = vunpack.c.l.b16 %v3773
    %v4364 = vunpack.c.h.b16 %v3773
    %v4365 = vunpack.c.l.b16 %v3774
    %v4366 = vunpack.c.h.b16 %v3774
    %v4367 = vunpack.c.l.b16 %v3775
    %v4368 = vunpack.c.h.b16 %v3775
    %v4369 = vunpack.c.l.b16 %v3776
    %v4370 = vunpack.c.h.b16 %v3776
    %v4371 = vunpack.c.l.b16 %v3777
    %v4372 = vunpack.c.h.b16 %v3777
    %v4373 = vunpack.c.l.b16 %v3778
    %v4374 = vunpack.c.h.b16 %v3778
    %v4375 = vunpack.c.l.b16 %v3779
    %v4376 = vunpack.c.h.b16 %v3779
    %v4377 = vunpack.c.l.b16 %v3780
    %v4378 = vunpack.c.h.b16 %v3780
    %v4379 = vunpack.c.l.b16 %v3781
    %v4380 = vunpack.c.h.b16 %v3781
    %v4381 = vunpack.c.l.b16 %v3782
    %v4382 = vunpack.c.h.b16 %v3782
    %v4383 = vunpack.c.l.b16 %v3783
    %v4384 = vunpack.c.h.b16 %v3783
    %v4385 = vunpack.c.l.b16 %v3784
    %v4386 = vunpack.c.h.b16 %v3784
    %v4387 = vunpack.c.l.b16 %v3785
    %v4388 = vunpack.c.h.b16 %v3785
    %v4389 = vunpack.c.l.b16 %v3786
    %v4390 = vunpack.c.h.b16 %v3786
    %v4391 = vunpack.c.l.b16 %v3787
    %v4392 = vunpack.c.h.b16 %v3787
    %v4393 = vunpack.c.l.b16 %v3788
    %v4394 = vunpack.c.h.b16 %v3788
    %v4395 = vunpack.c.l.b16 %v3789
    %v4396 = vunpack.c.h.b16 %v3789
    %v4397 = vunpack.c.l.b16 %v3790
    %v4398 = vunpack.c.h.b16 %v3790
    %v4399 = vunpack.c.l.b16 %v3791
    %v4400 = vunpack.c.h.b16 %v3791
    %v4401 = vunpack.c.l.b16 %v3792
    %v4402 = vunpack.c.h.b16 %v3792
    %v4403 = vunpack.c.l.b16 %v3793
    %v4404 = vunpack.c.h.b16 %v3793
    %v4405 = vunpack.c.l.b16 %v3794
    %v4406 = vunpack.c.h.b16 %v3794
    %v4407 = vunpack.c.l.b16 %v3795
    %v4408 = vunpack.c.h.b16 %v3795
    %v4409 = vunpack.c.l.b16 %v3796
    %v4410 = vunpack.c.h.b16 %v3796
    %v4411 = vunpack.c.l.b16 %v3797
    %v4412 = vunpack.c.h.b16 %v3797
    %v4413 = vunpack.c.l.b16 %v3798
    %v4414 = vunpack.c.h.b16 %v3798
    %v4415 = vunpack.c.l.b16 %v3799
    %v4416 = vunpack.c.h.b16 %v3799
    %v4417 = vunpack.c.l.b16 %v3800
    %v4418 = vunpack.c.h.b16 %v3800
    %v4419 = vunpack.c.l.b16 %v3801
    %v4420 = vunpack.c.h.b16 %v3801
    %v4421 = vunpack.c.l.b16 %v3802
    %v4422 = vunpack.c.h.b16 %v3802
    %v4423 = vunpack.c.l.b16 %v3803
    %v4424 = vunpack.c.h.b16 %v3803
    %v4425 = vunpack.c.l.b16 %v3804
    %v4426 = vunpack.c.h.b16 %v3804
    %v4427 = vunpack.c.l.b16 %v3805
    %v4428 = vunpack.c.h.b16 %v3805
    %v4429 = vunpack.c.l.b16 %v3806
    %v4430 = vunpack.c.h.b16 %v3806
    %v4431 = vunpack.c.l.b16 %v3807
    %v4432 = vunpack.c.h.b16 %v3807
    %v4433 = vunpack.c.l.b16 %v3808
    %v4434 = vunpack.c.h.b16 %v3808
    %v4435 = vunpack.c.l.b16 %v3809
    %v4436 = vunpack.c.h.b16 %v3809
    %v4437 = vunpack.c.l.b16 %v3810
    %v4438 = vunpack.c.h.b16 %v3810
    %v4439 = vunpack.c.l.b16 %v3811
    %v4440 = vunpack.c.h.b16 %v3811
    %v4441 = vunpack.c.l.b16 %v3812
    %v4442 = vunpack.c.h.b16 %v3812
    %v4443 = vunpack.c.l.b16 %v3813
    %v4444 = vunpack.c.h.b16 %v3813
    %v4445 = vunpack.c.l.b16 %v3814
    %v4446 = vunpack.c.h.b16 %v3814
    %v4447 = vunpack.c.l.b16 %v3815
    %v4448 = vunpack.c.h.b16 %v3815
    %v4449 = vunpack.c.l.b16 %v3816
    %v4450 = vunpack.c.h.b16 %v3816
    %v4451 = vunpack.c.l.b16 %v3817
    %v4452 = vunpack.c.h.b16 %v3817
    %v4453 = vunpack.c.l.b16 %v3818
    %v4454 = vunpack.c.h.b16 %v3818
    %v4455 = vunpack.c.l.b16 %v3819
    %v4456 = vunpack.c.h.b16 %v3819
    %v4457 = vunpack.c.l.b16 %v3820
    %v4458 = vunpack.c.h.b16 %v3820
    %v4459 = vunpack.c.l.b16 %v3821
    %v4460 = vunpack.c.h.b16 %v3821
    %v4461 = vunpack.c.l.b16 %v3822
    %v4462 = vunpack.c.h.b16 %v3822
    %v4463 = vunpack.c.l.b16 %v3823
    %v4464 = vunpack.c.h.b16 %v3823
    %v4465 = vunpack.c.l.b16 %v3824
    %v4466 = vunpack.c.h.b16 %v3824
    %v4467 = vunpack.c.l.b16 %v3825
    %v4468 = vunpack.c.h.b16 %v3825
    %v4469 = vunpack.c.l.b16 %v3826
    %v4470 = vunpack.c.h.b16 %v3826
    %v4471 = vunpack.c.l.b16 %v3827
    %v4472 = vunpack.c.h.b16 %v3827
    %v4473 = vunpack.c.l.b16 %v3828
    %v4474 = vunpack.c.h.b16 %v3828
    %v4475 = vunpack.c.l.b16 %v3829
    %v4476 = vunpack.c.h.b16 %v3829
    %v4477 = vunpack.c.l.b16 %v3830
    %v4478 = vunpack.c.h.b16 %v3830
    %v4479 = vunpack.c.l.b16 %v3831
    %v4480 = vunpack.c.h.b16 %v3831
    %v4481 = vunpack.c.l.b16 %v3832
    %v4482 = vunpack.c.h.b16 %v3832
    %v4483 = vunpack.c.l.b16 %v3833
    %v4484 = vunpack.c.h.b16 %v3833
    %v4485 = vunpack.c.l.b16 %v3834
    %v4486 = vunpack.c.h.b16 %v3834
    %v4487 = vunpack.c.l.b16 %v3835
    %v4488 = vunpack.c.h.b16 %v3835
    %v4489 = vunpack.c.l.b16 %v3836
    %v4490 = vunpack.c.h.b16 %v3836
    %v4491 = vunpack.c.l.b16 %v3837
    %v4492 = vunpack.c.h.b16 %v3837
    %v4493 = vunpack.c.l.b16 %v3838
    %v4494 = vunpack.c.h.b16 %v3838
    %v4495 = vunpack.c.l.b16 %v3839
    %v4496 = vunpack.c.h.b16 %v3839
    %v4497 = vunpack.c.l.b16 %v3840
    %v4498 = vunpack.c.h.b16 %v3840
    %v4499 = vunpack.c.l.b16 %v3841
    %v4500 = vunpack.c.h.b16 %v3841
    %v4501 = vunpack.c.l.b16 %v3842
    %v4502 = vunpack.c.h.b16 %v3842
    %v4503 = vunpack.c.l.b16 %v3843
    %v4504 = vunpack.c.h.b16 %v3843
    %v4505 = vunpack.c.l.b16 %v3844
    %v4506 = vunpack.c.h.b16 %v3844
    %v4507 = vunpack.c.l.b16 %v3845
    %v4508 = vunpack.c.h.b16 %v3845
    %v4509 = vunpack.c.l.b16 %v3846
    %v4510 = vunpack.c.h.b16 %v3846
    %v4511 = vunpack.c.l.b16 %v3847
    %v4512 = vunpack.c.h.b16 %v3847
    %v4513 = vunpack.c.l.b16 %v3848
    %v4514 = vunpack.c.h.b16 %v3848
    %v4515 = vunpack.c.l.b16 %v3849
    %v4516 = vunpack.c.h.b16 %v3849
    %v4517 = vunpack.c.l.b16 %v3850
    %v4518 = vunpack.c.h.b16 %v3850
    %v4519 = vunpack.c.l.b16 %v3851
    %v4520 = vunpack.c.h.b16 %v3851
    %v4521 = vunpack.c.l.b16 %v3852
    %v4522 = vunpack.c.h.b16 %v3852
    %v4523 = vunpack.c.l.b16 %v3853
    %v4524 = vunpack.c.h.b16 %v3853
    %v4525 = vunpack.c.l.b16 %v3854
    %v4526 = vunpack.c.h.b16 %v3854
    %v4527 = vunpack.c.l.b16 %v3855
    %v4528 = vunpack.c.h.b16 %v3855
    %v4529 = vunpack.c.l.b16 %v3856
    %v4530 = vunpack.c.h.b16 %v3856
    %v4531 = vunpack.c.l.b16 %v3857
    %v4532 = vunpack.c.h.b16 %v3857
    %v4533 = vunpack.c.l.b16 %v3858
    %v4534 = vunpack.c.h.b16 %v3858
    %v4535 = vunpack.c.l.b16 %v3859
    %v4536 = vunpack.c.h.b16 %v3859
    %v4537 = vunpack.c.l.b16 %v3860
    %v4538 = vunpack.c.h.b16 %v3860
    %v4539 = vunpack.c.l.b16 %v3861
    %v4540 = vunpack.c.h.b16 %v3861
    %v4541 = vunpack.c.l.b16 %v3862
    %v4542 = vunpack.c.h.b16 %v3862
    %v4543 = vunpack.c.l.b16 %v3863
    %v4544 = vunpack.c.h.b16 %v3863
    %v4545 = vunpack.c.l.b16 %v3864
    %v4546 = vunpack.c.h.b16 %v3864
    %v4547 = vunpack.c.l.b16 %v3865
    %v4548 = vunpack.c.h.b16 %v3865
    %v4549 = vunpack.c.l.b16 %v3866
    %v4550 = vunpack.c.h.b16 %v3866
    %v4551 = vunpack.c.l.b16 %v3867
    %v4552 = vunpack.c.h.b16 %v3867
    %v4553 = vunpack.c.l.b16 %v3868
    %v4554 = vunpack.c.h.b16 %v3868
    %v4555 = vunpack.c.l.b16 %v3869
    %v4556 = vunpack.c.h.b16 %v3869
    %v4557 = vunpack.c.l.b16 %v3870
    %v4558 = vunpack.c.h.b16 %v3870
    %v4559 = vunpack.c.l.b16 %v3871
    %v4560 = vunpack.c.h.b16 %v3871
    %v4561 = vunpack.c.l.b16 %v3872
    %v4562 = vunpack.c.h.b16 %v3872
    %v4563 = vunpack.c.l.b16 %v3873
    %v4564 = vunpack.c.h.b16 %v3873
    %v4565 = vunpack.c.l.b16 %v3874
    %v4566 = vunpack.c.h.b16 %v3874
    %v4567 = vunpack.c.l.b16 %v3875
    %v4568 = vunpack.c.h.b16 %v3875
    %v4569 = vunpack.c.l.b16 %v3876
    %v4570 = vunpack.c.h.b16 %v3876
    %v4571 = vunpack.c.l.b16 %v3877
    %v4572 = vunpack.c.h.b16 %v3877
    %v4573 = vunpack.c.l.b16 %v3878
    %v4574 = vunpack.c.h.b16 %v3878
    %v4575 = vunpack.c.l.b16 %v3879
    %v4576 = vunpack.c.h.b16 %v3879
    %v4577 = vunpack.c.l.b16 %v3880
    %v4578 = vunpack.c.h.b16 %v3880
    %v4579 = vunpack.c.l.b16 %v3881
    %v4580 = vunpack.c.h.b16 %v3881
    %v4581 = vunpack.c.l.b16 %v3882
    %v4582 = vunpack.c.h.b16 %v3882
    %v4583 = vunpack.c.l.b16 %v3883
    %v4584 = vunpack.c.h.b16 %v3883
    %v4585 = vunpack.c.l.b16 %v3884
    %v4586 = vunpack.c.h.b16 %v3884
    %v4587 = vunpack.c.l.b16 %v3885
    %v4588 = vunpack.c.h.b16 %v3885
    %v4589 = vunpack.c.l.b16 %v3886
    %v4590 = vunpack.c.h.b16 %v3886
    %v4591 = vunpack.c.l.b16 %v3887
    %v4592 = vunpack.c.h.b16 %v3887
    %v4593 = vunpack.c.l.b16 %v3888
    %v4594 = vunpack.c.h.b16 %v3888
    %v4595 = vunpack.c.l.b16 %v3889
    %v4596 = vunpack.c.h.b16 %v3889
    %v4597 = vunpack.c.l.b16 %v3890
    %v4598 = vunpack.c.h.b16 %v3890
    %v4599 = vunpack.c.l.b16 %v3891
    %v4600 = vunpack.c.h.b16 %v3891
    %v4601 = vunpack.c.l.b16 %v3892
    %v4602 = vunpack.c.h.b16 %v3892
    %v4603 = vunpack.c.l.b16 %v3893
    %v4604 = vunpack.c.h.b16 %v3893
    %v4605 = vunpack.c.l.b16 %v3894
    %v4606 = vunpack.c.h.b16 %v3894
    %v4607 = vunpack.c.l.b16 %v3895
    %v4608 = vunpack.c.h.b16 %v3895
    %v4609 = vunpack.c.l.b16 %v3896
    %v4610 = vunpack.c.h.b16 %v3896
    %v4611 = vunpack.c.l.b16 %v3897
    %v4612 = vunpack.c.h.b16 %v3897
    %v4613 = vunpack.c.l.b16 %v3898
    %v4614 = vunpack.c.h.b16 %v3898
    %v4615 = vunpack.c.l.b16 %v3899
    %v4616 = vunpack.c.h.b16 %v3899
    %v4617 = vunpack.c.l.b16 %v3900
    %v4618 = vunpack.c.h.b16 %v3900
    %v4619 = vunpack.c.l.b16 %v3901
    %v4620 = vunpack.c.h.b16 %v3901
    %v4621 = vunpack.c.l.b16 %v3902
    %v4622 = vunpack.c.h.b16 %v3902
    %v4623 = vunpack.c.l.b16 %v3903
    %v4624 = vunpack.c.h.b16 %v3903
    %v4625 = vunpack.c.l.b16 %v3904
    %v4626 = vunpack.c.h.b16 %v3904
    %v4627 = vunpack.c.l.b16 %v3905
    %v4628 = vunpack.c.h.b16 %v3905
    %v4629 = vunpack.c.l.b16 %v3906
    %v4630 = vunpack.c.h.b16 %v3906
    %v4631 = vunpack.c.l.b16 %v3907
    %v4632 = vunpack.c.h.b16 %v3907
    %v4633 = vunpack.c.l.b16 %v3908
    %v4634 = vunpack.c.h.b16 %v3908
    %v4635 = vunpack.c.l.b16 %v3909
    %v4636 = vunpack.c.h.b16 %v3909
    %v4637 = vunpack.c.l.b16 %v3910
    %v4638 = vunpack.c.h.b16 %v3910
    %v4639 = vunpack.c.l.b16 %v3911
    %v4640 = vunpack.c.h.b16 %v3911
    %v4641 = vunpack.c.l.b16 %v3912
    %v4642 = vunpack.c.h.b16 %v3912
    %v4643 = vunpack.c.l.b16 %v3913
    %v4644 = vunpack.c.h.b16 %v3913
    %v4645 = vunpack.c.l.b16 %v3914
    %v4646 = vunpack.c.h.b16 %v3914
    %v4647 = vunpack.c.l.b16 %v3915
    %v4648 = vunpack.c.h.b16 %v3915
    %v4649 = vunpack.c.l.b16 %v3916
    %v4650 = vunpack.c.h.b16 %v3916
    %v4651 = vunpack.c.l.b16 %v3917
    %v4652 = vunpack.c.h.b16 %v3917
    %v4653 = vunpack.c.l.b16 %v3918
    %v4654 = vunpack.c.h.b16 %v3918
    %v4655 = vunpack.c.l.b16 %v3919
    %v4656 = vunpack.c.h.b16 %v3919
    %v4657 = vunpack.c.l.b16 %v3920
    %v4658 = vunpack.c.h.b16 %v3920
    %v4659 = vunpack.c.l.b16 %v3921
    %v4660 = vunpack.c.h.b16 %v3921
    %v4661 = vunpack.c.l.b16 %v3922
    %v4662 = vunpack.c.h.b16 %v3922
    %v4663 = vunpack.c.l.b16 %v3923
    %v4664 = vunpack.c.h.b16 %v3923
    %v4665 = vunpack.c.l.b16 %v3924
    %v4666 = vunpack.c.h.b16 %v3924
    %v4667 = vunpack.c.l.b16 %v3925
    %v4668 = vunpack.c.h.b16 %v3925
    %v4669 = vunpack.c.l.b16 %v3926
    %v4670 = vunpack.c.h.b16 %v3926
    %v4671 = vunpack.c.l.b16 %v3927
    %v4672 = vunpack.c.h.b16 %v3927
    %v4673 = vunpack.c.l.b16 %v3928
    %v4674 = vunpack.c.h.b16 %v3928
    %v4675 = vunpack.c.l.b16 %v3929
    %v4676 = vunpack.c.h.b16 %v3929
    %v4677 = vunpack.c.l.b16 %v3930
    %v4678 = vunpack.c.h.b16 %v3930
    %v4679 = vunpack.c.l.b16 %v3931
    %v4680 = vunpack.c.h.b16 %v3931
    %v4681 = vunpack.c.l.b16 %v3932
    %v4682 = vunpack.c.h.b16 %v3932
    %v4683 = vunpack.c.l.b16 %v3933
    %v4684 = vunpack.c.h.b16 %v3933
    %v4685 = vunpack.c.l.b16 %v3934
    %v4686 = vunpack.c.h.b16 %v3934
    %v4687 = vunpack.c.l.b16 %v3935
    %v4688 = vunpack.c.h.b16 %v3935
    %v4689 = vunpack.c.l.b16 %v3936
    %v4690 = vunpack.c.h.b16 %v3936
    %v4691 = vunpack.c.l.b16 %v3937
    %v4692 = vunpack.c.h.b16 %v3937
    %v4693 = vunpack.c.l.b16 %v3938
    %v4694 = vunpack.c.h.b16 %v3938
    %v4695 = vunpack.c.l.b16 %v3939
    %v4696 = vunpack.c.h.b16 %v3939
    %v4697 = vunpack.c.l.b16 %v3940
    %v4698 = vunpack.c.h.b16 %v3940
    %v4699 = vunpack.c.l.b16 %v3941
    %v4700 = vunpack.c.h.b16 %v3941
    %v4701 = vunpack.c.l.b16 %v3942
    %v4702 = vunpack.c.h.b16 %v3942
    %v4703 = vunpack.c.l.b16 %v3943
    %v4704 = vunpack.c.h.b16 %v3943
    %v4705 = vunpack.c.l.b16 %v3944
    %v4706 = vunpack.c.h.b16 %v3944
    %v4707 = vunpack.c.l.b16 %v3945
    %v4708 = vunpack.c.h.b16 %v3945
    %v4709 = vunpack.c.l.b16 %v3946
    %v4710 = vunpack.c.h.b16 %v3946
    %v4711 = vunpack.c.l.b16 %v3947
    %v4712 = vunpack.c.h.b16 %v3947
    %v4713 = vunpack.c.l.b16 %v3948
    %v4714 = vunpack.c.h.b16 %v3948
    %v4715 = vunpack.c.l.b16 %v3949
    %v4716 = vunpack.c.h.b16 %v3949
    %v4717 = vunpack.c.l.b16 %v3950
    %v4718 = vunpack.c.h.b16 %v3950
    %v4719 = vunpack.c.l.b16 %v3951
    %v4720 = vunpack.c.h.b16 %v3951
    %v4721 = vunpack.c.l.b16 %v3952
    %v4722 = vunpack.c.h.b16 %v3952
    %v4723 = vunpack.c.l.b16 %v3953
    %v4724 = vunpack.c.h.b16 %v3953
    %v4725 = vunpack.c.l.b16 %v3954
    %v4726 = vunpack.c.h.b16 %v3954
    %v4727 = vunpack.c.l.b16 %v3955
    %v4728 = vunpack.c.h.b16 %v3955
    %v4729 = vunpack.c.l.b16 %v3956
    %v4730 = vunpack.c.h.b16 %v3956
    %v4731 = vunpack.c.l.b16 %v3957
    %v4732 = vunpack.c.h.b16 %v3957
    %v4733 = vunpack.c.l.b16 %v3958
    %v4734 = vunpack.c.h.b16 %v3958
    %v4735 = vunpack.c.l.b16 %v3959
    %v4736 = vunpack.c.h.b16 %v3959
    %v4737 = vunpack.c.l.b16 %v3960
    %v4738 = vunpack.c.h.b16 %v3960
    %v4739 = vunpack.c.l.b16 %v3961
    %v4740 = vunpack.c.h.b16 %v3961
    %v4741 = vunpack.c.l.b16 %v3962
    %v4742 = vunpack.c.h.b16 %v3962
    %v4743 = vunpack.c.l.b16 %v3963
    %v4744 = vunpack.c.h.b16 %v3963
    %v4745 = vunpack.c.l.b16 %v3964
    %v4746 = vunpack.c.h.b16 %v3964
    %v4747 = vunpack.c.l.b16 %v3965
    %v4748 = vunpack.c.h.b16 %v3965
    %v4749 = vunpack.c.l.b16 %v3966
    %v4750 = vunpack.c.h.b16 %v3966
    %v4751 = vunpack.c.l.b16 %v3967
    %v4752 = vunpack.c.h.b16 %v3967
    %v4753 = vunpack.c.l.b16 %v3968
    %v4754 = vunpack.c.h.b16 %v3968
    %v4755 = vunpack.c.l.b16 %v3969
    %v4756 = vunpack.c.h.b16 %v3969
    %v4757 = vunpack.c.l.b16 %v3970
    %v4758 = vunpack.c.h.b16 %v3970
    %v4759 = vunpack.c.l.b16 %v3971
    %v4760 = vunpack.c.h.b16 %v3971
    %v4761 = vunpack.c.l.b16 %v3972
    %v4762 = vunpack.c.h.b16 %v3972
    %v4763 = vunpack.c.l.b16 %v3973
    %v4764 = vunpack.c.h.b16 %v3973
    %v4765 = vunpack.c.l.b16 %v3974
    %v4766 = vunpack.c.h.b16 %v3974
    %v4767 = vunpack.c.l.b16 %v3975
    %v4768 = vunpack.c.h.b16 %v3975
    %v4769 = vunpack.c.l.b16 %v3976
    %v4770 = vunpack.c.h.b16 %v3976
    %v4771 = vunpack.c.l.b16 %v3977
    %v4772 = vunpack.c.h.b16 %v3977
    %v4773 = vunpack.c.l.b16 %v3978
    %v4774 = vunpack.c.h.b16 %v3978
    %v4775 = vunpack.c.l.b16 %v3979
    %v4776 = vunpack.c.h.b16 %v3979
    %v4777 = vunpack.c.l.b16 %v3980
    %v4778 = vunpack.c.h.b16 %v3980
    %v4779 = vunpack.c.l.b16 %v3981
    %v4780 = vunpack.c.h.b16 %v3981
    %v4781 = vunpack.c.l.b16 %v3982
    %v4782 = vunpack.c.h.b16 %v3982
    %v4783 = vunpack.c.l.b16 %v3983
    %v4784 = vunpack.c.h.b16 %v3983
    %v4785 = vunpack.c.l.b16 %v3984
    %v4786 = vunpack.c.h.b16 %v3984
    %v4787 = vunpack.c.l.b16 %v3985
    %v4788 = vunpack.c.h.b16 %v3985
    %v4789 = vunpack.c.l.b16 %v3986
    %v4790 = vunpack.c.h.b16 %v3986
    %v4791 = vunpack.c.l.b16 %v3987
    %v4792 = vunpack.c.h.b16 %v3987
    %v4793 = vunpack.c.l.b16 %v3988
    %v4794 = vunpack.c.h.b16 %v3988
    %v4795 = vunpack.c.l.b16 %v3989
    %v4796 = vunpack.c.h.b16 %v3989
    %v4797 = vunpack.c.l.b16 %v3990
    %v4798 = vunpack.c.h.b16 %v3990
    %v4799 = vunpack.c.l.b16 %v3991
    %v4800 = vunpack.c.h.b16 %v3991
    %v4801 = vunpack.c.l.b16 %v3992
    %v4802 = vunpack.c.h.b16 %v3992
    %v4803 = vpack.c.b16 %v4299, %v4291
    %v4804 = vpack.c.b16 %v4300, %v4292
    %v4805 = vpack.c.b16 %v4301, %v4293
    %v4806 = vpack.c.b16 %v4302, %v4294
    %v4807 = vpack.c.b16 %v4303, %v4295
    %v4808 = vpack.c.b16 %v4304, %v4296
    %v4809 = vpack.c.b16 %v4305, %v4297
    %v4810 = vpack.c.b16 %v4306, %v4298
    %v4811 = vpack.c.b16 %v4315, %v4307
    %v4812 = vpack.c.b16 %v4316, %v4308
    %v4813 = vpack.c.b16 %v4317, %v4309
    %v4814 = vpack.c.b16 %v4318, %v4310
    %v4815 = vpack.c.b16 %v4319, %v4311
    %v4816 = vpack.c.b16 %v4320, %v4312
    %v4817 = vpack.c.b16 %v4321, %v4313
    %v4818 = vpack.c.b16 %v4322, %v4314
    %v4819 = vpack.c.b16 %v4331, %v4323
    %v4820 = vpack.c.b16 %v4332, %v4324
    %v4821 = vpack.c.b16 %v4333, %v4325
    %v4822 = vpack.c.b16 %v4334, %v4326
    %v4823 = vpack.c.b16 %v4335, %v4327
    %v4824 = vpack.c.b16 %v4336, %v4328
    %v4825 = vpack.c.b16 %v4337, %v4329
    %v4826 = vpack.c.b16 %v4338, %v4330
    %v4827 = vpack.c.b16 %v4347, %v4339
    %v4828 = vpack.c.b16 %v4348, %v4340
    %v4829 = vpack.c.b16 %v4349, %v4341
    %v4830 = vpack.c.b16 %v4350, %v4342
    %v4831 = vpack.c.b16 %v4351, %v4343
    %v4832 = vpack.c.b16 %v4352, %v4344
    %v4833 = vpack.c.b16 %v4353, %v4345
    %v4834 = vpack.c.b16 %v4354, %v4346
    %v4835 = vpack.c.b16 %v4363, %v4355
    %v4836 = vpack.c.b16 %v4364, %v4356
    %v4837 = vpack.c.b16 %v4365, %v4357
    %v4838 = vpack.c.b16 %v4366, %v4358
    %v4839 = vpack.c.b16 %v4367, %v4359
    %v4840 = vpack.c.b16 %v4368, %v4360
    %v4841 = vpack.c.b16 %v4369, %v4361
    %v4842 = vpack.c.b16 %v4370, %v4362
    %v4843 = vpack.c.b16 %v4379, %v4371
    %v4844 = vpack.c.b16 %v4380, %v4372
    %v4845 = vpack.c.b16 %v4381, %v4373
    %v4846 = vpack.c.b16 %v4382, %v4374
    %v4847 = vpack.c.b16 %v4383, %v4375
    %v4848 = vpack.c.b16 %v4384, %v4376
    %v4849 = vpack.c.b16 %v4385, %v4377
    %v4850 = vpack.c.b16 %v4386, %v4378
    %v4851 = vpack.c.b16 %v4395, %v4387
    %v4852 = vpack.c.b16 %v4396, %v4388
    %v4853 = vpack.c.b16 %v4397, %v4389
    %v4854 = vpack.c.b16 %v4398, %v4390
    %v4855 = vpack.c.b16 %v4399, %v4391
    %v4856 = vpack.c.b16 %v4400, %v4392
    %v4857 = vpack.c.b16 %v4401, %v4393
    %v4858 = vpack.c.b16 %v4402, %v4394
    %v4859 = vpack.c.b16 %v4411, %v4403
    %v4860 = vpack.c.b16 %v4412, %v4404
    %v4861 = vpack.c.b16 %v4413, %v4405
    %v4862 = vpack.c.b16 %v4414, %v4406
    %v4863 = vpack.c.b16 %v4415, %v4407
    %v4864 = vpack.c.b16 %v4416, %v4408
    %v4865 = vpack.c.b16 %v4417, %v4409
    %v4866 = vpack.c.b16 %v4418, %v4410
    %v4867 = vpack.c.b16 %v4427, %v4419
    %v4868 = vpack.c.b16 %v4428, %v4420
    %v4869 = vpack.c.b16 %v4429, %v4421
    %v4870 = vpack.c.b16 %v4430, %v4422
    %v4871 = vpack.c.b16 %v4431, %v4423
    %v4872 = vpack.c.b16 %v4432, %v4424
    %v4873 = vpack.c.b16 %v4433, %v4425
    %v4874 = vpack.c.b16 %v4434, %v4426
    %v4875 = vpack.c.b16 %v4443, %v4435
    %v4876 = vpack.c.b16 %v4444, %v4436
    %v4877 = vpack.c.b16 %v4445, %v4437
    %v4878 = vpack.c.b16 %v4446, %v4438
    %v4879 = vpack.c.b16 %v4447, %v4439
    %v4880 = vpack.c.b16 %v4448, %v4440
    %v4881 = vpack.c.b16 %v4449, %v4441
    %v4882 = vpack.c.b16 %v4450, %v4442
    %v4883 = vpack.c.b16 %v4459, %v4451
    %v4884 = vpack.c.b16 %v4460, %v4452
    %v4885 = vpack.c.b16 %v4461, %v4453
    %v4886 = vpack.c.b16 %v4462, %v4454
    %v4887 = vpack.c.b16 %v4463, %v4455
    %v4888 = vpack.c.b16 %v4464, %v4456
    %v4889 = vpack.c.b16 %v4465, %v4457
    %v4890 = vpack.c.b16 %v4466, %v4458
    %v4891 = vpack.c.b16 %v4475, %v4467
    %v4892 = vpack.c.b16 %v4476, %v4468
    %v4893 = vpack.c.b16 %v4477, %v4469
    %v4894 = vpack.c.b16 %v4478, %v4470
    %v4895 = vpack.c.b16 %v4479, %v4471
    %v4896 = vpack.c.b16 %v4480, %v4472
    %v4897 = vpack.c.b16 %v4481, %v4473
    %v4898 = vpack.c.b16 %v4482, %v4474
    %v4899 = vpack.c.b16 %v4491, %v4483
    %v4900 = vpack.c.b16 %v4492, %v4484
    %v4901 = vpack.c.b16 %v4493, %v4485
    %v4902 = vpack.c.b16 %v4494, %v4486
    %v4903 = vpack.c.b16 %v4495, %v4487
    %v4904 = vpack.c.b16 %v4496, %v4488
    %v4905 = vpack.c.b16 %v4497, %v4489
    %v4906 = vpack.c.b16 %v4498, %v4490
    %v4907 = vpack.c.b16 %v4507, %v4499
    %v4908 = vpack.c.b16 %v4508, %v4500
    %v4909 = vpack.c.b16 %v4509, %v4501
    %v4910 = vpack.c.b16 %v4510, %v4502
    %v4911 = vpack.c.b16 %v4511, %v4503
    %v4912 = vpack.c.b16 %v4512, %v4504
    %v4913 = vpack.c.b16 %v4513, %v4505
    %v4914 = vpack.c.b16 %v4514, %v4506
    %v4915 = vpack.c.b16 %v4523, %v4515
    %v4916 = vpack.c.b16 %v4524, %v4516
    %v4917 = vpack.c.b16 %v4525, %v4517
    %v4918 = vpack.c.b16 %v4526, %v4518
    %v4919 = vpack.c.b16 %v4527, %v4519
    %v4920 = vpack.c.b16 %v4528, %v4520
    %v4921 = vpack.c.b16 %v4529, %v4521
    %v4922 = vpack.c.b16 %v4530, %v4522
    %v4923 = vpack.c.b16 %v4539, %v4531
    %v4924 = vpack.c.b16 %v4540, %v4532
    %v4925 = vpack.c.b16 %v4541, %v4533
    %v4926 = vpack.c.b16 %v4542, %v4534
    %v4927 = vpack.c.b16 %v4543, %v4535
    %v4928 = vpack.c.b16 %v4544, %v4536
    %v4929 = vpack.c.b16 %v4545, %v4537
    %v4930 = vpack.c.b16 %v4546, %v4538
    %v4931 = vpack.c.b16 %v4555, %v4547
    %v4932 = vpack.c.b16 %v4556, %v4548
    %v4933 = vpack.c.b16 %v4557, %v4549
    %v4934 = vpack.c.b16 %v4558, %v4550
    %v4935 = vpack.c.b16 %v4559, %v4551
    %v4936 = vpack.c.b16 %v4560, %v4552
    %v4937 = vpack.c.b16 %v4561, %v4553
    %v4938 = vpack.c.b16 %v4562, %v4554
    %v4939 = vpack.c.b16 %v4571, %v4563
    %v4940 = vpack.c.b16 %v4572, %v4564
    %v4941 = vpack.c.b16 %v4573, %v4565
    %v4942 = vpack.c.b16 %v4574, %v4566
    %v4943 = vpack.c.b16 %v4575, %v4567
    %v4944 = vpack.c.b16 %v4576, %v4568
    %v4945 = vpack.c.b16 %v4577, %v4569
    %v4946 = vpack.c.b16 %v4578, %v4570
    %v4947 = vpack.c.b16 %v4587, %v4579
    %v4948 = vpack.c.b16 %v4588, %v4580
    %v4949 = vpack.c.b16 %v4589, %v4581
    %v4950 = vpack.c.b16 %v4590, %v4582
    %v4951 = vpack.c.b16 %v4591, %v4583
    %v4952 = vpack.c.b16 %v4592, %v4584
    %v4953 = vpack.c.b16 %v4593, %v4585
    %v4954 = vpack.c.b16 %v4594, %v4586
    %v4955 = vpack.c.b16 %v4603, %v4595
    %v4956 = vpack.c.b16 %v4604, %v4596
    %v4957 = vpack.c.b16 %v4605, %v4597
    %v4958 = vpack.c.b16 %v4606, %v4598
    %v4959 = vpack.c.b16 %v4607, %v4599
    %v4960 = vpack.c.b16 %v4608, %v4600
    %v4961 = vpack.c.b16 %v4609, %v4601
    %v4962 = vpack.c.b16 %v4610, %v4602
    %v4963 = vpack.c.b16 %v4619, %v4611
    %v4964 = vpack.c.b16 %v4620, %v4612
    %v4965 = vpack.c.b16 %v4621, %v4613
    %v4966 = vpack.c.b16 %v4622, %v4614
    %v4967 = vpack.c.b16 %v4623, %v4615
    %v4968 = vpack.c.b16 %v4624, %v4616
    %v4969 = vpack.c.b16 %v4625, %v4617
    %v4970 = vpack.c.b16 %v4626, %v4618
    %v4971 = vpack.c.b16 %v4635, %v4627
    %v4972 = vpack.c.b16 %v4636, %v4628
    %v4973 = vpack.c.b16 %v4637, %v4629
    %v4974 = vpack.c.b16 %v4638, %v4630
    %v4975 = vpack.c.b16 %v4639, %v4631
    %v4976 = vpack.c.b16 %v4640, %v4632
    %v4977 = vpack.c.b16 %v4641, %v4633
    %v4978 = vpack.c.b16 %v4642, %v4634
    %v4979 = vpack.c.b16 %v4651, %v4643
    %v4980 = vpack.c.b16 %v4652, %v4644
    %v4981 = vpack.c.b16 %v4653, %v4645
    %v4982 = vpack.c.b16 %v4654, %v4646
    %v4983 = vpack.c.b16 %v4655, %v4647
    %v4984 = vpack.c.b16 %v4656, %v4648
    %v4985 = vpack.c.b16 %v4657, %v4649
    %v4986 = vpack.c.b16 %v4658, %v4650
    %v4987 = vpack.c.b16 %v4667, %v4659
    %v4988 = vpack.c.b16 %v4668, %v4660
    %v4989 = vpack.c.b16 %v4669, %v4661
    %v4990 = vpack.c.b16 %v4670, %v4662
    %v4991 = vpack.c.b16 %v4671, %v4663
    %v4992 = vpack.c.b16 %v4672, %v4664
    %v4993 = vpack.c.b16 %v4673, %v4665
    %v4994 = vpack.c.b16 %v4674, %v4666
    %v4995 = vpack.c.b16 %v4683, %v4675
    %v4996 = vpack.c.b16 %v4684, %v4676
    %v4997 = vpack.c.b16 %v4685, %v4677
    %v4998 = vpack.c.b16 %v4686, %v4678
    %v4999 = vpack.c.b16 %v4687, %v4679
    %v5000 = vpack.c.b16 %v4688, %v4680
    %v5001 = vpack.c.b16 %v4689, %v4681
    %v5002 = vpack.c.b16 %v4690, %v4682
    %v5003 = vpack.c.b16 %v4699, %v4691
    %v5004 = vpack.c.b16 %v4700, %v4692
    %v5005 = vpack.c.b16 %v4701, %v4693
    %v5006 = vpack.c.b16 %v4702, %v4694
    %v5007 = vpack.c.b16 %v4703, %v4695
    %v5008 = vpack.c.b16 %v4704, %v4696
    %v5009 = vpack.c.b16 %v4705, %v4697
    %v5010 = vpack.c.b16 %v4706, %v4698
    %v5011 = vpack.c.b16 %v4715, %v4707
    %v5012 = vpack.c.b16 %v4716, %v4708
    %v5013 = vpack.c.b16 %v4717, %v4709
    %v5014 = vpack.c.b16 %v4718, %v4710
    %v5015 = vpack.c.b16 %v4719, %v4711
    %v5016 = vpack.c.b16 %v4720, %v4712
    %v5017 = vpack.c.b16 %v4721, %v4713
    %v5018 = vpack.c.b16 %v4722, %v4714
    %v5019 = vpack.c.b16 %v4731, %v4723
    %v5020 = vpack.c.b16 %v4732, %v4724
    %v5021 = vpack.c.b16 %v4733, %v4725
    %v5022 = vpack.c.b16 %v4734, %v4726
    %v5023 = vpack.c.b16 %v4735, %v4727
    %v5024 = vpack.c.b16 %v4736, %v4728
    %v5025 = vpack.c.b16 %v4737, %v4729
    %v5026 = vpack.c.b16 %v4738, %v4730
    %v5027 = vpack.c.b16 %v4747, %v4739
    %v5028 = vpack.c.b16 %v4748, %v4740
    %v5029 = vpack.c.b16 %v4749, %v4741
    %v5030 = vpack.c.b16 %v4750, %v4742
    %v5031 = vpack.c.b16 %v4751, %v4743
    %v5032 = vpack.c.b16 %v4752, %v4744
    %v5033 = vpack.c.b16 %v4753, %v4745
    %v5034 = vpack.c.b16 %v4754, %v4746
    %v5035 = vpack.c.b16 %v4763, %v4755
    %v5036 = vpack.c.b16 %v4764, %v4756
    %v5037 = vpack.c.b16 %v4765, %v4757
    %v5038 = vpack.c.b16 %v4766, %v4758
    %v5039 = vpack.c.b16 %v4767, %v4759
    %v5040 = vpack.c.b16 %v4768, %v4760
    %v5041 = vpack.c.b16 %v4769, %v4761
    %v5042 = vpack.c.b16 %v4770, %v4762
    %v5043 = vpack.c.b16 %v4779, %v4771
    %v5044 = vpack.c.b16 %v4780, %v4772
    %v5045 = vpack.c.b16 %v4781, %v4773
    %v5046 = vpack.c.b16 %v4782, %v4774
    %v5047 = vpack.c.b16 %v4783, %v4775
    %v5048 = vpack.c.b16 %v4784, %v4776
    %v5049 = vpack.c.b16 %v4785, %v4777
    %v5050 = vpack.c.b16 %v4786, %v4778
    %v5051 = vpack.c.b16 %v4795, %v4787
    %v5052 = vpack.c.b16 %v4796, %v4788
    %v5053 = vpack.c.b16 %v4797, %v4789
    %v5054 = vpack.c.b16 %v4798, %v4790
    %v5055 = vpack.c.b16 %v4799, %v4791
    %v5056 = vpack.c.b16 %v4800, %v4792
    %v5057 = vpack.c.b16 %v4801, %v4793
    %v5058 = vpack.c.b16 %v4802, %v4794
    %5315 = vmatprep.subr.bf16.mxu0 %v4804
    %5316 = vmatpush1.bf16.msra.mxu0 %v4803
    %5317 = vmatprep.subr.bf16.mxu0 %v4812
    %5318 = vmatpush1.bf16.msra.mxu0 %v4811
    %5319 = vmatprep.subr.bf16.mxu0 %v4820
    %5320 = vmatpush1.bf16.msra.mxu0 %v4819
    %5321 = vmatprep.subr.bf16.mxu0 %v4828
    %5322 = vmatpush1.bf16.msra.mxu0 %v4827
    %5323 = vmatprep.subr.bf16.mxu0 %v4836
    %5324 = vmatpush1.bf16.msra.mxu0 %v4835
    %5325 = vmatprep.subr.bf16.mxu0 %v4844
    %5326 = vmatpush1.bf16.msra.mxu0 %v4843
    %5327 = vmatprep.subr.bf16.mxu0 %v4852
    %5328 = vmatpush1.bf16.msra.mxu0 %v4851
    %5329 = vmatprep.subr.bf16.mxu0 %v4860
    %5330 = vmatpush1.bf16.msra.mxu0 %v4859
    %5331 = vmatprep.subr.bf16.mxu0 %v4868
    %5332 = vmatpush1.bf16.msra.mxu0 %v4867
    %5333 = vmatprep.subr.bf16.mxu0 %v4876
    %5334 = vmatpush1.bf16.msra.mxu0 %v4875
    %5335 = vmatprep.subr.bf16.mxu0 %v4884
    %5336 = vmatpush1.bf16.msra.mxu0 %v4883
    %5337 = vmatprep.subr.bf16.mxu0 %v4892
    %5338 = vmatpush1.bf16.msra.mxu0 %v4891
    %5339 = vmatprep.subr.bf16.mxu0 %v4900
    %5340 = vmatpush1.bf16.msra.mxu0 %v4899
    %5341 = vmatprep.subr.bf16.mxu0 %v4908
    %5342 = vmatpush1.bf16.msra.mxu0 %v4907
    %5343 = vmatprep.subr.bf16.mxu0 %v4916
    %5344 = vmatpush1.bf16.msra.mxu0 %v4915
    %5345 = vmatprep.subr.bf16.mxu0 %v4924
    %5346 = vmatpush1.bf16.msra.mxu0 %v4923
    %5347 = vmatprep.mubr.bf16.mxu0 %v3734
    %5348 = vmatmul.mubr.bf16.gmra.mrb[0].mxu0 %v3733
    %v5349 = vpop.f32.mrb[0].mxu0
    %v5350 = vadd.f32 %v3998, %v5349
    %v5351 = vpop.f32.mrb[0].mxu0
    %v5352 = vadd.f32 %v4002, %v5351
    %v5353 = vpop.f32.mrb[0].mxu0
    %v5354 = vpop.f32.mrb[0].mxu0
    %5355 = vdwg.mxu0
    %5356 = vmatprep.subr.bf16.mxu0 %v4932
    %5357 = vmatpush1.bf16.msra.mxu0 %v4931
    %5358 = vmatprep.subr.bf16.mxu0 %v4940
    %5359 = vmatpush1.bf16.msra.mxu0 %v4939
    %5360 = vmatprep.subr.bf16.mxu0 %v4948
    %5361 = vmatpush1.bf16.msra.mxu0 %v4947
    %5362 = vmatprep.subr.bf16.mxu0 %v4956
    %5363 = vmatpush1.bf16.msra.mxu0 %v4955
    %5364 = vmatprep.subr.bf16.mxu0 %v4964
    %5365 = vmatpush1.bf16.msra.mxu0 %v4963
    %5366 = vmatprep.subr.bf16.mxu0 %v4972
    %5367 = vmatpush1.bf16.msra.mxu0 %v4971
    %5368 = vmatprep.subr.bf16.mxu0 %v4980
    %5369 = vmatpush1.bf16.msra.mxu0 %v4979
    %5370 = vmatprep.subr.bf16.mxu0 %v4988
    %5371 = vmatpush1.bf16.msra.mxu0 %v4987
    %5372 = vmatprep.subr.bf16.mxu0 %v4996
    %5373 = vmatpush1.bf16.msra.mxu0 %v4995
    %5374 = vmatprep.subr.bf16.mxu0 %v5004
    %5375 = vmatpush1.bf16.msra.mxu0 %v5003
    %5376 = vmatprep.subr.bf16.mxu0 %v5012
    %5377 = vmatpush1.bf16.msra.mxu0 %v5011
    %5378 = vmatprep.subr.bf16.mxu0 %v5020
    %5379 = vmatpush1.bf16.msra.mxu0 %v5019
    %5380 = vmatprep.subr.bf16.mxu0 %v5028
    %5381 = vmatpush1.bf16.msra.mxu0 %v5027
    %5382 = vmatprep.subr.bf16.mxu0 %v5036
    %5383 = vmatpush1.bf16.msra.mxu0 %v5035
    %5384 = vmatprep.subr.bf16.mxu0 %v5044
    %5385 = vmatpush1.bf16.msra.mxu0 %v5043
    %5386 = vmatprep.subr.bf16.mxu0 %v5052
    %5387 = vmatpush1.bf16.msra.mxu0 %v5051
    %5388 = vmatprep.mubr.bf16.mxu0 %v3736
    %5389 = vmatmul.mubr.bf16.gmra.mrb[0].mxu0 %v3735
    %v5390 = vpop.f32.mrb[0].mxu0
    %v5391 = vadd.f32 %v5350, %v5390
    %v5392 = vpop.f32.mrb[0].mxu0
    %v5393 = vadd.f32 %v5352, %v5392
    %v5394 = vpop.f32.mrb[0].mxu0
    %v5395 = vpop.f32.mrb[0].mxu0
    %5396 = vdwg.mxu0
    %5397 = vmatprep.subr.bf16.mxu0 %v4806
    %5398 = vmatpush1.bf16.msra.mxu0 %v4805
    %5399 = vmatprep.subr.bf16.mxu0 %v4814
    %5400 = vmatpush1.bf16.msra.mxu0 %v4813
    %5401 = vmatprep.subr.bf16.mxu0 %v4822
    %5402 = vmatpush1.bf16.msra.mxu0 %v4821
    %5403 = vmatprep.subr.bf16.mxu0 %v4830
    %5404 = vmatpush1.bf16.msra.mxu0 %v4829
    %5405 = vmatprep.subr.bf16.mxu0 %v4838
    %5406 = vmatpush1.bf16.msra.mxu0 %v4837
    %5407 = vmatprep.subr.bf16.mxu0 %v4846
    %5408 = vmatpush1.bf16.msra.mxu0 %v4845
    %5409 = vmatprep.subr.bf16.mxu0 %v4854
    %5410 = vmatpush1.bf16.msra.mxu0 %v4853
    %5411 = vmatprep.subr.bf16.mxu0 %v4862
    %5412 = vmatpush1.bf16.msra.mxu0 %v4861
    %5413 = vmatprep.subr.bf16.mxu0 %v4870
    %5414 = vmatpush1.bf16.msra.mxu0 %v4869
    %5415 = vmatprep.subr.bf16.mxu0 %v4878
    %5416 = vmatpush1.bf16.msra.mxu0 %v4877
    %5417 = vmatprep.subr.bf16.mxu0 %v4886
    %5418 = vmatpush1.bf16.msra.mxu0 %v4885
    %5419 = vmatprep.subr.bf16.mxu0 %v4894
    %5420 = vmatpush1.bf16.msra.mxu0 %v4893
    %5421 = vmatprep.subr.bf16.mxu0 %v4902
    %5422 = vmatpush1.bf16.msra.mxu0 %v4901
    %5423 = vmatprep.subr.bf16.mxu0 %v4910
    %5424 = vmatpush1.bf16.msra.mxu0 %v4909
    %5425 = vmatprep.subr.bf16.mxu0 %v4918
    %5426 = vmatpush1.bf16.msra.mxu0 %v4917
    %5427 = vmatprep.subr.bf16.mxu0 %v4926
    %5428 = vmatpush1.bf16.msra.mxu0 %v4925
    %5429 = vmatprep.mubr.bf16.mxu0 %v3734
    %5430 = vmatmul.mubr.bf16.gmra.mrb[0].mxu0 %v3733
    %v5431 = vpop.f32.mrb[0].mxu0
    %v5432 = vadd.f32 %v4006, %v5431
    %v5433 = vpop.f32.mrb[0].mxu0
    %v5434 = vadd.f32 %v4010, %v5433
    %v5435 = vpop.f32.mrb[0].mxu0
    %v5436 = vpop.f32.mrb[0].mxu0
    %5437 = vdwg.mxu0
    %5438 = vmatprep.subr.bf16.mxu0 %v4934
    %5439 = vmatpush1.bf16.msra.mxu0 %v4933
    %5440 = vmatprep.subr.bf16.mxu0 %v4942
    %5441 = vmatpush1.bf16.msra.mxu0 %v4941
    %5442 = vmatprep.subr.bf16.mxu0 %v4950
    %5443 = vmatpush1.bf16.msra.mxu0 %v4949
    %5444 = vmatprep.subr.bf16.mxu0 %v4958
    %5445 = vmatpush1.bf16.msra.mxu0 %v4957
    %5446 = vmatprep.subr.bf16.mxu0 %v4966
    %5447 = vmatpush1.bf16.msra.mxu0 %v4965
    %5448 = vmatprep.subr.bf16.mxu0 %v4974
    %5449 = vmatpush1.bf16.msra.mxu0 %v4973
    %5450 = vmatprep.subr.bf16.mxu0 %v4982
    %5451 = vmatpush1.bf16.msra.mxu0 %v4981
    %5452 = vmatprep.subr.bf16.mxu0 %v4990
    %5453 = vmatpush1.bf16.msra.mxu0 %v4989
    %5454 = vmatprep.subr.bf16.mxu0 %v4998
    %5455 = vmatpush1.bf16.msra.mxu0 %v4997
    %5456 = vmatprep.subr.bf16.mxu0 %v5006
    %5457 = vmatpush1.bf16.msra.mxu0 %v5005
    %5458 = vmatprep.subr.bf16.mxu0 %v5014
    %5459 = vmatpush1.bf16.msra.mxu0 %v5013
    %5460 = vmatprep.subr.bf16.mxu0 %v5022
    %5461 = vmatpush1.bf16.msra.mxu0 %v5021
    %5462 = vmatprep.subr.bf16.mxu0 %v5030
    %5463 = vmatpush1.bf16.msra.mxu0 %v5029
    %5464 = vmatprep.subr.bf16.mxu0 %v5038
    %5465 = vmatpush1.bf16.msra.mxu0 %v5037
    %5466 = vmatprep.subr.bf16.mxu0 %v5046
    %5467 = vmatpush1.bf16.msra.mxu0 %v5045
    %5468 = vmatprep.subr.bf16.mxu0 %v5054
    %5469 = vmatpush1.bf16.msra.mxu0 %v5053
    %5470 = vmatprep.mubr.bf16.mxu0 %v3736
    %5471 = vmatmul.mubr.bf16.gmra.mrb[0].mxu0 %v3735
    %v5472 = vpop.f32.mrb[0].mxu0
    %v5473 = vadd.f32 %v5432, %v5472
    %v5474 = vpop.f32.mrb[0].mxu0
    %v5475 = vadd.f32 %v5434, %v5474
    %v5476 = vpop.f32.mrb[0].mxu0
    %v5477 = vpop.f32.mrb[0].mxu0
    %5478 = vdwg.mxu0
    %5479 = vmatprep.subr.bf16.mxu0 %v4808
    %5480 = vmatpush1.bf16.msra.mxu0 %v4807
    %5481 = vmatprep.subr.bf16.mxu0 %v4816
    %5482 = vmatpush1.bf16.msra.mxu0 %v4815
    %5483 = vmatprep.subr.bf16.mxu0 %v4824
    %5484 = vmatpush1.bf16.msra.mxu0 %v4823
    %5485 = vmatprep.subr.bf16.mxu0 %v4832
    %5486 = vmatpush1.bf16.msra.mxu0 %v4831
    %5487 = vmatprep.subr.bf16.mxu0 %v4840
    %5488 = vmatpush1.bf16.msra.mxu0 %v4839
    %5489 = vmatprep.subr.bf16.mxu0 %v4848
    %5490 = vmatpush1.bf16.msra.mxu0 %v4847
    %5491 = vmatprep.subr.bf16.mxu0 %v4856
    %5492 = vmatpush1.bf16.msra.mxu0 %v4855
    %5493 = vmatprep.subr.bf16.mxu0 %v4864
    %5494 = vmatpush1.bf16.msra.mxu0 %v4863
    %5495 = vmatprep.subr.bf16.mxu0 %v4872
    %5496 = vmatpush1.bf16.msra.mxu0 %v4871
    %5497 = vmatprep.subr.bf16.mxu0 %v4880
    %5498 = vmatpush1.bf16.msra.mxu0 %v4879
    %5499 = vmatprep.subr.bf16.mxu0 %v4888
    %5500 = vmatpush1.bf16.msra.mxu0 %v4887
    %5501 = vmatprep.subr.bf16.mxu0 %v4896
    %5502 = vmatpush1.bf16.msra.mxu0 %v4895
    %5503 = vmatprep.subr.bf16.mxu0 %v4904
    %5504 = vmatpush1.bf16.msra.mxu0 %v4903
    %5505 = vmatprep.subr.bf16.mxu0 %v4912
    %5506 = vmatpush1.bf16.msra.mxu0 %v4911
    %5507 = vmatprep.subr.bf16.mxu0 %v4920
    %5508 = vmatpush1.bf16.msra.mxu0 %v4919
    %5509 = vmatprep.subr.bf16.mxu0 %v4928
    %5510 = vmatpush1.bf16.msra.mxu0 %v4927
    %5511 = vmatprep.mubr.bf16.mxu0 %v3734
    %5512 = vmatmul.mubr.bf16.gmra.mrb[0].mxu0 %v3733
    %v5513 = vpop.f32.mrb[0].mxu0
    %v5514 = vadd.f32 %v4014, %v5513
    %v5515 = vpop.f32.mrb[0].mxu0
    %v5516 = vadd.f32 %v4018, %v5515
    %v5517 = vpop.f32.mrb[0].mxu0
    %v5518 = vpop.f32.mrb[0].mxu0
    %5519 = vdwg.mxu0
    %5520 = vmatprep.subr.bf16.mxu0 %v4936
    %5521 = vmatpush1.bf16.msra.mxu0 %v4935
    %5522 = vmatprep.subr.bf16.mxu0 %v4944
    %5523 = vmatpush1.bf16.msra.mxu0 %v4943
    %5524 = vmatprep.subr.bf16.mxu0 %v4952
    %5525 = vmatpush1.bf16.msra.mxu0 %v4951
    %5526 = vmatprep.subr.bf16.mxu0 %v4960
    %5527 = vmatpush1.bf16.msra.mxu0 %v4959
    %5528 = vmatprep.subr.bf16.mxu0 %v4968
    %5529 = vmatpush1.bf16.msra.mxu0 %v4967
    %5530 = vmatprep.subr.bf16.mxu0 %v4976
    %5531 = vmatpush1.bf16.msra.mxu0 %v4975
    %5532 = vmatprep.subr.bf16.mxu0 %v4984
    %5533 = vmatpush1.bf16.msra.mxu0 %v4983
    %5534 = vmatprep.subr.bf16.mxu0 %v4992
    %5535 = vmatpush1.bf16.msra.mxu0 %v4991
    %5536 = vmatprep.subr.bf16.mxu0 %v5000
    %5537 = vmatpush1.bf16.msra.mxu0 %v4999
    %5538 = vmatprep.subr.bf16.mxu0 %v5008
    %5539 = vmatpush1.bf16.msra.mxu0 %v5007
    %5540 = vmatprep.subr.bf16.mxu0 %v5016
    %5541 = vmatpush1.bf16.msra.mxu0 %v5015
    %5542 = vmatprep.subr.bf16.mxu0 %v5024
    %5543 = vmatpush1.bf16.msra.mxu0 %v5023
    %5544 = vmatprep.subr.bf16.mxu0 %v5032
    %5545 = vmatpush1.bf16.msra.mxu0 %v5031
    %5546 = vmatprep.subr.bf16.mxu0 %v5040
    %5547 = vmatpush1.bf16.msra.mxu0 %v5039
    %5548 = vmatprep.subr.bf16.mxu0 %v5048
    %5549 = vmatpush1.bf16.msra.mxu0 %v5047
    %5550 = vmatprep.subr.bf16.mxu0 %v5056
    %5551 = vmatpush1.bf16.msra.mxu0 %v5055
    %5552 = vmatprep.mubr.bf16.mxu0 %v3736
    %5553 = vmatmul.mubr.bf16.gmra.mrb[0].mxu0 %v3735
    %v5554 = vpop.f32.mrb[0].mxu0
    %v5555 = vadd.f32 %v5514, %v5554
    %v5556 = vpop.f32.mrb[0].mxu0
    %v5557 = vadd.f32 %v5516, %v5556
    %v5558 = vpop.f32.mrb[0].mxu0
    %v5559 = vpop.f32.mrb[0].mxu0
    %5560 = vdwg.mxu0
    %5561 = vmatprep.subr.bf16.mxu0 %v4810
    %5562 = vmatpush1.bf16.msra.mxu0 %v4809
    %5563 = vmatprep.subr.bf16.mxu0 %v4818
    %5564 = vmatpush1.bf16.msra.mxu0 %v4817
    %5565 = vmatprep.subr.bf16.mxu0 %v4826
    %5566 = vmatpush1.bf16.msra.mxu0 %v4825
    %5567 = vmatprep.subr.bf16.mxu0 %v4834
    %5568 = vmatpush1.bf16.msra.mxu0 %v4833
    %5569 = vmatprep.subr.bf16.mxu0 %v4842
    %5570 = vmatpush1.bf16.msra.mxu0 %v4841
    %5571 = vmatprep.subr.bf16.mxu0 %v4850
    %5572 = vmatpush1.bf16.msra.mxu0 %v4849
    %5573 = vmatprep.subr.bf16.mxu0 %v4858
    %5574 = vmatpush1.bf16.msra.mxu0 %v4857
    %5575 = vmatprep.subr.bf16.mxu0 %v4866
    %5576 = vmatpush1.bf16.msra.mxu0 %v4865
    %5577 = vmatprep.subr.bf16.mxu0 %v4874
    %5578 = vmatpush1.bf16.msra.mxu0 %v4873
    %5579 = vmatprep.subr.bf16.mxu0 %v4882
    %5580 = vmatpush1.bf16.msra.mxu0 %v4881
    %5581 = vmatprep.subr.bf16.mxu0 %v4890
    %5582 = vmatpush1.bf16.msra.mxu0 %v4889
    %5583 = vmatprep.subr.bf16.mxu0 %v4898
    %5584 = vmatpush1.bf16.msra.mxu0 %v4897
    %5585 = vmatprep.subr.bf16.mxu0 %v4906
    %5586 = vmatpush1.bf16.msra.mxu0 %v4905
    %5587 = vmatprep.subr.bf16.mxu0 %v4914
    %5588 = vmatpush1.bf16.msra.mxu0 %v4913
    %5589 = vmatprep.subr.bf16.mxu0 %v4922
    %5590 = vmatpush1.bf16.msra.mxu0 %v4921
    %5591 = vmatprep.subr.bf16.mxu0 %v4930
    %5592 = vmatpush1.bf16.msra.mxu0 %v4929
    %5593 = vmatprep.mubr.bf16.mxu0 %v3734
    %5594 = vmatmul.mubr.bf16.gmra.mrb[0].mxu0 %v3733
    %v5595 = vpop.f32.mrb[0].mxu0
    %v5596 = vadd.f32 %v4022, %v5595
    %v5597 = vpop.f32.mrb[0].mxu0
    %v5598 = vadd.f32 %v4026, %v5597
    %v5599 = vpop.f32.mrb[0].mxu0
    %v5600 = vpop.f32.mrb[0].mxu0
    %5601 = vdwg.mxu0
    %5602 = vmatprep.subr.bf16.mxu0 %v4938
    %5603 = vmatpush1.bf16.msra.mxu0 %v4937
    %5604 = vmatprep.subr.bf16.mxu0 %v4946
    %5605 = vmatpush1.bf16.msra.mxu0 %v4945
    %5606 = vmatprep.subr.bf16.mxu0 %v4954
    %5607 = vmatpush1.bf16.msra.mxu0 %v4953
    %5608 = vmatprep.subr.bf16.mxu0 %v4962
    %5609 = vmatpush1.bf16.msra.mxu0 %v4961
    %5610 = vmatprep.subr.bf16.mxu0 %v4970
    %5611 = vmatpush1.bf16.msra.mxu0 %v4969
    %5612 = vmatprep.subr.bf16.mxu0 %v4978
    %5613 = vmatpush1.bf16.msra.mxu0 %v4977
    %5614 = vmatprep.subr.bf16.mxu0 %v4986
    %5615 = vmatpush1.bf16.msra.mxu0 %v4985
    %5616 = vmatprep.subr.bf16.mxu0 %v4994
    %5617 = vmatpush1.bf16.msra.mxu0 %v4993
    %5618 = vmatprep.subr.bf16.mxu0 %v5002
    %5619 = vmatpush1.bf16.msra.mxu0 %v5001
    %5620 = vmatprep.subr.bf16.mxu0 %v5010
    %5621 = vmatpush1.bf16.msra.mxu0 %v5009
    %5622 = vmatprep.subr.bf16.mxu0 %v5018
    %5623 = vmatpush1.bf16.msra.mxu0 %v5017
    %5624 = vmatprep.subr.bf16.mxu0 %v5026
    %5625 = vmatpush1.bf16.msra.mxu0 %v5025
    %5626 = vmatprep.subr.bf16.mxu0 %v5034
    %5627 = vmatpush1.bf16.msra.mxu0 %v5033
    %5628 = vmatprep.subr.bf16.mxu0 %v5042
    %5629 = vmatpush1.bf16.msra.mxu0 %v5041
    %5630 = vmatprep.subr.bf16.mxu0 %v5050
    %5631 = vmatpush1.bf16.msra.mxu0 %v5049
    %5632 = vmatprep.subr.bf16.mxu0 %v5058
    %5633 = vmatpush1.bf16.msra.mxu0 %v5057
    %5634 = vmatprep.mubr.bf16.mxu0 %v3736
    %5635 = vmatmul.mubr.bf16.gmra.mrb[0].mxu0 %v3735
    %v5636 = vpop.f32.mrb[0].mxu0
    %v5637 = vadd.f32 %v5596, %v5636
    %v5638 = vpop.f32.mrb[0].mxu0
    %v5639 = vadd.f32 %v5598, %v5638
    %v5640 = vpop.f32.mrb[0].mxu0
    %v5641 = vpop.f32.mrb[0].mxu0
    %5642 = vdwg.mxu0
    %v5643 = vmax.f32 %v5391, 0.0
    %v5644 = vmax.f32 %v5393, 0.0
    %v5645 = vmax.f32 %v5473, 0.0
    %v5646 = vmax.f32 %v5475, 0.0
    %v5647 = vmax.f32 %v5555, 0.0
    %v5648 = vmax.f32 %v5557, 0.0
    %v5649 = vmax.f32 %v5637, 0.0
    %v5650 = vmax.f32 %v5639, 0.0
    %5651 = vst [vmem:[%s16] sm:$0xff] %v5643
    %5652 = vst [vmem:[%s16 + $0x8] sm:$0xff] %v5644
    %5653 = vst [vmem:[%s16 + $0x10] sm:$0xff] %v5645
    %5654 = vst [vmem:[%s16 + $0x18] sm:$0xff] %v5646
    %5655 = vst [vmem:[%s16 + $0x20] sm:$0xff] %v5647
    %5656 = vst [vmem:[%s16 + $0x28] sm:$0xff] %v5648
    %5657 = vst [vmem:[%s16 + $0x30] sm:$0xff] %v5649
    %5658 = vst [vmem:[%s16 + $0x38] sm:$0xff] %v5650
    %v5659 = vpack.c.bf16 %v5643, %v5643
    %v5660 = vpack.c.bf16 %v5644, %v5644
    %v5661 = vpack.c.bf16 %v5645, %v5645
    %v5662 = vpack.c.bf16 %v5646, %v5646
    %v5663 = vpack.c.bf16 %v5647, %v5647
    %v5664 = vpack.c.bf16 %v5648, %v5648
    %v5665 = vpack.c.bf16 %v5649, %v5649
    %v5666 = vpack.c.bf16 %v5650, %v5650
    %v5667 = vld [vmem:[#allocation18] sm:$0xff]
    %v5668 = vld [vmem:[#allocation18 + $0x8] sm:$0xff]
    %v5669 = vld [vmem:[#allocation18 + $0x10] sm:$0xff]
    %v5670 = vld [vmem:[#allocation18 + $0x18] sm:$0xff]
    %v5671 = vld [vmem:[#allocation18 + $0x20] sm:$0xff]
    %v5672 = vld [vmem:[#allocation18 + $0x28] sm:$0xff]
    %v5673 = vld [vmem:[#allocation18 + $0x30] sm:$0xff]
    %v5674 = vld [vmem:[#allocation18 + $0x38] sm:$0xff]
    %v5675 = vld [vmem:[#allocation18 + $0x40] sm:$0xff]
    %v5676 = vld [vmem:[#allocation18 + $0x48] sm:$0xff]
    %v5677 = vld [vmem:[#allocation18 + $0x50] sm:$0xff]
    %v5678 = vld [vmem:[#allocation18 + $0x58] sm:$0xff]
    %v5679 = vld [vmem:[#allocation18 + $0x60] sm:$0xff]
    %v5680 = vld [vmem:[#allocation18 + $0x68] sm:$0xff]
    %v5681 = vld [vmem:[#allocation18 + $0x70] sm:$0xff]
    %v5682 = vld [vmem:[#allocation18 + $0x78] sm:$0xff]
    %v5683 = vld [vmem:[#allocation18 + $0x80] sm:$0xff]
    %v5684 = vld [vmem:[#allocation18 + $0x88] sm:$0xff]
    %v5685 = vld [vmem:[#allocation18 + $0x90] sm:$0xff]
    %v5686 = vld [vmem:[#allocation18 + $0x98] sm:$0xff]
    %v5687 = vld [vmem:[#allocation18 + $0xa0] sm:$0xff]
    %v5688 = vld [vmem:[#allocation18 + $0xa8] sm:$0xff]
    %v5689 = vld [vmem:[#allocation18 + $0xb0] sm:$0xff]
    %v5690 = vld [vmem:[#allocation18 + $0xb8] sm:$0xff]
    %v5691 = vld [vmem:[#allocation18 + $0xc0] sm:$0xff]
    %v5692 = vld [vmem:[#allocation18 + $0xc8] sm:$0xff]
    %v5693 = vld [vmem:[#allocation18 + $0xd0] sm:$0xff]
    %v5694 = vld [vmem:[#allocation18 + $0xd8] sm:$0xff]
    %v5695 = vld [vmem:[#allocation18 + $0xe0] sm:$0xff]
    %v5696 = vld [vmem:[#allocation18 + $0xe8] sm:$0xff]
    %v5697 = vld [vmem:[#allocation18 + $0xf0] sm:$0xff]
    %v5698 = vld [vmem:[#allocation18 + $0xf8] sm:$0xff]
    %v5699 = vld [vmem:[#allocation18 + $0x100] sm:$0xff]
    %v5700 = vld [vmem:[#allocation18 + $0x108] sm:$0xff]
    %v5701 = vld [vmem:[#allocation18 + $0x110] sm:$0xff]
    %v5702 = vld [vmem:[#allocation18 + $0x118] sm:$0xff]
    %v5703 = vld [vmem:[#allocation18 + $0x120] sm:$0xff]
    %v5704 = vld [vmem:[#allocation18 + $0x128] sm:$0xff]
    %v5705 = vld [vmem:[#allocation18 + $0x130] sm:$0xff]
    %v5706 = vld [vmem:[#allocation18 + $0x138] sm:$0xff]
    %v5707 = vld [vmem:[#allocation18 + $0x140] sm:$0xff]
    %v5708 = vld [vmem:[#allocation18 + $0x148] sm:$0xff]
    %v5709 = vld [vmem:[#allocation18 + $0x150] sm:$0xff]
    %v5710 = vld [vmem:[#allocation18 + $0x158] sm:$0xff]
    %v5711 = vld [vmem:[#allocation18 + $0x160] sm:$0xff]
    %v5712 = vld [vmem:[#allocation18 + $0x168] sm:$0xff]
    %v5713 = vld [vmem:[#allocation18 + $0x170] sm:$0xff]
    %v5714 = vld [vmem:[#allocation18 + $0x178] sm:$0xff]
    %v5715 = vld [vmem:[#allocation18 + $0x180] sm:$0xff]
    %v5716 = vld [vmem:[#allocation18 + $0x188] sm:$0xff]
    %v5717 = vld [vmem:[#allocation18 + $0x190] sm:$0xff]
    %v5718 = vld [vmem:[#allocation18 + $0x198] sm:$0xff]
    %v5719 = vld [vmem:[#allocation18 + $0x1a0] sm:$0xff]
    %v5720 = vld [vmem:[#allocation18 + $0x1a8] sm:$0xff]
    %v5721 = vld [vmem:[#allocation18 + $0x1b0] sm:$0xff]
    %v5722 = vld [vmem:[#allocation18 + $0x1b8] sm:$0xff]
    %v5723 = vld [vmem:[#allocation18 + $0x1c0] sm:$0xff]
    %v5724 = vld [vmem:[#allocation18 + $0x1c8] sm:$0xff]
    %v5725 = vld [vmem:[#allocation18 + $0x1d0] sm:$0xff]
    %v5726 = vld [vmem:[#allocation18 + $0x1d8] sm:$0xff]
    %v5727 = vld [vmem:[#allocation18 + $0x1e0] sm:$0xff]
    %v5728 = vld [vmem:[#allocation18 + $0x1e8] sm:$0xff]
    %v5729 = vld [vmem:[#allocation18 + $0x1f0] sm:$0xff]
    %v5730 = vld [vmem:[#allocation18 + $0x1f8] sm:$0xff]
    %v5731 = vld [vmem:[#allocation18 + $0x200] sm:$0xff]
    %v5732 = vld [vmem:[#allocation18 + $0x208] sm:$0xff]
    %v5733 = vld [vmem:[#allocation18 + $0x210] sm:$0xff]
    %v5734 = vld [vmem:[#allocation18 + $0x218] sm:$0xff]
    %v5735 = vld [vmem:[#allocation18 + $0x220] sm:$0xff]
    %v5736 = vld [vmem:[#allocation18 + $0x228] sm:$0xff]
    %v5737 = vld [vmem:[#allocation18 + $0x230] sm:$0xff]
    %v5738 = vld [vmem:[#allocation18 + $0x238] sm:$0xff]
    %v5739 = vld [vmem:[#allocation18 + $0x240] sm:$0xff]
    %v5740 = vld [vmem:[#allocation18 + $0x248] sm:$0xff]
    %v5741 = vld [vmem:[#allocation18 + $0x250] sm:$0xff]
    %v5742 = vld [vmem:[#allocation18 + $0x258] sm:$0xff]
    %v5743 = vld [vmem:[#allocation18 + $0x260] sm:$0xff]
    %v5744 = vld [vmem:[#allocation18 + $0x268] sm:$0xff]
    %v5745 = vld [vmem:[#allocation18 + $0x270] sm:$0xff]
    %v5746 = vld [vmem:[#allocation18 + $0x278] sm:$0xff]
    %v5747 = vld [vmem:[#allocation18 + $0x280] sm:$0xff]
    %v5748 = vld [vmem:[#allocation18 + $0x288] sm:$0xff]
    %v5749 = vld [vmem:[#allocation18 + $0x290] sm:$0xff]
    %v5750 = vld [vmem:[#allocation18 + $0x298] sm:$0xff]
    %v5751 = vld [vmem:[#allocation18 + $0x2a0] sm:$0xff]
    %v5752 = vld [vmem:[#allocation18 + $0x2a8] sm:$0xff]
    %v5753 = vld [vmem:[#allocation18 + $0x2b0] sm:$0xff]
    %v5754 = vld [vmem:[#allocation18 + $0x2b8] sm:$0xff]
    %v5755 = vld [vmem:[#allocation18 + $0x2c0] sm:$0xff]
    %v5756 = vld [vmem:[#allocation18 + $0x2c8] sm:$0xff]
    %v5757 = vld [vmem:[#allocation18 + $0x2d0] sm:$0xff]
    %v5758 = vld [vmem:[#allocation18 + $0x2d8] sm:$0xff]
    %v5759 = vld [vmem:[#allocation18 + $0x2e0] sm:$0xff]
    %v5760 = vld [vmem:[#allocation18 + $0x2e8] sm:$0xff]
    %v5761 = vld [vmem:[#allocation18 + $0x2f0] sm:$0xff]
    %v5762 = vld [vmem:[#allocation18 + $0x2f8] sm:$0xff]
    %v5763 = vld [vmem:[#allocation18 + $0x300] sm:$0xff]
    %v5764 = vld [vmem:[#allocation18 + $0x308] sm:$0xff]
    %v5765 = vld [vmem:[#allocation18 + $0x310] sm:$0xff]
    %v5766 = vld [vmem:[#allocation18 + $0x318] sm:$0xff]
    %v5767 = vld [vmem:[#allocation18 + $0x320] sm:$0xff]
    %v5768 = vld [vmem:[#allocation18 + $0x328] sm:$0xff]
    %v5769 = vld [vmem:[#allocation18 + $0x330] sm:$0xff]
    %v5770 = vld [vmem:[#allocation18 + $0x338] sm:$0xff]
    %v5771 = vld [vmem:[#allocation18 + $0x340] sm:$0xff]
    %v5772 = vld [vmem:[#allocation18 + $0x348] sm:$0xff]
    %v5773 = vld [vmem:[#allocation18 + $0x350] sm:$0xff]
    %v5774 = vld [vmem:[#allocation18 + $0x358] sm:$0xff]
    %v5775 = vld [vmem:[#allocation18 + $0x360] sm:$0xff]
    %v5776 = vld [vmem:[#allocation18 + $0x368] sm:$0xff]
    %v5777 = vld [vmem:[#allocation18 + $0x370] sm:$0xff]
    %v5778 = vld [vmem:[#allocation18 + $0x378] sm:$0xff]
    %v5779 = vld [vmem:[#allocation18 + $0x380] sm:$0xff]
    %v5780 = vld [vmem:[#allocation18 + $0x388] sm:$0xff]
    %v5781 = vld [vmem:[#allocation18 + $0x390] sm:$0xff]
    %v5782 = vld [vmem:[#allocation18 + $0x398] sm:$0xff]
    %v5783 = vld [vmem:[#allocation18 + $0x3a0] sm:$0xff]
    %v5784 = vld [vmem:[#allocation18 + $0x3a8] sm:$0xff]
    %v5785 = vld [vmem:[#allocation18 + $0x3b0] sm:$0xff]
    %v5786 = vld [vmem:[#allocation18 + $0x3b8] sm:$0xff]
    %v5787 = vld [vmem:[#allocation18 + $0x3c0] sm:$0xff]
    %v5788 = vld [vmem:[#allocation18 + $0x3c8] sm:$0xff]
    %v5789 = vld [vmem:[#allocation18 + $0x3d0] sm:$0xff]
    %v5790 = vld [vmem:[#allocation18 + $0x3d8] sm:$0xff]
    %v5791 = vld [vmem:[#allocation18 + $0x3e0] sm:$0xff]
    %v5792 = vld [vmem:[#allocation18 + $0x3e8] sm:$0xff]
    %v5793 = vld [vmem:[#allocation18 + $0x3f0] sm:$0xff]
    %v5794 = vld [vmem:[#allocation18 + $0x3f8] sm:$0xff]
    %v5795 = vld [vmem:[#allocation18 + $0x400] sm:$0xff]
    %v5796 = vld [vmem:[#allocation18 + $0x408] sm:$0xff]
    %v5797 = vld [vmem:[#allocation18 + $0x410] sm:$0xff]
    %v5798 = vld [vmem:[#allocation18 + $0x418] sm:$0xff]
    %v5799 = vld [vmem:[#allocation18 + $0x420] sm:$0xff]
    %v5800 = vld [vmem:[#allocation18 + $0x428] sm:$0xff]
    %v5801 = vld [vmem:[#allocation18 + $0x430] sm:$0xff]
    %v5802 = vld [vmem:[#allocation18 + $0x438] sm:$0xff]
    %v5803 = vld [vmem:[#allocation18 + $0x440] sm:$0xff]
    %v5804 = vld [vmem:[#allocation18 + $0x448] sm:$0xff]
    %v5805 = vld [vmem:[#allocation18 + $0x450] sm:$0xff]
    %v5806 = vld [vmem:[#allocation18 + $0x458] sm:$0xff]
    %v5807 = vld [vmem:[#allocation18 + $0x460] sm:$0xff]
    %v5808 = vld [vmem:[#allocation18 + $0x468] sm:$0xff]
    %v5809 = vld [vmem:[#allocation18 + $0x470] sm:$0xff]
    %v5810 = vld [vmem:[#allocation18 + $0x478] sm:$0xff]
    %v5811 = vld [vmem:[#allocation18 + $0x480] sm:$0xff]
    %v5812 = vld [vmem:[#allocation18 + $0x488] sm:$0xff]
    %v5813 = vld [vmem:[#allocation18 + $0x490] sm:$0xff]
    %v5814 = vld [vmem:[#allocation18 + $0x498] sm:$0xff]
    %v5815 = vld [vmem:[#allocation18 + $0x4a0] sm:$0xff]
    %v5816 = vld [vmem:[#allocation18 + $0x4a8] sm:$0xff]
    %v5817 = vld [vmem:[#allocation18 + $0x4b0] sm:$0xff]
    %v5818 = vld [vmem:[#allocation18 + $0x4b8] sm:$0xff]
    %v5819 = vld [vmem:[#allocation18 + $0x4c0] sm:$0xff]
    %v5820 = vld [vmem:[#allocation18 + $0x4c8] sm:$0xff]
    %v5821 = vld [vmem:[#allocation18 + $0x4d0] sm:$0xff]
    %v5822 = vld [vmem:[#allocation18 + $0x4d8] sm:$0xff]
    %v5823 = vld [vmem:[#allocation18 + $0x4e0] sm:$0xff]
    %v5824 = vld [vmem:[#allocation18 + $0x4e8] sm:$0xff]
    %v5825 = vld [vmem:[#allocation18 + $0x4f0] sm:$0xff]
    %v5826 = vld [vmem:[#allocation18 + $0x4f8] sm:$0xff]
    %v5827 = vld [vmem:[#allocation18 + $0x500] sm:$0xff]
    %v5828 = vld [vmem:[#allocation18 + $0x508] sm:$0xff]
    %v5829 = vld [vmem:[#allocation18 + $0x510] sm:$0xff]
    %v5830 = vld [vmem:[#allocation18 + $0x518] sm:$0xff]
    %v5831 = vld [vmem:[#allocation18 + $0x520] sm:$0xff]
    %v5832 = vld [vmem:[#allocation18 + $0x528] sm:$0xff]
    %v5833 = vld [vmem:[#allocation18 + $0x530] sm:$0xff]
    %v5834 = vld [vmem:[#allocation18 + $0x538] sm:$0xff]
    %v5835 = vld [vmem:[#allocation18 + $0x540] sm:$0xff]
    %v5836 = vld [vmem:[#allocation18 + $0x548] sm:$0xff]
    %v5837 = vld [vmem:[#allocation18 + $0x550] sm:$0xff]
    %v5838 = vld [vmem:[#allocation18 + $0x558] sm:$0xff]
    %v5839 = vld [vmem:[#allocation18 + $0x560] sm:$0xff]
    %v5840 = vld [vmem:[#allocation18 + $0x568] sm:$0xff]
    %v5841 = vld [vmem:[#allocation18 + $0x570] sm:$0xff]
    %v5842 = vld [vmem:[#allocation18 + $0x578] sm:$0xff]
    %v5843 = vld [vmem:[#allocation18 + $0x580] sm:$0xff]
    %v5844 = vld [vmem:[#allocation18 + $0x588] sm:$0xff]
    %v5845 = vld [vmem:[#allocation18 + $0x590] sm:$0xff]
    %v5846 = vld [vmem:[#allocation18 + $0x598] sm:$0xff]
    %v5847 = vld [vmem:[#allocation18 + $0x5a0] sm:$0xff]
    %v5848 = vld [vmem:[#allocation18 + $0x5a8] sm:$0xff]
    %v5849 = vld [vmem:[#allocation18 + $0x5b0] sm:$0xff]
    %v5850 = vld [vmem:[#allocation18 + $0x5b8] sm:$0xff]
    %v5851 = vld [vmem:[#allocation18 + $0x5c0] sm:$0xff]
    %v5852 = vld [vmem:[#allocation18 + $0x5c8] sm:$0xff]
    %v5853 = vld [vmem:[#allocation18 + $0x5d0] sm:$0xff]
    %v5854 = vld [vmem:[#allocation18 + $0x5d8] sm:$0xff]
    %v5855 = vld [vmem:[#allocation18 + $0x5e0] sm:$0xff]
    %v5856 = vld [vmem:[#allocation18 + $0x5e8] sm:$0xff]
    %v5857 = vld [vmem:[#allocation18 + $0x5f0] sm:$0xff]
    %v5858 = vld [vmem:[#allocation18 + $0x5f8] sm:$0xff]
    %v5859 = vld [vmem:[#allocation18 + $0x600] sm:$0xff]
    %v5860 = vld [vmem:[#allocation18 + $0x608] sm:$0xff]
    %v5861 = vld [vmem:[#allocation18 + $0x610] sm:$0xff]
    %v5862 = vld [vmem:[#allocation18 + $0x618] sm:$0xff]
    %v5863 = vld [vmem:[#allocation18 + $0x620] sm:$0xff]
    %v5864 = vld [vmem:[#allocation18 + $0x628] sm:$0xff]
    %v5865 = vld [vmem:[#allocation18 + $0x630] sm:$0xff]
    %v5866 = vld [vmem:[#allocation18 + $0x638] sm:$0xff]
    %v5867 = vld [vmem:[#allocation18 + $0x640] sm:$0xff]
    %v5868 = vld [vmem:[#allocation18 + $0x648] sm:$0xff]
    %v5869 = vld [vmem:[#allocation18 + $0x650] sm:$0xff]
    %v5870 = vld [vmem:[#allocation18 + $0x658] sm:$0xff]
    %v5871 = vld [vmem:[#allocation18 + $0x660] sm:$0xff]
    %v5872 = vld [vmem:[#allocation18 + $0x668] sm:$0xff]
    %v5873 = vld [vmem:[#allocation18 + $0x670] sm:$0xff]
    %v5874 = vld [vmem:[#allocation18 + $0x678] sm:$0xff]
    %v5875 = vld [vmem:[#allocation18 + $0x680] sm:$0xff]
    %v5876 = vld [vmem:[#allocation18 + $0x688] sm:$0xff]
    %v5877 = vld [vmem:[#allocation18 + $0x690] sm:$0xff]
    %v5878 = vld [vmem:[#allocation18 + $0x698] sm:$0xff]
    %v5879 = vld [vmem:[#allocation18 + $0x6a0] sm:$0xff]
    %v5880 = vld [vmem:[#allocation18 + $0x6a8] sm:$0xff]
    %v5881 = vld [vmem:[#allocation18 + $0x6b0] sm:$0xff]
    %v5882 = vld [vmem:[#allocation18 + $0x6b8] sm:$0xff]
    %v5883 = vld [vmem:[#allocation18 + $0x6c0] sm:$0xff]
    %v5884 = vld [vmem:[#allocation18 + $0x6c8] sm:$0xff]
    %v5885 = vld [vmem:[#allocation18 + $0x6d0] sm:$0xff]
    %v5886 = vld [vmem:[#allocation18 + $0x6d8] sm:$0xff]
    %v5887 = vld [vmem:[#allocation18 + $0x6e0] sm:$0xff]
    %v5888 = vld [vmem:[#allocation18 + $0x6e8] sm:$0xff]
    %v5889 = vld [vmem:[#allocation18 + $0x6f0] sm:$0xff]
    %v5890 = vld [vmem:[#allocation18 + $0x6f8] sm:$0xff]
    %v5891 = vld [vmem:[#allocation18 + $0x700] sm:$0xff]
    %v5892 = vld [vmem:[#allocation18 + $0x708] sm:$0xff]
    %v5893 = vld [vmem:[#allocation18 + $0x710] sm:$0xff]
    %v5894 = vld [vmem:[#allocation18 + $0x718] sm:$0xff]
    %v5895 = vld [vmem:[#allocation18 + $0x720] sm:$0xff]
    %v5896 = vld [vmem:[#allocation18 + $0x728] sm:$0xff]
    %v5897 = vld [vmem:[#allocation18 + $0x730] sm:$0xff]
    %v5898 = vld [vmem:[#allocation18 + $0x738] sm:$0xff]
    %v5899 = vld [vmem:[#allocation18 + $0x740] sm:$0xff]
    %v5900 = vld [vmem:[#allocation18 + $0x748] sm:$0xff]
    %v5901 = vld [vmem:[#allocation18 + $0x750] sm:$0xff]
    %v5902 = vld [vmem:[#allocation18 + $0x758] sm:$0xff]
    %v5903 = vld [vmem:[#allocation18 + $0x760] sm:$0xff]
    %v5904 = vld [vmem:[#allocation18 + $0x768] sm:$0xff]
    %v5905 = vld [vmem:[#allocation18 + $0x770] sm:$0xff]
    %v5906 = vld [vmem:[#allocation18 + $0x778] sm:$0xff]
    %v5907 = vld [vmem:[#allocation18 + $0x780] sm:$0xff]
    %v5908 = vld [vmem:[#allocation18 + $0x788] sm:$0xff]
    %v5909 = vld [vmem:[#allocation18 + $0x790] sm:$0xff]
    %v5910 = vld [vmem:[#allocation18 + $0x798] sm:$0xff]
    %v5911 = vld [vmem:[#allocation18 + $0x7a0] sm:$0xff]
    %v5912 = vld [vmem:[#allocation18 + $0x7a8] sm:$0xff]
    %v5913 = vld [vmem:[#allocation18 + $0x7b0] sm:$0xff]
    %v5914 = vld [vmem:[#allocation18 + $0x7b8] sm:$0xff]
    %v5915 = vld [vmem:[#allocation18 + $0x7c0] sm:$0xff]
    %v5916 = vld [vmem:[#allocation18 + $0x7c8] sm:$0xff]
    %v5917 = vld [vmem:[#allocation18 + $0x7d0] sm:$0xff]
    %v5918 = vld [vmem:[#allocation18 + $0x7d8] sm:$0xff]
    %v5919 = vld [vmem:[#allocation18 + $0x7e0] sm:$0xff]
    %v5920 = vld [vmem:[#allocation18 + $0x7e8] sm:$0xff]
    %v5921 = vld [vmem:[#allocation18 + $0x7f0] sm:$0xff]
    %v5922 = vld [vmem:[#allocation18 + $0x7f8] sm:$0xff]
    %v5923 = vld [vmem:[#allocation18 + $0x800] sm:$0xff]
    %v5924 = vld [vmem:[#allocation18 + $0x808] sm:$0xff]
    %v5925 = vld [vmem:[#allocation18 + $0x810] sm:$0xff]
    %v5926 = vld [vmem:[#allocation18 + $0x818] sm:$0xff]
    %v5927 = vld [vmem:[#allocation18 + $0x820] sm:$0xff]
    %v5928 = vld [vmem:[#allocation18 + $0x828] sm:$0xff]
    %v5929 = vld [vmem:[#allocation18 + $0x830] sm:$0xff]
    %v5930 = vld [vmem:[#allocation18 + $0x838] sm:$0xff]
    %v5931 = vld [vmem:[#allocation18 + $0x840] sm:$0xff]
    %v5932 = vld [vmem:[#allocation18 + $0x848] sm:$0xff]
    %v5933 = vld [vmem:[#allocation18 + $0x850] sm:$0xff]
    %v5934 = vld [vmem:[#allocation18 + $0x858] sm:$0xff]
    %v5935 = vld [vmem:[#allocation18 + $0x860] sm:$0xff]
    %v5936 = vld [vmem:[#allocation18 + $0x868] sm:$0xff]
    %v5937 = vld [vmem:[#allocation18 + $0x870] sm:$0xff]
    %v5938 = vld [vmem:[#allocation18 + $0x878] sm:$0xff]
    %v5939 = vld [vmem:[#allocation18 + $0x880] sm:$0xff]
    %v5940 = vld [vmem:[#allocation18 + $0x888] sm:$0xff]
    %v5941 = vld [vmem:[#allocation18 + $0x890] sm:$0xff]
    %v5942 = vld [vmem:[#allocation18 + $0x898] sm:$0xff]
    %v5943 = vld [vmem:[#allocation18 + $0x8a0] sm:$0xff]
    %v5944 = vld [vmem:[#allocation18 + $0x8a8] sm:$0xff]
    %v5945 = vld [vmem:[#allocation18 + $0x8b0] sm:$0xff]
    %v5946 = vld [vmem:[#allocation18 + $0x8b8] sm:$0xff]
    %v5947 = vld [vmem:[#allocation18 + $0x8c0] sm:$0xff]
    %v5948 = vld [vmem:[#allocation18 + $0x8c8] sm:$0xff]
    %v5949 = vld [vmem:[#allocation18 + $0x8d0] sm:$0xff]
    %v5950 = vld [vmem:[#allocation18 + $0x8d8] sm:$0xff]
    %v5951 = vld [vmem:[#allocation18 + $0x8e0] sm:$0xff]
    %v5952 = vld [vmem:[#allocation18 + $0x8e8] sm:$0xff]
    %v5953 = vld [vmem:[#allocation18 + $0x8f0] sm:$0xff]
    %v5954 = vld [vmem:[#allocation18 + $0x8f8] sm:$0xff]
    %v5955 = vld [vmem:[#allocation18 + $0x900] sm:$0xff]
    %v5956 = vld [vmem:[#allocation18 + $0x908] sm:$0xff]
    %v5957 = vld [vmem:[#allocation18 + $0x910] sm:$0xff]
    %v5958 = vld [vmem:[#allocation18 + $0x918] sm:$0xff]
    %v5959 = vld [vmem:[#allocation18 + $0x920] sm:$0xff]
    %v5960 = vld [vmem:[#allocation18 + $0x928] sm:$0xff]
    %v5961 = vld [vmem:[#allocation18 + $0x930] sm:$0xff]
    %v5962 = vld [vmem:[#allocation18 + $0x938] sm:$0xff]
    %v5963 = vld [vmem:[#allocation18 + $0x940] sm:$0xff]
    %v5964 = vld [vmem:[#allocation18 + $0x948] sm:$0xff]
    %v5965 = vld [vmem:[#allocation18 + $0x950] sm:$0xff]
    %v5966 = vld [vmem:[#allocation18 + $0x958] sm:$0xff]
    %v5967 = vld [vmem:[#allocation18 + $0x960] sm:$0xff]
    %v5968 = vld [vmem:[#allocation18 + $0x968] sm:$0xff]
    %v5969 = vld [vmem:[#allocation18 + $0x970] sm:$0xff]
    %v5970 = vld [vmem:[#allocation18 + $0x978] sm:$0xff]
    %v5971 = vld [vmem:[#allocation18 + $0x980] sm:$0xff]
    %v5972 = vld [vmem:[#allocation18 + $0x988] sm:$0xff]
    %v5973 = vld [vmem:[#allocation18 + $0x990] sm:$0xff]
    %v5974 = vld [vmem:[#allocation18 + $0x998] sm:$0xff]
    %v5975 = vld [vmem:[#allocation18 + $0x9a0] sm:$0xff]
    %v5976 = vld [vmem:[#allocation18 + $0x9a8] sm:$0xff]
    %v5977 = vld [vmem:[#allocation18 + $0x9b0] sm:$0xff]
    %v5978 = vld [vmem:[#allocation18 + $0x9b8] sm:$0xff]
    %v5979 = vld [vmem:[#allocation18 + $0x9c0] sm:$0xff]
    %v5980 = vld [vmem:[#allocation18 + $0x9c8] sm:$0xff]
    %v5981 = vld [vmem:[#allocation18 + $0x9d0] sm:$0xff]
    %v5982 = vld [vmem:[#allocation18 + $0x9d8] sm:$0xff]
    %v5983 = vld [vmem:[#allocation18 + $0x9e0] sm:$0xff]
    %v5984 = vld [vmem:[#allocation18 + $0x9e8] sm:$0xff]
    %v5985 = vld [vmem:[#allocation18 + $0x9f0] sm:$0xff]
    %v5986 = vld [vmem:[#allocation18 + $0x9f8] sm:$0xff]
    %v5987 = vld [vmem:[#allocation18 + $0xa00] sm:$0xff]
    %v5988 = vld [vmem:[#allocation18 + $0xa08] sm:$0xff]
    %v5989 = vld [vmem:[#allocation18 + $0xa10] sm:$0xff]
    %v5990 = vld [vmem:[#allocation18 + $0xa18] sm:$0xff]
    %v5991 = vld [vmem:[#allocation18 + $0xa20] sm:$0xff]
    %v5992 = vld [vmem:[#allocation18 + $0xa28] sm:$0xff]
    %v5993 = vld [vmem:[#allocation18 + $0xa30] sm:$0xff]
    %v5994 = vld [vmem:[#allocation18 + $0xa38] sm:$0xff]
    %v5995 = vld [vmem:[#allocation18 + $0xa40] sm:$0xff]
    %v5996 = vld [vmem:[#allocation18 + $0xa48] sm:$0xff]
    %v5997 = vld [vmem:[#allocation18 + $0xa50] sm:$0xff]
    %v5998 = vld [vmem:[#allocation18 + $0xa58] sm:$0xff]
    %v5999 = vld [vmem:[#allocation18 + $0xa60] sm:$0xff]
    %v6000 = vld [vmem:[#allocation18 + $0xa68] sm:$0xff]
    %v6001 = vld [vmem:[#allocation18 + $0xa70] sm:$0xff]
    %v6002 = vld [vmem:[#allocation18 + $0xa78] sm:$0xff]
    %v6003 = vld [vmem:[#allocation18 + $0xa80] sm:$0xff]
    %v6004 = vld [vmem:[#allocation18 + $0xa88] sm:$0xff]
    %v6005 = vld [vmem:[#allocation18 + $0xa90] sm:$0xff]
    %v6006 = vld [vmem:[#allocation18 + $0xa98] sm:$0xff]
    %v6007 = vld [vmem:[#allocation18 + $0xaa0] sm:$0xff]
    %v6008 = vld [vmem:[#allocation18 + $0xaa8] sm:$0xff]
    %v6009 = vld [vmem:[#allocation18 + $0xab0] sm:$0xff]
    %v6010 = vld [vmem:[#allocation18 + $0xab8] sm:$0xff]
    %v6011 = vld [vmem:[#allocation18 + $0xac0] sm:$0xff]
    %v6012 = vld [vmem:[#allocation18 + $0xac8] sm:$0xff]
    %v6013 = vld [vmem:[#allocation18 + $0xad0] sm:$0xff]
    %v6014 = vld [vmem:[#allocation18 + $0xad8] sm:$0xff]
    %v6015 = vld [vmem:[#allocation18 + $0xae0] sm:$0xff]
    %v6016 = vld [vmem:[#allocation18 + $0xae8] sm:$0xff]
    %v6017 = vld [vmem:[#allocation18 + $0xaf0] sm:$0xff]
    %v6018 = vld [vmem:[#allocation18 + $0xaf8] sm:$0xff]
    %v6019 = vld [vmem:[#allocation18 + $0xb00] sm:$0xff]
    %v6020 = vld [vmem:[#allocation18 + $0xb08] sm:$0xff]
    %v6021 = vld [vmem:[#allocation18 + $0xb10] sm:$0xff]
    %v6022 = vld [vmem:[#allocation18 + $0xb18] sm:$0xff]
    %v6023 = vld [vmem:[#allocation18 + $0xb20] sm:$0xff]
    %v6024 = vld [vmem:[#allocation18 + $0xb28] sm:$0xff]
    %v6025 = vld [vmem:[#allocation18 + $0xb30] sm:$0xff]
    %v6026 = vld [vmem:[#allocation18 + $0xb38] sm:$0xff]
    %v6027 = vld [vmem:[#allocation18 + $0xb40] sm:$0xff]
    %v6028 = vld [vmem:[#allocation18 + $0xb48] sm:$0xff]
    %v6029 = vld [vmem:[#allocation18 + $0xb50] sm:$0xff]
    %v6030 = vld [vmem:[#allocation18 + $0xb58] sm:$0xff]
    %v6031 = vld [vmem:[#allocation18 + $0xb60] sm:$0xff]
    %v6032 = vld [vmem:[#allocation18 + $0xb68] sm:$0xff]
    %v6033 = vld [vmem:[#allocation18 + $0xb70] sm:$0xff]
    %v6034 = vld [vmem:[#allocation18 + $0xb78] sm:$0xff]
    %v6035 = vld [vmem:[#allocation18 + $0xb80] sm:$0xff]
    %v6036 = vld [vmem:[#allocation18 + $0xb88] sm:$0xff]
    %v6037 = vld [vmem:[#allocation18 + $0xb90] sm:$0xff]
    %v6038 = vld [vmem:[#allocation18 + $0xb98] sm:$0xff]
    %v6039 = vld [vmem:[#allocation18 + $0xba0] sm:$0xff]
    %v6040 = vld [vmem:[#allocation18 + $0xba8] sm:$0xff]
    %v6041 = vld [vmem:[#allocation18 + $0xbb0] sm:$0xff]
    %v6042 = vld [vmem:[#allocation18 + $0xbb8] sm:$0xff]
    %v6043 = vld [vmem:[#allocation18 + $0xbc0] sm:$0xff]
    %v6044 = vld [vmem:[#allocation18 + $0xbc8] sm:$0xff]
    %v6045 = vld [vmem:[#allocation18 + $0xbd0] sm:$0xff]
    %v6046 = vld [vmem:[#allocation18 + $0xbd8] sm:$0xff]
    %v6047 = vld [vmem:[#allocation18 + $0xbe0] sm:$0xff]
    %v6048 = vld [vmem:[#allocation18 + $0xbe8] sm:$0xff]
    %v6049 = vld [vmem:[#allocation18 + $0xbf0] sm:$0xff]
    %v6050 = vld [vmem:[#allocation18 + $0xbf8] sm:$0xff]
    %v6051 = vld [vmem:[#allocation18 + $0xc00] sm:$0xff]
    %v6052 = vld [vmem:[#allocation18 + $0xc08] sm:$0xff]
    %v6053 = vld [vmem:[#allocation18 + $0xc10] sm:$0xff]
    %v6054 = vld [vmem:[#allocation18 + $0xc18] sm:$0xff]
    %v6055 = vld [vmem:[#allocation18 + $0xc20] sm:$0xff]
    %v6056 = vld [vmem:[#allocation18 + $0xc28] sm:$0xff]
    %v6057 = vld [vmem:[#allocation18 + $0xc30] sm:$0xff]
    %v6058 = vld [vmem:[#allocation18 + $0xc38] sm:$0xff]
    %v6059 = vld [vmem:[#allocation18 + $0xc40] sm:$0xff]
    %v6060 = vld [vmem:[#allocation18 + $0xc48] sm:$0xff]
    %v6061 = vld [vmem:[#allocation18 + $0xc50] sm:$0xff]
    %v6062 = vld [vmem:[#allocation18 + $0xc58] sm:$0xff]
    %v6063 = vld [vmem:[#allocation18 + $0xc60] sm:$0xff]
    %v6064 = vld [vmem:[#allocation18 + $0xc68] sm:$0xff]
    %v6065 = vld [vmem:[#allocation18 + $0xc70] sm:$0xff]
    %v6066 = vld [vmem:[#allocation18 + $0xc78] sm:$0xff]
    %v6067 = vld [vmem:[#allocation18 + $0xc80] sm:$0xff]
    %v6068 = vld [vmem:[#allocation18 + $0xc88] sm:$0xff]
    %v6069 = vld [vmem:[#allocation18 + $0xc90] sm:$0xff]
    %v6070 = vld [vmem:[#allocation18 + $0xc98] sm:$0xff]
    %v6071 = vld [vmem:[#allocation18 + $0xca0] sm:$0xff]
    %v6072 = vld [vmem:[#allocation18 + $0xca8] sm:$0xff]
    %v6073 = vld [vmem:[#allocation18 + $0xcb0] sm:$0xff]
    %v6074 = vld [vmem:[#allocation18 + $0xcb8] sm:$0xff]
    %v6075 = vld [vmem:[#allocation18 + $0xcc0] sm:$0xff]
    %v6076 = vld [vmem:[#allocation18 + $0xcc8] sm:$0xff]
    %v6077 = vld [vmem:[#allocation18 + $0xcd0] sm:$0xff]
    %v6078 = vld [vmem:[#allocation18 + $0xcd8] sm:$0xff]
    %v6079 = vld [vmem:[#allocation18 + $0xce0] sm:$0xff]
    %v6080 = vld [vmem:[#allocation18 + $0xce8] sm:$0xff]
    %v6081 = vld [vmem:[#allocation18 + $0xcf0] sm:$0xff]
    %v6082 = vld [vmem:[#allocation18 + $0xcf8] sm:$0xff]
    %v6083 = vld [vmem:[#allocation18 + $0xd00] sm:$0xff]
    %v6084 = vld [vmem:[#allocation18 + $0xd08] sm:$0xff]
    %v6085 = vld [vmem:[#allocation18 + $0xd10] sm:$0xff]
    %v6086 = vld [vmem:[#allocation18 + $0xd18] sm:$0xff]
    %v6087 = vld [vmem:[#allocation18 + $0xd20] sm:$0xff]
    %v6088 = vld [vmem:[#allocation18 + $0xd28] sm:$0xff]
    %v6089 = vld [vmem:[#allocation18 + $0xd30] sm:$0xff]
    %v6090 = vld [vmem:[#allocation18 + $0xd38] sm:$0xff]
    %v6091 = vld [vmem:[#allocation18 + $0xd40] sm:$0xff]
    %v6092 = vld [vmem:[#allocation18 + $0xd48] sm:$0xff]
    %v6093 = vld [vmem:[#allocation18 + $0xd50] sm:$0xff]
    %v6094 = vld [vmem:[#allocation18 + $0xd58] sm:$0xff]
    %v6095 = vld [vmem:[#allocation18 + $0xd60] sm:$0xff]
    %v6096 = vld [vmem:[#allocation18 + $0xd68] sm:$0xff]
    %v6097 = vld [vmem:[#allocation18 + $0xd70] sm:$0xff]
    %v6098 = vld [vmem:[#allocation18 + $0xd78] sm:$0xff]
    %v6099 = vld [vmem:[#allocation18 + $0xd80] sm:$0xff]
    %v6100 = vld [vmem:[#allocation18 + $0xd88] sm:$0xff]
    %v6101 = vld [vmem:[#allocation18 + $0xd90] sm:$0xff]
    %v6102 = vld [vmem:[#allocation18 + $0xd98] sm:$0xff]
    %v6103 = vld [vmem:[#allocation18 + $0xda0] sm:$0xff]
    %v6104 = vld [vmem:[#allocation18 + $0xda8] sm:$0xff]
    %v6105 = vld [vmem:[#allocation18 + $0xdb0] sm:$0xff]
    %v6106 = vld [vmem:[#allocation18 + $0xdb8] sm:$0xff]
    %v6107 = vld [vmem:[#allocation18 + $0xdc0] sm:$0xff]
    %v6108 = vld [vmem:[#allocation18 + $0xdc8] sm:$0xff]
    %v6109 = vld [vmem:[#allocation18 + $0xdd0] sm:$0xff]
    %v6110 = vld [vmem:[#allocation18 + $0xdd8] sm:$0xff]
    %v6111 = vld [vmem:[#allocation18 + $0xde0] sm:$0xff]
    %v6112 = vld [vmem:[#allocation18 + $0xde8] sm:$0xff]
    %v6113 = vld [vmem:[#allocation18 + $0xdf0] sm:$0xff]
    %v6114 = vld [vmem:[#allocation18 + $0xdf8] sm:$0xff]
    %v6115 = vld [vmem:[#allocation18 + $0xe00] sm:$0xff]
    %v6116 = vld [vmem:[#allocation18 + $0xe08] sm:$0xff]
    %v6117 = vld [vmem:[#allocation18 + $0xe10] sm:$0xff]
    %v6118 = vld [vmem:[#allocation18 + $0xe18] sm:$0xff]
    %v6119 = vld [vmem:[#allocation18 + $0xe20] sm:$0xff]
    %v6120 = vld [vmem:[#allocation18 + $0xe28] sm:$0xff]
    %v6121 = vld [vmem:[#allocation18 + $0xe30] sm:$0xff]
    %v6122 = vld [vmem:[#allocation18 + $0xe38] sm:$0xff]
    %v6123 = vld [vmem:[#allocation18 + $0xe40] sm:$0xff]
    %v6124 = vld [vmem:[#allocation18 + $0xe48] sm:$0xff]
    %v6125 = vld [vmem:[#allocation18 + $0xe50] sm:$0xff]
    %v6126 = vld [vmem:[#allocation18 + $0xe58] sm:$0xff]
    %v6127 = vld [vmem:[#allocation18 + $0xe60] sm:$0xff]
    %v6128 = vld [vmem:[#allocation18 + $0xe68] sm:$0xff]
    %v6129 = vld [vmem:[#allocation18 + $0xe70] sm:$0xff]
    %v6130 = vld [vmem:[#allocation18 + $0xe78] sm:$0xff]
    %v6131 = vld [vmem:[#allocation18 + $0xe80] sm:$0xff]
    %v6132 = vld [vmem:[#allocation18 + $0xe88] sm:$0xff]
    %v6133 = vld [vmem:[#allocation18 + $0xe90] sm:$0xff]
    %v6134 = vld [vmem:[#allocation18 + $0xe98] sm:$0xff]
    %v6135 = vld [vmem:[#allocation18 + $0xea0] sm:$0xff]
    %v6136 = vld [vmem:[#allocation18 + $0xea8] sm:$0xff]
    %v6137 = vld [vmem:[#allocation18 + $0xeb0] sm:$0xff]
    %v6138 = vld [vmem:[#allocation18 + $0xeb8] sm:$0xff]
    %v6139 = vld [vmem:[#allocation18 + $0xec0] sm:$0xff]
    %v6140 = vld [vmem:[#allocation18 + $0xec8] sm:$0xff]
    %v6141 = vld [vmem:[#allocation18 + $0xed0] sm:$0xff]
    %v6142 = vld [vmem:[#allocation18 + $0xed8] sm:$0xff]
    %v6143 = vld [vmem:[#allocation18 + $0xee0] sm:$0xff]
    %v6144 = vld [vmem:[#allocation18 + $0xee8] sm:$0xff]
    %v6145 = vld [vmem:[#allocation18 + $0xef0] sm:$0xff]
    %v6146 = vld [vmem:[#allocation18 + $0xef8] sm:$0xff]
    %v6147 = vld [vmem:[#allocation18 + $0xf00] sm:$0xff]
    %v6148 = vld [vmem:[#allocation18 + $0xf08] sm:$0xff]
    %v6149 = vld [vmem:[#allocation18 + $0xf10] sm:$0xff]
    %v6150 = vld [vmem:[#allocation18 + $0xf18] sm:$0xff]
    %v6151 = vld [vmem:[#allocation18 + $0xf20] sm:$0xff]
    %v6152 = vld [vmem:[#allocation18 + $0xf28] sm:$0xff]
    %v6153 = vld [vmem:[#allocation18 + $0xf30] sm:$0xff]
    %v6154 = vld [vmem:[#allocation18 + $0xf38] sm:$0xff]
    %v6155 = vld [vmem:[#allocation18 + $0xf40] sm:$0xff]
    %v6156 = vld [vmem:[#allocation18 + $0xf48] sm:$0xff]
    %v6157 = vld [vmem:[#allocation18 + $0xf50] sm:$0xff]
    %v6158 = vld [vmem:[#allocation18 + $0xf58] sm:$0xff]
    %v6159 = vld [vmem:[#allocation18 + $0xf60] sm:$0xff]
    %v6160 = vld [vmem:[#allocation18 + $0xf68] sm:$0xff]
    %v6161 = vld [vmem:[#allocation18 + $0xf70] sm:$0xff]
    %v6162 = vld [vmem:[#allocation18 + $0xf78] sm:$0xff]
    %v6163 = vld [vmem:[#allocation18 + $0xf80] sm:$0xff]
    %v6164 = vld [vmem:[#allocation18 + $0xf88] sm:$0xff]
    %v6165 = vld [vmem:[#allocation18 + $0xf90] sm:$0xff]
    %v6166 = vld [vmem:[#allocation18 + $0xf98] sm:$0xff]
    %v6167 = vld [vmem:[#allocation18 + $0xfa0] sm:$0xff]
    %v6168 = vld [vmem:[#allocation18 + $0xfa8] sm:$0xff]
    %v6169 = vld [vmem:[#allocation18 + $0xfb0] sm:$0xff]
    %v6170 = vld [vmem:[#allocation18 + $0xfb8] sm:$0xff]
    %v6171 = vld [vmem:[#allocation18 + $0xfc0] sm:$0xff]
    %v6172 = vld [vmem:[#allocation18 + $0xfc8] sm:$0xff]
    %v6173 = vld [vmem:[#allocation18 + $0xfd0] sm:$0xff]
    %v6174 = vld [vmem:[#allocation18 + $0xfd8] sm:$0xff]
    %v6175 = vld [vmem:[#allocation18 + $0xfe0] sm:$0xff]
    %v6176 = vld [vmem:[#allocation18 + $0xfe8] sm:$0xff]
    %v6177 = vld [vmem:[#allocation18 + $0xff0] sm:$0xff]
    %v6178 = vld [vmem:[#allocation18 + $0xff8] sm:$0xff]
    %v6179 = vld [vmem:[#allocation18 + $0x1000] sm:$0xff]
    %v6180 = vld [vmem:[#allocation18 + $0x1008] sm:$0xff]
    %v6181 = vld [vmem:[#allocation18 + $0x1010] sm:$0xff]
    %v6182 = vld [vmem:[#allocation18 + $0x1018] sm:$0xff]
    %v6183 = vld [vmem:[#allocation18 + $0x1020] sm:$0xff]
    %v6184 = vld [vmem:[#allocation18 + $0x1028] sm:$0xff]
    %v6185 = vld [vmem:[#allocation18 + $0x1030] sm:$0xff]
    %v6186 = vld [vmem:[#allocation18 + $0x1038] sm:$0xff]
    %v6187 = vld [vmem:[#allocation18 + $0x1040] sm:$0xff]
    %v6188 = vld [vmem:[#allocation18 + $0x1048] sm:$0xff]
    %v6189 = vld [vmem:[#allocation18 + $0x1050] sm:$0xff]
    %v6190 = vld [vmem:[#allocation18 + $0x1058] sm:$0xff]
    %v6191 = vld [vmem:[#allocation18 + $0x1060] sm:$0xff]
    %v6192 = vld [vmem:[#allocation18 + $0x1068] sm:$0xff]
    %v6193 = vld [vmem:[#allocation18 + $0x1070] sm:$0xff]
    %v6194 = vld [vmem:[#allocation18 + $0x1078] sm:$0xff]
    %v6195 = vld [vmem:[#allocation18 + $0x1080] sm:$0xff]
    %v6196 = vld [vmem:[#allocation18 + $0x1088] sm:$0xff]
    %v6197 = vld [vmem:[#allocation18 + $0x1090] sm:$0xff]
    %v6198 = vld [vmem:[#allocation18 + $0x1098] sm:$0xff]
    %v6199 = vld [vmem:[#allocation18 + $0x10a0] sm:$0xff]
    %v6200 = vld [vmem:[#allocation18 + $0x10a8] sm:$0xff]
    %v6201 = vld [vmem:[#allocation18 + $0x10b0] sm:$0xff]
    %v6202 = vld [vmem:[#allocation18 + $0x10b8] sm:$0xff]
    %v6203 = vld [vmem:[#allocation18 + $0x10c0] sm:$0xff]
    %v6204 = vld [vmem:[#allocation18 + $0x10c8] sm:$0xff]
    %v6205 = vld [vmem:[#allocation18 + $0x10d0] sm:$0xff]
    %v6206 = vld [vmem:[#allocation18 + $0x10d8] sm:$0xff]
    %v6207 = vld [vmem:[#allocation18 + $0x10e0] sm:$0xff]
    %v6208 = vld [vmem:[#allocation18 + $0x10e8] sm:$0xff]
    %v6209 = vld [vmem:[#allocation18 + $0x10f0] sm:$0xff]
    %v6210 = vld [vmem:[#allocation18 + $0x10f8] sm:$0xff]
    %v6211 = vld [vmem:[#allocation18 + $0x1100] sm:$0xff]
    %v6212 = vld [vmem:[#allocation18 + $0x1108] sm:$0xff]
    %v6213 = vld [vmem:[#allocation18 + $0x1110] sm:$0xff]
    %v6214 = vld [vmem:[#allocation18 + $0x1118] sm:$0xff]
    %v6215 = vld [vmem:[#allocation18 + $0x1120] sm:$0xff]
    %v6216 = vld [vmem:[#allocation18 + $0x1128] sm:$0xff]
    %v6217 = vld [vmem:[#allocation18 + $0x1130] sm:$0xff]
    %v6218 = vld [vmem:[#allocation18 + $0x1138] sm:$0xff]
    %v6219 = vld [vmem:[#allocation18 + $0x1140] sm:$0xff]
    %v6220 = vld [vmem:[#allocation18 + $0x1148] sm:$0xff]
    %v6221 = vld [vmem:[#allocation18 + $0x1150] sm:$0xff]
    %v6222 = vld [vmem:[#allocation18 + $0x1158] sm:$0xff]
    %v6223 = vld [vmem:[#allocation18 + $0x1160] sm:$0xff]
    %v6224 = vld [vmem:[#allocation18 + $0x1168] sm:$0xff]
    %v6225 = vld [vmem:[#allocation18 + $0x1170] sm:$0xff]
    %v6226 = vld [vmem:[#allocation18 + $0x1178] sm:$0xff]
    %v6227 = vld [vmem:[#allocation18 + $0x1180] sm:$0xff]
    %v6228 = vld [vmem:[#allocation18 + $0x1188] sm:$0xff]
    %v6229 = vld [vmem:[#allocation18 + $0x1190] sm:$0xff]
    %v6230 = vld [vmem:[#allocation18 + $0x1198] sm:$0xff]
    %v6231 = vld [vmem:[#allocation18 + $0x11a0] sm:$0xff]
    %v6232 = vld [vmem:[#allocation18 + $0x11a8] sm:$0xff]
    %v6233 = vld [vmem:[#allocation18 + $0x11b0] sm:$0xff]
    %v6234 = vld [vmem:[#allocation18 + $0x11b8] sm:$0xff]
    %v6235 = vld [vmem:[#allocation18 + $0x11c0] sm:$0xff]
    %v6236 = vld [vmem:[#allocation18 + $0x11c8] sm:$0xff]
    %v6237 = vld [vmem:[#allocation18 + $0x11d0] sm:$0xff]
    %v6238 = vld [vmem:[#allocation18 + $0x11d8] sm:$0xff]
    %v6239 = vld [vmem:[#allocation18 + $0x11e0] sm:$0xff]
    %v6240 = vld [vmem:[#allocation18 + $0x11e8] sm:$0xff]
    %v6241 = vld [vmem:[#allocation18 + $0x11f0] sm:$0xff]
    %v6242 = vld [vmem:[#allocation18 + $0x11f8] sm:$0xff]
    %v6243 = vld [vmem:[#allocation18 + $0x1200] sm:$0xff]
    %v6244 = vld [vmem:[#allocation18 + $0x1208] sm:$0xff]
    %v6245 = vld [vmem:[#allocation18 + $0x1210] sm:$0xff]
    %v6246 = vld [vmem:[#allocation18 + $0x1218] sm:$0xff]
    %v6247 = vld [vmem:[#allocation18 + $0x1220] sm:$0xff]
    %v6248 = vld [vmem:[#allocation18 + $0x1228] sm:$0xff]
    %v6249 = vld [vmem:[#allocation18 + $0x1230] sm:$0xff]
    %v6250 = vld [vmem:[#allocation18 + $0x1238] sm:$0xff]
    %v6251 = vld [vmem:[#allocation18 + $0x1240] sm:$0xff]
    %v6252 = vld [vmem:[#allocation18 + $0x1248] sm:$0xff]
    %v6253 = vld [vmem:[#allocation18 + $0x1250] sm:$0xff]
    %v6254 = vld [vmem:[#allocation18 + $0x1258] sm:$0xff]
    %v6255 = vld [vmem:[#allocation18 + $0x1260] sm:$0xff]
    %v6256 = vld [vmem:[#allocation18 + $0x1268] sm:$0xff]
    %v6257 = vld [vmem:[#allocation18 + $0x1270] sm:$0xff]
    %v6258 = vld [vmem:[#allocation18 + $0x1278] sm:$0xff]
    %v6259 = vld [vmem:[#allocation18 + $0x1280] sm:$0xff]
    %v6260 = vld [vmem:[#allocation18 + $0x1288] sm:$0xff]
    %v6261 = vld [vmem:[#allocation18 + $0x1290] sm:$0xff]
    %v6262 = vld [vmem:[#allocation18 + $0x1298] sm:$0xff]
    %v6263 = vld [vmem:[#allocation18 + $0x12a0] sm:$0xff]
    %v6264 = vld [vmem:[#allocation18 + $0x12a8] sm:$0xff]
    %v6265 = vld [vmem:[#allocation18 + $0x12b0] sm:$0xff]
    %v6266 = vld [vmem:[#allocation18 + $0x12b8] sm:$0xff]
    %v6267 = vld [vmem:[#allocation18 + $0x12c0] sm:$0xff]
    %v6268 = vld [vmem:[#allocation18 + $0x12c8] sm:$0xff]
    %v6269 = vld [vmem:[#allocation18 + $0x12d0] sm:$0xff]
    %v6270 = vld [vmem:[#allocation18 + $0x12d8] sm:$0xff]
    %v6271 = vld [vmem:[#allocation18 + $0x12e0] sm:$0xff]
    %v6272 = vld [vmem:[#allocation18 + $0x12e8] sm:$0xff]
    %v6273 = vld [vmem:[#allocation18 + $0x12f0] sm:$0xff]
    %v6274 = vld [vmem:[#allocation18 + $0x12f8] sm:$0xff]
    %v6275 = vld [vmem:[#allocation18 + $0x1300] sm:$0xff]
    %v6276 = vld [vmem:[#allocation18 + $0x1308] sm:$0xff]
    %v6277 = vld [vmem:[#allocation18 + $0x1310] sm:$0xff]
    %v6278 = vld [vmem:[#allocation18 + $0x1318] sm:$0xff]
    %v6279 = vld [vmem:[#allocation18 + $0x1320] sm:$0xff]
    %v6280 = vld [vmem:[#allocation18 + $0x1328] sm:$0xff]
    %v6281 = vld [vmem:[#allocation18 + $0x1330] sm:$0xff]
    %v6282 = vld [vmem:[#allocation18 + $0x1338] sm:$0xff]
    %v6283 = vld [vmem:[#allocation18 + $0x1340] sm:$0xff]
    %v6284 = vld [vmem:[#allocation18 + $0x1348] sm:$0xff]
    %v6285 = vld [vmem:[#allocation18 + $0x1350] sm:$0xff]
    %v6286 = vld [vmem:[#allocation18 + $0x1358] sm:$0xff]
    %v6287 = vld [vmem:[#allocation18 + $0x1360] sm:$0xff]
    %v6288 = vld [vmem:[#allocation18 + $0x1368] sm:$0xff]
    %v6289 = vld [vmem:[#allocation18 + $0x1370] sm:$0xff]
    %v6290 = vld [vmem:[#allocation18 + $0x1378] sm:$0xff]
    %v6291 = vld [vmem:[#allocation18 + $0x1380] sm:$0xff]
    %v6292 = vld [vmem:[#allocation18 + $0x1388] sm:$0xff]
    %v6293 = vld [vmem:[#allocation18 + $0x1390] sm:$0xff]
    %v6294 = vld [vmem:[#allocation18 + $0x1398] sm:$0xff]
    %v6295 = vld [vmem:[#allocation18 + $0x13a0] sm:$0xff]
    %v6296 = vld [vmem:[#allocation18 + $0x13a8] sm:$0xff]
    %v6297 = vld [vmem:[#allocation18 + $0x13b0] sm:$0xff]
    %v6298 = vld [vmem:[#allocation18 + $0x13b8] sm:$0xff]
    %v6299 = vld [vmem:[#allocation18 + $0x13c0] sm:$0xff]
    %v6300 = vld [vmem:[#allocation18 + $0x13c8] sm:$0xff]
    %v6301 = vld [vmem:[#allocation18 + $0x13d0] sm:$0xff]
    %v6302 = vld [vmem:[#allocation18 + $0x13d8] sm:$0xff]
    %v6303 = vld [vmem:[#allocation18 + $0x13e0] sm:$0xff]
    %v6304 = vld [vmem:[#allocation18 + $0x13e8] sm:$0xff]
    %v6305 = vld [vmem:[#allocation18 + $0x13f0] sm:$0xff]
    %v6306 = vld [vmem:[#allocation18 + $0x13f8] sm:$0xff]
    %v6307 = vld [vmem:[#allocation18 + $0x1400] sm:$0xff]
    %v6308 = vld [vmem:[#allocation18 + $0x1408] sm:$0xff]
    %v6309 = vld [vmem:[#allocation18 + $0x1410] sm:$0xff]
    %v6310 = vld [vmem:[#allocation18 + $0x1418] sm:$0xff]
    %v6311 = vld [vmem:[#allocation18 + $0x1420] sm:$0xff]
    %v6312 = vld [vmem:[#allocation18 + $0x1428] sm:$0xff]
    %v6313 = vld [vmem:[#allocation18 + $0x1430] sm:$0xff]
    %v6314 = vld [vmem:[#allocation18 + $0x1438] sm:$0xff]
    %v6315 = vld [vmem:[#allocation18 + $0x1440] sm:$0xff]
    %v6316 = vld [vmem:[#allocation18 + $0x1448] sm:$0xff]
    %v6317 = vld [vmem:[#allocation18 + $0x1450] sm:$0xff]
    %v6318 = vld [vmem:[#allocation18 + $0x1458] sm:$0xff]
    %v6319 = vld [vmem:[#allocation18 + $0x1460] sm:$0xff]
    %v6320 = vld [vmem:[#allocation18 + $0x1468] sm:$0xff]
    %v6321 = vld [vmem:[#allocation18 + $0x1470] sm:$0xff]
    %v6322 = vld [vmem:[#allocation18 + $0x1478] sm:$0xff]
    %v6323 = vld [vmem:[#allocation18 + $0x1480] sm:$0xff]
    %v6324 = vld [vmem:[#allocation18 + $0x1488] sm:$0xff]
    %v6325 = vld [vmem:[#allocation18 + $0x1490] sm:$0xff]
    %v6326 = vld [vmem:[#allocation18 + $0x1498] sm:$0xff]
    %v6327 = vld [vmem:[#allocation18 + $0x14a0] sm:$0xff]
    %v6328 = vld [vmem:[#allocation18 + $0x14a8] sm:$0xff]
    %v6329 = vld [vmem:[#allocation18 + $0x14b0] sm:$0xff]
    %v6330 = vld [vmem:[#allocation18 + $0x14b8] sm:$0xff]
    %v6331 = vld [vmem:[#allocation18 + $0x14c0] sm:$0xff]
    %v6332 = vld [vmem:[#allocation18 + $0x14c8] sm:$0xff]
    %v6333 = vld [vmem:[#allocation18 + $0x14d0] sm:$0xff]
    %v6334 = vld [vmem:[#allocation18 + $0x14d8] sm:$0xff]
    %v6335 = vld [vmem:[#allocation18 + $0x14e0] sm:$0xff]
    %v6336 = vld [vmem:[#allocation18 + $0x14e8] sm:$0xff]
    %v6337 = vld [vmem:[#allocation18 + $0x14f0] sm:$0xff]
    %v6338 = vld [vmem:[#allocation18 + $0x14f8] sm:$0xff]
    %v6339 = vld [vmem:[#allocation18 + $0x1500] sm:$0xff]
    %v6340 = vld [vmem:[#allocation18 + $0x1508] sm:$0xff]
    %v6341 = vld [vmem:[#allocation18 + $0x1510] sm:$0xff]
    %v6342 = vld [vmem:[#allocation18 + $0x1518] sm:$0xff]
    %v6343 = vld [vmem:[#allocation18 + $0x1520] sm:$0xff]
    %v6344 = vld [vmem:[#allocation18 + $0x1528] sm:$0xff]
    %v6345 = vld [vmem:[#allocation18 + $0x1530] sm:$0xff]
    %v6346 = vld [vmem:[#allocation18 + $0x1538] sm:$0xff]
    %v6347 = vld [vmem:[#allocation18 + $0x1540] sm:$0xff]
    %v6348 = vld [vmem:[#allocation18 + $0x1548] sm:$0xff]
    %v6349 = vld [vmem:[#allocation18 + $0x1550] sm:$0xff]
    %v6350 = vld [vmem:[#allocation18 + $0x1558] sm:$0xff]
    %v6351 = vld [vmem:[#allocation18 + $0x1560] sm:$0xff]
    %v6352 = vld [vmem:[#allocation18 + $0x1568] sm:$0xff]
    %v6353 = vld [vmem:[#allocation18 + $0x1570] sm:$0xff]
    %v6354 = vld [vmem:[#allocation18 + $0x1578] sm:$0xff]
    %v6355 = vld [vmem:[#allocation18 + $0x1580] sm:$0xff]
    %v6356 = vld [vmem:[#allocation18 + $0x1588] sm:$0xff]
    %v6357 = vld [vmem:[#allocation18 + $0x1590] sm:$0xff]
    %v6358 = vld [vmem:[#allocation18 + $0x1598] sm:$0xff]
    %v6359 = vld [vmem:[#allocation18 + $0x15a0] sm:$0xff]
    %v6360 = vld [vmem:[#allocation18 + $0x15a8] sm:$0xff]
    %v6361 = vld [vmem:[#allocation18 + $0x15b0] sm:$0xff]
    %v6362 = vld [vmem:[#allocation18 + $0x15b8] sm:$0xff]
    %v6363 = vld [vmem:[#allocation18 + $0x15c0] sm:$0xff]
    %v6364 = vld [vmem:[#allocation18 + $0x15c8] sm:$0xff]
    %v6365 = vld [vmem:[#allocation18 + $0x15d0] sm:$0xff]
    %v6366 = vld [vmem:[#allocation18 + $0x15d8] sm:$0xff]
    %v6367 = vld [vmem:[#allocation18 + $0x15e0] sm:$0xff]
    %v6368 = vld [vmem:[#allocation18 + $0x15e8] sm:$0xff]
    %v6369 = vld [vmem:[#allocation18 + $0x15f0] sm:$0xff]
    %v6370 = vld [vmem:[#allocation18 + $0x15f8] sm:$0xff]
    %v6371 = vld [vmem:[#allocation18 + $0x1600] sm:$0xff]
    %v6372 = vld [vmem:[#allocation18 + $0x1608] sm:$0xff]
    %v6373 = vld [vmem:[#allocation18 + $0x1610] sm:$0xff]
    %v6374 = vld [vmem:[#allocation18 + $0x1618] sm:$0xff]
    %v6375 = vld [vmem:[#allocation18 + $0x1620] sm:$0xff]
    %v6376 = vld [vmem:[#allocation18 + $0x1628] sm:$0xff]
    %v6377 = vld [vmem:[#allocation18 + $0x1630] sm:$0xff]
    %v6378 = vld [vmem:[#allocation18 + $0x1638] sm:$0xff]
    %v6379 = vld [vmem:[#allocation18 + $0x1640] sm:$0xff]
    %v6380 = vld [vmem:[#allocation18 + $0x1648] sm:$0xff]
    %v6381 = vld [vmem:[#allocation18 + $0x1650] sm:$0xff]
    %v6382 = vld [vmem:[#allocation18 + $0x1658] sm:$0xff]
    %v6383 = vld [vmem:[#allocation18 + $0x1660] sm:$0xff]
    %v6384 = vld [vmem:[#allocation18 + $0x1668] sm:$0xff]
    %v6385 = vld [vmem:[#allocation18 + $0x1670] sm:$0xff]
    %v6386 = vld [vmem:[#allocation18 + $0x1678] sm:$0xff]
    %v6387 = vld [vmem:[#allocation18 + $0x1680] sm:$0xff]
    %v6388 = vld [vmem:[#allocation18 + $0x1688] sm:$0xff]
    %v6389 = vld [vmem:[#allocation18 + $0x1690] sm:$0xff]
    %v6390 = vld [vmem:[#allocation18 + $0x1698] sm:$0xff]
    %v6391 = vld [vmem:[#allocation18 + $0x16a0] sm:$0xff]
    %v6392 = vld [vmem:[#allocation18 + $0x16a8] sm:$0xff]
    %v6393 = vld [vmem:[#allocation18 + $0x16b0] sm:$0xff]
    %v6394 = vld [vmem:[#allocation18 + $0x16b8] sm:$0xff]
    %v6395 = vld [vmem:[#allocation18 + $0x16c0] sm:$0xff]
    %v6396 = vld [vmem:[#allocation18 + $0x16c8] sm:$0xff]
    %v6397 = vld [vmem:[#allocation18 + $0x16d0] sm:$0xff]
    %v6398 = vld [vmem:[#allocation18 + $0x16d8] sm:$0xff]
    %v6399 = vld [vmem:[#allocation18 + $0x16e0] sm:$0xff]
    %v6400 = vld [vmem:[#allocation18 + $0x16e8] sm:$0xff]
    %v6401 = vld [vmem:[#allocation18 + $0x16f0] sm:$0xff]
    %v6402 = vld [vmem:[#allocation18 + $0x16f8] sm:$0xff]
    %v6403 = vld [vmem:[#allocation18 + $0x1700] sm:$0xff]
    %v6404 = vld [vmem:[#allocation18 + $0x1708] sm:$0xff]
    %v6405 = vld [vmem:[#allocation18 + $0x1710] sm:$0xff]
    %v6406 = vld [vmem:[#allocation18 + $0x1718] sm:$0xff]
    %v6407 = vld [vmem:[#allocation18 + $0x1720] sm:$0xff]
    %v6408 = vld [vmem:[#allocation18 + $0x1728] sm:$0xff]
    %v6409 = vld [vmem:[#allocation18 + $0x1730] sm:$0xff]
    %v6410 = vld [vmem:[#allocation18 + $0x1738] sm:$0xff]
    %v6411 = vld [vmem:[#allocation18 + $0x1740] sm:$0xff]
    %v6412 = vld [vmem:[#allocation18 + $0x1748] sm:$0xff]
    %v6413 = vld [vmem:[#allocation18 + $0x1750] sm:$0xff]
    %v6414 = vld [vmem:[#allocation18 + $0x1758] sm:$0xff]
    %v6415 = vld [vmem:[#allocation18 + $0x1760] sm:$0xff]
    %v6416 = vld [vmem:[#allocation18 + $0x1768] sm:$0xff]
    %v6417 = vld [vmem:[#allocation18 + $0x1770] sm:$0xff]
    %v6418 = vld [vmem:[#allocation18 + $0x1778] sm:$0xff]
    %v6419 = vld [vmem:[#allocation18 + $0x1780] sm:$0xff]
    %v6420 = vld [vmem:[#allocation18 + $0x1788] sm:$0xff]
    %v6421 = vld [vmem:[#allocation18 + $0x1790] sm:$0xff]
    %v6422 = vld [vmem:[#allocation18 + $0x1798] sm:$0xff]
    %v6423 = vld [vmem:[#allocation18 + $0x17a0] sm:$0xff]
    %v6424 = vld [vmem:[#allocation18 + $0x17a8] sm:$0xff]
    %v6425 = vld [vmem:[#allocation18 + $0x17b0] sm:$0xff]
    %v6426 = vld [vmem:[#allocation18 + $0x17b8] sm:$0xff]
    %v6427 = vld [vmem:[#allocation18 + $0x17c0] sm:$0xff]
    %v6428 = vld [vmem:[#allocation18 + $0x17c8] sm:$0xff]
    %v6429 = vld [vmem:[#allocation18 + $0x17d0] sm:$0xff]
    %v6430 = vld [vmem:[#allocation18 + $0x17d8] sm:$0xff]
    %v6431 = vld [vmem:[#allocation18 + $0x17e0] sm:$0xff]
    %v6432 = vld [vmem:[#allocation18 + $0x17e8] sm:$0xff]
    %v6433 = vld [vmem:[#allocation18 + $0x17f0] sm:$0xff]
    %v6434 = vld [vmem:[#allocation18 + $0x17f8] sm:$0xff]
    %v6435 = vld [vmem:[#allocation18 + $0x1800] sm:$0xff]
    %v6436 = vld [vmem:[#allocation18 + $0x1808] sm:$0xff]
    %v6437 = vld [vmem:[#allocation18 + $0x1810] sm:$0xff]
    %v6438 = vld [vmem:[#allocation18 + $0x1818] sm:$0xff]
    %v6439 = vld [vmem:[#allocation18 + $0x1820] sm:$0xff]
    %v6440 = vld [vmem:[#allocation18 + $0x1828] sm:$0xff]
    %v6441 = vld [vmem:[#allocation18 + $0x1830] sm:$0xff]
    %v6442 = vld [vmem:[#allocation18 + $0x1838] sm:$0xff]
    %v6443 = vld [vmem:[#allocation18 + $0x1840] sm:$0xff]
    %v6444 = vld [vmem:[#allocation18 + $0x1848] sm:$0xff]
    %v6445 = vld [vmem:[#allocation18 + $0x1850] sm:$0xff]
    %v6446 = vld [vmem:[#allocation18 + $0x1858] sm:$0xff]
    %v6447 = vld [vmem:[#allocation18 + $0x1860] sm:$0xff]
    %v6448 = vld [vmem:[#allocation18 + $0x1868] sm:$0xff]
    %v6449 = vld [vmem:[#allocation18 + $0x1870] sm:$0xff]
    %v6450 = vld [vmem:[#allocation18 + $0x1878] sm:$0xff]
    %v6451 = vld [vmem:[#allocation18 + $0x1880] sm:$0xff]
    %v6452 = vld [vmem:[#allocation18 + $0x1888] sm:$0xff]
    %v6453 = vld [vmem:[#allocation18 + $0x1890] sm:$0xff]
    %v6454 = vld [vmem:[#allocation18 + $0x1898] sm:$0xff]
    %v6455 = vld [vmem:[#allocation18 + $0x18a0] sm:$0xff]
    %v6456 = vld [vmem:[#allocation18 + $0x18a8] sm:$0xff]
    %v6457 = vld [vmem:[#allocation18 + $0x18b0] sm:$0xff]
    %v6458 = vld [vmem:[#allocation18 + $0x18b8] sm:$0xff]
    %v6459 = vld [vmem:[#allocation18 + $0x18c0] sm:$0xff]
    %v6460 = vld [vmem:[#allocation18 + $0x18c8] sm:$0xff]
    %v6461 = vld [vmem:[#allocation18 + $0x18d0] sm:$0xff]
    %v6462 = vld [vmem:[#allocation18 + $0x18d8] sm:$0xff]
    %v6463 = vld [vmem:[#allocation18 + $0x18e0] sm:$0xff]
    %v6464 = vld [vmem:[#allocation18 + $0x18e8] sm:$0xff]
    %v6465 = vld [vmem:[#allocation18 + $0x18f0] sm:$0xff]
    %v6466 = vld [vmem:[#allocation18 + $0x18f8] sm:$0xff]
    %v6467 = vld [vmem:[#allocation18 + $0x1900] sm:$0xff]
    %v6468 = vld [vmem:[#allocation18 + $0x1908] sm:$0xff]
    %v6469 = vld [vmem:[#allocation18 + $0x1910] sm:$0xff]
    %v6470 = vld [vmem:[#allocation18 + $0x1918] sm:$0xff]
    %v6471 = vld [vmem:[#allocation18 + $0x1920] sm:$0xff]
    %v6472 = vld [vmem:[#allocation18 + $0x1928] sm:$0xff]
    %v6473 = vld [vmem:[#allocation18 + $0x1930] sm:$0xff]
    %v6474 = vld [vmem:[#allocation18 + $0x1938] sm:$0xff]
    %v6475 = vld [vmem:[#allocation18 + $0x1940] sm:$0xff]
    %v6476 = vld [vmem:[#allocation18 + $0x1948] sm:$0xff]
    %v6477 = vld [vmem:[#allocation18 + $0x1950] sm:$0xff]
    %v6478 = vld [vmem:[#allocation18 + $0x1958] sm:$0xff]
    %v6479 = vld [vmem:[#allocation18 + $0x1960] sm:$0xff]
    %v6480 = vld [vmem:[#allocation18 + $0x1968] sm:$0xff]
    %v6481 = vld [vmem:[#allocation18 + $0x1970] sm:$0xff]
    %v6482 = vld [vmem:[#allocation18 + $0x1978] sm:$0xff]
    %v6483 = vld [vmem:[#allocation18 + $0x1980] sm:$0xff]
    %v6484 = vld [vmem:[#allocation18 + $0x1988] sm:$0xff]
    %v6485 = vld [vmem:[#allocation18 + $0x1990] sm:$0xff]
    %v6486 = vld [vmem:[#allocation18 + $0x1998] sm:$0xff]
    %v6487 = vld [vmem:[#allocation18 + $0x19a0] sm:$0xff]
    %v6488 = vld [vmem:[#allocation18 + $0x19a8] sm:$0xff]
    %v6489 = vld [vmem:[#allocation18 + $0x19b0] sm:$0xff]
    %v6490 = vld [vmem:[#allocation18 + $0x19b8] sm:$0xff]
    %v6491 = vld [vmem:[#allocation18 + $0x19c0] sm:$0xff]
    %v6492 = vld [vmem:[#allocation18 + $0x19c8] sm:$0xff]
    %v6493 = vld [vmem:[#allocation18 + $0x19d0] sm:$0xff]
    %v6494 = vld [vmem:[#allocation18 + $0x19d8] sm:$0xff]
    %v6495 = vld [vmem:[#allocation18 + $0x19e0] sm:$0xff]
    %v6496 = vld [vmem:[#allocation18 + $0x19e8] sm:$0xff]
    %v6497 = vld [vmem:[#allocation18 + $0x19f0] sm:$0xff]
    %v6498 = vld [vmem:[#allocation18 + $0x19f8] sm:$0xff]
    %v6499 = vld [vmem:[#allocation18 + $0x1a00] sm:$0xff]
    %v6500 = vld [vmem:[#allocation18 + $0x1a08] sm:$0xff]
    %v6501 = vld [vmem:[#allocation18 + $0x1a10] sm:$0xff]
    %v6502 = vld [vmem:[#allocation18 + $0x1a18] sm:$0xff]
    %v6503 = vld [vmem:[#allocation18 + $0x1a20] sm:$0xff]
    %v6504 = vld [vmem:[#allocation18 + $0x1a28] sm:$0xff]
    %v6505 = vld [vmem:[#allocation18 + $0x1a30] sm:$0xff]
    %v6506 = vld [vmem:[#allocation18 + $0x1a38] sm:$0xff]
    %v6507 = vld [vmem:[#allocation18 + $0x1a40] sm:$0xff]
    %v6508 = vld [vmem:[#allocation18 + $0x1a48] sm:$0xff]
    %v6509 = vld [vmem:[#allocation18 + $0x1a50] sm:$0xff]
    %v6510 = vld [vmem:[#allocation18 + $0x1a58] sm:$0xff]
    %v6511 = vld [vmem:[#allocation18 + $0x1a60] sm:$0xff]
    %v6512 = vld [vmem:[#allocation18 + $0x1a68] sm:$0xff]
    %v6513 = vld [vmem:[#allocation18 + $0x1a70] sm:$0xff]
    %v6514 = vld [vmem:[#allocation18 + $0x1a78] sm:$0xff]
    %v6515 = vld [vmem:[#allocation18 + $0x1a80] sm:$0xff]
    %v6516 = vld [vmem:[#allocation18 + $0x1a88] sm:$0xff]
    %v6517 = vld [vmem:[#allocation18 + $0x1a90] sm:$0xff]
    %v6518 = vld [vmem:[#allocation18 + $0x1a98] sm:$0xff]
    %v6519 = vld [vmem:[#allocation18 + $0x1aa0] sm:$0xff]
    %v6520 = vld [vmem:[#allocation18 + $0x1aa8] sm:$0xff]
    %v6521 = vld [vmem:[#allocation18 + $0x1ab0] sm:$0xff]
    %v6522 = vld [vmem:[#allocation18 + $0x1ab8] sm:$0xff]
    %v6523 = vld [vmem:[#allocation18 + $0x1ac0] sm:$0xff]
    %v6524 = vld [vmem:[#allocation18 + $0x1ac8] sm:$0xff]
    %v6525 = vld [vmem:[#allocation18 + $0x1ad0] sm:$0xff]
    %v6526 = vld [vmem:[#allocation18 + $0x1ad8] sm:$0xff]
    %v6527 = vld [vmem:[#allocation18 + $0x1ae0] sm:$0xff]
    %v6528 = vld [vmem:[#allocation18 + $0x1ae8] sm:$0xff]
    %v6529 = vld [vmem:[#allocation18 + $0x1af0] sm:$0xff]
    %v6530 = vld [vmem:[#allocation18 + $0x1af8] sm:$0xff]
    %v6531 = vld [vmem:[#allocation18 + $0x1b00] sm:$0xff]
    %v6532 = vld [vmem:[#allocation18 + $0x1b08] sm:$0xff]
    %v6533 = vld [vmem:[#allocation18 + $0x1b10] sm:$0xff]
    %v6534 = vld [vmem:[#allocation18 + $0x1b18] sm:$0xff]
    %v6535 = vld [vmem:[#allocation18 + $0x1b20] sm:$0xff]
    %v6536 = vld [vmem:[#allocation18 + $0x1b28] sm:$0xff]
    %v6537 = vld [vmem:[#allocation18 + $0x1b30] sm:$0xff]
    %v6538 = vld [vmem:[#allocation18 + $0x1b38] sm:$0xff]
    %v6539 = vld [vmem:[#allocation18 + $0x1b40] sm:$0xff]
    %v6540 = vld [vmem:[#allocation18 + $0x1b48] sm:$0xff]
    %v6541 = vld [vmem:[#allocation18 + $0x1b50] sm:$0xff]
    %v6542 = vld [vmem:[#allocation18 + $0x1b58] sm:$0xff]
    %v6543 = vld [vmem:[#allocation18 + $0x1b60] sm:$0xff]
    %v6544 = vld [vmem:[#allocation18 + $0x1b68] sm:$0xff]
    %v6545 = vld [vmem:[#allocation18 + $0x1b70] sm:$0xff]
    %v6546 = vld [vmem:[#allocation18 + $0x1b78] sm:$0xff]
    %v6547 = vld [vmem:[#allocation18 + $0x1b80] sm:$0xff]
    %v6548 = vld [vmem:[#allocation18 + $0x1b88] sm:$0xff]
    %v6549 = vld [vmem:[#allocation18 + $0x1b90] sm:$0xff]
    %v6550 = vld [vmem:[#allocation18 + $0x1b98] sm:$0xff]
    %v6551 = vld [vmem:[#allocation18 + $0x1ba0] sm:$0xff]
    %v6552 = vld [vmem:[#allocation18 + $0x1ba8] sm:$0xff]
    %v6553 = vld [vmem:[#allocation18 + $0x1bb0] sm:$0xff]
    %v6554 = vld [vmem:[#allocation18 + $0x1bb8] sm:$0xff]
    %v6555 = vld [vmem:[#allocation18 + $0x1bc0] sm:$0xff]
    %v6556 = vld [vmem:[#allocation18 + $0x1bc8] sm:$0xff]
    %v6557 = vld [vmem:[#allocation18 + $0x1bd0] sm:$0xff]
    %v6558 = vld [vmem:[#allocation18 + $0x1bd8] sm:$0xff]
    %v6559 = vld [vmem:[#allocation18 + $0x1be0] sm:$0xff]
    %v6560 = vld [vmem:[#allocation18 + $0x1be8] sm:$0xff]
    %v6561 = vld [vmem:[#allocation18 + $0x1bf0] sm:$0xff]
    %v6562 = vld [vmem:[#allocation18 + $0x1bf8] sm:$0xff]
    %v6563 = vld [vmem:[#allocation18 + $0x1c00] sm:$0xff]
    %v6564 = vld [vmem:[#allocation18 + $0x1c08] sm:$0xff]
    %v6565 = vld [vmem:[#allocation18 + $0x1c10] sm:$0xff]
    %v6566 = vld [vmem:[#allocation18 + $0x1c18] sm:$0xff]
    %v6567 = vld [vmem:[#allocation18 + $0x1c20] sm:$0xff]
    %v6568 = vld [vmem:[#allocation18 + $0x1c28] sm:$0xff]
    %v6569 = vld [vmem:[#allocation18 + $0x1c30] sm:$0xff]
    %v6570 = vld [vmem:[#allocation18 + $0x1c38] sm:$0xff]
    %v6571 = vld [vmem:[#allocation18 + $0x1c40] sm:$0xff]
    %v6572 = vld [vmem:[#allocation18 + $0x1c48] sm:$0xff]
    %v6573 = vld [vmem:[#allocation18 + $0x1c50] sm:$0xff]
    %v6574 = vld [vmem:[#allocation18 + $0x1c58] sm:$0xff]
    %v6575 = vld [vmem:[#allocation18 + $0x1c60] sm:$0xff]
    %v6576 = vld [vmem:[#allocation18 + $0x1c68] sm:$0xff]
    %v6577 = vld [vmem:[#allocation18 + $0x1c70] sm:$0xff]
    %v6578 = vld [vmem:[#allocation18 + $0x1c78] sm:$0xff]
    %v6579 = vld [vmem:[#allocation18 + $0x1c80] sm:$0xff]
    %v6580 = vld [vmem:[#allocation18 + $0x1c88] sm:$0xff]
    %v6581 = vld [vmem:[#allocation18 + $0x1c90] sm:$0xff]
    %v6582 = vld [vmem:[#allocation18 + $0x1c98] sm:$0xff]
    %v6583 = vld [vmem:[#allocation18 + $0x1ca0] sm:$0xff]
    %v6584 = vld [vmem:[#allocation18 + $0x1ca8] sm:$0xff]
    %v6585 = vld [vmem:[#allocation18 + $0x1cb0] sm:$0xff]
    %v6586 = vld [vmem:[#allocation18 + $0x1cb8] sm:$0xff]
    %v6587 = vld [vmem:[#allocation18 + $0x1cc0] sm:$0xff]
    %v6588 = vld [vmem:[#allocation18 + $0x1cc8] sm:$0xff]
    %v6589 = vld [vmem:[#allocation18 + $0x1cd0] sm:$0xff]
    %v6590 = vld [vmem:[#allocation18 + $0x1cd8] sm:$0xff]
    %v6591 = vld [vmem:[#allocation18 + $0x1ce0] sm:$0xff]
    %v6592 = vld [vmem:[#allocation18 + $0x1ce8] sm:$0xff]
    %v6593 = vld [vmem:[#allocation18 + $0x1cf0] sm:$0xff]
    %v6594 = vld [vmem:[#allocation18 + $0x1cf8] sm:$0xff]
    %v6595 = vld [vmem:[#allocation18 + $0x1d00] sm:$0xff]
    %v6596 = vld [vmem:[#allocation18 + $0x1d08] sm:$0xff]
    %v6597 = vld [vmem:[#allocation18 + $0x1d10] sm:$0xff]
    %v6598 = vld [vmem:[#allocation18 + $0x1d18] sm:$0xff]
    %v6599 = vld [vmem:[#allocation18 + $0x1d20] sm:$0xff]
    %v6600 = vld [vmem:[#allocation18 + $0x1d28] sm:$0xff]
    %v6601 = vld [vmem:[#allocation18 + $0x1d30] sm:$0xff]
    %v6602 = vld [vmem:[#allocation18 + $0x1d38] sm:$0xff]
    %v6603 = vld [vmem:[#allocation18 + $0x1d40] sm:$0xff]
    %v6604 = vld [vmem:[#allocation18 + $0x1d48] sm:$0xff]
    %v6605 = vld [vmem:[#allocation18 + $0x1d50] sm:$0xff]
    %v6606 = vld [vmem:[#allocation18 + $0x1d58] sm:$0xff]
    %v6607 = vld [vmem:[#allocation18 + $0x1d60] sm:$0xff]
    %v6608 = vld [vmem:[#allocation18 + $0x1d68] sm:$0xff]
    %v6609 = vld [vmem:[#allocation18 + $0x1d70] sm:$0xff]
    %v6610 = vld [vmem:[#allocation18 + $0x1d78] sm:$0xff]
    %v6611 = vld [vmem:[#allocation18 + $0x1d80] sm:$0xff]
    %v6612 = vld [vmem:[#allocation18 + $0x1d88] sm:$0xff]
    %v6613 = vld [vmem:[#allocation18 + $0x1d90] sm:$0xff]
    %v6614 = vld [vmem:[#allocation18 + $0x1d98] sm:$0xff]
    %v6615 = vld [vmem:[#allocation18 + $0x1da0] sm:$0xff]
    %v6616 = vld [vmem:[#allocation18 + $0x1da8] sm:$0xff]
    %v6617 = vld [vmem:[#allocation18 + $0x1db0] sm:$0xff]
    %v6618 = vld [vmem:[#allocation18 + $0x1db8] sm:$0xff]
    %v6619 = vld [vmem:[#allocation18 + $0x1dc0] sm:$0xff]
    %v6620 = vld [vmem:[#allocation18 + $0x1dc8] sm:$0xff]
    %v6621 = vld [vmem:[#allocation18 + $0x1dd0] sm:$0xff]
    %v6622 = vld [vmem:[#allocation18 + $0x1dd8] sm:$0xff]
    %v6623 = vld [vmem:[#allocation18 + $0x1de0] sm:$0xff]
    %v6624 = vld [vmem:[#allocation18 + $0x1de8] sm:$0xff]
    %v6625 = vld [vmem:[#allocation18 + $0x1df0] sm:$0xff]
    %v6626 = vld [vmem:[#allocation18 + $0x1df8] sm:$0xff]
    %v6627 = vld [vmem:[#allocation18 + $0x1e00] sm:$0xff]
    %v6628 = vld [vmem:[#allocation18 + $0x1e08] sm:$0xff]
    %v6629 = vld [vmem:[#allocation18 + $0x1e10] sm:$0xff]
    %v6630 = vld [vmem:[#allocation18 + $0x1e18] sm:$0xff]
    %v6631 = vld [vmem:[#allocation18 + $0x1e20] sm:$0xff]
    %v6632 = vld [vmem:[#allocation18 + $0x1e28] sm:$0xff]
    %v6633 = vld [vmem:[#allocation18 + $0x1e30] sm:$0xff]
    %v6634 = vld [vmem:[#allocation18 + $0x1e38] sm:$0xff]
    %v6635 = vld [vmem:[#allocation18 + $0x1e40] sm:$0xff]
    %v6636 = vld [vmem:[#allocation18 + $0x1e48] sm:$0xff]
    %v6637 = vld [vmem:[#allocation18 + $0x1e50] sm:$0xff]
    %v6638 = vld [vmem:[#allocation18 + $0x1e58] sm:$0xff]
    %v6639 = vld [vmem:[#allocation18 + $0x1e60] sm:$0xff]
    %v6640 = vld [vmem:[#allocation18 + $0x1e68] sm:$0xff]
    %v6641 = vld [vmem:[#allocation18 + $0x1e70] sm:$0xff]
    %v6642 = vld [vmem:[#allocation18 + $0x1e78] sm:$0xff]
    %v6643 = vld [vmem:[#allocation18 + $0x1e80] sm:$0xff]
    %v6644 = vld [vmem:[#allocation18 + $0x1e88] sm:$0xff]
    %v6645 = vld [vmem:[#allocation18 + $0x1e90] sm:$0xff]
    %v6646 = vld [vmem:[#allocation18 + $0x1e98] sm:$0xff]
    %v6647 = vld [vmem:[#allocation18 + $0x1ea0] sm:$0xff]
    %v6648 = vld [vmem:[#allocation18 + $0x1ea8] sm:$0xff]
    %v6649 = vld [vmem:[#allocation18 + $0x1eb0] sm:$0xff]
    %v6650 = vld [vmem:[#allocation18 + $0x1eb8] sm:$0xff]
    %v6651 = vld [vmem:[#allocation18 + $0x1ec0] sm:$0xff]
    %v6652 = vld [vmem:[#allocation18 + $0x1ec8] sm:$0xff]
    %v6653 = vld [vmem:[#allocation18 + $0x1ed0] sm:$0xff]
    %v6654 = vld [vmem:[#allocation18 + $0x1ed8] sm:$0xff]
    %v6655 = vld [vmem:[#allocation18 + $0x1ee0] sm:$0xff]
    %v6656 = vld [vmem:[#allocation18 + $0x1ee8] sm:$0xff]
    %v6657 = vld [vmem:[#allocation18 + $0x1ef0] sm:$0xff]
    %v6658 = vld [vmem:[#allocation18 + $0x1ef8] sm:$0xff]
    %v6659 = vld [vmem:[#allocation18 + $0x1f00] sm:$0xff]
    %v6660 = vld [vmem:[#allocation18 + $0x1f08] sm:$0xff]
    %v6661 = vld [vmem:[#allocation18 + $0x1f10] sm:$0xff]
    %v6662 = vld [vmem:[#allocation18 + $0x1f18] sm:$0xff]
    %v6663 = vld [vmem:[#allocation18 + $0x1f20] sm:$0xff]
    %v6664 = vld [vmem:[#allocation18 + $0x1f28] sm:$0xff]
    %v6665 = vld [vmem:[#allocation18 + $0x1f30] sm:$0xff]
    %v6666 = vld [vmem:[#allocation18 + $0x1f38] sm:$0xff]
    %v6667 = vld [vmem:[#allocation18 + $0x1f40] sm:$0xff]
    %v6668 = vld [vmem:[#allocation18 + $0x1f48] sm:$0xff]
    %v6669 = vld [vmem:[#allocation18 + $0x1f50] sm:$0xff]
    %v6670 = vld [vmem:[#allocation18 + $0x1f58] sm:$0xff]
    %v6671 = vld [vmem:[#allocation18 + $0x1f60] sm:$0xff]
    %v6672 = vld [vmem:[#allocation18 + $0x1f68] sm:$0xff]
    %v6673 = vld [vmem:[#allocation18 + $0x1f70] sm:$0xff]
    %v6674 = vld [vmem:[#allocation18 + $0x1f78] sm:$0xff]
    %v6675 = vld [vmem:[#allocation18 + $0x1f80] sm:$0xff]
    %v6676 = vld [vmem:[#allocation18 + $0x1f88] sm:$0xff]
    %v6677 = vld [vmem:[#allocation18 + $0x1f90] sm:$0xff]
    %v6678 = vld [vmem:[#allocation18 + $0x1f98] sm:$0xff]
    %v6679 = vld [vmem:[#allocation18 + $0x1fa0] sm:$0xff]
    %v6680 = vld [vmem:[#allocation18 + $0x1fa8] sm:$0xff]
    %v6681 = vld [vmem:[#allocation18 + $0x1fb0] sm:$0xff]
    %v6682 = vld [vmem:[#allocation18 + $0x1fb8] sm:$0xff]
    %v6683 = vld [vmem:[#allocation18 + $0x1fc0] sm:$0xff]
    %v6684 = vld [vmem:[#allocation18 + $0x1fc8] sm:$0xff]
    %v6685 = vld [vmem:[#allocation18 + $0x1fd0] sm:$0xff]
    %v6686 = vld [vmem:[#allocation18 + $0x1fd8] sm:$0xff]
    %v6687 = vld [vmem:[#allocation18 + $0x1fe0] sm:$0xff]
    %v6688 = vld [vmem:[#allocation18 + $0x1fe8] sm:$0xff]
    %v6689 = vld [vmem:[#allocation18 + $0x1ff0] sm:$0xff]
    %v6690 = vld [vmem:[#allocation18 + $0x1ff8] sm:$0xff]
    %v6691 = vld [vmem:[#allocation19] sm:$0xff]
    %v6692 = vld [vmem:[#allocation19 + $0x8] sm:$0xff]
    %v6695 = vlaneseq
    %v6696 = vshrl.u32 %v6695, 7
    %v6697 = vsub.s32 0, %v6696
    %v6698 = vrot.slane %v6691, %v6697
    %v6699 = vlaneseq
    %v6700 = vshrl.u32 %v6699, 7
    %v6701 = vsub.s32 1, %v6700
    %v6702 = vrot.slane %v6691, %v6701
    %v6703 = vlaneseq
    %v6704 = vshrl.u32 %v6703, 7
    %v6705 = vsub.s32 2, %v6704
    %v6706 = vrot.slane %v6691, %v6705
    %v6707 = vlaneseq
    %v6708 = vshrl.u32 %v6707, 7
    %v6709 = vsub.s32 3, %v6708
    %v6710 = vrot.slane %v6691, %v6709
    %v6711 = vlaneseq
    %v6712 = vshrl.u32 %v6711, 7
    %v6713 = vsub.s32 4, %v6712
    %v6714 = vrot.slane %v6691, %v6713
    %v6715 = vlaneseq
    %v6716 = vshrl.u32 %v6715, 7
    %v6717 = vsub.s32 5, %v6716
    %v6718 = vrot.slane %v6691, %v6717
    %v6719 = vlaneseq
    %v6720 = vshrl.u32 %v6719, 7
    %v6721 = vsub.s32 6, %v6720
    %v6722 = vrot.slane %v6691, %v6721
    %v6723 = vlaneseq
    %v6724 = vshrl.u32 %v6723, 7
    %v6725 = vsub.s32 7, %v6724
    %v6726 = vrot.slane %v6691, %v6725
    %v6727 = vlaneseq
    %v6728 = vshrl.u32 %v6727, 7
    %v6729 = vsub.s32 0, %v6728
    %v6730 = vrot.slane %v6692, %v6729
    %v6731 = vlaneseq
    %v6732 = vshrl.u32 %v6731, 7
    %v6733 = vsub.s32 1, %v6732
    %v6734 = vrot.slane %v6692, %v6733
    %v6735 = vlaneseq
    %v6736 = vshrl.u32 %v6735, 7
    %v6737 = vsub.s32 2, %v6736
    %v6738 = vrot.slane %v6692, %v6737
    %v6739 = vlaneseq
    %v6740 = vshrl.u32 %v6739, 7
    %v6741 = vsub.s32 3, %v6740
    %v6742 = vrot.slane %v6692, %v6741
    %v6743 = vlaneseq
    %v6744 = vshrl.u32 %v6743, 7
    %v6745 = vsub.s32 4, %v6744
    %v6746 = vrot.slane %v6692, %v6745
    %v6747 = vlaneseq
    %v6748 = vshrl.u32 %v6747, 7
    %v6749 = vsub.s32 5, %v6748
    %v6750 = vrot.slane %v6692, %v6749
    %v6751 = vlaneseq
    %v6752 = vshrl.u32 %v6751, 7
    %v6753 = vsub.s32 6, %v6752
    %v6754 = vrot.slane %v6692, %v6753
    %v6755 = vlaneseq
    %v6756 = vshrl.u32 %v6755, 7
    %v6757 = vsub.s32 7, %v6756
    %v6758 = vrot.slane %v6692, %v6757
    %v7799 = vunpack.c.l.b16 %v5667
    %v7800 = vunpack.c.h.b16 %v5667
    %v7801 = vunpack.c.l.b16 %v5668
    %v7802 = vunpack.c.h.b16 %v5668
    %v7803 = vunpack.c.l.b16 %v5669
    %v7804 = vunpack.c.h.b16 %v5669
    %v7805 = vunpack.c.l.b16 %v5670
    %v7806 = vunpack.c.h.b16 %v5670
    %v7807 = vunpack.c.l.b16 %v5671
    %v7808 = vunpack.c.h.b16 %v5671
    %v7809 = vunpack.c.l.b16 %v5672
    %v7810 = vunpack.c.h.b16 %v5672
    %v7811 = vunpack.c.l.b16 %v5673
    %v7812 = vunpack.c.h.b16 %v5673
    %v7813 = vunpack.c.l.b16 %v5674
    %v7814 = vunpack.c.h.b16 %v5674
    %v7815 = vunpack.c.l.b16 %v5675
    %v7816 = vunpack.c.h.b16 %v5675
    %v7817 = vunpack.c.l.b16 %v5676
    %v7818 = vunpack.c.h.b16 %v5676
    %v7819 = vunpack.c.l.b16 %v5677
    %v7820 = vunpack.c.h.b16 %v5677
    %v7821 = vunpack.c.l.b16 %v5678
    %v7822 = vunpack.c.h.b16 %v5678
    %v7823 = vunpack.c.l.b16 %v5679
    %v7824 = vunpack.c.h.b16 %v5679
    %v7825 = vunpack.c.l.b16 %v5680
    %v7826 = vunpack.c.h.b16 %v5680
    %v7827 = vunpack.c.l.b16 %v5681
    %v7828 = vunpack.c.h.b16 %v5681
    %v7829 = vunpack.c.l.b16 %v5682
    %v7830 = vunpack.c.h.b16 %v5682
    %v7831 = vunpack.c.l.b16 %v5683
    %v7832 = vunpack.c.h.b16 %v5683
    %v7833 = vunpack.c.l.b16 %v5684
    %v7834 = vunpack.c.h.b16 %v5684
    %v7835 = vunpack.c.l.b16 %v5685
    %v7836 = vunpack.c.h.b16 %v5685
    %v7837 = vunpack.c.l.b16 %v5686
    %v7838 = vunpack.c.h.b16 %v5686
    %v7839 = vunpack.c.l.b16 %v5687
    %v7840 = vunpack.c.h.b16 %v5687
    %v7841 = vunpack.c.l.b16 %v5688
    %v7842 = vunpack.c.h.b16 %v5688
    %v7843 = vunpack.c.l.b16 %v5689
    %v7844 = vunpack.c.h.b16 %v5689
    %v7845 = vunpack.c.l.b16 %v5690
    %v7846 = vunpack.c.h.b16 %v5690
    %v7847 = vunpack.c.l.b16 %v5691
    %v7848 = vunpack.c.h.b16 %v5691
    %v7849 = vunpack.c.l.b16 %v5692
    %v7850 = vunpack.c.h.b16 %v5692
    %v7851 = vunpack.c.l.b16 %v5693
    %v7852 = vunpack.c.h.b16 %v5693
    %v7853 = vunpack.c.l.b16 %v5694
    %v7854 = vunpack.c.h.b16 %v5694
    %v7855 = vunpack.c.l.b16 %v5695
    %v7856 = vunpack.c.h.b16 %v5695
    %v7857 = vunpack.c.l.b16 %v5696
    %v7858 = vunpack.c.h.b16 %v5696
    %v7859 = vunpack.c.l.b16 %v5697
    %v7860 = vunpack.c.h.b16 %v5697
    %v7861 = vunpack.c.l.b16 %v5698
    %v7862 = vunpack.c.h.b16 %v5698
    %v7863 = vunpack.c.l.b16 %v5699
    %v7864 = vunpack.c.h.b16 %v5699
    %v7865 = vunpack.c.l.b16 %v5700
    %v7866 = vunpack.c.h.b16 %v5700
    %v7867 = vunpack.c.l.b16 %v5701
    %v7868 = vunpack.c.h.b16 %v5701
    %v7869 = vunpack.c.l.b16 %v5702
    %v7870 = vunpack.c.h.b16 %v5702
    %v7871 = vunpack.c.l.b16 %v5703
    %v7872 = vunpack.c.h.b16 %v5703
    %v7873 = vunpack.c.l.b16 %v5704
    %v7874 = vunpack.c.h.b16 %v5704
    %v7875 = vunpack.c.l.b16 %v5705
    %v7876 = vunpack.c.h.b16 %v5705
    %v7877 = vunpack.c.l.b16 %v5706
    %v7878 = vunpack.c.h.b16 %v5706
    %v7879 = vunpack.c.l.b16 %v5707
    %v7880 = vunpack.c.h.b16 %v5707
    %v7881 = vunpack.c.l.b16 %v5708
    %v7882 = vunpack.c.h.b16 %v5708
    %v7883 = vunpack.c.l.b16 %v5709
    %v7884 = vunpack.c.h.b16 %v5709
    %v7885 = vunpack.c.l.b16 %v5710
    %v7886 = vunpack.c.h.b16 %v5710
    %v7887 = vunpack.c.l.b16 %v5711
    %v7888 = vunpack.c.h.b16 %v5711
    %v7889 = vunpack.c.l.b16 %v5712
    %v7890 = vunpack.c.h.b16 %v5712
    %v7891 = vunpack.c.l.b16 %v5713
    %v7892 = vunpack.c.h.b16 %v5713
    %v7893 = vunpack.c.l.b16 %v5714
    %v7894 = vunpack.c.h.b16 %v5714
    %v7895 = vunpack.c.l.b16 %v5715
    %v7896 = vunpack.c.h.b16 %v5715
    %v7897 = vunpack.c.l.b16 %v5716
    %v7898 = vunpack.c.h.b16 %v5716
    %v7899 = vunpack.c.l.b16 %v5717
    %v7900 = vunpack.c.h.b16 %v5717
    %v7901 = vunpack.c.l.b16 %v5718
    %v7902 = vunpack.c.h.b16 %v5718
    %v7903 = vunpack.c.l.b16 %v5719
    %v7904 = vunpack.c.h.b16 %v5719
    %v7905 = vunpack.c.l.b16 %v5720
    %v7906 = vunpack.c.h.b16 %v5720
    %v7907 = vunpack.c.l.b16 %v5721
    %v7908 = vunpack.c.h.b16 %v5721
    %v7909 = vunpack.c.l.b16 %v5722
    %v7910 = vunpack.c.h.b16 %v5722
    %v7911 = vunpack.c.l.b16 %v5723
    %v7912 = vunpack.c.h.b16 %v5723
    %v7913 = vunpack.c.l.b16 %v5724
    %v7914 = vunpack.c.h.b16 %v5724
    %v7915 = vunpack.c.l.b16 %v5725
    %v7916 = vunpack.c.h.b16 %v5725
    %v7917 = vunpack.c.l.b16 %v5726
    %v7918 = vunpack.c.h.b16 %v5726
    %v7919 = vunpack.c.l.b16 %v5727
    %v7920 = vunpack.c.h.b16 %v5727
    %v7921 = vunpack.c.l.b16 %v5728
    %v7922 = vunpack.c.h.b16 %v5728
    %v7923 = vunpack.c.l.b16 %v5729
    %v7924 = vunpack.c.h.b16 %v5729
    %v7925 = vunpack.c.l.b16 %v5730
    %v7926 = vunpack.c.h.b16 %v5730
    %v7927 = vunpack.c.l.b16 %v5731
    %v7928 = vunpack.c.h.b16 %v5731
    %v7929 = vunpack.c.l.b16 %v5732
    %v7930 = vunpack.c.h.b16 %v5732
    %v7931 = vunpack.c.l.b16 %v5733
    %v7932 = vunpack.c.h.b16 %v5733
    %v7933 = vunpack.c.l.b16 %v5734
    %v7934 = vunpack.c.h.b16 %v5734
    %v7935 = vunpack.c.l.b16 %v5735
    %v7936 = vunpack.c.h.b16 %v5735
    %v7937 = vunpack.c.l.b16 %v5736
    %v7938 = vunpack.c.h.b16 %v5736
    %v7939 = vunpack.c.l.b16 %v5737
    %v7940 = vunpack.c.h.b16 %v5737
    %v7941 = vunpack.c.l.b16 %v5738
    %v7942 = vunpack.c.h.b16 %v5738
    %v7943 = vunpack.c.l.b16 %v5739
    %v7944 = vunpack.c.h.b16 %v5739
    %v7945 = vunpack.c.l.b16 %v5740
    %v7946 = vunpack.c.h.b16 %v5740
    %v7947 = vunpack.c.l.b16 %v5741
    %v7948 = vunpack.c.h.b16 %v5741
    %v7949 = vunpack.c.l.b16 %v5742
    %v7950 = vunpack.c.h.b16 %v5742
    %v7951 = vunpack.c.l.b16 %v5743
    %v7952 = vunpack.c.h.b16 %v5743
    %v7953 = vunpack.c.l.b16 %v5744
    %v7954 = vunpack.c.h.b16 %v5744
    %v7955 = vunpack.c.l.b16 %v5745
    %v7956 = vunpack.c.h.b16 %v5745
    %v7957 = vunpack.c.l.b16 %v5746
    %v7958 = vunpack.c.h.b16 %v5746
    %v7959 = vunpack.c.l.b16 %v5747
    %v7960 = vunpack.c.h.b16 %v5747
    %v7961 = vunpack.c.l.b16 %v5748
    %v7962 = vunpack.c.h.b16 %v5748
    %v7963 = vunpack.c.l.b16 %v5749
    %v7964 = vunpack.c.h.b16 %v5749
    %v7965 = vunpack.c.l.b16 %v5750
    %v7966 = vunpack.c.h.b16 %v5750
    %v7967 = vunpack.c.l.b16 %v5751
    %v7968 = vunpack.c.h.b16 %v5751
    %v7969 = vunpack.c.l.b16 %v5752
    %v7970 = vunpack.c.h.b16 %v5752
    %v7971 = vunpack.c.l.b16 %v5753
    %v7972 = vunpack.c.h.b16 %v5753
    %v7973 = vunpack.c.l.b16 %v5754
    %v7974 = vunpack.c.h.b16 %v5754
    %v7975 = vunpack.c.l.b16 %v5755
    %v7976 = vunpack.c.h.b16 %v5755
    %v7977 = vunpack.c.l.b16 %v5756
    %v7978 = vunpack.c.h.b16 %v5756
    %v7979 = vunpack.c.l.b16 %v5757
    %v7980 = vunpack.c.h.b16 %v5757
    %v7981 = vunpack.c.l.b16 %v5758
    %v7982 = vunpack.c.h.b16 %v5758
    %v7983 = vunpack.c.l.b16 %v5759
    %v7984 = vunpack.c.h.b16 %v5759
    %v7985 = vunpack.c.l.b16 %v5760
    %v7986 = vunpack.c.h.b16 %v5760
    %v7987 = vunpack.c.l.b16 %v5761
    %v7988 = vunpack.c.h.b16 %v5761
    %v7989 = vunpack.c.l.b16 %v5762
    %v7990 = vunpack.c.h.b16 %v5762
    %v7991 = vunpack.c.l.b16 %v5763
    %v7992 = vunpack.c.h.b16 %v5763
    %v7993 = vunpack.c.l.b16 %v5764
    %v7994 = vunpack.c.h.b16 %v5764
    %v7995 = vunpack.c.l.b16 %v5765
    %v7996 = vunpack.c.h.b16 %v5765
    %v7997 = vunpack.c.l.b16 %v5766
    %v7998 = vunpack.c.h.b16 %v5766
    %v7999 = vunpack.c.l.b16 %v5767
    %v8000 = vunpack.c.h.b16 %v5767
    %v8001 = vunpack.c.l.b16 %v5768
    %v8002 = vunpack.c.h.b16 %v5768
    %v8003 = vunpack.c.l.b16 %v5769
    %v8004 = vunpack.c.h.b16 %v5769
    %v8005 = vunpack.c.l.b16 %v5770
    %v8006 = vunpack.c.h.b16 %v5770
    %v8007 = vunpack.c.l.b16 %v5771
    %v8008 = vunpack.c.h.b16 %v5771
    %v8009 = vunpack.c.l.b16 %v5772
    %v8010 = vunpack.c.h.b16 %v5772
    %v8011 = vunpack.c.l.b16 %v5773
    %v8012 = vunpack.c.h.b16 %v5773
    %v8013 = vunpack.c.l.b16 %v5774
    %v8014 = vunpack.c.h.b16 %v5774
    %v8015 = vunpack.c.l.b16 %v5775
    %v8016 = vunpack.c.h.b16 %v5775
    %v8017 = vunpack.c.l.b16 %v5776
    %v8018 = vunpack.c.h.b16 %v5776
    %v8019 = vunpack.c.l.b16 %v5777
    %v8020 = vunpack.c.h.b16 %v5777
    %v8021 = vunpack.c.l.b16 %v5778
    %v8022 = vunpack.c.h.b16 %v5778
    %v8023 = vunpack.c.l.b16 %v5779
    %v8024 = vunpack.c.h.b16 %v5779
    %v8025 = vunpack.c.l.b16 %v5780
    %v8026 = vunpack.c.h.b16 %v5780
    %v8027 = vunpack.c.l.b16 %v5781
    %v8028 = vunpack.c.h.b16 %v5781
    %v8029 = vunpack.c.l.b16 %v5782
    %v8030 = vunpack.c.h.b16 %v5782
    %v8031 = vunpack.c.l.b16 %v5783
    %v8032 = vunpack.c.h.b16 %v5783
    %v8033 = vunpack.c.l.b16 %v5784
    %v8034 = vunpack.c.h.b16 %v5784
    %v8035 = vunpack.c.l.b16 %v5785
    %v8036 = vunpack.c.h.b16 %v5785
    %v8037 = vunpack.c.l.b16 %v5786
    %v8038 = vunpack.c.h.b16 %v5786
    %v8039 = vunpack.c.l.b16 %v5787
    %v8040 = vunpack.c.h.b16 %v5787
    %v8041 = vunpack.c.l.b16 %v5788
    %v8042 = vunpack.c.h.b16 %v5788
    %v8043 = vunpack.c.l.b16 %v5789
    %v8044 = vunpack.c.h.b16 %v5789
    %v8045 = vunpack.c.l.b16 %v5790
    %v8046 = vunpack.c.h.b16 %v5790
    %v8047 = vunpack.c.l.b16 %v5791
    %v8048 = vunpack.c.h.b16 %v5791
    %v8049 = vunpack.c.l.b16 %v5792
    %v8050 = vunpack.c.h.b16 %v5792
    %v8051 = vunpack.c.l.b16 %v5793
    %v8052 = vunpack.c.h.b16 %v5793
    %v8053 = vunpack.c.l.b16 %v5794
    %v8054 = vunpack.c.h.b16 %v5794
    %v8055 = vunpack.c.l.b16 %v5795
    %v8056 = vunpack.c.h.b16 %v5795
    %v8057 = vunpack.c.l.b16 %v5796
    %v8058 = vunpack.c.h.b16 %v5796
    %v8059 = vunpack.c.l.b16 %v5797
    %v8060 = vunpack.c.h.b16 %v5797
    %v8061 = vunpack.c.l.b16 %v5798
    %v8062 = vunpack.c.h.b16 %v5798
    %v8063 = vunpack.c.l.b16 %v5799
    %v8064 = vunpack.c.h.b16 %v5799
    %v8065 = vunpack.c.l.b16 %v5800
    %v8066 = vunpack.c.h.b16 %v5800
    %v8067 = vunpack.c.l.b16 %v5801
    %v8068 = vunpack.c.h.b16 %v5801
    %v8069 = vunpack.c.l.b16 %v5802
    %v8070 = vunpack.c.h.b16 %v5802
    %v8071 = vunpack.c.l.b16 %v5803
    %v8072 = vunpack.c.h.b16 %v5803
    %v8073 = vunpack.c.l.b16 %v5804
    %v8074 = vunpack.c.h.b16 %v5804
    %v8075 = vunpack.c.l.b16 %v5805
    %v8076 = vunpack.c.h.b16 %v5805
    %v8077 = vunpack.c.l.b16 %v5806
    %v8078 = vunpack.c.h.b16 %v5806
    %v8079 = vunpack.c.l.b16 %v5807
    %v8080 = vunpack.c.h.b16 %v5807
    %v8081 = vunpack.c.l.b16 %v5808
    %v8082 = vunpack.c.h.b16 %v5808
    %v8083 = vunpack.c.l.b16 %v5809
    %v8084 = vunpack.c.h.b16 %v5809
    %v8085 = vunpack.c.l.b16 %v5810
    %v8086 = vunpack.c.h.b16 %v5810
    %v8087 = vunpack.c.l.b16 %v5811
    %v8088 = vunpack.c.h.b16 %v5811
    %v8089 = vunpack.c.l.b16 %v5812
    %v8090 = vunpack.c.h.b16 %v5812
    %v8091 = vunpack.c.l.b16 %v5813
    %v8092 = vunpack.c.h.b16 %v5813
    %v8093 = vunpack.c.l.b16 %v5814
    %v8094 = vunpack.c.h.b16 %v5814
    %v8095 = vunpack.c.l.b16 %v5815
    %v8096 = vunpack.c.h.b16 %v5815
    %v8097 = vunpack.c.l.b16 %v5816
    %v8098 = vunpack.c.h.b16 %v5816
    %v8099 = vunpack.c.l.b16 %v5817
    %v8100 = vunpack.c.h.b16 %v5817
    %v8101 = vunpack.c.l.b16 %v5818
    %v8102 = vunpack.c.h.b16 %v5818
    %v8103 = vunpack.c.l.b16 %v5819
    %v8104 = vunpack.c.h.b16 %v5819
    %v8105 = vunpack.c.l.b16 %v5820
    %v8106 = vunpack.c.h.b16 %v5820
    %v8107 = vunpack.c.l.b16 %v5821
    %v8108 = vunpack.c.h.b16 %v5821
    %v8109 = vunpack.c.l.b16 %v5822
    %v8110 = vunpack.c.h.b16 %v5822
    %v8111 = vunpack.c.l.b16 %v5823
    %v8112 = vunpack.c.h.b16 %v5823
    %v8113 = vunpack.c.l.b16 %v5824
    %v8114 = vunpack.c.h.b16 %v5824
    %v8115 = vunpack.c.l.b16 %v5825
    %v8116 = vunpack.c.h.b16 %v5825
    %v8117 = vunpack.c.l.b16 %v5826
    %v8118 = vunpack.c.h.b16 %v5826
    %v8119 = vunpack.c.l.b16 %v5827
    %v8120 = vunpack.c.h.b16 %v5827
    %v8121 = vunpack.c.l.b16 %v5828
    %v8122 = vunpack.c.h.b16 %v5828
    %v8123 = vunpack.c.l.b16 %v5829
    %v8124 = vunpack.c.h.b16 %v5829
    %v8125 = vunpack.c.l.b16 %v5830
    %v8126 = vunpack.c.h.b16 %v5830
    %v8127 = vunpack.c.l.b16 %v5831
    %v8128 = vunpack.c.h.b16 %v5831
    %v8129 = vunpack.c.l.b16 %v5832
    %v8130 = vunpack.c.h.b16 %v5832
    %v8131 = vunpack.c.l.b16 %v5833
    %v8132 = vunpack.c.h.b16 %v5833
    %v8133 = vunpack.c.l.b16 %v5834
    %v8134 = vunpack.c.h.b16 %v5834
    %v8135 = vunpack.c.l.b16 %v5835
    %v8136 = vunpack.c.h.b16 %v5835
    %v8137 = vunpack.c.l.b16 %v5836
    %v8138 = vunpack.c.h.b16 %v5836
    %v8139 = vunpack.c.l.b16 %v5837
    %v8140 = vunpack.c.h.b16 %v5837
    %v8141 = vunpack.c.l.b16 %v5838
    %v8142 = vunpack.c.h.b16 %v5838
    %v8143 = vunpack.c.l.b16 %v5839
    %v8144 = vunpack.c.h.b16 %v5839
    %v8145 = vunpack.c.l.b16 %v5840
    %v8146 = vunpack.c.h.b16 %v5840
    %v8147 = vunpack.c.l.b16 %v5841
    %v8148 = vunpack.c.h.b16 %v5841
    %v8149 = vunpack.c.l.b16 %v5842
    %v8150 = vunpack.c.h.b16 %v5842
    %v8151 = vunpack.c.l.b16 %v5843
    %v8152 = vunpack.c.h.b16 %v5843
    %v8153 = vunpack.c.l.b16 %v5844
    %v8154 = vunpack.c.h.b16 %v5844
    %v8155 = vunpack.c.l.b16 %v5845
    %v8156 = vunpack.c.h.b16 %v5845
    %v8157 = vunpack.c.l.b16 %v5846
    %v8158 = vunpack.c.h.b16 %v5846
    %v8159 = vunpack.c.l.b16 %v5847
    %v8160 = vunpack.c.h.b16 %v5847
    %v8161 = vunpack.c.l.b16 %v5848
    %v8162 = vunpack.c.h.b16 %v5848
    %v8163 = vunpack.c.l.b16 %v5849
    %v8164 = vunpack.c.h.b16 %v5849
    %v8165 = vunpack.c.l.b16 %v5850
    %v8166 = vunpack.c.h.b16 %v5850
    %v8167 = vunpack.c.l.b16 %v5851
    %v8168 = vunpack.c.h.b16 %v5851
    %v8169 = vunpack.c.l.b16 %v5852
    %v8170 = vunpack.c.h.b16 %v5852
    %v8171 = vunpack.c.l.b16 %v5853
    %v8172 = vunpack.c.h.b16 %v5853
    %v8173 = vunpack.c.l.b16 %v5854
    %v8174 = vunpack.c.h.b16 %v5854
    %v8175 = vunpack.c.l.b16 %v5855
    %v8176 = vunpack.c.h.b16 %v5855
    %v8177 = vunpack.c.l.b16 %v5856
    %v8178 = vunpack.c.h.b16 %v5856
    %v8179 = vunpack.c.l.b16 %v5857
    %v8180 = vunpack.c.h.b16 %v5857
    %v8181 = vunpack.c.l.b16 %v5858
    %v8182 = vunpack.c.h.b16 %v5858
    %v8183 = vunpack.c.l.b16 %v5859
    %v8184 = vunpack.c.h.b16 %v5859
    %v8185 = vunpack.c.l.b16 %v5860
    %v8186 = vunpack.c.h.b16 %v5860
    %v8187 = vunpack.c.l.b16 %v5861
    %v8188 = vunpack.c.h.b16 %v5861
    %v8189 = vunpack.c.l.b16 %v5862
    %v8190 = vunpack.c.h.b16 %v5862
    %v8191 = vunpack.c.l.b16 %v5863
    %v8192 = vunpack.c.h.b16 %v5863
    %v8193 = vunpack.c.l.b16 %v5864
    %v8194 = vunpack.c.h.b16 %v5864
    %v8195 = vunpack.c.l.b16 %v5865
    %v8196 = vunpack.c.h.b16 %v5865
    %v8197 = vunpack.c.l.b16 %v5866
    %v8198 = vunpack.c.h.b16 %v5866
    %v8199 = vunpack.c.l.b16 %v5867
    %v8200 = vunpack.c.h.b16 %v5867
    %v8201 = vunpack.c.l.b16 %v5868
    %v8202 = vunpack.c.h.b16 %v5868
    %v8203 = vunpack.c.l.b16 %v5869
    %v8204 = vunpack.c.h.b16 %v5869
    %v8205 = vunpack.c.l.b16 %v5870
    %v8206 = vunpack.c.h.b16 %v5870
    %v8207 = vunpack.c.l.b16 %v5871
    %v8208 = vunpack.c.h.b16 %v5871
    %v8209 = vunpack.c.l.b16 %v5872
    %v8210 = vunpack.c.h.b16 %v5872
    %v8211 = vunpack.c.l.b16 %v5873
    %v8212 = vunpack.c.h.b16 %v5873
    %v8213 = vunpack.c.l.b16 %v5874
    %v8214 = vunpack.c.h.b16 %v5874
    %v8215 = vunpack.c.l.b16 %v5875
    %v8216 = vunpack.c.h.b16 %v5875
    %v8217 = vunpack.c.l.b16 %v5876
    %v8218 = vunpack.c.h.b16 %v5876
    %v8219 = vunpack.c.l.b16 %v5877
    %v8220 = vunpack.c.h.b16 %v5877
    %v8221 = vunpack.c.l.b16 %v5878
    %v8222 = vunpack.c.h.b16 %v5878
    %v8223 = vunpack.c.l.b16 %v5879
    %v8224 = vunpack.c.h.b16 %v5879
    %v8225 = vunpack.c.l.b16 %v5880
    %v8226 = vunpack.c.h.b16 %v5880
    %v8227 = vunpack.c.l.b16 %v5881
    %v8228 = vunpack.c.h.b16 %v5881
    %v8229 = vunpack.c.l.b16 %v5882
    %v8230 = vunpack.c.h.b16 %v5882
    %v8231 = vunpack.c.l.b16 %v5883
    %v8232 = vunpack.c.h.b16 %v5883
    %v8233 = vunpack.c.l.b16 %v5884
    %v8234 = vunpack.c.h.b16 %v5884
    %v8235 = vunpack.c.l.b16 %v5885
    %v8236 = vunpack.c.h.b16 %v5885
    %v8237 = vunpack.c.l.b16 %v5886
    %v8238 = vunpack.c.h.b16 %v5886
    %v8239 = vunpack.c.l.b16 %v5887
    %v8240 = vunpack.c.h.b16 %v5887
    %v8241 = vunpack.c.l.b16 %v5888
    %v8242 = vunpack.c.h.b16 %v5888
    %v8243 = vunpack.c.l.b16 %v5889
    %v8244 = vunpack.c.h.b16 %v5889
    %v8245 = vunpack.c.l.b16 %v5890
    %v8246 = vunpack.c.h.b16 %v5890
    %v8247 = vunpack.c.l.b16 %v5891
    %v8248 = vunpack.c.h.b16 %v5891
    %v8249 = vunpack.c.l.b16 %v5892
    %v8250 = vunpack.c.h.b16 %v5892
    %v8251 = vunpack.c.l.b16 %v5893
    %v8252 = vunpack.c.h.b16 %v5893
    %v8253 = vunpack.c.l.b16 %v5894
    %v8254 = vunpack.c.h.b16 %v5894
    %v8255 = vunpack.c.l.b16 %v5895
    %v8256 = vunpack.c.h.b16 %v5895
    %v8257 = vunpack.c.l.b16 %v5896
    %v8258 = vunpack.c.h.b16 %v5896
    %v8259 = vunpack.c.l.b16 %v5897
    %v8260 = vunpack.c.h.b16 %v5897
    %v8261 = vunpack.c.l.b16 %v5898
    %v8262 = vunpack.c.h.b16 %v5898
    %v8263 = vunpack.c.l.b16 %v5899
    %v8264 = vunpack.c.h.b16 %v5899
    %v8265 = vunpack.c.l.b16 %v5900
    %v8266 = vunpack.c.h.b16 %v5900
    %v8267 = vunpack.c.l.b16 %v5901
    %v8268 = vunpack.c.h.b16 %v5901
    %v8269 = vunpack.c.l.b16 %v5902
    %v8270 = vunpack.c.h.b16 %v5902
    %v8271 = vunpack.c.l.b16 %v5903
    %v8272 = vunpack.c.h.b16 %v5903
    %v8273 = vunpack.c.l.b16 %v5904
    %v8274 = vunpack.c.h.b16 %v5904
    %v8275 = vunpack.c.l.b16 %v5905
    %v8276 = vunpack.c.h.b16 %v5905
    %v8277 = vunpack.c.l.b16 %v5906
    %v8278 = vunpack.c.h.b16 %v5906
    %v8279 = vunpack.c.l.b16 %v5907
    %v8280 = vunpack.c.h.b16 %v5907
    %v8281 = vunpack.c.l.b16 %v5908
    %v8282 = vunpack.c.h.b16 %v5908
    %v8283 = vunpack.c.l.b16 %v5909
    %v8284 = vunpack.c.h.b16 %v5909
    %v8285 = vunpack.c.l.b16 %v5910
    %v8286 = vunpack.c.h.b16 %v5910
    %v8287 = vunpack.c.l.b16 %v5911
    %v8288 = vunpack.c.h.b16 %v5911
    %v8289 = vunpack.c.l.b16 %v5912
    %v8290 = vunpack.c.h.b16 %v5912
    %v8291 = vunpack.c.l.b16 %v5913
    %v8292 = vunpack.c.h.b16 %v5913
    %v8293 = vunpack.c.l.b16 %v5914
    %v8294 = vunpack.c.h.b16 %v5914
    %v8295 = vunpack.c.l.b16 %v5915
    %v8296 = vunpack.c.h.b16 %v5915
    %v8297 = vunpack.c.l.b16 %v5916
    %v8298 = vunpack.c.h.b16 %v5916
    %v8299 = vunpack.c.l.b16 %v5917
    %v8300 = vunpack.c.h.b16 %v5917
    %v8301 = vunpack.c.l.b16 %v5918
    %v8302 = vunpack.c.h.b16 %v5918
    %v8303 = vunpack.c.l.b16 %v5919
    %v8304 = vunpack.c.h.b16 %v5919
    %v8305 = vunpack.c.l.b16 %v5920
    %v8306 = vunpack.c.h.b16 %v5920
    %v8307 = vunpack.c.l.b16 %v5921
    %v8308 = vunpack.c.h.b16 %v5921
    %v8309 = vunpack.c.l.b16 %v5922
    %v8310 = vunpack.c.h.b16 %v5922
    %v8311 = vunpack.c.l.b16 %v5923
    %v8312 = vunpack.c.h.b16 %v5923
    %v8313 = vunpack.c.l.b16 %v5924
    %v8314 = vunpack.c.h.b16 %v5924
    %v8315 = vunpack.c.l.b16 %v5925
    %v8316 = vunpack.c.h.b16 %v5925
    %v8317 = vunpack.c.l.b16 %v5926
    %v8318 = vunpack.c.h.b16 %v5926
    %v8319 = vunpack.c.l.b16 %v5927
    %v8320 = vunpack.c.h.b16 %v5927
    %v8321 = vunpack.c.l.b16 %v5928
    %v8322 = vunpack.c.h.b16 %v5928
    %v8323 = vunpack.c.l.b16 %v5929
    %v8324 = vunpack.c.h.b16 %v5929
    %v8325 = vunpack.c.l.b16 %v5930
    %v8326 = vunpack.c.h.b16 %v5930
    %v8327 = vunpack.c.l.b16 %v5931
    %v8328 = vunpack.c.h.b16 %v5931
    %v8329 = vunpack.c.l.b16 %v5932
    %v8330 = vunpack.c.h.b16 %v5932
    %v8331 = vunpack.c.l.b16 %v5933
    %v8332 = vunpack.c.h.b16 %v5933
    %v8333 = vunpack.c.l.b16 %v5934
    %v8334 = vunpack.c.h.b16 %v5934
    %v8335 = vunpack.c.l.b16 %v5935
    %v8336 = vunpack.c.h.b16 %v5935
    %v8337 = vunpack.c.l.b16 %v5936
    %v8338 = vunpack.c.h.b16 %v5936
    %v8339 = vunpack.c.l.b16 %v5937
    %v8340 = vunpack.c.h.b16 %v5937
    %v8341 = vunpack.c.l.b16 %v5938
    %v8342 = vunpack.c.h.b16 %v5938
    %v8343 = vunpack.c.l.b16 %v5939
    %v8344 = vunpack.c.h.b16 %v5939
    %v8345 = vunpack.c.l.b16 %v5940
    %v8346 = vunpack.c.h.b16 %v5940
    %v8347 = vunpack.c.l.b16 %v5941
    %v8348 = vunpack.c.h.b16 %v5941
    %v8349 = vunpack.c.l.b16 %v5942
    %v8350 = vunpack.c.h.b16 %v5942
    %v8351 = vunpack.c.l.b16 %v5943
    %v8352 = vunpack.c.h.b16 %v5943
    %v8353 = vunpack.c.l.b16 %v5944
    %v8354 = vunpack.c.h.b16 %v5944
    %v8355 = vunpack.c.l.b16 %v5945
    %v8356 = vunpack.c.h.b16 %v5945
    %v8357 = vunpack.c.l.b16 %v5946
    %v8358 = vunpack.c.h.b16 %v5946
    %v8359 = vunpack.c.l.b16 %v5947
    %v8360 = vunpack.c.h.b16 %v5947
    %v8361 = vunpack.c.l.b16 %v5948
    %v8362 = vunpack.c.h.b16 %v5948
    %v8363 = vunpack.c.l.b16 %v5949
    %v8364 = vunpack.c.h.b16 %v5949
    %v8365 = vunpack.c.l.b16 %v5950
    %v8366 = vunpack.c.h.b16 %v5950
    %v8367 = vunpack.c.l.b16 %v5951
    %v8368 = vunpack.c.h.b16 %v5951
    %v8369 = vunpack.c.l.b16 %v5952
    %v8370 = vunpack.c.h.b16 %v5952
    %v8371 = vunpack.c.l.b16 %v5953
    %v8372 = vunpack.c.h.b16 %v5953
    %v8373 = vunpack.c.l.b16 %v5954
    %v8374 = vunpack.c.h.b16 %v5954
    %v8375 = vunpack.c.l.b16 %v5955
    %v8376 = vunpack.c.h.b16 %v5955
    %v8377 = vunpack.c.l.b16 %v5956
    %v8378 = vunpack.c.h.b16 %v5956
    %v8379 = vunpack.c.l.b16 %v5957
    %v8380 = vunpack.c.h.b16 %v5957
    %v8381 = vunpack.c.l.b16 %v5958
    %v8382 = vunpack.c.h.b16 %v5958
    %v8383 = vunpack.c.l.b16 %v5959
    %v8384 = vunpack.c.h.b16 %v5959
    %v8385 = vunpack.c.l.b16 %v5960
    %v8386 = vunpack.c.h.b16 %v5960
    %v8387 = vunpack.c.l.b16 %v5961
    %v8388 = vunpack.c.h.b16 %v5961
    %v8389 = vunpack.c.l.b16 %v5962
    %v8390 = vunpack.c.h.b16 %v5962
    %v8391 = vunpack.c.l.b16 %v5963
    %v8392 = vunpack.c.h.b16 %v5963
    %v8393 = vunpack.c.l.b16 %v5964
    %v8394 = vunpack.c.h.b16 %v5964
    %v8395 = vunpack.c.l.b16 %v5965
    %v8396 = vunpack.c.h.b16 %v5965
    %v8397 = vunpack.c.l.b16 %v5966
    %v8398 = vunpack.c.h.b16 %v5966
    %v8399 = vunpack.c.l.b16 %v5967
    %v8400 = vunpack.c.h.b16 %v5967
    %v8401 = vunpack.c.l.b16 %v5968
    %v8402 = vunpack.c.h.b16 %v5968
    %v8403 = vunpack.c.l.b16 %v5969
    %v8404 = vunpack.c.h.b16 %v5969
    %v8405 = vunpack.c.l.b16 %v5970
    %v8406 = vunpack.c.h.b16 %v5970
    %v8407 = vunpack.c.l.b16 %v5971
    %v8408 = vunpack.c.h.b16 %v5971
    %v8409 = vunpack.c.l.b16 %v5972
    %v8410 = vunpack.c.h.b16 %v5972
    %v8411 = vunpack.c.l.b16 %v5973
    %v8412 = vunpack.c.h.b16 %v5973
    %v8413 = vunpack.c.l.b16 %v5974
    %v8414 = vunpack.c.h.b16 %v5974
    %v8415 = vunpack.c.l.b16 %v5975
    %v8416 = vunpack.c.h.b16 %v5975
    %v8417 = vunpack.c.l.b16 %v5976
    %v8418 = vunpack.c.h.b16 %v5976
    %v8419 = vunpack.c.l.b16 %v5977
    %v8420 = vunpack.c.h.b16 %v5977
    %v8421 = vunpack.c.l.b16 %v5978
    %v8422 = vunpack.c.h.b16 %v5978
    %v8423 = vunpack.c.l.b16 %v5979
    %v8424 = vunpack.c.h.b16 %v5979
    %v8425 = vunpack.c.l.b16 %v5980
    %v8426 = vunpack.c.h.b16 %v5980
    %v8427 = vunpack.c.l.b16 %v5981
    %v8428 = vunpack.c.h.b16 %v5981
    %v8429 = vunpack.c.l.b16 %v5982
    %v8430 = vunpack.c.h.b16 %v5982
    %v8431 = vunpack.c.l.b16 %v5983
    %v8432 = vunpack.c.h.b16 %v5983
    %v8433 = vunpack.c.l.b16 %v5984
    %v8434 = vunpack.c.h.b16 %v5984
    %v8435 = vunpack.c.l.b16 %v5985
    %v8436 = vunpack.c.h.b16 %v5985
    %v8437 = vunpack.c.l.b16 %v5986
    %v8438 = vunpack.c.h.b16 %v5986
    %v8439 = vunpack.c.l.b16 %v5987
    %v8440 = vunpack.c.h.b16 %v5987
    %v8441 = vunpack.c.l.b16 %v5988
    %v8442 = vunpack.c.h.b16 %v5988
    %v8443 = vunpack.c.l.b16 %v5989
    %v8444 = vunpack.c.h.b16 %v5989
    %v8445 = vunpack.c.l.b16 %v5990
    %v8446 = vunpack.c.h.b16 %v5990
    %v8447 = vunpack.c.l.b16 %v5991
    %v8448 = vunpack.c.h.b16 %v5991
    %v8449 = vunpack.c.l.b16 %v5992
    %v8450 = vunpack.c.h.b16 %v5992
    %v8451 = vunpack.c.l.b16 %v5993
    %v8452 = vunpack.c.h.b16 %v5993
    %v8453 = vunpack.c.l.b16 %v5994
    %v8454 = vunpack.c.h.b16 %v5994
    %v8455 = vunpack.c.l.b16 %v5995
    %v8456 = vunpack.c.h.b16 %v5995
    %v8457 = vunpack.c.l.b16 %v5996
    %v8458 = vunpack.c.h.b16 %v5996
    %v8459 = vunpack.c.l.b16 %v5997
    %v8460 = vunpack.c.h.b16 %v5997
    %v8461 = vunpack.c.l.b16 %v5998
    %v8462 = vunpack.c.h.b16 %v5998
    %v8463 = vunpack.c.l.b16 %v5999
    %v8464 = vunpack.c.h.b16 %v5999
    %v8465 = vunpack.c.l.b16 %v6000
    %v8466 = vunpack.c.h.b16 %v6000
    %v8467 = vunpack.c.l.b16 %v6001
    %v8468 = vunpack.c.h.b16 %v6001
    %v8469 = vunpack.c.l.b16 %v6002
    %v8470 = vunpack.c.h.b16 %v6002
    %v8471 = vunpack.c.l.b16 %v6003
    %v8472 = vunpack.c.h.b16 %v6003
    %v8473 = vunpack.c.l.b16 %v6004
    %v8474 = vunpack.c.h.b16 %v6004
    %v8475 = vunpack.c.l.b16 %v6005
    %v8476 = vunpack.c.h.b16 %v6005
    %v8477 = vunpack.c.l.b16 %v6006
    %v8478 = vunpack.c.h.b16 %v6006
    %v8479 = vunpack.c.l.b16 %v6007
    %v8480 = vunpack.c.h.b16 %v6007
    %v8481 = vunpack.c.l.b16 %v6008
    %v8482 = vunpack.c.h.b16 %v6008
    %v8483 = vunpack.c.l.b16 %v6009
    %v8484 = vunpack.c.h.b16 %v6009
    %v8485 = vunpack.c.l.b16 %v6010
    %v8486 = vunpack.c.h.b16 %v6010
    %v8487 = vunpack.c.l.b16 %v6011
    %v8488 = vunpack.c.h.b16 %v6011
    %v8489 = vunpack.c.l.b16 %v6012
    %v8490 = vunpack.c.h.b16 %v6012
    %v8491 = vunpack.c.l.b16 %v6013
    %v8492 = vunpack.c.h.b16 %v6013
    %v8493 = vunpack.c.l.b16 %v6014
    %v8494 = vunpack.c.h.b16 %v6014
    %v8495 = vunpack.c.l.b16 %v6015
    %v8496 = vunpack.c.h.b16 %v6015
    %v8497 = vunpack.c.l.b16 %v6016
    %v8498 = vunpack.c.h.b16 %v6016
    %v8499 = vunpack.c.l.b16 %v6017
    %v8500 = vunpack.c.h.b16 %v6017
    %v8501 = vunpack.c.l.b16 %v6018
    %v8502 = vunpack.c.h.b16 %v6018
    %v8503 = vunpack.c.l.b16 %v6019
    %v8504 = vunpack.c.h.b16 %v6019
    %v8505 = vunpack.c.l.b16 %v6020
    %v8506 = vunpack.c.h.b16 %v6020
    %v8507 = vunpack.c.l.b16 %v6021
    %v8508 = vunpack.c.h.b16 %v6021
    %v8509 = vunpack.c.l.b16 %v6022
    %v8510 = vunpack.c.h.b16 %v6022
    %v8511 = vunpack.c.l.b16 %v6023
    %v8512 = vunpack.c.h.b16 %v6023
    %v8513 = vunpack.c.l.b16 %v6024
    %v8514 = vunpack.c.h.b16 %v6024
    %v8515 = vunpack.c.l.b16 %v6025
    %v8516 = vunpack.c.h.b16 %v6025
    %v8517 = vunpack.c.l.b16 %v6026
    %v8518 = vunpack.c.h.b16 %v6026
    %v8519 = vunpack.c.l.b16 %v6027
    %v8520 = vunpack.c.h.b16 %v6027
    %v8521 = vunpack.c.l.b16 %v6028
    %v8522 = vunpack.c.h.b16 %v6028
    %v8523 = vunpack.c.l.b16 %v6029
    %v8524 = vunpack.c.h.b16 %v6029
    %v8525 = vunpack.c.l.b16 %v6030
    %v8526 = vunpack.c.h.b16 %v6030
    %v8527 = vunpack.c.l.b16 %v6031
    %v8528 = vunpack.c.h.b16 %v6031
    %v8529 = vunpack.c.l.b16 %v6032
    %v8530 = vunpack.c.h.b16 %v6032
    %v8531 = vunpack.c.l.b16 %v6033
    %v8532 = vunpack.c.h.b16 %v6033
    %v8533 = vunpack.c.l.b16 %v6034
    %v8534 = vunpack.c.h.b16 %v6034
    %v8535 = vunpack.c.l.b16 %v6035
    %v8536 = vunpack.c.h.b16 %v6035
    %v8537 = vunpack.c.l.b16 %v6036
    %v8538 = vunpack.c.h.b16 %v6036
    %v8539 = vunpack.c.l.b16 %v6037
    %v8540 = vunpack.c.h.b16 %v6037
    %v8541 = vunpack.c.l.b16 %v6038
    %v8542 = vunpack.c.h.b16 %v6038
    %v8543 = vunpack.c.l.b16 %v6039
    %v8544 = vunpack.c.h.b16 %v6039
    %v8545 = vunpack.c.l.b16 %v6040
    %v8546 = vunpack.c.h.b16 %v6040
    %v8547 = vunpack.c.l.b16 %v6041
    %v8548 = vunpack.c.h.b16 %v6041
    %v8549 = vunpack.c.l.b16 %v6042
    %v8550 = vunpack.c.h.b16 %v6042
    %v8551 = vunpack.c.l.b16 %v6043
    %v8552 = vunpack.c.h.b16 %v6043
    %v8553 = vunpack.c.l.b16 %v6044
    %v8554 = vunpack.c.h.b16 %v6044
    %v8555 = vunpack.c.l.b16 %v6045
    %v8556 = vunpack.c.h.b16 %v6045
    %v8557 = vunpack.c.l.b16 %v6046
    %v8558 = vunpack.c.h.b16 %v6046
    %v8559 = vunpack.c.l.b16 %v6047
    %v8560 = vunpack.c.h.b16 %v6047
    %v8561 = vunpack.c.l.b16 %v6048
    %v8562 = vunpack.c.h.b16 %v6048
    %v8563 = vunpack.c.l.b16 %v6049
    %v8564 = vunpack.c.h.b16 %v6049
    %v8565 = vunpack.c.l.b16 %v6050
    %v8566 = vunpack.c.h.b16 %v6050
    %v8567 = vunpack.c.l.b16 %v6051
    %v8568 = vunpack.c.h.b16 %v6051
    %v8569 = vunpack.c.l.b16 %v6052
    %v8570 = vunpack.c.h.b16 %v6052
    %v8571 = vunpack.c.l.b16 %v6053
    %v8572 = vunpack.c.h.b16 %v6053
    %v8573 = vunpack.c.l.b16 %v6054
    %v8574 = vunpack.c.h.b16 %v6054
    %v8575 = vunpack.c.l.b16 %v6055
    %v8576 = vunpack.c.h.b16 %v6055
    %v8577 = vunpack.c.l.b16 %v6056
    %v8578 = vunpack.c.h.b16 %v6056
    %v8579 = vunpack.c.l.b16 %v6057
    %v8580 = vunpack.c.h.b16 %v6057
    %v8581 = vunpack.c.l.b16 %v6058
    %v8582 = vunpack.c.h.b16 %v6058
    %v8583 = vunpack.c.l.b16 %v6059
    %v8584 = vunpack.c.h.b16 %v6059
    %v8585 = vunpack.c.l.b16 %v6060
    %v8586 = vunpack.c.h.b16 %v6060
    %v8587 = vunpack.c.l.b16 %v6061
    %v8588 = vunpack.c.h.b16 %v6061
    %v8589 = vunpack.c.l.b16 %v6062
    %v8590 = vunpack.c.h.b16 %v6062
    %v8591 = vunpack.c.l.b16 %v6063
    %v8592 = vunpack.c.h.b16 %v6063
    %v8593 = vunpack.c.l.b16 %v6064
    %v8594 = vunpack.c.h.b16 %v6064
    %v8595 = vunpack.c.l.b16 %v6065
    %v8596 = vunpack.c.h.b16 %v6065
    %v8597 = vunpack.c.l.b16 %v6066
    %v8598 = vunpack.c.h.b16 %v6066
    %v8599 = vunpack.c.l.b16 %v6067
    %v8600 = vunpack.c.h.b16 %v6067
    %v8601 = vunpack.c.l.b16 %v6068
    %v8602 = vunpack.c.h.b16 %v6068
    %v8603 = vunpack.c.l.b16 %v6069
    %v8604 = vunpack.c.h.b16 %v6069
    %v8605 = vunpack.c.l.b16 %v6070
    %v8606 = vunpack.c.h.b16 %v6070
    %v8607 = vunpack.c.l.b16 %v6071
    %v8608 = vunpack.c.h.b16 %v6071
    %v8609 = vunpack.c.l.b16 %v6072
    %v8610 = vunpack.c.h.b16 %v6072
    %v8611 = vunpack.c.l.b16 %v6073
    %v8612 = vunpack.c.h.b16 %v6073
    %v8613 = vunpack.c.l.b16 %v6074
    %v8614 = vunpack.c.h.b16 %v6074
    %v8615 = vunpack.c.l.b16 %v6075
    %v8616 = vunpack.c.h.b16 %v6075
    %v8617 = vunpack.c.l.b16 %v6076
    %v8618 = vunpack.c.h.b16 %v6076
    %v8619 = vunpack.c.l.b16 %v6077
    %v8620 = vunpack.c.h.b16 %v6077
    %v8621 = vunpack.c.l.b16 %v6078
    %v8622 = vunpack.c.h.b16 %v6078
    %v8623 = vunpack.c.l.b16 %v6079
    %v8624 = vunpack.c.h.b16 %v6079
    %v8625 = vunpack.c.l.b16 %v6080
    %v8626 = vunpack.c.h.b16 %v6080
    %v8627 = vunpack.c.l.b16 %v6081
    %v8628 = vunpack.c.h.b16 %v6081
    %v8629 = vunpack.c.l.b16 %v6082
    %v8630 = vunpack.c.h.b16 %v6082
    %v8631 = vunpack.c.l.b16 %v6083
    %v8632 = vunpack.c.h.b16 %v6083
    %v8633 = vunpack.c.l.b16 %v6084
    %v8634 = vunpack.c.h.b16 %v6084
    %v8635 = vunpack.c.l.b16 %v6085
    %v8636 = vunpack.c.h.b16 %v6085
    %v8637 = vunpack.c.l.b16 %v6086
    %v8638 = vunpack.c.h.b16 %v6086
    %v8639 = vunpack.c.l.b16 %v6087
    %v8640 = vunpack.c.h.b16 %v6087
    %v8641 = vunpack.c.l.b16 %v6088
    %v8642 = vunpack.c.h.b16 %v6088
    %v8643 = vunpack.c.l.b16 %v6089
    %v8644 = vunpack.c.h.b16 %v6089
    %v8645 = vunpack.c.l.b16 %v6090
    %v8646 = vunpack.c.h.b16 %v6090
    %v8647 = vunpack.c.l.b16 %v6091
    %v8648 = vunpack.c.h.b16 %v6091
    %v8649 = vunpack.c.l.b16 %v6092
    %v8650 = vunpack.c.h.b16 %v6092
    %v8651 = vunpack.c.l.b16 %v6093
    %v8652 = vunpack.c.h.b16 %v6093
    %v8653 = vunpack.c.l.b16 %v6094
    %v8654 = vunpack.c.h.b16 %v6094
    %v8655 = vunpack.c.l.b16 %v6095
    %v8656 = vunpack.c.h.b16 %v6095
    %v8657 = vunpack.c.l.b16 %v6096
    %v8658 = vunpack.c.h.b16 %v6096
    %v8659 = vunpack.c.l.b16 %v6097
    %v8660 = vunpack.c.h.b16 %v6097
    %v8661 = vunpack.c.l.b16 %v6098
    %v8662 = vunpack.c.h.b16 %v6098
    %v8663 = vunpack.c.l.b16 %v6099
    %v8664 = vunpack.c.h.b16 %v6099
    %v8665 = vunpack.c.l.b16 %v6100
    %v8666 = vunpack.c.h.b16 %v6100
    %v8667 = vunpack.c.l.b16 %v6101
    %v8668 = vunpack.c.h.b16 %v6101
    %v8669 = vunpack.c.l.b16 %v6102
    %v8670 = vunpack.c.h.b16 %v6102
    %v8671 = vunpack.c.l.b16 %v6103
    %v8672 = vunpack.c.h.b16 %v6103
    %v8673 = vunpack.c.l.b16 %v6104
    %v8674 = vunpack.c.h.b16 %v6104
    %v8675 = vunpack.c.l.b16 %v6105
    %v8676 = vunpack.c.h.b16 %v6105
    %v8677 = vunpack.c.l.b16 %v6106
    %v8678 = vunpack.c.h.b16 %v6106
    %v8679 = vunpack.c.l.b16 %v6107
    %v8680 = vunpack.c.h.b16 %v6107
    %v8681 = vunpack.c.l.b16 %v6108
    %v8682 = vunpack.c.h.b16 %v6108
    %v8683 = vunpack.c.l.b16 %v6109
    %v8684 = vunpack.c.h.b16 %v6109
    %v8685 = vunpack.c.l.b16 %v6110
    %v8686 = vunpack.c.h.b16 %v6110
    %v8687 = vunpack.c.l.b16 %v6111
    %v8688 = vunpack.c.h.b16 %v6111
    %v8689 = vunpack.c.l.b16 %v6112
    %v8690 = vunpack.c.h.b16 %v6112
    %v8691 = vunpack.c.l.b16 %v6113
    %v8692 = vunpack.c.h.b16 %v6113
    %v8693 = vunpack.c.l.b16 %v6114
    %v8694 = vunpack.c.h.b16 %v6114
    %v8695 = vunpack.c.l.b16 %v6115
    %v8696 = vunpack.c.h.b16 %v6115
    %v8697 = vunpack.c.l.b16 %v6116
    %v8698 = vunpack.c.h.b16 %v6116
    %v8699 = vunpack.c.l.b16 %v6117
    %v8700 = vunpack.c.h.b16 %v6117
    %v8701 = vunpack.c.l.b16 %v6118
    %v8702 = vunpack.c.h.b16 %v6118
    %v8703 = vunpack.c.l.b16 %v6119
    %v8704 = vunpack.c.h.b16 %v6119
    %v8705 = vunpack.c.l.b16 %v6120
    %v8706 = vunpack.c.h.b16 %v6120
    %v8707 = vunpack.c.l.b16 %v6121
    %v8708 = vunpack.c.h.b16 %v6121
    %v8709 = vunpack.c.l.b16 %v6122
    %v8710 = vunpack.c.h.b16 %v6122
    %v8711 = vunpack.c.l.b16 %v6123
    %v8712 = vunpack.c.h.b16 %v6123
    %v8713 = vunpack.c.l.b16 %v6124
    %v8714 = vunpack.c.h.b16 %v6124
    %v8715 = vunpack.c.l.b16 %v6125
    %v8716 = vunpack.c.h.b16 %v6125
    %v8717 = vunpack.c.l.b16 %v6126
    %v8718 = vunpack.c.h.b16 %v6126
    %v8719 = vunpack.c.l.b16 %v6127
    %v8720 = vunpack.c.h.b16 %v6127
    %v8721 = vunpack.c.l.b16 %v6128
    %v8722 = vunpack.c.h.b16 %v6128
    %v8723 = vunpack.c.l.b16 %v6129
    %v8724 = vunpack.c.h.b16 %v6129
    %v8725 = vunpack.c.l.b16 %v6130
    %v8726 = vunpack.c.h.b16 %v6130
    %v8727 = vunpack.c.l.b16 %v6131
    %v8728 = vunpack.c.h.b16 %v6131
    %v8729 = vunpack.c.l.b16 %v6132
    %v8730 = vunpack.c.h.b16 %v6132
    %v8731 = vunpack.c.l.b16 %v6133
    %v8732 = vunpack.c.h.b16 %v6133
    %v8733 = vunpack.c.l.b16 %v6134
    %v8734 = vunpack.c.h.b16 %v6134
    %v8735 = vunpack.c.l.b16 %v6135
    %v8736 = vunpack.c.h.b16 %v6135
    %v8737 = vunpack.c.l.b16 %v6136
    %v8738 = vunpack.c.h.b16 %v6136
    %v8739 = vunpack.c.l.b16 %v6137
    %v8740 = vunpack.c.h.b16 %v6137
    %v8741 = vunpack.c.l.b16 %v6138
    %v8742 = vunpack.c.h.b16 %v6138
    %v8743 = vunpack.c.l.b16 %v6139
    %v8744 = vunpack.c.h.b16 %v6139
    %v8745 = vunpack.c.l.b16 %v6140
    %v8746 = vunpack.c.h.b16 %v6140
    %v8747 = vunpack.c.l.b16 %v6141
    %v8748 = vunpack.c.h.b16 %v6141
    %v8749 = vunpack.c.l.b16 %v6142
    %v8750 = vunpack.c.h.b16 %v6142
    %v8751 = vunpack.c.l.b16 %v6143
    %v8752 = vunpack.c.h.b16 %v6143
    %v8753 = vunpack.c.l.b16 %v6144
    %v8754 = vunpack.c.h.b16 %v6144
    %v8755 = vunpack.c.l.b16 %v6145
    %v8756 = vunpack.c.h.b16 %v6145
    %v8757 = vunpack.c.l.b16 %v6146
    %v8758 = vunpack.c.h.b16 %v6146
    %v8759 = vunpack.c.l.b16 %v6147
    %v8760 = vunpack.c.h.b16 %v6147
    %v8761 = vunpack.c.l.b16 %v6148
    %v8762 = vunpack.c.h.b16 %v6148
    %v8763 = vunpack.c.l.b16 %v6149
    %v8764 = vunpack.c.h.b16 %v6149
    %v8765 = vunpack.c.l.b16 %v6150
    %v8766 = vunpack.c.h.b16 %v6150
    %v8767 = vunpack.c.l.b16 %v6151
    %v8768 = vunpack.c.h.b16 %v6151
    %v8769 = vunpack.c.l.b16 %v6152
    %v8770 = vunpack.c.h.b16 %v6152
    %v8771 = vunpack.c.l.b16 %v6153
    %v8772 = vunpack.c.h.b16 %v6153
    %v8773 = vunpack.c.l.b16 %v6154
    %v8774 = vunpack.c.h.b16 %v6154
    %v8775 = vunpack.c.l.b16 %v6155
    %v8776 = vunpack.c.h.b16 %v6155
    %v8777 = vunpack.c.l.b16 %v6156
    %v8778 = vunpack.c.h.b16 %v6156
    %v8779 = vunpack.c.l.b16 %v6157
    %v8780 = vunpack.c.h.b16 %v6157
    %v8781 = vunpack.c.l.b16 %v6158
    %v8782 = vunpack.c.h.b16 %v6158
    %v8783 = vunpack.c.l.b16 %v6159
    %v8784 = vunpack.c.h.b16 %v6159
    %v8785 = vunpack.c.l.b16 %v6160
    %v8786 = vunpack.c.h.b16 %v6160
    %v8787 = vunpack.c.l.b16 %v6161
    %v8788 = vunpack.c.h.b16 %v6161
    %v8789 = vunpack.c.l.b16 %v6162
    %v8790 = vunpack.c.h.b16 %v6162
    %v8791 = vunpack.c.l.b16 %v6163
    %v8792 = vunpack.c.h.b16 %v6163
    %v8793 = vunpack.c.l.b16 %v6164
    %v8794 = vunpack.c.h.b16 %v6164
    %v8795 = vunpack.c.l.b16 %v6165
    %v8796 = vunpack.c.h.b16 %v6165
    %v8797 = vunpack.c.l.b16 %v6166
    %v8798 = vunpack.c.h.b16 %v6166
    %v8799 = vunpack.c.l.b16 %v6167
    %v8800 = vunpack.c.h.b16 %v6167
    %v8801 = vunpack.c.l.b16 %v6168
    %v8802 = vunpack.c.h.b16 %v6168
    %v8803 = vunpack.c.l.b16 %v6169
    %v8804 = vunpack.c.h.b16 %v6169
    %v8805 = vunpack.c.l.b16 %v6170
    %v8806 = vunpack.c.h.b16 %v6170
    %v8807 = vunpack.c.l.b16 %v6171
    %v8808 = vunpack.c.h.b16 %v6171
    %v8809 = vunpack.c.l.b16 %v6172
    %v8810 = vunpack.c.h.b16 %v6172
    %v8811 = vunpack.c.l.b16 %v6173
    %v8812 = vunpack.c.h.b16 %v6173
    %v8813 = vunpack.c.l.b16 %v6174
    %v8814 = vunpack.c.h.b16 %v6174
    %v8815 = vunpack.c.l.b16 %v6175
    %v8816 = vunpack.c.h.b16 %v6175
    %v8817 = vunpack.c.l.b16 %v6176
    %v8818 = vunpack.c.h.b16 %v6176
    %v8819 = vunpack.c.l.b16 %v6177
    %v8820 = vunpack.c.h.b16 %v6177
    %v8821 = vunpack.c.l.b16 %v6178
    %v8822 = vunpack.c.h.b16 %v6178
    %v8823 = vunpack.c.l.b16 %v6179
    %v8824 = vunpack.c.h.b16 %v6179
    %v8825 = vunpack.c.l.b16 %v6180
    %v8826 = vunpack.c.h.b16 %v6180
    %v8827 = vunpack.c.l.b16 %v6181
    %v8828 = vunpack.c.h.b16 %v6181
    %v8829 = vunpack.c.l.b16 %v6182
    %v8830 = vunpack.c.h.b16 %v6182
    %v8831 = vunpack.c.l.b16 %v6183
    %v8832 = vunpack.c.h.b16 %v6183
    %v8833 = vunpack.c.l.b16 %v6184
    %v8834 = vunpack.c.h.b16 %v6184
    %v8835 = vunpack.c.l.b16 %v6185
    %v8836 = vunpack.c.h.b16 %v6185
    %v8837 = vunpack.c.l.b16 %v6186
    %v8838 = vunpack.c.h.b16 %v6186
    %v8839 = vunpack.c.l.b16 %v6187
    %v8840 = vunpack.c.h.b16 %v6187
    %v8841 = vunpack.c.l.b16 %v6188
    %v8842 = vunpack.c.h.b16 %v6188
    %v8843 = vunpack.c.l.b16 %v6189
    %v8844 = vunpack.c.h.b16 %v6189
    %v8845 = vunpack.c.l.b16 %v6190
    %v8846 = vunpack.c.h.b16 %v6190
    %v8847 = vunpack.c.l.b16 %v6191
    %v8848 = vunpack.c.h.b16 %v6191
    %v8849 = vunpack.c.l.b16 %v6192
    %v8850 = vunpack.c.h.b16 %v6192
    %v8851 = vunpack.c.l.b16 %v6193
    %v8852 = vunpack.c.h.b16 %v6193
    %v8853 = vunpack.c.l.b16 %v6194
    %v8854 = vunpack.c.h.b16 %v6194
    %v8855 = vunpack.c.l.b16 %v6195
    %v8856 = vunpack.c.h.b16 %v6195
    %v8857 = vunpack.c.l.b16 %v6196
    %v8858 = vunpack.c.h.b16 %v6196
    %v8859 = vunpack.c.l.b16 %v6197
    %v8860 = vunpack.c.h.b16 %v6197
    %v8861 = vunpack.c.l.b16 %v6198
    %v8862 = vunpack.c.h.b16 %v6198
    %v8863 = vunpack.c.l.b16 %v6199
    %v8864 = vunpack.c.h.b16 %v6199
    %v8865 = vunpack.c.l.b16 %v6200
    %v8866 = vunpack.c.h.b16 %v6200
    %v8867 = vunpack.c.l.b16 %v6201
    %v8868 = vunpack.c.h.b16 %v6201
    %v8869 = vunpack.c.l.b16 %v6202
    %v8870 = vunpack.c.h.b16 %v6202
    %v8871 = vunpack.c.l.b16 %v6203
    %v8872 = vunpack.c.h.b16 %v6203
    %v8873 = vunpack.c.l.b16 %v6204
    %v8874 = vunpack.c.h.b16 %v6204
    %v8875 = vunpack.c.l.b16 %v6205
    %v8876 = vunpack.c.h.b16 %v6205
    %v8877 = vunpack.c.l.b16 %v6206
    %v8878 = vunpack.c.h.b16 %v6206
    %v8879 = vunpack.c.l.b16 %v6207
    %v8880 = vunpack.c.h.b16 %v6207
    %v8881 = vunpack.c.l.b16 %v6208
    %v8882 = vunpack.c.h.b16 %v6208
    %v8883 = vunpack.c.l.b16 %v6209
    %v8884 = vunpack.c.h.b16 %v6209
    %v8885 = vunpack.c.l.b16 %v6210
    %v8886 = vunpack.c.h.b16 %v6210
    %v8887 = vunpack.c.l.b16 %v6211
    %v8888 = vunpack.c.h.b16 %v6211
    %v8889 = vunpack.c.l.b16 %v6212
    %v8890 = vunpack.c.h.b16 %v6212
    %v8891 = vunpack.c.l.b16 %v6213
    %v8892 = vunpack.c.h.b16 %v6213
    %v8893 = vunpack.c.l.b16 %v6214
    %v8894 = vunpack.c.h.b16 %v6214
    %v8895 = vunpack.c.l.b16 %v6215
    %v8896 = vunpack.c.h.b16 %v6215
    %v8897 = vunpack.c.l.b16 %v6216
    %v8898 = vunpack.c.h.b16 %v6216
    %v8899 = vunpack.c.l.b16 %v6217
    %v8900 = vunpack.c.h.b16 %v6217
    %v8901 = vunpack.c.l.b16 %v6218
    %v8902 = vunpack.c.h.b16 %v6218
    %v8903 = vunpack.c.l.b16 %v6219
    %v8904 = vunpack.c.h.b16 %v6219
    %v8905 = vunpack.c.l.b16 %v6220
    %v8906 = vunpack.c.h.b16 %v6220
    %v8907 = vunpack.c.l.b16 %v6221
    %v8908 = vunpack.c.h.b16 %v6221
    %v8909 = vunpack.c.l.b16 %v6222
    %v8910 = vunpack.c.h.b16 %v6222
    %v8911 = vunpack.c.l.b16 %v6223
    %v8912 = vunpack.c.h.b16 %v6223
    %v8913 = vunpack.c.l.b16 %v6224
    %v8914 = vunpack.c.h.b16 %v6224
    %v8915 = vunpack.c.l.b16 %v6225
    %v8916 = vunpack.c.h.b16 %v6225
    %v8917 = vunpack.c.l.b16 %v6226
    %v8918 = vunpack.c.h.b16 %v6226
    %v8919 = vunpack.c.l.b16 %v6227
    %v8920 = vunpack.c.h.b16 %v6227
    %v8921 = vunpack.c.l.b16 %v6228
    %v8922 = vunpack.c.h.b16 %v6228
    %v8923 = vunpack.c.l.b16 %v6229
    %v8924 = vunpack.c.h.b16 %v6229
    %v8925 = vunpack.c.l.b16 %v6230
    %v8926 = vunpack.c.h.b16 %v6230
    %v8927 = vunpack.c.l.b16 %v6231
    %v8928 = vunpack.c.h.b16 %v6231
    %v8929 = vunpack.c.l.b16 %v6232
    %v8930 = vunpack.c.h.b16 %v6232
    %v8931 = vunpack.c.l.b16 %v6233
    %v8932 = vunpack.c.h.b16 %v6233
    %v8933 = vunpack.c.l.b16 %v6234
    %v8934 = vunpack.c.h.b16 %v6234
    %v8935 = vunpack.c.l.b16 %v6235
    %v8936 = vunpack.c.h.b16 %v6235
    %v8937 = vunpack.c.l.b16 %v6236
    %v8938 = vunpack.c.h.b16 %v6236
    %v8939 = vunpack.c.l.b16 %v6237
    %v8940 = vunpack.c.h.b16 %v6237
    %v8941 = vunpack.c.l.b16 %v6238
    %v8942 = vunpack.c.h.b16 %v6238
    %v8943 = vunpack.c.l.b16 %v6239
    %v8944 = vunpack.c.h.b16 %v6239
    %v8945 = vunpack.c.l.b16 %v6240
    %v8946 = vunpack.c.h.b16 %v6240
    %v8947 = vunpack.c.l.b16 %v6241
    %v8948 = vunpack.c.h.b16 %v6241
    %v8949 = vunpack.c.l.b16 %v6242
    %v8950 = vunpack.c.h.b16 %v6242
    %v8951 = vunpack.c.l.b16 %v6243
    %v8952 = vunpack.c.h.b16 %v6243
    %v8953 = vunpack.c.l.b16 %v6244
    %v8954 = vunpack.c.h.b16 %v6244
    %v8955 = vunpack.c.l.b16 %v6245
    %v8956 = vunpack.c.h.b16 %v6245
    %v8957 = vunpack.c.l.b16 %v6246
    %v8958 = vunpack.c.h.b16 %v6246
    %v8959 = vunpack.c.l.b16 %v6247
    %v8960 = vunpack.c.h.b16 %v6247
    %v8961 = vunpack.c.l.b16 %v6248
    %v8962 = vunpack.c.h.b16 %v6248
    %v8963 = vunpack.c.l.b16 %v6249
    %v8964 = vunpack.c.h.b16 %v6249
    %v8965 = vunpack.c.l.b16 %v6250
    %v8966 = vunpack.c.h.b16 %v6250
    %v8967 = vunpack.c.l.b16 %v6251
    %v8968 = vunpack.c.h.b16 %v6251
    %v8969 = vunpack.c.l.b16 %v6252
    %v8970 = vunpack.c.h.b16 %v6252
    %v8971 = vunpack.c.l.b16 %v6253
    %v8972 = vunpack.c.h.b16 %v6253
    %v8973 = vunpack.c.l.b16 %v6254
    %v8974 = vunpack.c.h.b16 %v6254
    %v8975 = vunpack.c.l.b16 %v6255
    %v8976 = vunpack.c.h.b16 %v6255
    %v8977 = vunpack.c.l.b16 %v6256
    %v8978 = vunpack.c.h.b16 %v6256
    %v8979 = vunpack.c.l.b16 %v6257
    %v8980 = vunpack.c.h.b16 %v6257
    %v8981 = vunpack.c.l.b16 %v6258
    %v8982 = vunpack.c.h.b16 %v6258
    %v8983 = vunpack.c.l.b16 %v6259
    %v8984 = vunpack.c.h.b16 %v6259
    %v8985 = vunpack.c.l.b16 %v6260
    %v8986 = vunpack.c.h.b16 %v6260
    %v8987 = vunpack.c.l.b16 %v6261
    %v8988 = vunpack.c.h.b16 %v6261
    %v8989 = vunpack.c.l.b16 %v6262
    %v8990 = vunpack.c.h.b16 %v6262
    %v8991 = vunpack.c.l.b16 %v6263
    %v8992 = vunpack.c.h.b16 %v6263
    %v8993 = vunpack.c.l.b16 %v6264
    %v8994 = vunpack.c.h.b16 %v6264
    %v8995 = vunpack.c.l.b16 %v6265
    %v8996 = vunpack.c.h.b16 %v6265
    %v8997 = vunpack.c.l.b16 %v6266
    %v8998 = vunpack.c.h.b16 %v6266
    %v8999 = vunpack.c.l.b16 %v6267
    %v9000 = vunpack.c.h.b16 %v6267
    %v9001 = vunpack.c.l.b16 %v6268
    %v9002 = vunpack.c.h.b16 %v6268
    %v9003 = vunpack.c.l.b16 %v6269
    %v9004 = vunpack.c.h.b16 %v6269
    %v9005 = vunpack.c.l.b16 %v6270
    %v9006 = vunpack.c.h.b16 %v6270
    %v9007 = vunpack.c.l.b16 %v6271
    %v9008 = vunpack.c.h.b16 %v6271
    %v9009 = vunpack.c.l.b16 %v6272
    %v9010 = vunpack.c.h.b16 %v6272
    %v9011 = vunpack.c.l.b16 %v6273
    %v9012 = vunpack.c.h.b16 %v6273
    %v9013 = vunpack.c.l.b16 %v6274
    %v9014 = vunpack.c.h.b16 %v6274
    %v9015 = vunpack.c.l.b16 %v6275
    %v9016 = vunpack.c.h.b16 %v6275
    %v9017 = vunpack.c.l.b16 %v6276
    %v9018 = vunpack.c.h.b16 %v6276
    %v9019 = vunpack.c.l.b16 %v6277
    %v9020 = vunpack.c.h.b16 %v6277
    %v9021 = vunpack.c.l.b16 %v6278
    %v9022 = vunpack.c.h.b16 %v6278
    %v9023 = vunpack.c.l.b16 %v6279
    %v9024 = vunpack.c.h.b16 %v6279
    %v9025 = vunpack.c.l.b16 %v6280
    %v9026 = vunpack.c.h.b16 %v6280
    %v9027 = vunpack.c.l.b16 %v6281
    %v9028 = vunpack.c.h.b16 %v6281
    %v9029 = vunpack.c.l.b16 %v6282
    %v9030 = vunpack.c.h.b16 %v6282
    %v9031 = vunpack.c.l.b16 %v6283
    %v9032 = vunpack.c.h.b16 %v6283
    %v9033 = vunpack.c.l.b16 %v6284
    %v9034 = vunpack.c.h.b16 %v6284
    %v9035 = vunpack.c.l.b16 %v6285
    %v9036 = vunpack.c.h.b16 %v6285
    %v9037 = vunpack.c.l.b16 %v6286
    %v9038 = vunpack.c.h.b16 %v6286
    %v9039 = vunpack.c.l.b16 %v6287
    %v9040 = vunpack.c.h.b16 %v6287
    %v9041 = vunpack.c.l.b16 %v6288
    %v9042 = vunpack.c.h.b16 %v6288
    %v9043 = vunpack.c.l.b16 %v6289
    %v9044 = vunpack.c.h.b16 %v6289
    %v9045 = vunpack.c.l.b16 %v6290
    %v9046 = vunpack.c.h.b16 %v6290
    %v9047 = vunpack.c.l.b16 %v6291
    %v9048 = vunpack.c.h.b16 %v6291
    %v9049 = vunpack.c.l.b16 %v6292
    %v9050 = vunpack.c.h.b16 %v6292
    %v9051 = vunpack.c.l.b16 %v6293
    %v9052 = vunpack.c.h.b16 %v6293
    %v9053 = vunpack.c.l.b16 %v6294
    %v9054 = vunpack.c.h.b16 %v6294
    %v9055 = vunpack.c.l.b16 %v6295
    %v9056 = vunpack.c.h.b16 %v6295
    %v9057 = vunpack.c.l.b16 %v6296
    %v9058 = vunpack.c.h.b16 %v6296
    %v9059 = vunpack.c.l.b16 %v6297
    %v9060 = vunpack.c.h.b16 %v6297
    %v9061 = vunpack.c.l.b16 %v6298
    %v9062 = vunpack.c.h.b16 %v6298
    %v9063 = vunpack.c.l.b16 %v6299
    %v9064 = vunpack.c.h.b16 %v6299
    %v9065 = vunpack.c.l.b16 %v6300
    %v9066 = vunpack.c.h.b16 %v6300
    %v9067 = vunpack.c.l.b16 %v6301
    %v9068 = vunpack.c.h.b16 %v6301
    %v9069 = vunpack.c.l.b16 %v6302
    %v9070 = vunpack.c.h.b16 %v6302
    %v9071 = vunpack.c.l.b16 %v6303
    %v9072 = vunpack.c.h.b16 %v6303
    %v9073 = vunpack.c.l.b16 %v6304
    %v9074 = vunpack.c.h.b16 %v6304
    %v9075 = vunpack.c.l.b16 %v6305
    %v9076 = vunpack.c.h.b16 %v6305
    %v9077 = vunpack.c.l.b16 %v6306
    %v9078 = vunpack.c.h.b16 %v6306
    %v9079 = vunpack.c.l.b16 %v6307
    %v9080 = vunpack.c.h.b16 %v6307
    %v9081 = vunpack.c.l.b16 %v6308
    %v9082 = vunpack.c.h.b16 %v6308
    %v9083 = vunpack.c.l.b16 %v6309
    %v9084 = vunpack.c.h.b16 %v6309
    %v9085 = vunpack.c.l.b16 %v6310
    %v9086 = vunpack.c.h.b16 %v6310
    %v9087 = vunpack.c.l.b16 %v6311
    %v9088 = vunpack.c.h.b16 %v6311
    %v9089 = vunpack.c.l.b16 %v6312
    %v9090 = vunpack.c.h.b16 %v6312
    %v9091 = vunpack.c.l.b16 %v6313
    %v9092 = vunpack.c.h.b16 %v6313
    %v9093 = vunpack.c.l.b16 %v6314
    %v9094 = vunpack.c.h.b16 %v6314
    %v9095 = vunpack.c.l.b16 %v6315
    %v9096 = vunpack.c.h.b16 %v6315
    %v9097 = vunpack.c.l.b16 %v6316
    %v9098 = vunpack.c.h.b16 %v6316
    %v9099 = vunpack.c.l.b16 %v6317
    %v9100 = vunpack.c.h.b16 %v6317
    %v9101 = vunpack.c.l.b16 %v6318
    %v9102 = vunpack.c.h.b16 %v6318
    %v9103 = vunpack.c.l.b16 %v6319
    %v9104 = vunpack.c.h.b16 %v6319
    %v9105 = vunpack.c.l.b16 %v6320
    %v9106 = vunpack.c.h.b16 %v6320
    %v9107 = vunpack.c.l.b16 %v6321
    %v9108 = vunpack.c.h.b16 %v6321
    %v9109 = vunpack.c.l.b16 %v6322
    %v9110 = vunpack.c.h.b16 %v6322
    %v9111 = vunpack.c.l.b16 %v6323
    %v9112 = vunpack.c.h.b16 %v6323
    %v9113 = vunpack.c.l.b16 %v6324
    %v9114 = vunpack.c.h.b16 %v6324
    %v9115 = vunpack.c.l.b16 %v6325
    %v9116 = vunpack.c.h.b16 %v6325
    %v9117 = vunpack.c.l.b16 %v6326
    %v9118 = vunpack.c.h.b16 %v6326
    %v9119 = vunpack.c.l.b16 %v6327
    %v9120 = vunpack.c.h.b16 %v6327
    %v9121 = vunpack.c.l.b16 %v6328
    %v9122 = vunpack.c.h.b16 %v6328
    %v9123 = vunpack.c.l.b16 %v6329
    %v9124 = vunpack.c.h.b16 %v6329
    %v9125 = vunpack.c.l.b16 %v6330
    %v9126 = vunpack.c.h.b16 %v6330
    %v9127 = vunpack.c.l.b16 %v6331
    %v9128 = vunpack.c.h.b16 %v6331
    %v9129 = vunpack.c.l.b16 %v6332
    %v9130 = vunpack.c.h.b16 %v6332
    %v9131 = vunpack.c.l.b16 %v6333
    %v9132 = vunpack.c.h.b16 %v6333
    %v9133 = vunpack.c.l.b16 %v6334
    %v9134 = vunpack.c.h.b16 %v6334
    %v9135 = vunpack.c.l.b16 %v6335
    %v9136 = vunpack.c.h.b16 %v6335
    %v9137 = vunpack.c.l.b16 %v6336
    %v9138 = vunpack.c.h.b16 %v6336
    %v9139 = vunpack.c.l.b16 %v6337
    %v9140 = vunpack.c.h.b16 %v6337
    %v9141 = vunpack.c.l.b16 %v6338
    %v9142 = vunpack.c.h.b16 %v6338
    %v9143 = vunpack.c.l.b16 %v6339
    %v9144 = vunpack.c.h.b16 %v6339
    %v9145 = vunpack.c.l.b16 %v6340
    %v9146 = vunpack.c.h.b16 %v6340
    %v9147 = vunpack.c.l.b16 %v6341
    %v9148 = vunpack.c.h.b16 %v6341
    %v9149 = vunpack.c.l.b16 %v6342
    %v9150 = vunpack.c.h.b16 %v6342
    %v9151 = vunpack.c.l.b16 %v6343
    %v9152 = vunpack.c.h.b16 %v6343
    %v9153 = vunpack.c.l.b16 %v6344
    %v9154 = vunpack.c.h.b16 %v6344
    %v9155 = vunpack.c.l.b16 %v6345
    %v9156 = vunpack.c.h.b16 %v6345
    %v9157 = vunpack.c.l.b16 %v6346
    %v9158 = vunpack.c.h.b16 %v6346
    %v9159 = vunpack.c.l.b16 %v6347
    %v9160 = vunpack.c.h.b16 %v6347
    %v9161 = vunpack.c.l.b16 %v6348
    %v9162 = vunpack.c.h.b16 %v6348
    %v9163 = vunpack.c.l.b16 %v6349
    %v9164 = vunpack.c.h.b16 %v6349
    %v9165 = vunpack.c.l.b16 %v6350
    %v9166 = vunpack.c.h.b16 %v6350
    %v9167 = vunpack.c.l.b16 %v6351
    %v9168 = vunpack.c.h.b16 %v6351
    %v9169 = vunpack.c.l.b16 %v6352
    %v9170 = vunpack.c.h.b16 %v6352
    %v9171 = vunpack.c.l.b16 %v6353
    %v9172 = vunpack.c.h.b16 %v6353
    %v9173 = vunpack.c.l.b16 %v6354
    %v9174 = vunpack.c.h.b16 %v6354
    %v9175 = vunpack.c.l.b16 %v6355
    %v9176 = vunpack.c.h.b16 %v6355
    %v9177 = vunpack.c.l.b16 %v6356
    %v9178 = vunpack.c.h.b16 %v6356
    %v9179 = vunpack.c.l.b16 %v6357
    %v9180 = vunpack.c.h.b16 %v6357
    %v9181 = vunpack.c.l.b16 %v6358
    %v9182 = vunpack.c.h.b16 %v6358
    %v9183 = vunpack.c.l.b16 %v6359
    %v9184 = vunpack.c.h.b16 %v6359
    %v9185 = vunpack.c.l.b16 %v6360
    %v9186 = vunpack.c.h.b16 %v6360
    %v9187 = vunpack.c.l.b16 %v6361
    %v9188 = vunpack.c.h.b16 %v6361
    %v9189 = vunpack.c.l.b16 %v6362
    %v9190 = vunpack.c.h.b16 %v6362
    %v9191 = vunpack.c.l.b16 %v6363
    %v9192 = vunpack.c.h.b16 %v6363
    %v9193 = vunpack.c.l.b16 %v6364
    %v9194 = vunpack.c.h.b16 %v6364
    %v9195 = vunpack.c.l.b16 %v6365
    %v9196 = vunpack.c.h.b16 %v6365
    %v9197 = vunpack.c.l.b16 %v6366
    %v9198 = vunpack.c.h.b16 %v6366
    %v9199 = vunpack.c.l.b16 %v6367
    %v9200 = vunpack.c.h.b16 %v6367
    %v9201 = vunpack.c.l.b16 %v6368
    %v9202 = vunpack.c.h.b16 %v6368
    %v9203 = vunpack.c.l.b16 %v6369
    %v9204 = vunpack.c.h.b16 %v6369
    %v9205 = vunpack.c.l.b16 %v6370
    %v9206 = vunpack.c.h.b16 %v6370
    %v9207 = vunpack.c.l.b16 %v6371
    %v9208 = vunpack.c.h.b16 %v6371
    %v9209 = vunpack.c.l.b16 %v6372
    %v9210 = vunpack.c.h.b16 %v6372
    %v9211 = vunpack.c.l.b16 %v6373
    %v9212 = vunpack.c.h.b16 %v6373
    %v9213 = vunpack.c.l.b16 %v6374
    %v9214 = vunpack.c.h.b16 %v6374
    %v9215 = vunpack.c.l.b16 %v6375
    %v9216 = vunpack.c.h.b16 %v6375
    %v9217 = vunpack.c.l.b16 %v6376
    %v9218 = vunpack.c.h.b16 %v6376
    %v9219 = vunpack.c.l.b16 %v6377
    %v9220 = vunpack.c.h.b16 %v6377
    %v9221 = vunpack.c.l.b16 %v6378
    %v9222 = vunpack.c.h.b16 %v6378
    %v9223 = vunpack.c.l.b16 %v6379
    %v9224 = vunpack.c.h.b16 %v6379
    %v9225 = vunpack.c.l.b16 %v6380
    %v9226 = vunpack.c.h.b16 %v6380
    %v9227 = vunpack.c.l.b16 %v6381
    %v9228 = vunpack.c.h.b16 %v6381
    %v9229 = vunpack.c.l.b16 %v6382
    %v9230 = vunpack.c.h.b16 %v6382
    %v9231 = vunpack.c.l.b16 %v6383
    %v9232 = vunpack.c.h.b16 %v6383
    %v9233 = vunpack.c.l.b16 %v6384
    %v9234 = vunpack.c.h.b16 %v6384
    %v9235 = vunpack.c.l.b16 %v6385
    %v9236 = vunpack.c.h.b16 %v6385
    %v9237 = vunpack.c.l.b16 %v6386
    %v9238 = vunpack.c.h.b16 %v6386
    %v9239 = vunpack.c.l.b16 %v6387
    %v9240 = vunpack.c.h.b16 %v6387
    %v9241 = vunpack.c.l.b16 %v6388
    %v9242 = vunpack.c.h.b16 %v6388
    %v9243 = vunpack.c.l.b16 %v6389
    %v9244 = vunpack.c.h.b16 %v6389
    %v9245 = vunpack.c.l.b16 %v6390
    %v9246 = vunpack.c.h.b16 %v6390
    %v9247 = vunpack.c.l.b16 %v6391
    %v9248 = vunpack.c.h.b16 %v6391
    %v9249 = vunpack.c.l.b16 %v6392
    %v9250 = vunpack.c.h.b16 %v6392
    %v9251 = vunpack.c.l.b16 %v6393
    %v9252 = vunpack.c.h.b16 %v6393
    %v9253 = vunpack.c.l.b16 %v6394
    %v9254 = vunpack.c.h.b16 %v6394
    %v9255 = vunpack.c.l.b16 %v6395
    %v9256 = vunpack.c.h.b16 %v6395
    %v9257 = vunpack.c.l.b16 %v6396
    %v9258 = vunpack.c.h.b16 %v6396
    %v9259 = vunpack.c.l.b16 %v6397
    %v9260 = vunpack.c.h.b16 %v6397
    %v9261 = vunpack.c.l.b16 %v6398
    %v9262 = vunpack.c.h.b16 %v6398
    %v9263 = vunpack.c.l.b16 %v6399
    %v9264 = vunpack.c.h.b16 %v6399
    %v9265 = vunpack.c.l.b16 %v6400
    %v9266 = vunpack.c.h.b16 %v6400
    %v9267 = vunpack.c.l.b16 %v6401
    %v9268 = vunpack.c.h.b16 %v6401
    %v9269 = vunpack.c.l.b16 %v6402
    %v9270 = vunpack.c.h.b16 %v6402
    %v9271 = vunpack.c.l.b16 %v6403
    %v9272 = vunpack.c.h.b16 %v6403
    %v9273 = vunpack.c.l.b16 %v6404
    %v9274 = vunpack.c.h.b16 %v6404
    %v9275 = vunpack.c.l.b16 %v6405
    %v9276 = vunpack.c.h.b16 %v6405
    %v9277 = vunpack.c.l.b16 %v6406
    %v9278 = vunpack.c.h.b16 %v6406
    %v9279 = vunpack.c.l.b16 %v6407
    %v9280 = vunpack.c.h.b16 %v6407
    %v9281 = vunpack.c.l.b16 %v6408
    %v9282 = vunpack.c.h.b16 %v6408
    %v9283 = vunpack.c.l.b16 %v6409
    %v9284 = vunpack.c.h.b16 %v6409
    %v9285 = vunpack.c.l.b16 %v6410
    %v9286 = vunpack.c.h.b16 %v6410
    %v9287 = vunpack.c.l.b16 %v6411
    %v9288 = vunpack.c.h.b16 %v6411
    %v9289 = vunpack.c.l.b16 %v6412
    %v9290 = vunpack.c.h.b16 %v6412
    %v9291 = vunpack.c.l.b16 %v6413
    %v9292 = vunpack.c.h.b16 %v6413
    %v9293 = vunpack.c.l.b16 %v6414
    %v9294 = vunpack.c.h.b16 %v6414
    %v9295 = vunpack.c.l.b16 %v6415
    %v9296 = vunpack.c.h.b16 %v6415
    %v9297 = vunpack.c.l.b16 %v6416
    %v9298 = vunpack.c.h.b16 %v6416
    %v9299 = vunpack.c.l.b16 %v6417
    %v9300 = vunpack.c.h.b16 %v6417
    %v9301 = vunpack.c.l.b16 %v6418
    %v9302 = vunpack.c.h.b16 %v6418
    %v9303 = vunpack.c.l.b16 %v6419
    %v9304 = vunpack.c.h.b16 %v6419
    %v9305 = vunpack.c.l.b16 %v6420
    %v9306 = vunpack.c.h.b16 %v6420
    %v9307 = vunpack.c.l.b16 %v6421
    %v9308 = vunpack.c.h.b16 %v6421
    %v9309 = vunpack.c.l.b16 %v6422
    %v9310 = vunpack.c.h.b16 %v6422
    %v9311 = vunpack.c.l.b16 %v6423
    %v9312 = vunpack.c.h.b16 %v6423
    %v9313 = vunpack.c.l.b16 %v6424
    %v9314 = vunpack.c.h.b16 %v6424
    %v9315 = vunpack.c.l.b16 %v6425
    %v9316 = vunpack.c.h.b16 %v6425
    %v9317 = vunpack.c.l.b16 %v6426
    %v9318 = vunpack.c.h.b16 %v6426
    %v9319 = vunpack.c.l.b16 %v6427
    %v9320 = vunpack.c.h.b16 %v6427
    %v9321 = vunpack.c.l.b16 %v6428
    %v9322 = vunpack.c.h.b16 %v6428
    %v9323 = vunpack.c.l.b16 %v6429
    %v9324 = vunpack.c.h.b16 %v6429
    %v9325 = vunpack.c.l.b16 %v6430
    %v9326 = vunpack.c.h.b16 %v6430
    %v9327 = vunpack.c.l.b16 %v6431
    %v9328 = vunpack.c.h.b16 %v6431
    %v9329 = vunpack.c.l.b16 %v6432
    %v9330 = vunpack.c.h.b16 %v6432
    %v9331 = vunpack.c.l.b16 %v6433
    %v9332 = vunpack.c.h.b16 %v6433
    %v9333 = vunpack.c.l.b16 %v6434
    %v9334 = vunpack.c.h.b16 %v6434
    %v9335 = vunpack.c.l.b16 %v6435
    %v9336 = vunpack.c.h.b16 %v6435
    %v9337 = vunpack.c.l.b16 %v6436
    %v9338 = vunpack.c.h.b16 %v6436
    %v9339 = vunpack.c.l.b16 %v6437
    %v9340 = vunpack.c.h.b16 %v6437
    %v9341 = vunpack.c.l.b16 %v6438
    %v9342 = vunpack.c.h.b16 %v6438
    %v9343 = vunpack.c.l.b16 %v6439
    %v9344 = vunpack.c.h.b16 %v6439
    %v9345 = vunpack.c.l.b16 %v6440
    %v9346 = vunpack.c.h.b16 %v6440
    %v9347 = vunpack.c.l.b16 %v6441
    %v9348 = vunpack.c.h.b16 %v6441
    %v9349 = vunpack.c.l.b16 %v6442
    %v9350 = vunpack.c.h.b16 %v6442
    %v9351 = vunpack.c.l.b16 %v6443
    %v9352 = vunpack.c.h.b16 %v6443
    %v9353 = vunpack.c.l.b16 %v6444
    %v9354 = vunpack.c.h.b16 %v6444
    %v9355 = vunpack.c.l.b16 %v6445
    %v9356 = vunpack.c.h.b16 %v6445
    %v9357 = vunpack.c.l.b16 %v6446
    %v9358 = vunpack.c.h.b16 %v6446
    %v9359 = vunpack.c.l.b16 %v6447
    %v9360 = vunpack.c.h.b16 %v6447
    %v9361 = vunpack.c.l.b16 %v6448
    %v9362 = vunpack.c.h.b16 %v6448
    %v9363 = vunpack.c.l.b16 %v6449
    %v9364 = vunpack.c.h.b16 %v6449
    %v9365 = vunpack.c.l.b16 %v6450
    %v9366 = vunpack.c.h.b16 %v6450
    %v9367 = vunpack.c.l.b16 %v6451
    %v9368 = vunpack.c.h.b16 %v6451
    %v9369 = vunpack.c.l.b16 %v6452
    %v9370 = vunpack.c.h.b16 %v6452
    %v9371 = vunpack.c.l.b16 %v6453
    %v9372 = vunpack.c.h.b16 %v6453
    %v9373 = vunpack.c.l.b16 %v6454
    %v9374 = vunpack.c.h.b16 %v6454
    %v9375 = vunpack.c.l.b16 %v6455
    %v9376 = vunpack.c.h.b16 %v6455
    %v9377 = vunpack.c.l.b16 %v6456
    %v9378 = vunpack.c.h.b16 %v6456
    %v9379 = vunpack.c.l.b16 %v6457
    %v9380 = vunpack.c.h.b16 %v6457
    %v9381 = vunpack.c.l.b16 %v6458
    %v9382 = vunpack.c.h.b16 %v6458
    %v9383 = vunpack.c.l.b16 %v6459
    %v9384 = vunpack.c.h.b16 %v6459
    %v9385 = vunpack.c.l.b16 %v6460
    %v9386 = vunpack.c.h.b16 %v6460
    %v9387 = vunpack.c.l.b16 %v6461
    %v9388 = vunpack.c.h.b16 %v6461
    %v9389 = vunpack.c.l.b16 %v6462
    %v9390 = vunpack.c.h.b16 %v6462
    %v9391 = vunpack.c.l.b16 %v6463
    %v9392 = vunpack.c.h.b16 %v6463
    %v9393 = vunpack.c.l.b16 %v6464
    %v9394 = vunpack.c.h.b16 %v6464
    %v9395 = vunpack.c.l.b16 %v6465
    %v9396 = vunpack.c.h.b16 %v6465
    %v9397 = vunpack.c.l.b16 %v6466
    %v9398 = vunpack.c.h.b16 %v6466
    %v9399 = vunpack.c.l.b16 %v6467
    %v9400 = vunpack.c.h.b16 %v6467
    %v9401 = vunpack.c.l.b16 %v6468
    %v9402 = vunpack.c.h.b16 %v6468
    %v9403 = vunpack.c.l.b16 %v6469
    %v9404 = vunpack.c.h.b16 %v6469
    %v9405 = vunpack.c.l.b16 %v6470
    %v9406 = vunpack.c.h.b16 %v6470
    %v9407 = vunpack.c.l.b16 %v6471
    %v9408 = vunpack.c.h.b16 %v6471
    %v9409 = vunpack.c.l.b16 %v6472
    %v9410 = vunpack.c.h.b16 %v6472
    %v9411 = vunpack.c.l.b16 %v6473
    %v9412 = vunpack.c.h.b16 %v6473
    %v9413 = vunpack.c.l.b16 %v6474
    %v9414 = vunpack.c.h.b16 %v6474
    %v9415 = vunpack.c.l.b16 %v6475
    %v9416 = vunpack.c.h.b16 %v6475
    %v9417 = vunpack.c.l.b16 %v6476
    %v9418 = vunpack.c.h.b16 %v6476
    %v9419 = vunpack.c.l.b16 %v6477
    %v9420 = vunpack.c.h.b16 %v6477
    %v9421 = vunpack.c.l.b16 %v6478
    %v9422 = vunpack.c.h.b16 %v6478
    %v9423 = vunpack.c.l.b16 %v6479
    %v9424 = vunpack.c.h.b16 %v6479
    %v9425 = vunpack.c.l.b16 %v6480
    %v9426 = vunpack.c.h.b16 %v6480
    %v9427 = vunpack.c.l.b16 %v6481
    %v9428 = vunpack.c.h.b16 %v6481
    %v9429 = vunpack.c.l.b16 %v6482
    %v9430 = vunpack.c.h.b16 %v6482
    %v9431 = vunpack.c.l.b16 %v6483
    %v9432 = vunpack.c.h.b16 %v6483
    %v9433 = vunpack.c.l.b16 %v6484
    %v9434 = vunpack.c.h.b16 %v6484
    %v9435 = vunpack.c.l.b16 %v6485
    %v9436 = vunpack.c.h.b16 %v6485
    %v9437 = vunpack.c.l.b16 %v6486
    %v9438 = vunpack.c.h.b16 %v6486
    %v9439 = vunpack.c.l.b16 %v6487
    %v9440 = vunpack.c.h.b16 %v6487
    %v9441 = vunpack.c.l.b16 %v6488
    %v9442 = vunpack.c.h.b16 %v6488
    %v9443 = vunpack.c.l.b16 %v6489
    %v9444 = vunpack.c.h.b16 %v6489
    %v9445 = vunpack.c.l.b16 %v6490
    %v9446 = vunpack.c.h.b16 %v6490
    %v9447 = vunpack.c.l.b16 %v6491
    %v9448 = vunpack.c.h.b16 %v6491
    %v9449 = vunpack.c.l.b16 %v6492
    %v9450 = vunpack.c.h.b16 %v6492
    %v9451 = vunpack.c.l.b16 %v6493
    %v9452 = vunpack.c.h.b16 %v6493
    %v9453 = vunpack.c.l.b16 %v6494
    %v9454 = vunpack.c.h.b16 %v6494
    %v9455 = vunpack.c.l.b16 %v6495
    %v9456 = vunpack.c.h.b16 %v6495
    %v9457 = vunpack.c.l.b16 %v6496
    %v9458 = vunpack.c.h.b16 %v6496
    %v9459 = vunpack.c.l.b16 %v6497
    %v9460 = vunpack.c.h.b16 %v6497
    %v9461 = vunpack.c.l.b16 %v6498
    %v9462 = vunpack.c.h.b16 %v6498
    %v9463 = vunpack.c.l.b16 %v6499
    %v9464 = vunpack.c.h.b16 %v6499
    %v9465 = vunpack.c.l.b16 %v6500
    %v9466 = vunpack.c.h.b16 %v6500
    %v9467 = vunpack.c.l.b16 %v6501
    %v9468 = vunpack.c.h.b16 %v6501
    %v9469 = vunpack.c.l.b16 %v6502
    %v9470 = vunpack.c.h.b16 %v6502
    %v9471 = vunpack.c.l.b16 %v6503
    %v9472 = vunpack.c.h.b16 %v6503
    %v9473 = vunpack.c.l.b16 %v6504
    %v9474 = vunpack.c.h.b16 %v6504
    %v9475 = vunpack.c.l.b16 %v6505
    %v9476 = vunpack.c.h.b16 %v6505
    %v9477 = vunpack.c.l.b16 %v6506
    %v9478 = vunpack.c.h.b16 %v6506
    %v9479 = vunpack.c.l.b16 %v6507
    %v9480 = vunpack.c.h.b16 %v6507
    %v9481 = vunpack.c.l.b16 %v6508
    %v9482 = vunpack.c.h.b16 %v6508
    %v9483 = vunpack.c.l.b16 %v6509
    %v9484 = vunpack.c.h.b16 %v6509
    %v9485 = vunpack.c.l.b16 %v6510
    %v9486 = vunpack.c.h.b16 %v6510
    %v9487 = vunpack.c.l.b16 %v6511
    %v9488 = vunpack.c.h.b16 %v6511
    %v9489 = vunpack.c.l.b16 %v6512
    %v9490 = vunpack.c.h.b16 %v6512
    %v9491 = vunpack.c.l.b16 %v6513
    %v9492 = vunpack.c.h.b16 %v6513
    %v9493 = vunpack.c.l.b16 %v6514
    %v9494 = vunpack.c.h.b16 %v6514
    %v9495 = vunpack.c.l.b16 %v6515
    %v9496 = vunpack.c.h.b16 %v6515
    %v9497 = vunpack.c.l.b16 %v6516
    %v9498 = vunpack.c.h.b16 %v6516
    %v9499 = vunpack.c.l.b16 %v6517
    %v9500 = vunpack.c.h.b16 %v6517
    %v9501 = vunpack.c.l.b16 %v6518
    %v9502 = vunpack.c.h.b16 %v6518
    %v9503 = vunpack.c.l.b16 %v6519
    %v9504 = vunpack.c.h.b16 %v6519
    %v9505 = vunpack.c.l.b16 %v6520
    %v9506 = vunpack.c.h.b16 %v6520
    %v9507 = vunpack.c.l.b16 %v6521
    %v9508 = vunpack.c.h.b16 %v6521
    %v9509 = vunpack.c.l.b16 %v6522
    %v9510 = vunpack.c.h.b16 %v6522
    %v9511 = vunpack.c.l.b16 %v6523
    %v9512 = vunpack.c.h.b16 %v6523
    %v9513 = vunpack.c.l.b16 %v6524
    %v9514 = vunpack.c.h.b16 %v6524
    %v9515 = vunpack.c.l.b16 %v6525
    %v9516 = vunpack.c.h.b16 %v6525
    %v9517 = vunpack.c.l.b16 %v6526
    %v9518 = vunpack.c.h.b16 %v6526
    %v9519 = vunpack.c.l.b16 %v6527
    %v9520 = vunpack.c.h.b16 %v6527
    %v9521 = vunpack.c.l.b16 %v6528
    %v9522 = vunpack.c.h.b16 %v6528
    %v9523 = vunpack.c.l.b16 %v6529
    %v9524 = vunpack.c.h.b16 %v6529
    %v9525 = vunpack.c.l.b16 %v6530
    %v9526 = vunpack.c.h.b16 %v6530
    %v9527 = vunpack.c.l.b16 %v6531
    %v9528 = vunpack.c.h.b16 %v6531
    %v9529 = vunpack.c.l.b16 %v6532
    %v9530 = vunpack.c.h.b16 %v6532
    %v9531 = vunpack.c.l.b16 %v6533
    %v9532 = vunpack.c.h.b16 %v6533
    %v9533 = vunpack.c.l.b16 %v6534
    %v9534 = vunpack.c.h.b16 %v6534
    %v9535 = vunpack.c.l.b16 %v6535
    %v9536 = vunpack.c.h.b16 %v6535
    %v9537 = vunpack.c.l.b16 %v6536
    %v9538 = vunpack.c.h.b16 %v6536
    %v9539 = vunpack.c.l.b16 %v6537
    %v9540 = vunpack.c.h.b16 %v6537
    %v9541 = vunpack.c.l.b16 %v6538
    %v9542 = vunpack.c.h.b16 %v6538
    %v9543 = vunpack.c.l.b16 %v6539
    %v9544 = vunpack.c.h.b16 %v6539
    %v9545 = vunpack.c.l.b16 %v6540
    %v9546 = vunpack.c.h.b16 %v6540
    %v9547 = vunpack.c.l.b16 %v6541
    %v9548 = vunpack.c.h.b16 %v6541
    %v9549 = vunpack.c.l.b16 %v6542
    %v9550 = vunpack.c.h.b16 %v6542
    %v9551 = vunpack.c.l.b16 %v6543
    %v9552 = vunpack.c.h.b16 %v6543
    %v9553 = vunpack.c.l.b16 %v6544
    %v9554 = vunpack.c.h.b16 %v6544
    %v9555 = vunpack.c.l.b16 %v6545
    %v9556 = vunpack.c.h.b16 %v6545
    %v9557 = vunpack.c.l.b16 %v6546
    %v9558 = vunpack.c.h.b16 %v6546
    %v9559 = vunpack.c.l.b16 %v6547
    %v9560 = vunpack.c.h.b16 %v6547
    %v9561 = vunpack.c.l.b16 %v6548
    %v9562 = vunpack.c.h.b16 %v6548
    %v9563 = vunpack.c.l.b16 %v6549
    %v9564 = vunpack.c.h.b16 %v6549
    %v9565 = vunpack.c.l.b16 %v6550
    %v9566 = vunpack.c.h.b16 %v6550
    %v9567 = vunpack.c.l.b16 %v6551
    %v9568 = vunpack.c.h.b16 %v6551
    %v9569 = vunpack.c.l.b16 %v6552
    %v9570 = vunpack.c.h.b16 %v6552
    %v9571 = vunpack.c.l.b16 %v6553
    %v9572 = vunpack.c.h.b16 %v6553
    %v9573 = vunpack.c.l.b16 %v6554
    %v9574 = vunpack.c.h.b16 %v6554
    %v9575 = vunpack.c.l.b16 %v6555
    %v9576 = vunpack.c.h.b16 %v6555
    %v9577 = vunpack.c.l.b16 %v6556
    %v9578 = vunpack.c.h.b16 %v6556
    %v9579 = vunpack.c.l.b16 %v6557
    %v9580 = vunpack.c.h.b16 %v6557
    %v9581 = vunpack.c.l.b16 %v6558
    %v9582 = vunpack.c.h.b16 %v6558
    %v9583 = vunpack.c.l.b16 %v6559
    %v9584 = vunpack.c.h.b16 %v6559
    %v9585 = vunpack.c.l.b16 %v6560
    %v9586 = vunpack.c.h.b16 %v6560
    %v9587 = vunpack.c.l.b16 %v6561
    %v9588 = vunpack.c.h.b16 %v6561
    %v9589 = vunpack.c.l.b16 %v6562
    %v9590 = vunpack.c.h.b16 %v6562
    %v9591 = vunpack.c.l.b16 %v6563
    %v9592 = vunpack.c.h.b16 %v6563
    %v9593 = vunpack.c.l.b16 %v6564
    %v9594 = vunpack.c.h.b16 %v6564
    %v9595 = vunpack.c.l.b16 %v6565
    %v9596 = vunpack.c.h.b16 %v6565
    %v9597 = vunpack.c.l.b16 %v6566
    %v9598 = vunpack.c.h.b16 %v6566
    %v9599 = vunpack.c.l.b16 %v6567
    %v9600 = vunpack.c.h.b16 %v6567
    %v9601 = vunpack.c.l.b16 %v6568
    %v9602 = vunpack.c.h.b16 %v6568
    %v9603 = vunpack.c.l.b16 %v6569
    %v9604 = vunpack.c.h.b16 %v6569
    %v9605 = vunpack.c.l.b16 %v6570
    %v9606 = vunpack.c.h.b16 %v6570
    %v9607 = vunpack.c.l.b16 %v6571
    %v9608 = vunpack.c.h.b16 %v6571
    %v9609 = vunpack.c.l.b16 %v6572
    %v9610 = vunpack.c.h.b16 %v6572
    %v9611 = vunpack.c.l.b16 %v6573
    %v9612 = vunpack.c.h.b16 %v6573
    %v9613 = vunpack.c.l.b16 %v6574
    %v9614 = vunpack.c.h.b16 %v6574
    %v9615 = vunpack.c.l.b16 %v6575
    %v9616 = vunpack.c.h.b16 %v6575
    %v9617 = vunpack.c.l.b16 %v6576
    %v9618 = vunpack.c.h.b16 %v6576
    %v9619 = vunpack.c.l.b16 %v6577
    %v9620 = vunpack.c.h.b16 %v6577
    %v9621 = vunpack.c.l.b16 %v6578
    %v9622 = vunpack.c.h.b16 %v6578
    %v9623 = vunpack.c.l.b16 %v6579
    %v9624 = vunpack.c.h.b16 %v6579
    %v9625 = vunpack.c.l.b16 %v6580
    %v9626 = vunpack.c.h.b16 %v6580
    %v9627 = vunpack.c.l.b16 %v6581
    %v9628 = vunpack.c.h.b16 %v6581
    %v9629 = vunpack.c.l.b16 %v6582
    %v9630 = vunpack.c.h.b16 %v6582
    %v9631 = vunpack.c.l.b16 %v6583
    %v9632 = vunpack.c.h.b16 %v6583
    %v9633 = vunpack.c.l.b16 %v6584
    %v9634 = vunpack.c.h.b16 %v6584
    %v9635 = vunpack.c.l.b16 %v6585
    %v9636 = vunpack.c.h.b16 %v6585
    %v9637 = vunpack.c.l.b16 %v6586
    %v9638 = vunpack.c.h.b16 %v6586
    %v9639 = vunpack.c.l.b16 %v6587
    %v9640 = vunpack.c.h.b16 %v6587
    %v9641 = vunpack.c.l.b16 %v6588
    %v9642 = vunpack.c.h.b16 %v6588
    %v9643 = vunpack.c.l.b16 %v6589
    %v9644 = vunpack.c.h.b16 %v6589
    %v9645 = vunpack.c.l.b16 %v6590
    %v9646 = vunpack.c.h.b16 %v6590
    %v9647 = vunpack.c.l.b16 %v6591
    %v9648 = vunpack.c.h.b16 %v6591
    %v9649 = vunpack.c.l.b16 %v6592
    %v9650 = vunpack.c.h.b16 %v6592
    %v9651 = vunpack.c.l.b16 %v6593
    %v9652 = vunpack.c.h.b16 %v6593
    %v9653 = vunpack.c.l.b16 %v6594
    %v9654 = vunpack.c.h.b16 %v6594
    %v9655 = vunpack.c.l.b16 %v6595
    %v9656 = vunpack.c.h.b16 %v6595
    %v9657 = vunpack.c.l.b16 %v6596
    %v9658 = vunpack.c.h.b16 %v6596
    %v9659 = vunpack.c.l.b16 %v6597
    %v9660 = vunpack.c.h.b16 %v6597
    %v9661 = vunpack.c.l.b16 %v6598
    %v9662 = vunpack.c.h.b16 %v6598
    %v9663 = vunpack.c.l.b16 %v6599
    %v9664 = vunpack.c.h.b16 %v6599
    %v9665 = vunpack.c.l.b16 %v6600
    %v9666 = vunpack.c.h.b16 %v6600
    %v9667 = vunpack.c.l.b16 %v6601
    %v9668 = vunpack.c.h.b16 %v6601
    %v9669 = vunpack.c.l.b16 %v6602
    %v9670 = vunpack.c.h.b16 %v6602
    %v9671 = vunpack.c.l.b16 %v6603
    %v9672 = vunpack.c.h.b16 %v6603
    %v9673 = vunpack.c.l.b16 %v6604
    %v9674 = vunpack.c.h.b16 %v6604
    %v9675 = vunpack.c.l.b16 %v6605
    %v9676 = vunpack.c.h.b16 %v6605
    %v9677 = vunpack.c.l.b16 %v6606
    %v9678 = vunpack.c.h.b16 %v6606
    %v9679 = vunpack.c.l.b16 %v6607
    %v9680 = vunpack.c.h.b16 %v6607
    %v9681 = vunpack.c.l.b16 %v6608
    %v9682 = vunpack.c.h.b16 %v6608
    %v9683 = vunpack.c.l.b16 %v6609
    %v9684 = vunpack.c.h.b16 %v6609
    %v9685 = vunpack.c.l.b16 %v6610
    %v9686 = vunpack.c.h.b16 %v6610
    %v9687 = vunpack.c.l.b16 %v6611
    %v9688 = vunpack.c.h.b16 %v6611
    %v9689 = vunpack.c.l.b16 %v6612
    %v9690 = vunpack.c.h.b16 %v6612
    %v9691 = vunpack.c.l.b16 %v6613
    %v9692 = vunpack.c.h.b16 %v6613
    %v9693 = vunpack.c.l.b16 %v6614
    %v9694 = vunpack.c.h.b16 %v6614
    %v9695 = vunpack.c.l.b16 %v6615
    %v9696 = vunpack.c.h.b16 %v6615
    %v9697 = vunpack.c.l.b16 %v6616
    %v9698 = vunpack.c.h.b16 %v6616
    %v9699 = vunpack.c.l.b16 %v6617
    %v9700 = vunpack.c.h.b16 %v6617
    %v9701 = vunpack.c.l.b16 %v6618
    %v9702 = vunpack.c.h.b16 %v6618
    %v9703 = vunpack.c.l.b16 %v6619
    %v9704 = vunpack.c.h.b16 %v6619
    %v9705 = vunpack.c.l.b16 %v6620
    %v9706 = vunpack.c.h.b16 %v6620
    %v9707 = vunpack.c.l.b16 %v6621
    %v9708 = vunpack.c.h.b16 %v6621
    %v9709 = vunpack.c.l.b16 %v6622
    %v9710 = vunpack.c.h.b16 %v6622
    %v9711 = vunpack.c.l.b16 %v6623
    %v9712 = vunpack.c.h.b16 %v6623
    %v9713 = vunpack.c.l.b16 %v6624
    %v9714 = vunpack.c.h.b16 %v6624
    %v9715 = vunpack.c.l.b16 %v6625
    %v9716 = vunpack.c.h.b16 %v6625
    %v9717 = vunpack.c.l.b16 %v6626
    %v9718 = vunpack.c.h.b16 %v6626
    %v9719 = vunpack.c.l.b16 %v6627
    %v9720 = vunpack.c.h.b16 %v6627
    %v9721 = vunpack.c.l.b16 %v6628
    %v9722 = vunpack.c.h.b16 %v6628
    %v9723 = vunpack.c.l.b16 %v6629
    %v9724 = vunpack.c.h.b16 %v6629
    %v9725 = vunpack.c.l.b16 %v6630
    %v9726 = vunpack.c.h.b16 %v6630
    %v9727 = vunpack.c.l.b16 %v6631
    %v9728 = vunpack.c.h.b16 %v6631
    %v9729 = vunpack.c.l.b16 %v6632
    %v9730 = vunpack.c.h.b16 %v6632
    %v9731 = vunpack.c.l.b16 %v6633
    %v9732 = vunpack.c.h.b16 %v6633
    %v9733 = vunpack.c.l.b16 %v6634
    %v9734 = vunpack.c.h.b16 %v6634
    %v9735 = vunpack.c.l.b16 %v6635
    %v9736 = vunpack.c.h.b16 %v6635
    %v9737 = vunpack.c.l.b16 %v6636
    %v9738 = vunpack.c.h.b16 %v6636
    %v9739 = vunpack.c.l.b16 %v6637
    %v9740 = vunpack.c.h.b16 %v6637
    %v9741 = vunpack.c.l.b16 %v6638
    %v9742 = vunpack.c.h.b16 %v6638
    %v9743 = vunpack.c.l.b16 %v6639
    %v9744 = vunpack.c.h.b16 %v6639
    %v9745 = vunpack.c.l.b16 %v6640
    %v9746 = vunpack.c.h.b16 %v6640
    %v9747 = vunpack.c.l.b16 %v6641
    %v9748 = vunpack.c.h.b16 %v6641
    %v9749 = vunpack.c.l.b16 %v6642
    %v9750 = vunpack.c.h.b16 %v6642
    %v9751 = vunpack.c.l.b16 %v6643
    %v9752 = vunpack.c.h.b16 %v6643
    %v9753 = vunpack.c.l.b16 %v6644
    %v9754 = vunpack.c.h.b16 %v6644
    %v9755 = vunpack.c.l.b16 %v6645
    %v9756 = vunpack.c.h.b16 %v6645
    %v9757 = vunpack.c.l.b16 %v6646
    %v9758 = vunpack.c.h.b16 %v6646
    %v9759 = vunpack.c.l.b16 %v6647
    %v9760 = vunpack.c.h.b16 %v6647
    %v9761 = vunpack.c.l.b16 %v6648
    %v9762 = vunpack.c.h.b16 %v6648
    %v9763 = vunpack.c.l.b16 %v6649
    %v9764 = vunpack.c.h.b16 %v6649
    %v9765 = vunpack.c.l.b16 %v6650
    %v9766 = vunpack.c.h.b16 %v6650
    %v9767 = vunpack.c.l.b16 %v6651
    %v9768 = vunpack.c.h.b16 %v6651
    %v9769 = vunpack.c.l.b16 %v6652
    %v9770 = vunpack.c.h.b16 %v6652
    %v9771 = vunpack.c.l.b16 %v6653
    %v9772 = vunpack.c.h.b16 %v6653
    %v9773 = vunpack.c.l.b16 %v6654
    %v9774 = vunpack.c.h.b16 %v6654
    %v9775 = vunpack.c.l.b16 %v6655
    %v9776 = vunpack.c.h.b16 %v6655
    %v9777 = vunpack.c.l.b16 %v6656
    %v9778 = vunpack.c.h.b16 %v6656
    %v9779 = vunpack.c.l.b16 %v6657
    %v9780 = vunpack.c.h.b16 %v6657
    %v9781 = vunpack.c.l.b16 %v6658
    %v9782 = vunpack.c.h.b16 %v6658
    %v9783 = vunpack.c.l.b16 %v6659
    %v9784 = vunpack.c.h.b16 %v6659
    %v9785 = vunpack.c.l.b16 %v6660
    %v9786 = vunpack.c.h.b16 %v6660
    %v9787 = vunpack.c.l.b16 %v6661
    %v9788 = vunpack.c.h.b16 %v6661
    %v9789 = vunpack.c.l.b16 %v6662
    %v9790 = vunpack.c.h.b16 %v6662
    %v9791 = vunpack.c.l.b16 %v6663
    %v9792 = vunpack.c.h.b16 %v6663
    %v9793 = vunpack.c.l.b16 %v6664
    %v9794 = vunpack.c.h.b16 %v6664
    %v9795 = vunpack.c.l.b16 %v6665
    %v9796 = vunpack.c.h.b16 %v6665
    %v9797 = vunpack.c.l.b16 %v6666
    %v9798 = vunpack.c.h.b16 %v6666
    %v9799 = vunpack.c.l.b16 %v6667
    %v9800 = vunpack.c.h.b16 %v6667
    %v9801 = vunpack.c.l.b16 %v6668
    %v9802 = vunpack.c.h.b16 %v6668
    %v9803 = vunpack.c.l.b16 %v6669
    %v9804 = vunpack.c.h.b16 %v6669
    %v9805 = vunpack.c.l.b16 %v6670
    %v9806 = vunpack.c.h.b16 %v6670
    %v9807 = vunpack.c.l.b16 %v6671
    %v9808 = vunpack.c.h.b16 %v6671
    %v9809 = vunpack.c.l.b16 %v6672
    %v9810 = vunpack.c.h.b16 %v6672
    %v9811 = vunpack.c.l.b16 %v6673
    %v9812 = vunpack.c.h.b16 %v6673
    %v9813 = vunpack.c.l.b16 %v6674
    %v9814 = vunpack.c.h.b16 %v6674
    %v9815 = vunpack.c.l.b16 %v6675
    %v9816 = vunpack.c.h.b16 %v6675
    %v9817 = vunpack.c.l.b16 %v6676
    %v9818 = vunpack.c.h.b16 %v6676
    %v9819 = vunpack.c.l.b16 %v6677
    %v9820 = vunpack.c.h.b16 %v6677
    %v9821 = vunpack.c.l.b16 %v6678
    %v9822 = vunpack.c.h.b16 %v6678
    %v9823 = vunpack.c.l.b16 %v6679
    %v9824 = vunpack.c.h.b16 %v6679
    %v9825 = vunpack.c.l.b16 %v6680
    %v9826 = vunpack.c.h.b16 %v6680
    %v9827 = vunpack.c.l.b16 %v6681
    %v9828 = vunpack.c.h.b16 %v6681
    %v9829 = vunpack.c.l.b16 %v6682
    %v9830 = vunpack.c.h.b16 %v6682
    %v9831 = vunpack.c.l.b16 %v6683
    %v9832 = vunpack.c.h.b16 %v6683
    %v9833 = vunpack.c.l.b16 %v6684
    %v9834 = vunpack.c.h.b16 %v6684
    %v9835 = vunpack.c.l.b16 %v6685
    %v9836 = vunpack.c.h.b16 %v6685
    %v9837 = vunpack.c.l.b16 %v6686
    %v9838 = vunpack.c.h.b16 %v6686
    %v9839 = vunpack.c.l.b16 %v6687
    %v9840 = vunpack.c.h.b16 %v6687
    %v9841 = vunpack.c.l.b16 %v6688
    %v9842 = vunpack.c.h.b16 %v6688
    %v9843 = vunpack.c.l.b16 %v6689
    %v9844 = vunpack.c.h.b16 %v6689
    %v9845 = vunpack.c.l.b16 %v6690
    %v9846 = vunpack.c.h.b16 %v6690
    %v9847 = vpack.c.b16 %v7815, %v7799
    %v9848 = vpack.c.b16 %v7816, %v7800
    %v9849 = vpack.c.b16 %v7817, %v7801
    %v9850 = vpack.c.b16 %v7818, %v7802
    %v9851 = vpack.c.b16 %v7819, %v7803
    %v9852 = vpack.c.b16 %v7820, %v7804
    %v9853 = vpack.c.b16 %v7821, %v7805
    %v9854 = vpack.c.b16 %v7822, %v7806
    %v9855 = vpack.c.b16 %v7823, %v7807
    %v9856 = vpack.c.b16 %v7824, %v7808
    %v9857 = vpack.c.b16 %v7825, %v7809
    %v9858 = vpack.c.b16 %v7826, %v7810
    %v9859 = vpack.c.b16 %v7827, %v7811
    %v9860 = vpack.c.b16 %v7828, %v7812
    %v9861 = vpack.c.b16 %v7829, %v7813
    %v9862 = vpack.c.b16 %v7830, %v7814
    %v9863 = vpack.c.b16 %v7847, %v7831
    %v9864 = vpack.c.b16 %v7848, %v7832
    %v9865 = vpack.c.b16 %v7849, %v7833
    %v9866 = vpack.c.b16 %v7850, %v7834
    %v9867 = vpack.c.b16 %v7851, %v7835
    %v9868 = vpack.c.b16 %v7852, %v7836
    %v9869 = vpack.c.b16 %v7853, %v7837
    %v9870 = vpack.c.b16 %v7854, %v7838
    %v9871 = vpack.c.b16 %v7855, %v7839
    %v9872 = vpack.c.b16 %v7856, %v7840
    %v9873 = vpack.c.b16 %v7857, %v7841
    %v9874 = vpack.c.b16 %v7858, %v7842
    %v9875 = vpack.c.b16 %v7859, %v7843
    %v9876 = vpack.c.b16 %v7860, %v7844
    %v9877 = vpack.c.b16 %v7861, %v7845
    %v9878 = vpack.c.b16 %v7862, %v7846
    %v9879 = vpack.c.b16 %v7879, %v7863
    %v9880 = vpack.c.b16 %v7880, %v7864
    %v9881 = vpack.c.b16 %v7881, %v7865
    %v9882 = vpack.c.b16 %v7882, %v7866
    %v9883 = vpack.c.b16 %v7883, %v7867
    %v9884 = vpack.c.b16 %v7884, %v7868
    %v9885 = vpack.c.b16 %v7885, %v7869
    %v9886 = vpack.c.b16 %v7886, %v7870
    %v9887 = vpack.c.b16 %v7887, %v7871
    %v9888 = vpack.c.b16 %v7888, %v7872
    %v9889 = vpack.c.b16 %v7889, %v7873
    %v9890 = vpack.c.b16 %v7890, %v7874
    %v9891 = vpack.c.b16 %v7891, %v7875
    %v9892 = vpack.c.b16 %v7892, %v7876
    %v9893 = vpack.c.b16 %v7893, %v7877
    %v9894 = vpack.c.b16 %v7894, %v7878
    %v9895 = vpack.c.b16 %v7911, %v7895
    %v9896 = vpack.c.b16 %v7912, %v7896
    %v9897 = vpack.c.b16 %v7913, %v7897
    %v9898 = vpack.c.b16 %v7914, %v7898
    %v9899 = vpack.c.b16 %v7915, %v7899
    %v9900 = vpack.c.b16 %v7916, %v7900
    %v9901 = vpack.c.b16 %v7917, %v7901
    %v9902 = vpack.c.b16 %v7918, %v7902
    %v9903 = vpack.c.b16 %v7919, %v7903
    %v9904 = vpack.c.b16 %v7920, %v7904
    %v9905 = vpack.c.b16 %v7921, %v7905
    %v9906 = vpack.c.b16 %v7922, %v7906
    %v9907 = vpack.c.b16 %v7923, %v7907
    %v9908 = vpack.c.b16 %v7924, %v7908
    %v9909 = vpack.c.b16 %v7925, %v7909
    %v9910 = vpack.c.b16 %v7926, %v7910
    %v9911 = vpack.c.b16 %v7943, %v7927
    %v9912 = vpack.c.b16 %v7944, %v7928
    %v9913 = vpack.c.b16 %v7945, %v7929
    %v9914 = vpack.c.b16 %v7946, %v7930
    %v9915 = vpack.c.b16 %v7947, %v7931
    %v9916 = vpack.c.b16 %v7948, %v7932
    %v9917 = vpack.c.b16 %v7949, %v7933
    %v9918 = vpack.c.b16 %v7950, %v7934
    %v9919 = vpack.c.b16 %v7951, %v7935
    %v9920 = vpack.c.b16 %v7952, %v7936
    %v9921 = vpack.c.b16 %v7953, %v7937
    %v9922 = vpack.c.b16 %v7954, %v7938
    %v9923 = vpack.c.b16 %v7955, %v7939
    %v9924 = vpack.c.b16 %v7956, %v7940
    %v9925 = vpack.c.b16 %v7957, %v7941
    %v9926 = vpack.c.b16 %v7958, %v7942
    %v9927 = vpack.c.b16 %v7975, %v7959
    %v9928 = vpack.c.b16 %v7976, %v7960
    %v9929 = vpack.c.b16 %v7977, %v7961
    %v9930 = vpack.c.b16 %v7978, %v7962
    %v9931 = vpack.c.b16 %v7979, %v7963
    %v9932 = vpack.c.b16 %v7980, %v7964
    %v9933 = vpack.c.b16 %v7981, %v7965
    %v9934 = vpack.c.b16 %v7982, %v7966
    %v9935 = vpack.c.b16 %v7983, %v7967
    %v9936 = vpack.c.b16 %v7984, %v7968
    %v9937 = vpack.c.b16 %v7985, %v7969
    %v9938 = vpack.c.b16 %v7986, %v7970
    %v9939 = vpack.c.b16 %v7987, %v7971
    %v9940 = vpack.c.b16 %v7988, %v7972
    %v9941 = vpack.c.b16 %v7989, %v7973
    %v9942 = vpack.c.b16 %v7990, %v7974
    %v9943 = vpack.c.b16 %v8007, %v7991
    %v9944 = vpack.c.b16 %v8008, %v7992
    %v9945 = vpack.c.b16 %v8009, %v7993
    %v9946 = vpack.c.b16 %v8010, %v7994
    %v9947 = vpack.c.b16 %v8011, %v7995
    %v9948 = vpack.c.b16 %v8012, %v7996
    %v9949 = vpack.c.b16 %v8013, %v7997
    %v9950 = vpack.c.b16 %v8014, %v7998
    %v9951 = vpack.c.b16 %v8015, %v7999
    %v9952 = vpack.c.b16 %v8016, %v8000
    %v9953 = vpack.c.b16 %v8017, %v8001
    %v9954 = vpack.c.b16 %v8018, %v8002
    %v9955 = vpack.c.b16 %v8019, %v8003
    %v9956 = vpack.c.b16 %v8020, %v8004
    %v9957 = vpack.c.b16 %v8021, %v8005
    %v9958 = vpack.c.b16 %v8022, %v8006
    %v9959 = vpack.c.b16 %v8039, %v8023
    %v9960 = vpack.c.b16 %v8040, %v8024
    %v9961 = vpack.c.b16 %v8041, %v8025
    %v9962 = vpack.c.b16 %v8042, %v8026
    %v9963 = vpack.c.b16 %v8043, %v8027
    %v9964 = vpack.c.b16 %v8044, %v8028
    %v9965 = vpack.c.b16 %v8045, %v8029
    %v9966 = vpack.c.b16 %v8046, %v8030
    %v9967 = vpack.c.b16 %v8047, %v8031
    %v9968 = vpack.c.b16 %v8048, %v8032
    %v9969 = vpack.c.b16 %v8049, %v8033
    %v9970 = vpack.c.b16 %v8050, %v8034
    %v9971 = vpack.c.b16 %v8051, %v8035
    %v9972 = vpack.c.b16 %v8052, %v8036
    %v9973 = vpack.c.b16 %v8053, %v8037
    %v9974 = vpack.c.b16 %v8054, %v8038
    %v9975 = vpack.c.b16 %v8071, %v8055
    %v9976 = vpack.c.b16 %v8072, %v8056
    %v9977 = vpack.c.b16 %v8073, %v8057
    %v9978 = vpack.c.b16 %v8074, %v8058
    %v9979 = vpack.c.b16 %v8075, %v8059
    %v9980 = vpack.c.b16 %v8076, %v8060
    %v9981 = vpack.c.b16 %v8077, %v8061
    %v9982 = vpack.c.b16 %v8078, %v8062
    %v9983 = vpack.c.b16 %v8079, %v8063
    %v9984 = vpack.c.b16 %v8080, %v8064
    %v9985 = vpack.c.b16 %v8081, %v8065
    %v9986 = vpack.c.b16 %v8082, %v8066
    %v9987 = vpack.c.b16 %v8083, %v8067
    %v9988 = vpack.c.b16 %v8084, %v8068
    %v9989 = vpack.c.b16 %v8085, %v8069
    %v9990 = vpack.c.b16 %v8086, %v8070
    %v9991 = vpack.c.b16 %v8103, %v8087
    %v9992 = vpack.c.b16 %v8104, %v8088
    %v9993 = vpack.c.b16 %v8105, %v8089
    %v9994 = vpack.c.b16 %v8106, %v8090
    %v9995 = vpack.c.b16 %v8107, %v8091
    %v9996 = vpack.c.b16 %v8108, %v8092
    %v9997 = vpack.c.b16 %v8109, %v8093
    %v9998 = vpack.c.b16 %v8110, %v8094
    %v9999 = vpack.c.b16 %v8111, %v8095
    %v10000 = vpack.c.b16 %v8112, %v8096
    %v10001 = vpack.c.b16 %v8113, %v8097
    %v10002 = vpack.c.b16 %v8114, %v8098
    %v10003 = vpack.c.b16 %v8115, %v8099
    %v10004 = vpack.c.b16 %v8116, %v8100
    %v10005 = vpack.c.b16 %v8117, %v8101
    %v10006 = vpack.c.b16 %v8118, %v8102
    %v10007 = vpack.c.b16 %v8135, %v8119
    %v10008 = vpack.c.b16 %v8136, %v8120
    %v10009 = vpack.c.b16 %v8137, %v8121
    %v10010 = vpack.c.b16 %v8138, %v8122
    %v10011 = vpack.c.b16 %v8139, %v8123
    %v10012 = vpack.c.b16 %v8140, %v8124
    %v10013 = vpack.c.b16 %v8141, %v8125
    %v10014 = vpack.c.b16 %v8142, %v8126
    %v10015 = vpack.c.b16 %v8143, %v8127
    %v10016 = vpack.c.b16 %v8144, %v8128
    %v10017 = vpack.c.b16 %v8145, %v8129
    %v10018 = vpack.c.b16 %v8146, %v8130
    %v10019 = vpack.c.b16 %v8147, %v8131
    %v10020 = vpack.c.b16 %v8148, %v8132
    %v10021 = vpack.c.b16 %v8149, %v8133
    %v10022 = vpack.c.b16 %v8150, %v8134
    %v10023 = vpack.c.b16 %v8167, %v8151
    %v10024 = vpack.c.b16 %v8168, %v8152
    %v10025 = vpack.c.b16 %v8169, %v8153
    %v10026 = vpack.c.b16 %v8170, %v8154
    %v10027 = vpack.c.b16 %v8171, %v8155
    %v10028 = vpack.c.b16 %v8172, %v8156
    %v10029 = vpack.c.b16 %v8173, %v8157
    %v10030 = vpack.c.b16 %v8174, %v8158
    %v10031 = vpack.c.b16 %v8175, %v8159
    %v10032 = vpack.c.b16 %v8176, %v8160
    %v10033 = vpack.c.b16 %v8177, %v8161
    %v10034 = vpack.c.b16 %v8178, %v8162
    %v10035 = vpack.c.b16 %v8179, %v8163
    %v10036 = vpack.c.b16 %v8180, %v8164
    %v10037 = vpack.c.b16 %v8181, %v8165
    %v10038 = vpack.c.b16 %v8182, %v8166
    %v10039 = vpack.c.b16 %v8199, %v8183
    %v10040 = vpack.c.b16 %v8200, %v8184
    %v10041 = vpack.c.b16 %v8201, %v8185
    %v10042 = vpack.c.b16 %v8202, %v8186
    %v10043 = vpack.c.b16 %v8203, %v8187
    %v10044 = vpack.c.b16 %v8204, %v8188
    %v10045 = vpack.c.b16 %v8205, %v8189
    %v10046 = vpack.c.b16 %v8206, %v8190
    %v10047 = vpack.c.b16 %v8207, %v8191
    %v10048 = vpack.c.b16 %v8208, %v8192
    %v10049 = vpack.c.b16 %v8209, %v8193
    %v10050 = vpack.c.b16 %v8210, %v8194
    %v10051 = vpack.c.b16 %v8211, %v8195
    %v10052 = vpack.c.b16 %v8212, %v8196
    %v10053 = vpack.c.b16 %v8213, %v8197
    %v10054 = vpack.c.b16 %v8214, %v8198
    %v10055 = vpack.c.b16 %v8231, %v8215
    %v10056 = vpack.c.b16 %v8232, %v8216
    %v10057 = vpack.c.b16 %v8233, %v8217
    %v10058 = vpack.c.b16 %v8234, %v8218
    %v10059 = vpack.c.b16 %v8235, %v8219
    %v10060 = vpack.c.b16 %v8236, %v8220
    %v10061 = vpack.c.b16 %v8237, %v8221
    %v10062 = vpack.c.b16 %v8238, %v8222
    %v10063 = vpack.c.b16 %v8239, %v8223
    %v10064 = vpack.c.b16 %v8240, %v8224
    %v10065 = vpack.c.b16 %v8241, %v8225
    %v10066 = vpack.c.b16 %v8242, %v8226
    %v10067 = vpack.c.b16 %v8243, %v8227
    %v10068 = vpack.c.b16 %v8244, %v8228
    %v10069 = vpack.c.b16 %v8245, %v8229
    %v10070 = vpack.c.b16 %v8246, %v8230
    %v10071 = vpack.c.b16 %v8263, %v8247
    %v10072 = vpack.c.b16 %v8264, %v8248
    %v10073 = vpack.c.b16 %v8265, %v8249
    %v10074 = vpack.c.b16 %v8266, %v8250
    %v10075 = vpack.c.b16 %v8267, %v8251
    %v10076 = vpack.c.b16 %v8268, %v8252
    %v10077 = vpack.c.b16 %v8269, %v8253
    %v10078 = vpack.c.b16 %v8270, %v8254
    %v10079 = vpack.c.b16 %v8271, %v8255
    %v10080 = vpack.c.b16 %v8272, %v8256
    %v10081 = vpack.c.b16 %v8273, %v8257
    %v10082 = vpack.c.b16 %v8274, %v8258
    %v10083 = vpack.c.b16 %v8275, %v8259
    %v10084 = vpack.c.b16 %v8276, %v8260
    %v10085 = vpack.c.b16 %v8277, %v8261
    %v10086 = vpack.c.b16 %v8278, %v8262
    %v10087 = vpack.c.b16 %v8295, %v8279
    %v10088 = vpack.c.b16 %v8296, %v8280
    %v10089 = vpack.c.b16 %v8297, %v8281
    %v10090 = vpack.c.b16 %v8298, %v8282
    %v10091 = vpack.c.b16 %v8299, %v8283
    %v10092 = vpack.c.b16 %v8300, %v8284
    %v10093 = vpack.c.b16 %v8301, %v8285
    %v10094 = vpack.c.b16 %v8302, %v8286
    %v10095 = vpack.c.b16 %v8303, %v8287
    %v10096 = vpack.c.b16 %v8304, %v8288
    %v10097 = vpack.c.b16 %v8305, %v8289
    %v10098 = vpack.c.b16 %v8306, %v8290
    %v10099 = vpack.c.b16 %v8307, %v8291
    %v10100 = vpack.c.b16 %v8308, %v8292
    %v10101 = vpack.c.b16 %v8309, %v8293
    %v10102 = vpack.c.b16 %v8310, %v8294
    %v10103 = vpack.c.b16 %v8327, %v8311
    %v10104 = vpack.c.b16 %v8328, %v8312
    %v10105 = vpack.c.b16 %v8329, %v8313
    %v10106 = vpack.c.b16 %v8330, %v8314
    %v10107 = vpack.c.b16 %v8331, %v8315
    %v10108 = vpack.c.b16 %v8332, %v8316
    %v10109 = vpack.c.b16 %v8333, %v8317
    %v10110 = vpack.c.b16 %v8334, %v8318
    %v10111 = vpack.c.b16 %v8335, %v8319
    %v10112 = vpack.c.b16 %v8336, %v8320
    %v10113 = vpack.c.b16 %v8337, %v8321
    %v10114 = vpack.c.b16 %v8338, %v8322
    %v10115 = vpack.c.b16 %v8339, %v8323
    %v10116 = vpack.c.b16 %v8340, %v8324
    %v10117 = vpack.c.b16 %v8341, %v8325
    %v10118 = vpack.c.b16 %v8342, %v8326
    %v10119 = vpack.c.b16 %v8359, %v8343
    %v10120 = vpack.c.b16 %v8360, %v8344
    %v10121 = vpack.c.b16 %v8361, %v8345
    %v10122 = vpack.c.b16 %v8362, %v8346
    %v10123 = vpack.c.b16 %v8363, %v8347
    %v10124 = vpack.c.b16 %v8364, %v8348
    %v10125 = vpack.c.b16 %v8365, %v8349
    %v10126 = vpack.c.b16 %v8366, %v8350
    %v10127 = vpack.c.b16 %v8367, %v8351
    %v10128 = vpack.c.b16 %v8368, %v8352
    %v10129 = vpack.c.b16 %v8369, %v8353
    %v10130 = vpack.c.b16 %v8370, %v8354
    %v10131 = vpack.c.b16 %v8371, %v8355
    %v10132 = vpack.c.b16 %v8372, %v8356
    %v10133 = vpack.c.b16 %v8373, %v8357
    %v10134 = vpack.c.b16 %v8374, %v8358
    %v10135 = vpack.c.b16 %v8391, %v8375
    %v10136 = vpack.c.b16 %v8392, %v8376
    %v10137 = vpack.c.b16 %v8393, %v8377
    %v10138 = vpack.c.b16 %v8394, %v8378
    %v10139 = vpack.c.b16 %v8395, %v8379
    %v10140 = vpack.c.b16 %v8396, %v8380
    %v10141 = vpack.c.b16 %v8397, %v8381
    %v10142 = vpack.c.b16 %v8398, %v8382
    %v10143 = vpack.c.b16 %v8399, %v8383
    %v10144 = vpack.c.b16 %v8400, %v8384
    %v10145 = vpack.c.b16 %v8401, %v8385
    %v10146 = vpack.c.b16 %v8402, %v8386
    %v10147 = vpack.c.b16 %v8403, %v8387
    %v10148 = vpack.c.b16 %v8404, %v8388
    %v10149 = vpack.c.b16 %v8405, %v8389
    %v10150 = vpack.c.b16 %v8406, %v8390
    %v10151 = vpack.c.b16 %v8423, %v8407
    %v10152 = vpack.c.b16 %v8424, %v8408
    %v10153 = vpack.c.b16 %v8425, %v8409
    %v10154 = vpack.c.b16 %v8426, %v8410
    %v10155 = vpack.c.b16 %v8427, %v8411
    %v10156 = vpack.c.b16 %v8428, %v8412
    %v10157 = vpack.c.b16 %v8429, %v8413
    %v10158 = vpack.c.b16 %v8430, %v8414
    %v10159 = vpack.c.b16 %v8431, %v8415
    %v10160 = vpack.c.b16 %v8432, %v8416
    %v10161 = vpack.c.b16 %v8433, %v8417
    %v10162 = vpack.c.b16 %v8434, %v8418
    %v10163 = vpack.c.b16 %v8435, %v8419
    %v10164 = vpack.c.b16 %v8436, %v8420
    %v10165 = vpack.c.b16 %v8437, %v8421
    %v10166 = vpack.c.b16 %v8438, %v8422
    %v10167 = vpack.c.b16 %v8455, %v8439
    %v10168 = vpack.c.b16 %v8456, %v8440
    %v10169 = vpack.c.b16 %v8457, %v8441
    %v10170 = vpack.c.b16 %v8458, %v8442
    %v10171 = vpack.c.b16 %v8459, %v8443
    %v10172 = vpack.c.b16 %v8460, %v8444
    %v10173 = vpack.c.b16 %v8461, %v8445
    %v10174 = vpack.c.b16 %v8462, %v8446
    %v10175 = vpack.c.b16 %v8463, %v8447
    %v10176 = vpack.c.b16 %v8464, %v8448
    %v10177 = vpack.c.b16 %v8465, %v8449
    %v10178 = vpack.c.b16 %v8466, %v8450
    %v10179 = vpack.c.b16 %v8467, %v8451
    %v10180 = vpack.c.b16 %v8468, %v8452
    %v10181 = vpack.c.b16 %v8469, %v8453
    %v10182 = vpack.c.b16 %v8470, %v8454
    %v10183 = vpack.c.b16 %v8487, %v8471
    %v10184 = vpack.c.b16 %v8488, %v8472
    %v10185 = vpack.c.b16 %v8489, %v8473
    %v10186 = vpack.c.b16 %v8490, %v8474
    %v10187 = vpack.c.b16 %v8491, %v8475
    %v10188 = vpack.c.b16 %v8492, %v8476
    %v10189 = vpack.c.b16 %v8493, %v8477
    %v10190 = vpack.c.b16 %v8494, %v8478
    %v10191 = vpack.c.b16 %v8495, %v8479
    %v10192 = vpack.c.b16 %v8496, %v8480
    %v10193 = vpack.c.b16 %v8497, %v8481
    %v10194 = vpack.c.b16 %v8498, %v8482
    %v10195 = vpack.c.b16 %v8499, %v8483
    %v10196 = vpack.c.b16 %v8500, %v8484
    %v10197 = vpack.c.b16 %v8501, %v8485
    %v10198 = vpack.c.b16 %v8502, %v8486
    %v10199 = vpack.c.b16 %v8519, %v8503
    %v10200 = vpack.c.b16 %v8520, %v8504
    %v10201 = vpack.c.b16 %v8521, %v8505
    %v10202 = vpack.c.b16 %v8522, %v8506
    %v10203 = vpack.c.b16 %v8523, %v8507
    %v10204 = vpack.c.b16 %v8524, %v8508
    %v10205 = vpack.c.b16 %v8525, %v8509
    %v10206 = vpack.c.b16 %v8526, %v8510
    %v10207 = vpack.c.b16 %v8527, %v8511
    %v10208 = vpack.c.b16 %v8528, %v8512
    %v10209 = vpack.c.b16 %v8529, %v8513
    %v10210 = vpack.c.b16 %v8530, %v8514
    %v10211 = vpack.c.b16 %v8531, %v8515
    %v10212 = vpack.c.b16 %v8532, %v8516
    %v10213 = vpack.c.b16 %v8533, %v8517
    %v10214 = vpack.c.b16 %v8534, %v8518
    %v10215 = vpack.c.b16 %v8551, %v8535
    %v10216 = vpack.c.b16 %v8552, %v8536
    %v10217 = vpack.c.b16 %v8553, %v8537
    %v10218 = vpack.c.b16 %v8554, %v8538
    %v10219 = vpack.c.b16 %v8555, %v8539
    %v10220 = vpack.c.b16 %v8556, %v8540
    %v10221 = vpack.c.b16 %v8557, %v8541
    %v10222 = vpack.c.b16 %v8558, %v8542
    %v10223 = vpack.c.b16 %v8559, %v8543
    %v10224 = vpack.c.b16 %v8560, %v8544
    %v10225 = vpack.c.b16 %v8561, %v8545
    %v10226 = vpack.c.b16 %v8562, %v8546
    %v10227 = vpack.c.b16 %v8563, %v8547
    %v10228 = vpack.c.b16 %v8564, %v8548
    %v10229 = vpack.c.b16 %v8565, %v8549
    %v10230 = vpack.c.b16 %v8566, %v8550
    %v10231 = vpack.c.b16 %v8583, %v8567
    %v10232 = vpack.c.b16 %v8584, %v8568
    %v10233 = vpack.c.b16 %v8585, %v8569
    %v10234 = vpack.c.b16 %v8586, %v8570
    %v10235 = vpack.c.b16 %v8587, %v8571
    %v10236 = vpack.c.b16 %v8588, %v8572
    %v10237 = vpack.c.b16 %v8589, %v8573
    %v10238 = vpack.c.b16 %v8590, %v8574
    %v10239 = vpack.c.b16 %v8591, %v8575
    %v10240 = vpack.c.b16 %v8592, %v8576
    %v10241 = vpack.c.b16 %v8593, %v8577
    %v10242 = vpack.c.b16 %v8594, %v8578
    %v10243 = vpack.c.b16 %v8595, %v8579
    %v10244 = vpack.c.b16 %v8596, %v8580
    %v10245 = vpack.c.b16 %v8597, %v8581
    %v10246 = vpack.c.b16 %v8598, %v8582
    %v10247 = vpack.c.b16 %v8615, %v8599
    %v10248 = vpack.c.b16 %v8616, %v8600
    %v10249 = vpack.c.b16 %v8617, %v8601
    %v10250 = vpack.c.b16 %v8618, %v8602
    %v10251 = vpack.c.b16 %v8619, %v8603
    %v10252 = vpack.c.b16 %v8620, %v8604
    %v10253 = vpack.c.b16 %v8621, %v8605
    %v10254 = vpack.c.b16 %v8622, %v8606
    %v10255 = vpack.c.b16 %v8623, %v8607
    %v10256 = vpack.c.b16 %v8624, %v8608
    %v10257 = vpack.c.b16 %v8625, %v8609
    %v10258 = vpack.c.b16 %v8626, %v8610
    %v10259 = vpack.c.b16 %v8627, %v8611
    %v10260 = vpack.c.b16 %v8628, %v8612
    %v10261 = vpack.c.b16 %v8629, %v8613
    %v10262 = vpack.c.b16 %v8630, %v8614
    %v10263 = vpack.c.b16 %v8647, %v8631
    %v10264 = vpack.c.b16 %v8648, %v8632
    %v10265 = vpack.c.b16 %v8649, %v8633
    %v10266 = vpack.c.b16 %v8650, %v8634
    %v10267 = vpack.c.b16 %v8651, %v8635
    %v10268 = vpack.c.b16 %v8652, %v8636
    %v10269 = vpack.c.b16 %v8653, %v8637
    %v10270 = vpack.c.b16 %v8654, %v8638
    %v10271 = vpack.c.b16 %v8655, %v8639
    %v10272 = vpack.c.b16 %v8656, %v8640
    %v10273 = vpack.c.b16 %v8657, %v8641
    %v10274 = vpack.c.b16 %v8658, %v8642
    %v10275 = vpack.c.b16 %v8659, %v8643
    %v10276 = vpack.c.b16 %v8660, %v8644
    %v10277 = vpack.c.b16 %v8661, %v8645
    %v10278 = vpack.c.b16 %v8662, %v8646
    %v10279 = vpack.c.b16 %v8679, %v8663
    %v10280 = vpack.c.b16 %v8680, %v8664
    %v10281 = vpack.c.b16 %v8681, %v8665
    %v10282 = vpack.c.b16 %v8682, %v8666
    %v10283 = vpack.c.b16 %v8683, %v8667
    %v10284 = vpack.c.b16 %v8684, %v8668
    %v10285 = vpack.c.b16 %v8685, %v8669
    %v10286 = vpack.c.b16 %v8686, %v8670
    %v10287 = vpack.c.b16 %v8687, %v8671
    %v10288 = vpack.c.b16 %v8688, %v8672
    %v10289 = vpack.c.b16 %v8689, %v8673
    %v10290 = vpack.c.b16 %v8690, %v8674
    %v10291 = vpack.c.b16 %v8691, %v8675
    %v10292 = vpack.c.b16 %v8692, %v8676
    %v10293 = vpack.c.b16 %v8693, %v8677
    %v10294 = vpack.c.b16 %v8694, %v8678
    %v10295 = vpack.c.b16 %v8711, %v8695
    %v10296 = vpack.c.b16 %v8712, %v8696
    %v10297 = vpack.c.b16 %v8713, %v8697
    %v10298 = vpack.c.b16 %v8714, %v8698
    %v10299 = vpack.c.b16 %v8715, %v8699
    %v10300 = vpack.c.b16 %v8716, %v8700
    %v10301 = vpack.c.b16 %v8717, %v8701
    %v10302 = vpack.c.b16 %v8718, %v8702
    %v10303 = vpack.c.b16 %v8719, %v8703
    %v10304 = vpack.c.b16 %v8720, %v8704
    %v10305 = vpack.c.b16 %v8721, %v8705
    %v10306 = vpack.c.b16 %v8722, %v8706
    %v10307 = vpack.c.b16 %v8723, %v8707
    %v10308 = vpack.c.b16 %v8724, %v8708
    %v10309 = vpack.c.b16 %v8725, %v8709
    %v10310 = vpack.c.b16 %v8726, %v8710
    %v10311 = vpack.c.b16 %v8743, %v8727
    %v10312 = vpack.c.b16 %v8744, %v8728
    %v10313 = vpack.c.b16 %v8745, %v8729
    %v10314 = vpack.c.b16 %v8746, %v8730
    %v10315 = vpack.c.b16 %v8747, %v8731
    %v10316 = vpack.c.b16 %v8748, %v8732
    %v10317 = vpack.c.b16 %v8749, %v8733
    %v10318 = vpack.c.b16 %v8750, %v8734
    %v10319 = vpack.c.b16 %v8751, %v8735
    %v10320 = vpack.c.b16 %v8752, %v8736
    %v10321 = vpack.c.b16 %v8753, %v8737
    %v10322 = vpack.c.b16 %v8754, %v8738
    %v10323 = vpack.c.b16 %v8755, %v8739
    %v10324 = vpack.c.b16 %v8756, %v8740
    %v10325 = vpack.c.b16 %v8757, %v8741
    %v10326 = vpack.c.b16 %v8758, %v8742
    %v10327 = vpack.c.b16 %v8775, %v8759
    %v10328 = vpack.c.b16 %v8776, %v8760
    %v10329 = vpack.c.b16 %v8777, %v8761
    %v10330 = vpack.c.b16 %v8778, %v8762
    %v10331 = vpack.c.b16 %v8779, %v8763
    %v10332 = vpack.c.b16 %v8780, %v8764
    %v10333 = vpack.c.b16 %v8781, %v8765
    %v10334 = vpack.c.b16 %v8782, %v8766
    %v10335 = vpack.c.b16 %v8783, %v8767
    %v10336 = vpack.c.b16 %v8784, %v8768
    %v10337 = vpack.c.b16 %v8785, %v8769
    %v10338 = vpack.c.b16 %v8786, %v8770
    %v10339 = vpack.c.b16 %v8787, %v8771
    %v10340 = vpack.c.b16 %v8788, %v8772
    %v10341 = vpack.c.b16 %v8789, %v8773
    %v10342 = vpack.c.b16 %v8790, %v8774
    %v10343 = vpack.c.b16 %v8807, %v8791
    %v10344 = vpack.c.b16 %v8808, %v8792
    %v10345 = vpack.c.b16 %v8809, %v8793
    %v10346 = vpack.c.b16 %v8810, %v8794
    %v10347 = vpack.c.b16 %v8811, %v8795
    %v10348 = vpack.c.b16 %v8812, %v8796
    %v10349 = vpack.c.b16 %v8813, %v8797
    %v10350 = vpack.c.b16 %v8814, %v8798
    %v10351 = vpack.c.b16 %v8815, %v8799
    %v10352 = vpack.c.b16 %v8816, %v8800
    %v10353 = vpack.c.b16 %v8817, %v8801
    %v10354 = vpack.c.b16 %v8818, %v8802
    %v10355 = vpack.c.b16 %v8819, %v8803
    %v10356 = vpack.c.b16 %v8820, %v8804
    %v10357 = vpack.c.b16 %v8821, %v8805
    %v10358 = vpack.c.b16 %v8822, %v8806
    %v10359 = vpack.c.b16 %v8839, %v8823
    %v10360 = vpack.c.b16 %v8840, %v8824
    %v10361 = vpack.c.b16 %v8841, %v8825
    %v10362 = vpack.c.b16 %v8842, %v8826
    %v10363 = vpack.c.b16 %v8843, %v8827
    %v10364 = vpack.c.b16 %v8844, %v8828
    %v10365 = vpack.c.b16 %v8845, %v8829
    %v10366 = vpack.c.b16 %v8846, %v8830
    %v10367 = vpack.c.b16 %v8847, %v8831
    %v10368 = vpack.c.b16 %v8848, %v8832
    %v10369 = vpack.c.b16 %v8849, %v8833
    %v10370 = vpack.c.b16 %v8850, %v8834
    %v10371 = vpack.c.b16 %v8851, %v8835
    %v10372 = vpack.c.b16 %v8852, %v8836
    %v10373 = vpack.c.b16 %v8853, %v8837
    %v10374 = vpack.c.b16 %v8854, %v8838
    %v10375 = vpack.c.b16 %v8871, %v8855
    %v10376 = vpack.c.b16 %v8872, %v8856
    %v10377 = vpack.c.b16 %v8873, %v8857
    %v10378 = vpack.c.b16 %v8874, %v8858
    %v10379 = vpack.c.b16 %v8875, %v8859
    %v10380 = vpack.c.b16 %v8876, %v8860
    %v10381 = vpack.c.b16 %v8877, %v8861
    %v10382 = vpack.c.b16 %v8878, %v8862
    %v10383 = vpack.c.b16 %v8879, %v8863
    %v10384 = vpack.c.b16 %v8880, %v8864
    %v10385 = vpack.c.b16 %v8881, %v8865
    %v10386 = vpack.c.b16 %v8882, %v8866
    %v10387 = vpack.c.b16 %v8883, %v8867
    %v10388 = vpack.c.b16 %v8884, %v8868
    %v10389 = vpack.c.b16 %v8885, %v8869
    %v10390 = vpack.c.b16 %v8886, %v8870
    %v10391 = vpack.c.b16 %v8903, %v8887
    %v10392 = vpack.c.b16 %v8904, %v8888
    %v10393 = vpack.c.b16 %v8905, %v8889
    %v10394 = vpack.c.b16 %v8906, %v8890
    %v10395 = vpack.c.b16 %v8907, %v8891
    %v10396 = vpack.c.b16 %v8908, %v8892
    %v10397 = vpack.c.b16 %v8909, %v8893
    %v10398 = vpack.c.b16 %v8910, %v8894
    %v10399 = vpack.c.b16 %v8911, %v8895
    %v10400 = vpack.c.b16 %v8912, %v8896
    %v10401 = vpack.c.b16 %v8913, %v8897
    %v10402 = vpack.c.b16 %v8914, %v8898
    %v10403 = vpack.c.b16 %v8915, %v8899
    %v10404 = vpack.c.b16 %v8916, %v8900
    %v10405 = vpack.c.b16 %v8917, %v8901
    %v10406 = vpack.c.b16 %v8918, %v8902
    %v10407 = vpack.c.b16 %v8935, %v8919
    %v10408 = vpack.c.b16 %v8936, %v8920
    %v10409 = vpack.c.b16 %v8937, %v8921
    %v10410 = vpack.c.b16 %v8938, %v8922
    %v10411 = vpack.c.b16 %v8939, %v8923
    %v10412 = vpack.c.b16 %v8940, %v8924
    %v10413 = vpack.c.b16 %v8941, %v8925
    %v10414 = vpack.c.b16 %v8942, %v8926
    %v10415 = vpack.c.b16 %v8943, %v8927
    %v10416 = vpack.c.b16 %v8944, %v8928
    %v10417 = vpack.c.b16 %v8945, %v8929
    %v10418 = vpack.c.b16 %v8946, %v8930
    %v10419 = vpack.c.b16 %v8947, %v8931
    %v10420 = vpack.c.b16 %v8948, %v8932
    %v10421 = vpack.c.b16 %v8949, %v8933
    %v10422 = vpack.c.b16 %v8950, %v8934
    %v10423 = vpack.c.b16 %v8967, %v8951
    %v10424 = vpack.c.b16 %v8968, %v8952
    %v10425 = vpack.c.b16 %v8969, %v8953
    %v10426 = vpack.c.b16 %v8970, %v8954
    %v10427 = vpack.c.b16 %v8971, %v8955
    %v10428 = vpack.c.b16 %v8972, %v8956
    %v10429 = vpack.c.b16 %v8973, %v8957
    %v10430 = vpack.c.b16 %v8974, %v8958
    %v10431 = vpack.c.b16 %v8975, %v8959
    %v10432 = vpack.c.b16 %v8976, %v8960
    %v10433 = vpack.c.b16 %v8977, %v8961
    %v10434 = vpack.c.b16 %v8978, %v8962
    %v10435 = vpack.c.b16 %v8979, %v8963
    %v10436 = vpack.c.b16 %v8980, %v8964
    %v10437 = vpack.c.b16 %v8981, %v8965
    %v10438 = vpack.c.b16 %v8982, %v8966
    %v10439 = vpack.c.b16 %v8999, %v8983
    %v10440 = vpack.c.b16 %v9000, %v8984
    %v10441 = vpack.c.b16 %v9001, %v8985
    %v10442 = vpack.c.b16 %v9002, %v8986
    %v10443 = vpack.c.b16 %v9003, %v8987
    %v10444 = vpack.c.b16 %v9004, %v8988
    %v10445 = vpack.c.b16 %v9005, %v8989
    %v10446 = vpack.c.b16 %v9006, %v8990
    %v10447 = vpack.c.b16 %v9007, %v8991
    %v10448 = vpack.c.b16 %v9008, %v8992
    %v10449 = vpack.c.b16 %v9009, %v8993
    %v10450 = vpack.c.b16 %v9010, %v8994
    %v10451 = vpack.c.b16 %v9011, %v8995
    %v10452 = vpack.c.b16 %v9012, %v8996
    %v10453 = vpack.c.b16 %v9013, %v8997
    %v10454 = vpack.c.b16 %v9014, %v8998
    %v10455 = vpack.c.b16 %v9031, %v9015
    %v10456 = vpack.c.b16 %v9032, %v9016
    %v10457 = vpack.c.b16 %v9033, %v9017
    %v10458 = vpack.c.b16 %v9034, %v9018
    %v10459 = vpack.c.b16 %v9035, %v9019
    %v10460 = vpack.c.b16 %v9036, %v9020
    %v10461 = vpack.c.b16 %v9037, %v9021
    %v10462 = vpack.c.b16 %v9038, %v9022
    %v10463 = vpack.c.b16 %v9039, %v9023
    %v10464 = vpack.c.b16 %v9040, %v9024
    %v10465 = vpack.c.b16 %v9041, %v9025
    %v10466 = vpack.c.b16 %v9042, %v9026
    %v10467 = vpack.c.b16 %v9043, %v9027
    %v10468 = vpack.c.b16 %v9044, %v9028
    %v10469 = vpack.c.b16 %v9045, %v9029
    %v10470 = vpack.c.b16 %v9046, %v9030
    %v10471 = vpack.c.b16 %v9063, %v9047
    %v10472 = vpack.c.b16 %v9064, %v9048
    %v10473 = vpack.c.b16 %v9065, %v9049
    %v10474 = vpack.c.b16 %v9066, %v9050
    %v10475 = vpack.c.b16 %v9067, %v9051
    %v10476 = vpack.c.b16 %v9068, %v9052
    %v10477 = vpack.c.b16 %v9069, %v9053
    %v10478 = vpack.c.b16 %v9070, %v9054
    %v10479 = vpack.c.b16 %v9071, %v9055
    %v10480 = vpack.c.b16 %v9072, %v9056
    %v10481 = vpack.c.b16 %v9073, %v9057
    %v10482 = vpack.c.b16 %v9074, %v9058
    %v10483 = vpack.c.b16 %v9075, %v9059
    %v10484 = vpack.c.b16 %v9076, %v9060
    %v10485 = vpack.c.b16 %v9077, %v9061
    %v10486 = vpack.c.b16 %v9078, %v9062
    %v10487 = vpack.c.b16 %v9095, %v9079
    %v10488 = vpack.c.b16 %v9096, %v9080
    %v10489 = vpack.c.b16 %v9097, %v9081
    %v10490 = vpack.c.b16 %v9098, %v9082
    %v10491 = vpack.c.b16 %v9099, %v9083
    %v10492 = vpack.c.b16 %v9100, %v9084
    %v10493 = vpack.c.b16 %v9101, %v9085
    %v10494 = vpack.c.b16 %v9102, %v9086
    %v10495 = vpack.c.b16 %v9103, %v9087
    %v10496 = vpack.c.b16 %v9104, %v9088
    %v10497 = vpack.c.b16 %v9105, %v9089
    %v10498 = vpack.c.b16 %v9106, %v9090
    %v10499 = vpack.c.b16 %v9107, %v9091
    %v10500 = vpack.c.b16 %v9108, %v9092
    %v10501 = vpack.c.b16 %v9109, %v9093
    %v10502 = vpack.c.b16 %v9110, %v9094
    %v10503 = vpack.c.b16 %v9127, %v9111
    %v10504 = vpack.c.b16 %v9128, %v9112
    %v10505 = vpack.c.b16 %v9129, %v9113
    %v10506 = vpack.c.b16 %v9130, %v9114
    %v10507 = vpack.c.b16 %v9131, %v9115
    %v10508 = vpack.c.b16 %v9132, %v9116
    %v10509 = vpack.c.b16 %v9133, %v9117
    %v10510 = vpack.c.b16 %v9134, %v9118
    %v10511 = vpack.c.b16 %v9135, %v9119
    %v10512 = vpack.c.b16 %v9136, %v9120
    %v10513 = vpack.c.b16 %v9137, %v9121
    %v10514 = vpack.c.b16 %v9138, %v9122
    %v10515 = vpack.c.b16 %v9139, %v9123
    %v10516 = vpack.c.b16 %v9140, %v9124
    %v10517 = vpack.c.b16 %v9141, %v9125
    %v10518 = vpack.c.b16 %v9142, %v9126
    %v10519 = vpack.c.b16 %v9159, %v9143
    %v10520 = vpack.c.b16 %v9160, %v9144
    %v10521 = vpack.c.b16 %v9161, %v9145
    %v10522 = vpack.c.b16 %v9162, %v9146
    %v10523 = vpack.c.b16 %v9163, %v9147
    %v10524 = vpack.c.b16 %v9164, %v9148
    %v10525 = vpack.c.b16 %v9165, %v9149
    %v10526 = vpack.c.b16 %v9166, %v9150
    %v10527 = vpack.c.b16 %v9167, %v9151
    %v10528 = vpack.c.b16 %v9168, %v9152
    %v10529 = vpack.c.b16 %v9169, %v9153
    %v10530 = vpack.c.b16 %v9170, %v9154
    %v10531 = vpack.c.b16 %v9171, %v9155
    %v10532 = vpack.c.b16 %v9172, %v9156
    %v10533 = vpack.c.b16 %v9173, %v9157
    %v10534 = vpack.c.b16 %v9174, %v9158
    %v10535 = vpack.c.b16 %v9191, %v9175
    %v10536 = vpack.c.b16 %v9192, %v9176
    %v10537 = vpack.c.b16 %v9193, %v9177
    %v10538 = vpack.c.b16 %v9194, %v9178
    %v10539 = vpack.c.b16 %v9195, %v9179
    %v10540 = vpack.c.b16 %v9196, %v9180
    %v10541 = vpack.c.b16 %v9197, %v9181
    %v10542 = vpack.c.b16 %v9198, %v9182
    %v10543 = vpack.c.b16 %v9199, %v9183
    %v10544 = vpack.c.b16 %v9200, %v9184
    %v10545 = vpack.c.b16 %v9201, %v9185
    %v10546 = vpack.c.b16 %v9202, %v9186
    %v10547 = vpack.c.b16 %v9203, %v9187
    %v10548 = vpack.c.b16 %v9204, %v9188
    %v10549 = vpack.c.b16 %v9205, %v9189
    %v10550 = vpack.c.b16 %v9206, %v9190
    %v10551 = vpack.c.b16 %v9223, %v9207
    %v10552 = vpack.c.b16 %v9224, %v9208
    %v10553 = vpack.c.b16 %v9225, %v9209
    %v10554 = vpack.c.b16 %v9226, %v9210
    %v10555 = vpack.c.b16 %v9227, %v9211
    %v10556 = vpack.c.b16 %v9228, %v9212
    %v10557 = vpack.c.b16 %v9229, %v9213
    %v10558 = vpack.c.b16 %v9230, %v9214
    %v10559 = vpack.c.b16 %v9231, %v9215
    %v10560 = vpack.c.b16 %v9232, %v9216
    %v10561 = vpack.c.b16 %v9233, %v9217
    %v10562 = vpack.c.b16 %v9234, %v9218
    %v10563 = vpack.c.b16 %v9235, %v9219
    %v10564 = vpack.c.b16 %v9236, %v9220
    %v10565 = vpack.c.b16 %v9237, %v9221
    %v10566 = vpack.c.b16 %v9238, %v9222
    %v10567 = vpack.c.b16 %v9255, %v9239
    %v10568 = vpack.c.b16 %v9256, %v9240
    %v10569 = vpack.c.b16 %v9257, %v9241
    %v10570 = vpack.c.b16 %v9258, %v9242
    %v10571 = vpack.c.b16 %v9259, %v9243
    %v10572 = vpack.c.b16 %v9260, %v9244
    %v10573 = vpack.c.b16 %v9261, %v9245
    %v10574 = vpack.c.b16 %v9262, %v9246
    %v10575 = vpack.c.b16 %v9263, %v9247
    %v10576 = vpack.c.b16 %v9264, %v9248
    %v10577 = vpack.c.b16 %v9265, %v9249
    %v10578 = vpack.c.b16 %v9266, %v9250
    %v10579 = vpack.c.b16 %v9267, %v9251
    %v10580 = vpack.c.b16 %v9268, %v9252
    %v10581 = vpack.c.b16 %v9269, %v9253
    %v10582 = vpack.c.b16 %v9270, %v9254
    %v10583 = vpack.c.b16 %v9287, %v9271
    %v10584 = vpack.c.b16 %v9288, %v9272
    %v10585 = vpack.c.b16 %v9289, %v9273
    %v10586 = vpack.c.b16 %v9290, %v9274
    %v10587 = vpack.c.b16 %v9291, %v9275
    %v10588 = vpack.c.b16 %v9292, %v9276
    %v10589 = vpack.c.b16 %v9293, %v9277
    %v10590 = vpack.c.b16 %v9294, %v9278
    %v10591 = vpack.c.b16 %v9295, %v9279
    %v10592 = vpack.c.b16 %v9296, %v9280
    %v10593 = vpack.c.b16 %v9297, %v9281
    %v10594 = vpack.c.b16 %v9298, %v9282
    %v10595 = vpack.c.b16 %v9299, %v9283
    %v10596 = vpack.c.b16 %v9300, %v9284
    %v10597 = vpack.c.b16 %v9301, %v9285
    %v10598 = vpack.c.b16 %v9302, %v9286
    %v10599 = vpack.c.b16 %v9319, %v9303
    %v10600 = vpack.c.b16 %v9320, %v9304
    %v10601 = vpack.c.b16 %v9321, %v9305
    %v10602 = vpack.c.b16 %v9322, %v9306
    %v10603 = vpack.c.b16 %v9323, %v9307
    %v10604 = vpack.c.b16 %v9324, %v9308
    %v10605 = vpack.c.b16 %v9325, %v9309
    %v10606 = vpack.c.b16 %v9326, %v9310
    %v10607 = vpack.c.b16 %v9327, %v9311
    %v10608 = vpack.c.b16 %v9328, %v9312
    %v10609 = vpack.c.b16 %v9329, %v9313
    %v10610 = vpack.c.b16 %v9330, %v9314
    %v10611 = vpack.c.b16 %v9331, %v9315
    %v10612 = vpack.c.b16 %v9332, %v9316
    %v10613 = vpack.c.b16 %v9333, %v9317
    %v10614 = vpack.c.b16 %v9334, %v9318
    %v10615 = vpack.c.b16 %v9351, %v9335
    %v10616 = vpack.c.b16 %v9352, %v9336
    %v10617 = vpack.c.b16 %v9353, %v9337
    %v10618 = vpack.c.b16 %v9354, %v9338
    %v10619 = vpack.c.b16 %v9355, %v9339
    %v10620 = vpack.c.b16 %v9356, %v9340
    %v10621 = vpack.c.b16 %v9357, %v9341
    %v10622 = vpack.c.b16 %v9358, %v9342
    %v10623 = vpack.c.b16 %v9359, %v9343
    %v10624 = vpack.c.b16 %v9360, %v9344
    %v10625 = vpack.c.b16 %v9361, %v9345
    %v10626 = vpack.c.b16 %v9362, %v9346
    %v10627 = vpack.c.b16 %v9363, %v9347
    %v10628 = vpack.c.b16 %v9364, %v9348
    %v10629 = vpack.c.b16 %v9365, %v9349
    %v10630 = vpack.c.b16 %v9366, %v9350
    %v10631 = vpack.c.b16 %v9383, %v9367
    %v10632 = vpack.c.b16 %v9384, %v9368
    %v10633 = vpack.c.b16 %v9385, %v9369
    %v10634 = vpack.c.b16 %v9386, %v9370
    %v10635 = vpack.c.b16 %v9387, %v9371
    %v10636 = vpack.c.b16 %v9388, %v9372
    %v10637 = vpack.c.b16 %v9389, %v9373
    %v10638 = vpack.c.b16 %v9390, %v9374
    %v10639 = vpack.c.b16 %v9391, %v9375
    %v10640 = vpack.c.b16 %v9392, %v9376
    %v10641 = vpack.c.b16 %v9393, %v9377
    %v10642 = vpack.c.b16 %v9394, %v9378
    %v10643 = vpack.c.b16 %v9395, %v9379
    %v10644 = vpack.c.b16 %v9396, %v9380
    %v10645 = vpack.c.b16 %v9397, %v9381
    %v10646 = vpack.c.b16 %v9398, %v9382
    %v10647 = vpack.c.b16 %v9415, %v9399
    %v10648 = vpack.c.b16 %v9416, %v9400
    %v10649 = vpack.c.b16 %v9417, %v9401
    %v10650 = vpack.c.b16 %v9418, %v9402
    %v10651 = vpack.c.b16 %v9419, %v9403
    %v10652 = vpack.c.b16 %v9420, %v9404
    %v10653 = vpack.c.b16 %v9421, %v9405
    %v10654 = vpack.c.b16 %v9422, %v9406
    %v10655 = vpack.c.b16 %v9423, %v9407
    %v10656 = vpack.c.b16 %v9424, %v9408
    %v10657 = vpack.c.b16 %v9425, %v9409
    %v10658 = vpack.c.b16 %v9426, %v9410
    %v10659 = vpack.c.b16 %v9427, %v9411
    %v10660 = vpack.c.b16 %v9428, %v9412
    %v10661 = vpack.c.b16 %v9429, %v9413
    %v10662 = vpack.c.b16 %v9430, %v9414
    %v10663 = vpack.c.b16 %v9447, %v9431
    %v10664 = vpack.c.b16 %v9448, %v9432
    %v10665 = vpack.c.b16 %v9449, %v9433
    %v10666 = vpack.c.b16 %v9450, %v9434
    %v10667 = vpack.c.b16 %v9451, %v9435
    %v10668 = vpack.c.b16 %v9452, %v9436
    %v10669 = vpack.c.b16 %v9453, %v9437
    %v10670 = vpack.c.b16 %v9454, %v9438
    %v10671 = vpack.c.b16 %v9455, %v9439
    %v10672 = vpack.c.b16 %v9456, %v9440
    %v10673 = vpack.c.b16 %v9457, %v9441
    %v10674 = vpack.c.b16 %v9458, %v9442
    %v10675 = vpack.c.b16 %v9459, %v9443
    %v10676 = vpack.c.b16 %v9460, %v9444
    %v10677 = vpack.c.b16 %v9461, %v9445
    %v10678 = vpack.c.b16 %v9462, %v9446
    %v10679 = vpack.c.b16 %v9479, %v9463
    %v10680 = vpack.c.b16 %v9480, %v9464
    %v10681 = vpack.c.b16 %v9481, %v9465
    %v10682 = vpack.c.b16 %v9482, %v9466
    %v10683 = vpack.c.b16 %v9483, %v9467
    %v10684 = vpack.c.b16 %v9484, %v9468
    %v10685 = vpack.c.b16 %v9485, %v9469
    %v10686 = vpack.c.b16 %v9486, %v9470
    %v10687 = vpack.c.b16 %v9487, %v9471
    %v10688 = vpack.c.b16 %v9488, %v9472
    %v10689 = vpack.c.b16 %v9489, %v9473
    %v10690 = vpack.c.b16 %v9490, %v9474
    %v10691 = vpack.c.b16 %v9491, %v9475
    %v10692 = vpack.c.b16 %v9492, %v9476
    %v10693 = vpack.c.b16 %v9493, %v9477
    %v10694 = vpack.c.b16 %v9494, %v9478
    %v10695 = vpack.c.b16 %v9511, %v9495
    %v10696 = vpack.c.b16 %v9512, %v9496
    %v10697 = vpack.c.b16 %v9513, %v9497
    %v10698 = vpack.c.b16 %v9514, %v9498
    %v10699 = vpack.c.b16 %v9515, %v9499
    %v10700 = vpack.c.b16 %v9516, %v9500
    %v10701 = vpack.c.b16 %v9517, %v9501
    %v10702 = vpack.c.b16 %v9518, %v9502
    %v10703 = vpack.c.b16 %v9519, %v9503
    %v10704 = vpack.c.b16 %v9520, %v9504
    %v10705 = vpack.c.b16 %v9521, %v9505
    %v10706 = vpack.c.b16 %v9522, %v9506
    %v10707 = vpack.c.b16 %v9523, %v9507
    %v10708 = vpack.c.b16 %v9524, %v9508
    %v10709 = vpack.c.b16 %v9525, %v9509
    %v10710 = vpack.c.b16 %v9526, %v9510
    %v10711 = vpack.c.b16 %v9543, %v9527
    %v10712 = vpack.c.b16 %v9544, %v9528
    %v10713 = vpack.c.b16 %v9545, %v9529
    %v10714 = vpack.c.b16 %v9546, %v9530
    %v10715 = vpack.c.b16 %v9547, %v9531
    %v10716 = vpack.c.b16 %v9548, %v9532
    %v10717 = vpack.c.b16 %v9549, %v9533
    %v10718 = vpack.c.b16 %v9550, %v9534
    %v10719 = vpack.c.b16 %v9551, %v9535
    %v10720 = vpack.c.b16 %v9552, %v9536
    %v10721 = vpack.c.b16 %v9553, %v9537
    %v10722 = vpack.c.b16 %v9554, %v9538
    %v10723 = vpack.c.b16 %v9555, %v9539
    %v10724 = vpack.c.b16 %v9556, %v9540
    %v10725 = vpack.c.b16 %v9557, %v9541
    %v10726 = vpack.c.b16 %v9558, %v9542
    %v10727 = vpack.c.b16 %v9575, %v9559
    %v10728 = vpack.c.b16 %v9576, %v9560
    %v10729 = vpack.c.b16 %v9577, %v9561
    %v10730 = vpack.c.b16 %v9578, %v9562
    %v10731 = vpack.c.b16 %v9579, %v9563
    %v10732 = vpack.c.b16 %v9580, %v9564
    %v10733 = vpack.c.b16 %v9581, %v9565
    %v10734 = vpack.c.b16 %v9582, %v9566
    %v10735 = vpack.c.b16 %v9583, %v9567
    %v10736 = vpack.c.b16 %v9584, %v9568
    %v10737 = vpack.c.b16 %v9585, %v9569
    %v10738 = vpack.c.b16 %v9586, %v9570
    %v10739 = vpack.c.b16 %v9587, %v9571
    %v10740 = vpack.c.b16 %v9588, %v9572
    %v10741 = vpack.c.b16 %v9589, %v9573
    %v10742 = vpack.c.b16 %v9590, %v9574
    %v10743 = vpack.c.b16 %v9607, %v9591
    %v10744 = vpack.c.b16 %v9608, %v9592
    %v10745 = vpack.c.b16 %v9609, %v9593
    %v10746 = vpack.c.b16 %v9610, %v9594
    %v10747 = vpack.c.b16 %v9611, %v9595
    %v10748 = vpack.c.b16 %v9612, %v9596
    %v10749 = vpack.c.b16 %v9613, %v9597
    %v10750 = vpack.c.b16 %v9614, %v9598
    %v10751 = vpack.c.b16 %v9615, %v9599
    %v10752 = vpack.c.b16 %v9616, %v9600
    %v10753 = vpack.c.b16 %v9617, %v9601
    %v10754 = vpack.c.b16 %v9618, %v9602
    %v10755 = vpack.c.b16 %v9619, %v9603
    %v10756 = vpack.c.b16 %v9620, %v9604
    %v10757 = vpack.c.b16 %v9621, %v9605
    %v10758 = vpack.c.b16 %v9622, %v9606
    %v10759 = vpack.c.b16 %v9639, %v9623
    %v10760 = vpack.c.b16 %v9640, %v9624
    %v10761 = vpack.c.b16 %v9641, %v9625
    %v10762 = vpack.c.b16 %v9642, %v9626
    %v10763 = vpack.c.b16 %v9643, %v9627
    %v10764 = vpack.c.b16 %v9644, %v9628
    %v10765 = vpack.c.b16 %v9645, %v9629
    %v10766 = vpack.c.b16 %v9646, %v9630
    %v10767 = vpack.c.b16 %v9647, %v9631
    %v10768 = vpack.c.b16 %v9648, %v9632
    %v10769 = vpack.c.b16 %v9649, %v9633
    %v10770 = vpack.c.b16 %v9650, %v9634
    %v10771 = vpack.c.b16 %v9651, %v9635
    %v10772 = vpack.c.b16 %v9652, %v9636
    %v10773 = vpack.c.b16 %v9653, %v9637
    %v10774 = vpack.c.b16 %v9654, %v9638
    %v10775 = vpack.c.b16 %v9671, %v9655
    %v10776 = vpack.c.b16 %v9672, %v9656
    %v10777 = vpack.c.b16 %v9673, %v9657
    %v10778 = vpack.c.b16 %v9674, %v9658
    %v10779 = vpack.c.b16 %v9675, %v9659
    %v10780 = vpack.c.b16 %v9676, %v9660
    %v10781 = vpack.c.b16 %v9677, %v9661
    %v10782 = vpack.c.b16 %v9678, %v9662
    %v10783 = vpack.c.b16 %v9679, %v9663
    %v10784 = vpack.c.b16 %v9680, %v9664
    %v10785 = vpack.c.b16 %v9681, %v9665
    %v10786 = vpack.c.b16 %v9682, %v9666
    %v10787 = vpack.c.b16 %v9683, %v9667
    %v10788 = vpack.c.b16 %v9684, %v9668
    %v10789 = vpack.c.b16 %v9685, %v9669
    %v10790 = vpack.c.b16 %v9686, %v9670
    %v10791 = vpack.c.b16 %v9703, %v9687
    %v10792 = vpack.c.b16 %v9704, %v9688
    %v10793 = vpack.c.b16 %v9705, %v9689
    %v10794 = vpack.c.b16 %v9706, %v9690
    %v10795 = vpack.c.b16 %v9707, %v9691
    %v10796 = vpack.c.b16 %v9708, %v9692
    %v10797 = vpack.c.b16 %v9709, %v9693
    %v10798 = vpack.c.b16 %v9710, %v9694
    %v10799 = vpack.c.b16 %v9711, %v9695
    %v10800 = vpack.c.b16 %v9712, %v9696
    %v10801 = vpack.c.b16 %v9713, %v9697
    %v10802 = vpack.c.b16 %v9714, %v9698
    %v10803 = vpack.c.b16 %v9715, %v9699
    %v10804 = vpack.c.b16 %v9716, %v9700
    %v10805 = vpack.c.b16 %v9717, %v9701
    %v10806 = vpack.c.b16 %v9718, %v9702
    %v10807 = vpack.c.b16 %v9735, %v9719
    %v10808 = vpack.c.b16 %v9736, %v9720
    %v10809 = vpack.c.b16 %v9737, %v9721
    %v10810 = vpack.c.b16 %v9738, %v9722
    %v10811 = vpack.c.b16 %v9739, %v9723
    %v10812 = vpack.c.b16 %v9740, %v9724
    %v10813 = vpack.c.b16 %v9741, %v9725
    %v10814 = vpack.c.b16 %v9742, %v9726
    %v10815 = vpack.c.b16 %v9743, %v9727
    %v10816 = vpack.c.b16 %v9744, %v9728
    %v10817 = vpack.c.b16 %v9745, %v9729
    %v10818 = vpack.c.b16 %v9746, %v9730
    %v10819 = vpack.c.b16 %v9747, %v9731
    %v10820 = vpack.c.b16 %v9748, %v9732
    %v10821 = vpack.c.b16 %v9749, %v9733
    %v10822 = vpack.c.b16 %v9750, %v9734
    %v10823 = vpack.c.b16 %v9767, %v9751
    %v10824 = vpack.c.b16 %v9768, %v9752
    %v10825 = vpack.c.b16 %v9769, %v9753
    %v10826 = vpack.c.b16 %v9770, %v9754
    %v10827 = vpack.c.b16 %v9771, %v9755
    %v10828 = vpack.c.b16 %v9772, %v9756
    %v10829 = vpack.c.b16 %v9773, %v9757
    %v10830 = vpack.c.b16 %v9774, %v9758
    %v10831 = vpack.c.b16 %v9775, %v9759
    %v10832 = vpack.c.b16 %v9776, %v9760
    %v10833 = vpack.c.b16 %v9777, %v9761
    %v10834 = vpack.c.b16 %v9778, %v9762
    %v10835 = vpack.c.b16 %v9779, %v9763
    %v10836 = vpack.c.b16 %v9780, %v9764
    %v10837 = vpack.c.b16 %v9781, %v9765
    %v10838 = vpack.c.b16 %v9782, %v9766
    %v10839 = vpack.c.b16 %v9799, %v9783
    %v10840 = vpack.c.b16 %v9800, %v9784
    %v10841 = vpack.c.b16 %v9801, %v9785
    %v10842 = vpack.c.b16 %v9802, %v9786
    %v10843 = vpack.c.b16 %v9803, %v9787
    %v10844 = vpack.c.b16 %v9804, %v9788
    %v10845 = vpack.c.b16 %v9805, %v9789
    %v10846 = vpack.c.b16 %v9806, %v9790
    %v10847 = vpack.c.b16 %v9807, %v9791
    %v10848 = vpack.c.b16 %v9808, %v9792
    %v10849 = vpack.c.b16 %v9809, %v9793
    %v10850 = vpack.c.b16 %v9810, %v9794
    %v10851 = vpack.c.b16 %v9811, %v9795
    %v10852 = vpack.c.b16 %v9812, %v9796
    %v10853 = vpack.c.b16 %v9813, %v9797
    %v10854 = vpack.c.b16 %v9814, %v9798
    %v10855 = vpack.c.b16 %v9831, %v9815
    %v10856 = vpack.c.b16 %v9832, %v9816
    %v10857 = vpack.c.b16 %v9833, %v9817
    %v10858 = vpack.c.b16 %v9834, %v9818
    %v10859 = vpack.c.b16 %v9835, %v9819
    %v10860 = vpack.c.b16 %v9836, %v9820
    %v10861 = vpack.c.b16 %v9837, %v9821
    %v10862 = vpack.c.b16 %v9838, %v9822
    %v10863 = vpack.c.b16 %v9839, %v9823
    %v10864 = vpack.c.b16 %v9840, %v9824
    %v10865 = vpack.c.b16 %v9841, %v9825
    %v10866 = vpack.c.b16 %v9842, %v9826
    %v10867 = vpack.c.b16 %v9843, %v9827
    %v10868 = vpack.c.b16 %v9844, %v9828
    %v10869 = vpack.c.b16 %v9845, %v9829
    %v10870 = vpack.c.b16 %v9846, %v9830
    %11895 = vmatprep.subr.bf16.mxu0 %v9848
    %11896 = vmatpush1.bf16.msra.mxu0 %v9847
    %11897 = vmatprep.subr.bf16.mxu0 %v9864
    %11898 = vmatpush1.bf16.msra.mxu0 %v9863
    %11899 = vmatprep.subr.bf16.mxu0 %v9880
    %11900 = vmatpush1.bf16.msra.mxu0 %v9879
    %11901 = vmatprep.subr.bf16.mxu0 %v9896
    %11902 = vmatpush1.bf16.msra.mxu0 %v9895
    %11903 = vmatprep.subr.bf16.mxu0 %v9912
    %11904 = vmatpush1.bf16.msra.mxu0 %v9911
    %11905 = vmatprep.subr.bf16.mxu0 %v9928
    %11906 = vmatpush1.bf16.msra.mxu0 %v9927
    %11907 = vmatprep.subr.bf16.mxu0 %v9944
    %11908 = vmatpush1.bf16.msra.mxu0 %v9943
    %11909 = vmatprep.subr.bf16.mxu0 %v9960
    %11910 = vmatpush1.bf16.msra.mxu0 %v9959
    %11911 = vmatprep.subr.bf16.mxu0 %v9976
    %11912 = vmatpush1.bf16.msra.mxu0 %v9975
    %11913 = vmatprep.subr.bf16.mxu0 %v9992
    %11914 = vmatpush1.bf16.msra.mxu0 %v9991
    %11915 = vmatprep.subr.bf16.mxu0 %v10008
    %11916 = vmatpush1.bf16.msra.mxu0 %v10007
    %11917 = vmatprep.subr.bf16.mxu0 %v10024
    %11918 = vmatpush1.bf16.msra.mxu0 %v10023
    %11919 = vmatprep.subr.bf16.mxu0 %v10040
    %11920 = vmatpush1.bf16.msra.mxu0 %v10039
    %11921 = vmatprep.subr.bf16.mxu0 %v10056
    %11922 = vmatpush1.bf16.msra.mxu0 %v10055
    %11923 = vmatprep.subr.bf16.mxu0 %v10072
    %11924 = vmatpush1.bf16.msra.mxu0 %v10071
    %11925 = vmatprep.subr.bf16.mxu0 %v10088
    %11926 = vmatpush1.bf16.msra.mxu0 %v10087
    %11927 = vmatprep.mubr.bf16.mxu0 %v5660
    %11928 = vmatmul.mubr.bf16.gmra.mrb[0].mxu0 %v5659
    %v11929 = vpop.f32.mrb[0].mxu0
    %v11930 = vadd.f32 %v6698, %v11929
    %v11931 = vpop.f32.mrb[0].mxu0
    %v11932 = vadd.f32 %v6702, %v11931
    %v11933 = vpop.f32.mrb[0].mxu0
    %v11934 = vpop.f32.mrb[0].mxu0
    %11935 = vdwg.mxu0
    %11936 = vmatprep.subr.bf16.mxu0 %v10104
    %11937 = vmatpush1.bf16.msra.mxu0 %v10103
    %11938 = vmatprep.subr.bf16.mxu0 %v10120
    %11939 = vmatpush1.bf16.msra.mxu0 %v10119
    %11940 = vmatprep.subr.bf16.mxu0 %v10136
    %11941 = vmatpush1.bf16.msra.mxu0 %v10135
    %11942 = vmatprep.subr.bf16.mxu0 %v10152
    %11943 = vmatpush1.bf16.msra.mxu0 %v10151
    %11944 = vmatprep.subr.bf16.mxu0 %v10168
    %11945 = vmatpush1.bf16.msra.mxu0 %v10167
    %11946 = vmatprep.subr.bf16.mxu0 %v10184
    %11947 = vmatpush1.bf16.msra.mxu0 %v10183
    %11948 = vmatprep.subr.bf16.mxu0 %v10200
    %11949 = vmatpush1.bf16.msra.mxu0 %v10199
    %11950 = vmatprep.subr.bf16.mxu0 %v10216
    %11951 = vmatpush1.bf16.msra.mxu0 %v10215
    %11952 = vmatprep.subr.bf16.mxu0 %v10232
    %11953 = vmatpush1.bf16.msra.mxu0 %v10231
    %11954 = vmatprep.subr.bf16.mxu0 %v10248
    %11955 = vmatpush1.bf16.msra.mxu0 %v10247
    %11956 = vmatprep.subr.bf16.mxu0 %v10264
    %11957 = vmatpush1.bf16.msra.mxu0 %v10263
    %11958 = vmatprep.subr.bf16.mxu0 %v10280
    %11959 = vmatpush1.bf16.msra.mxu0 %v10279
    %11960 = vmatprep.subr.bf16.mxu0 %v10296
    %11961 = vmatpush1.bf16.msra.mxu0 %v10295
    %11962 = vmatprep.subr.bf16.mxu0 %v10312
    %11963 = vmatpush1.bf16.msra.mxu0 %v10311
    %11964 = vmatprep.subr.bf16.mxu0 %v10328
    %11965 = vmatpush1.bf16.msra.mxu0 %v10327
    %11966 = vmatprep.subr.bf16.mxu0 %v10344
    %11967 = vmatpush1.bf16.msra.mxu0 %v10343
    %11968 = vmatprep.mubr.bf16.mxu0 %v5662
    %11969 = vmatmul.mubr.bf16.gmra.mrb[0].mxu0 %v5661
    %v11970 = vpop.f32.mrb[0].mxu0
    %v11971 = vadd.f32 %v11930, %v11970
    %v11972 = vpop.f32.mrb[0].mxu0
    %v11973 = vadd.f32 %v11932, %v11972
    %v11974 = vpop.f32.mrb[0].mxu0
    %v11975 = vpop.f32.mrb[0].mxu0
    %11976 = vdwg.mxu0
    %11977 = vmatprep.subr.bf16.mxu0 %v10360
    %11978 = vmatpush1.bf16.msra.mxu0 %v10359
    %11979 = vmatprep.subr.bf16.mxu0 %v10376
    %11980 = vmatpush1.bf16.msra.mxu0 %v10375
    %11981 = vmatprep.subr.bf16.mxu0 %v10392
    %11982 = vmatpush1.bf16.msra.mxu0 %v10391
    %11983 = vmatprep.subr.bf16.mxu0 %v10408
    %11984 = vmatpush1.bf16.msra.mxu0 %v10407
    %11985 = vmatprep.subr.bf16.mxu0 %v10424
    %11986 = vmatpush1.bf16.msra.mxu0 %v10423
    %11987 = vmatprep.subr.bf16.mxu0 %v10440
    %11988 = vmatpush1.bf16.msra.mxu0 %v10439
    %11989 = vmatprep.subr.bf16.mxu0 %v10456
    %11990 = vmatpush1.bf16.msra.mxu0 %v10455
    %11991 = vmatprep.subr.bf16.mxu0 %v10472
    %11992 = vmatpush1.bf16.msra.mxu0 %v10471
    %11993 = vmatprep.subr.bf16.mxu0 %v10488
    %11994 = vmatpush1.bf16.msra.mxu0 %v10487
    %11995 = vmatprep.subr.bf16.mxu0 %v10504
    %11996 = vmatpush1.bf16.msra.mxu0 %v10503
    %11997 = vmatprep.subr.bf16.mxu0 %v10520
    %11998 = vmatpush1.bf16.msra.mxu0 %v10519
    %11999 = vmatprep.subr.bf16.mxu0 %v10536
    %12000 = vmatpush1.bf16.msra.mxu0 %v10535
    %12001 = vmatprep.subr.bf16.mxu0 %v10552
    %12002 = vmatpush1.bf16.msra.mxu0 %v10551
    %12003 = vmatprep.subr.bf16.mxu0 %v10568
    %12004 = vmatpush1.bf16.msra.mxu0 %v10567
    %12005 = vmatprep.subr.bf16.mxu0 %v10584
    %12006 = vmatpush1.bf16.msra.mxu0 %v10583
    %12007 = vmatprep.subr.bf16.mxu0 %v10600
    %12008 = vmatpush1.bf16.msra.mxu0 %v10599
    %12009 = vmatprep.mubr.bf16.mxu0 %v5664
    %12010 = vmatmul.mubr.bf16.gmra.mrb[0].mxu0 %v5663
    %v12011 = vpop.f32.mrb[0].mxu0
    %v12012 = vadd.f32 %v11971, %v12011
    %v12013 = vpop.f32.mrb[0].mxu0
    %v12014 = vadd.f32 %v11973, %v12013
    %v12015 = vpop.f32.mrb[0].mxu0
    %v12016 = vpop.f32.mrb[0].mxu0
    %12017 = vdwg.mxu0
    %12018 = vmatprep.subr.bf16.mxu0 %v10616
    %12019 = vmatpush1.bf16.msra.mxu0 %v10615
    %12020 = vmatprep.subr.bf16.mxu0 %v10632
    %12021 = vmatpush1.bf16.msra.mxu0 %v10631
    %12022 = vmatprep.subr.bf16.mxu0 %v10648
    %12023 = vmatpush1.bf16.msra.mxu0 %v10647
    %12024 = vmatprep.subr.bf16.mxu0 %v10664
    %12025 = vmatpush1.bf16.msra.mxu0 %v10663
    %12026 = vmatprep.subr.bf16.mxu0 %v10680
    %12027 = vmatpush1.bf16.msra.mxu0 %v10679
    %12028 = vmatprep.subr.bf16.mxu0 %v10696
    %12029 = vmatpush1.bf16.msra.mxu0 %v10695
    %12030 = vmatprep.subr.bf16.mxu0 %v10712
    %12031 = vmatpush1.bf16.msra.mxu0 %v10711
    %12032 = vmatprep.subr.bf16.mxu0 %v10728
    %12033 = vmatpush1.bf16.msra.mxu0 %v10727
    %12034 = vmatprep.subr.bf16.mxu0 %v10744
    %12035 = vmatpush1.bf16.msra.mxu0 %v10743
    %12036 = vmatprep.subr.bf16.mxu0 %v10760
    %12037 = vmatpush1.bf16.msra.mxu0 %v10759
    %12038 = vmatprep.subr.bf16.mxu0 %v10776
    %12039 = vmatpush1.bf16.msra.mxu0 %v10775
    %12040 = vmatprep.subr.bf16.mxu0 %v10792
    %12041 = vmatpush1.bf16.msra.mxu0 %v10791
    %12042 = vmatprep.subr.bf16.mxu0 %v10808
    %12043 = vmatpush1.bf16.msra.mxu0 %v10807
    %12044 = vmatprep.subr.bf16.mxu0 %v10824
    %12045 = vmatpush1.bf16.msra.mxu0 %v10823
    %12046 = vmatprep.subr.bf16.mxu0 %v10840
    %12047 = vmatpush1.bf16.msra.mxu0 %v10839
    %12048 = vmatprep.subr.bf16.mxu0 %v10856
    %12049 = vmatpush1.bf16.msra.mxu0 %v10855
    %12050 = vmatprep.mubr.bf16.mxu0 %v5666
    %12051 = vmatmul.mubr.bf16.gmra.mrb[0].mxu0 %v5665
    %v12052 = vpop.f32.mrb[0].mxu0
    %v12053 = vadd.f32 %v12012, %v12052
    %v12054 = vpop.f32.mrb[0].mxu0
    %v12055 = vadd.f32 %v12014, %v12054
    %v12056 = vpop.f32.mrb[0].mxu0
    %v12057 = vpop.f32.mrb[0].mxu0
    %12058 = vdwg.mxu0
    %12059 = vmatprep.subr.bf16.mxu0 %v9850
    %12060 = vmatpush1.bf16.msra.mxu0 %v9849
    %12061 = vmatprep.subr.bf16.mxu0 %v9866
    %12062 = vmatpush1.bf16.msra.mxu0 %v9865
    %12063 = vmatprep.subr.bf16.mxu0 %v9882
    %12064 = vmatpush1.bf16.msra.mxu0 %v9881
    %12065 = vmatprep.subr.bf16.mxu0 %v9898
    %12066 = vmatpush1.bf16.msra.mxu0 %v9897
    %12067 = vmatprep.subr.bf16.mxu0 %v9914
    %12068 = vmatpush1.bf16.msra.mxu0 %v9913
    %12069 = vmatprep.subr.bf16.mxu0 %v9930
    %12070 = vmatpush1.bf16.msra.mxu0 %v9929
    %12071 = vmatprep.subr.bf16.mxu0 %v9946
    %12072 = vmatpush1.bf16.msra.mxu0 %v9945
    %12073 = vmatprep.subr.bf16.mxu0 %v9962
    %12074 = vmatpush1.bf16.msra.mxu0 %v9961
    %12075 = vmatprep.subr.bf16.mxu0 %v9978
    %12076 = vmatpush1.bf16.msra.mxu0 %v9977
    %12077 = vmatprep.subr.bf16.mxu0 %v9994
    %12078 = vmatpush1.bf16.msra.mxu0 %v9993
    %12079 = vmatprep.subr.bf16.mxu0 %v10010
    %12080 = vmatpush1.bf16.msra.mxu0 %v10009
    %12081 = vmatprep.subr.bf16.mxu0 %v10026
    %12082 = vmatpush1.bf16.msra.mxu0 %v10025
    %12083 = vmatprep.subr.bf16.mxu0 %v10042
    %12084 = vmatpush1.bf16.msra.mxu0 %v10041
    %12085 = vmatprep.subr.bf16.mxu0 %v10058
    %12086 = vmatpush1.bf16.msra.mxu0 %v10057
    %12087 = vmatprep.subr.bf16.mxu0 %v10074
    %12088 = vmatpush1.bf16.msra.mxu0 %v10073
    %12089 = vmatprep.subr.bf16.mxu0 %v10090
    %12090 = vmatpush1.bf16.msra.mxu0 %v10089
    %12091 = vmatprep.mubr.bf16.mxu0 %v5660
    %12092 = vmatmul.mubr.bf16.gmra.mrb[0].mxu0 %v5659
    %v12093 = vpop.f32.mrb[0].mxu0
    %v12094 = vadd.f32 %v6706, %v12093
    %v12095 = vpop.f32.mrb[0].mxu0
    %v12096 = vadd.f32 %v6710, %v12095
    %v12097 = vpop.f32.mrb[0].mxu0
    %v12098 = vpop.f32.mrb[0].mxu0
    %12099 = vdwg.mxu0
    %12100 = vmatprep.subr.bf16.mxu0 %v10106
    %12101 = vmatpush1.bf16.msra.mxu0 %v10105
    %12102 = vmatprep.subr.bf16.mxu0 %v10122
    %12103 = vmatpush1.bf16.msra.mxu0 %v10121
    %12104 = vmatprep.subr.bf16.mxu0 %v10138
    %12105 = vmatpush1.bf16.msra.mxu0 %v10137
    %12106 = vmatprep.subr.bf16.mxu0 %v10154
    %12107 = vmatpush1.bf16.msra.mxu0 %v10153
    %12108 = vmatprep.subr.bf16.mxu0 %v10170
    %12109 = vmatpush1.bf16.msra.mxu0 %v10169
    %12110 = vmatprep.subr.bf16.mxu0 %v10186
    %12111 = vmatpush1.bf16.msra.mxu0 %v10185
    %12112 = vmatprep.subr.bf16.mxu0 %v10202
    %12113 = vmatpush1.bf16.msra.mxu0 %v10201
    %12114 = vmatprep.subr.bf16.mxu0 %v10218
    %12115 = vmatpush1.bf16.msra.mxu0 %v10217
    %12116 = vmatprep.subr.bf16.mxu0 %v10234
    %12117 = vmatpush1.bf16.msra.mxu0 %v10233
    %12118 = vmatprep.subr.bf16.mxu0 %v10250
    %12119 = vmatpush1.bf16.msra.mxu0 %v10249
    %12120 = vmatprep.subr.bf16.mxu0 %v10266
    %12121 = vmatpush1.bf16.msra.mxu0 %v10265
    %12122 = vmatprep.subr.bf16.mxu0 %v10282
    %12123 = vmatpush1.bf16.msra.mxu0 %v10281
    %12124 = vmatprep.subr.bf16.mxu0 %v10298
    %12125 = vmatpush1.bf16.msra.mxu0 %v10297
    %12126 = vmatprep.subr.bf16.mxu0 %v10314
    %12127 = vmatpush1.bf16.msra.mxu0 %v10313
    %12128 = vmatprep.subr.bf16.mxu0 %v10330
    %12129 = vmatpush1.bf16.msra.mxu0 %v10329
    %12130 = vmatprep.subr.bf16.mxu0 %v10346
    %12131 = vmatpush1.bf16.msra.mxu0 %v10345
    %12132 = vmatprep.mubr.bf16.mxu0 %v5662
    %12133 = vmatmul.mubr.bf16.gmra.mrb[0].mxu0 %v5661
    %v12134 = vpop.f32.mrb[0].mxu0
    %v12135 = vadd.f32 %v12094, %v12134
    %v12136 = vpop.f32.mrb[0].mxu0
    %v12137 = vadd.f32 %v12096, %v12136
    %v12138 = vpop.f32.mrb[0].mxu0
    %v12139 = vpop.f32.mrb[0].mxu0
    %12140 = vdwg.mxu0
    %12141 = vmatprep.subr.bf16.mxu0 %v10362
    %12142 = vmatpush1.bf16.msra.mxu0 %v10361
    %12143 = vmatprep.subr.bf16.mxu0 %v10378
    %12144 = vmatpush1.bf16.msra.mxu0 %v10377
    %12145 = vmatprep.subr.bf16.mxu0 %v10394
    %12146 = vmatpush1.bf16.msra.mxu0 %v10393
    %12147 = vmatprep.subr.bf16.mxu0 %v10410
    %12148 = vmatpush1.bf16.msra.mxu0 %v10409
    %12149 = vmatprep.subr.bf16.mxu0 %v10426
    %12150 = vmatpush1.bf16.msra.mxu0 %v10425
    %12151 = vmatprep.subr.bf16.mxu0 %v10442
    %12152 = vmatpush1.bf16.msra.mxu0 %v10441
    %12153 = vmatprep.subr.bf16.mxu0 %v10458
    %12154 = vmatpush1.bf16.msra.mxu0 %v10457
    %12155 = vmatprep.subr.bf16.mxu0 %v10474
    %12156 = vmatpush1.bf16.msra.mxu0 %v10473
    %12157 = vmatprep.subr.bf16.mxu0 %v10490
    %12158 = vmatpush1.bf16.msra.mxu0 %v10489
    %12159 = vmatprep.subr.bf16.mxu0 %v10506
    %12160 = vmatpush1.bf16.msra.mxu0 %v10505
    %12161 = vmatprep.subr.bf16.mxu0 %v10522
    %12162 = vmatpush1.bf16.msra.mxu0 %v10521
    %12163 = vmatprep.subr.bf16.mxu0 %v10538
    %12164 = vmatpush1.bf16.msra.mxu0 %v10537
    %12165 = vmatprep.subr.bf16.mxu0 %v10554
    %12166 = vmatpush1.bf16.msra.mxu0 %v10553
    %12167 = vmatprep.subr.bf16.mxu0 %v10570
    %12168 = vmatpush1.bf16.msra.mxu0 %v10569
    %12169 = vmatprep.subr.bf16.mxu0 %v10586
    %12170 = vmatpush1.bf16.msra.mxu0 %v10585
    %12171 = vmatprep.subr.bf16.mxu0 %v10602
    %12172 = vmatpush1.bf16.msra.mxu0 %v10601
    %12173 = vmatprep.mubr.bf16.mxu0 %v5664
    %12174 = vmatmul.mubr.bf16.gmra.mrb[0].mxu0 %v5663
    %v12175 = vpop.f32.mrb[0].mxu0
    %v12176 = vadd.f32 %v12135, %v12175
    %v12177 = vpop.f32.mrb[0].mxu0
    %v12178 = vadd.f32 %v12137, %v12177
    %v12179 = vpop.f32.mrb[0].mxu0
    %v12180 = vpop.f32.mrb[0].mxu0
    %12181 = vdwg.mxu0
    %12182 = vmatprep.subr.bf16.mxu0 %v10618
    %12183 = vmatpush1.bf16.msra.mxu0 %v10617
    %12184 = vmatprep.subr.bf16.mxu0 %v10634
    %12185 = vmatpush1.bf16.msra.mxu0 %v10633
    %12186 = vmatprep.subr.bf16.mxu0 %v10650
    %12187 = vmatpush1.bf16.msra.mxu0 %v10649
    %12188 = vmatprep.subr.bf16.mxu0 %v10666
    %12189 = vmatpush1.bf16.msra.mxu0 %v10665
    %12190 = vmatprep.subr.bf16.mxu0 %v10682
    %12191 = vmatpush1.bf16.msra.mxu0 %v10681
    %12192 = vmatprep.subr.bf16.mxu0 %v10698
    %12193 = vmatpush1.bf16.msra.mxu0 %v10697
    %12194 = vmatprep.subr.bf16.mxu0 %v10714
    %12195 = vmatpush1.bf16.msra.mxu0 %v10713
    %12196 = vmatprep.subr.bf16.mxu0 %v10730
    %12197 = vmatpush1.bf16.msra.mxu0 %v10729
    %12198 = vmatprep.subr.bf16.mxu0 %v10746
    %12199 = vmatpush1.bf16.msra.mxu0 %v10745
    %12200 = vmatprep.subr.bf16.mxu0 %v10762
    %12201 = vmatpush1.bf16.msra.mxu0 %v10761
    %12202 = vmatprep.subr.bf16.mxu0 %v10778
    %12203 = vmatpush1.bf16.msra.mxu0 %v10777
    %12204 = vmatprep.subr.bf16.mxu0 %v10794
    %12205 = vmatpush1.bf16.msra.mxu0 %v10793
    %12206 = vmatprep.subr.bf16.mxu0 %v10810
    %12207 = vmatpush1.bf16.msra.mxu0 %v10809
    %12208 = vmatprep.subr.bf16.mxu0 %v10826
    %12209 = vmatpush1.bf16.msra.mxu0 %v10825
    %12210 = vmatprep.subr.bf16.mxu0 %v10842
    %12211 = vmatpush1.bf16.msra.mxu0 %v10841
    %12212 = vmatprep.subr.bf16.mxu0 %v10858
    %12213 = vmatpush1.bf16.msra.mxu0 %v10857
    %12214 = vmatprep.mubr.bf16.mxu0 %v5666
    %12215 = vmatmul.mubr.bf16.gmra.mrb[0].mxu0 %v5665
    %v12216 = vpop.f32.mrb[0].mxu0
    %v12217 = vadd.f32 %v12176, %v12216
    %v12218 = vpop.f32.mrb[0].mxu0
    %v12219 = vadd.f32 %v12178, %v12218
    %v12220 = vpop.f32.mrb[0].mxu0
    %v12221 = vpop.f32.mrb[0].mxu0
    %12222 = vdwg.mxu0
    %12223 = vmatprep.subr.bf16.mxu0 %v9852
    %12224 = vmatpush1.bf16.msra.mxu0 %v9851
    %12225 = vmatprep.subr.bf16.mxu0 %v9868
    %12226 = vmatpush1.bf16.msra.mxu0 %v9867
    %12227 = vmatprep.subr.bf16.mxu0 %v9884
    %12228 = vmatpush1.bf16.msra.mxu0 %v9883
    %12229 = vmatprep.subr.bf16.mxu0 %v9900
    %12230 = vmatpush1.bf16.msra.mxu0 %v9899
    %12231 = vmatprep.subr.bf16.mxu0 %v9916
    %12232 = vmatpush1.bf16.msra.mxu0 %v9915
    %12233 = vmatprep.subr.bf16.mxu0 %v9932
    %12234 = vmatpush1.bf16.msra.mxu0 %v9931
    %12235 = vmatprep.subr.bf16.mxu0 %v9948
    %12236 = vmatpush1.bf16.msra.mxu0 %v9947
    %12237 = vmatprep.subr.bf16.mxu0 %v9964
    %12238 = vmatpush1.bf16.msra.mxu0 %v9963
    %12239 = vmatprep.subr.bf16.mxu0 %v9980
    %12240 = vmatpush1.bf16.msra.mxu0 %v9979
    %12241 = vmatprep.subr.bf16.mxu0 %v9996
    %12242 = vmatpush1.bf16.msra.mxu0 %v9995
    %12243 = vmatprep.subr.bf16.mxu0 %v10012
    %12244 = vmatpush1.bf16.msra.mxu0 %v10011
    %12245 = vmatprep.subr.bf16.mxu0 %v10028
    %12246 = vmatpush1.bf16.msra.mxu0 %v10027
    %12247 = vmatprep.subr.bf16.mxu0 %v10044
    %12248 = vmatpush1.bf16.msra.mxu0 %v10043
    %12249 = vmatprep.subr.bf16.mxu0 %v10060
    %12250 = vmatpush1.bf16.msra.mxu0 %v10059
    %12251 = vmatprep.subr.bf16.mxu0 %v10076
    %12252 = vmatpush1.bf16.msra.mxu0 %v10075
    %12253 = vmatprep.subr.bf16.mxu0 %v10092
    %12254 = vmatpush1.bf16.msra.mxu0 %v10091
    %12255 = vmatprep.mubr.bf16.mxu0 %v5660
    %12256 = vmatmul.mubr.bf16.gmra.mrb[0].mxu0 %v5659
    %v12257 = vpop.f32.mrb[0].mxu0
    %v12258 = vadd.f32 %v6714, %v12257
    %v12259 = vpop.f32.mrb[0].mxu0
    %v12260 = vadd.f32 %v6718, %v12259
    %v12261 = vpop.f32.mrb[0].mxu0
    %v12262 = vpop.f32.mrb[0].mxu0
    %12263 = vdwg.mxu0
    %12264 = vmatprep.subr.bf16.mxu0 %v10108
    %12265 = vmatpush1.bf16.msra.mxu0 %v10107
    %12266 = vmatprep.subr.bf16.mxu0 %v10124
    %12267 = vmatpush1.bf16.msra.mxu0 %v10123
    %12268 = vmatprep.subr.bf16.mxu0 %v10140
    %12269 = vmatpush1.bf16.msra.mxu0 %v10139
    %12270 = vmatprep.subr.bf16.mxu0 %v10156
    %12271 = vmatpush1.bf16.msra.mxu0 %v10155
    %12272 = vmatprep.subr.bf16.mxu0 %v10172
    %12273 = vmatpush1.bf16.msra.mxu0 %v10171
    %12274 = vmatprep.subr.bf16.mxu0 %v10188
    %12275 = vmatpush1.bf16.msra.mxu0 %v10187
    %12276 = vmatprep.subr.bf16.mxu0 %v10204
    %12277 = vmatpush1.bf16.msra.mxu0 %v10203
    %12278 = vmatprep.subr.bf16.mxu0 %v10220
    %12279 = vmatpush1.bf16.msra.mxu0 %v10219
    %12280 = vmatprep.subr.bf16.mxu0 %v10236
    %12281 = vmatpush1.bf16.msra.mxu0 %v10235
    %12282 = vmatprep.subr.bf16.mxu0 %v10252
    %12283 = vmatpush1.bf16.msra.mxu0 %v10251
    %12284 = vmatprep.subr.bf16.mxu0 %v10268
    %12285 = vmatpush1.bf16.msra.mxu0 %v10267
    %12286 = vmatprep.subr.bf16.mxu0 %v10284
    %12287 = vmatpush1.bf16.msra.mxu0 %v10283
    %12288 = vmatprep.subr.bf16.mxu0 %v10300
    %12289 = vmatpush1.bf16.msra.mxu0 %v10299
    %12290 = vmatprep.subr.bf16.mxu0 %v10316
    %12291 = vmatpush1.bf16.msra.mxu0 %v10315
    %12292 = vmatprep.subr.bf16.mxu0 %v10332
    %12293 = vmatpush1.bf16.msra.mxu0 %v10331
    %12294 = vmatprep.subr.bf16.mxu0 %v10348
    %12295 = vmatpush1.bf16.msra.mxu0 %v10347
    %12296 = vmatprep.mubr.bf16.mxu0 %v5662
    %12297 = vmatmul.mubr.bf16.gmra.mrb[0].mxu0 %v5661
    %v12298 = vpop.f32.mrb[0].mxu0
    %v12299 = vadd.f32 %v12258, %v12298
    %v12300 = vpop.f32.mrb[0].mxu0
    %v12301 = vadd.f32 %v12260, %v12300
    %v12302 = vpop.f32.mrb[0].mxu0
    %v12303 = vpop.f32.mrb[0].mxu0
    %12304 = vdwg.mxu0
    %12305 = vmatprep.subr.bf16.mxu0 %v10364
    %12306 = vmatpush1.bf16.msra.mxu0 %v10363
    %12307 = vmatprep.subr.bf16.mxu0 %v10380
    %12308 = vmatpush1.bf16.msra.mxu0 %v10379
    %12309 = vmatprep.subr.bf16.mxu0 %v10396
    %12310 = vmatpush1.bf16.msra.mxu0 %v10395
    %12311 = vmatprep.subr.bf16.mxu0 %v10412
    %12312 = vmatpush1.bf16.msra.mxu0 %v10411
    %12313 = vmatprep.subr.bf16.mxu0 %v10428
    %12314 = vmatpush1.bf16.msra.mxu0 %v10427
    %12315 = vmatprep.subr.bf16.mxu0 %v10444
    %12316 = vmatpush1.bf16.msra.mxu0 %v10443
    %12317 = vmatprep.subr.bf16.mxu0 %v10460
    %12318 = vmatpush1.bf16.msra.mxu0 %v10459
    %12319 = vmatprep.subr.bf16.mxu0 %v10476
    %12320 = vmatpush1.bf16.msra.mxu0 %v10475
    %12321 = vmatprep.subr.bf16.mxu0 %v10492
    %12322 = vmatpush1.bf16.msra.mxu0 %v10491
    %12323 = vmatprep.subr.bf16.mxu0 %v10508
    %12324 = vmatpush1.bf16.msra.mxu0 %v10507
    %12325 = vmatprep.subr.bf16.mxu0 %v10524
    %12326 = vmatpush1.bf16.msra.mxu0 %v10523
    %12327 = vmatprep.subr.bf16.mxu0 %v10540
    %12328 = vmatpush1.bf16.msra.mxu0 %v10539
    %12329 = vmatprep.subr.bf16.mxu0 %v10556
    %12330 = vmatpush1.bf16.msra.mxu0 %v10555
    %12331 = vmatprep.subr.bf16.mxu0 %v10572
    %12332 = vmatpush1.bf16.msra.mxu0 %v10571
    %12333 = vmatprep.subr.bf16.mxu0 %v10588
    %12334 = vmatpush1.bf16.msra.mxu0 %v10587
    %12335 = vmatprep.subr.bf16.mxu0 %v10604
    %12336 = vmatpush1.bf16.msra.mxu0 %v10603
    %12337 = vmatprep.mubr.bf16.mxu0 %v5664
    %12338 = vmatmul.mubr.bf16.gmra.mrb[0].mxu0 %v5663
    %v12339 = vpop.f32.mrb[0].mxu0
    %v12340 = vadd.f32 %v12299, %v12339
    %v12341 = vpop.f32.mrb[0].mxu0
    %v12342 = vadd.f32 %v12301, %v12341
    %v12343 = vpop.f32.mrb[0].mxu0
    %v12344 = vpop.f32.mrb[0].mxu0
    %12345 = vdwg.mxu0
    %12346 = vmatprep.subr.bf16.mxu0 %v10620
    %12347 = vmatpush1.bf16.msra.mxu0 %v10619
    %12348 = vmatprep.subr.bf16.mxu0 %v10636
    %12349 = vmatpush1.bf16.msra.mxu0 %v10635
    %12350 = vmatprep.subr.bf16.mxu0 %v10652
    %12351 = vmatpush1.bf16.msra.mxu0 %v10651
    %12352 = vmatprep.subr.bf16.mxu0 %v10668
    %12353 = vmatpush1.bf16.msra.mxu0 %v10667
    %12354 = vmatprep.subr.bf16.mxu0 %v10684
    %12355 = vmatpush1.bf16.msra.mxu0 %v10683
    %12356 = vmatprep.subr.bf16.mxu0 %v10700
    %12357 = vmatpush1.bf16.msra.mxu0 %v10699
    %12358 = vmatprep.subr.bf16.mxu0 %v10716
    %12359 = vmatpush1.bf16.msra.mxu0 %v10715
    %12360 = vmatprep.subr.bf16.mxu0 %v10732
    %12361 = vmatpush1.bf16.msra.mxu0 %v10731
    %12362 = vmatprep.subr.bf16.mxu0 %v10748
    %12363 = vmatpush1.bf16.msra.mxu0 %v10747
    %12364 = vmatprep.subr.bf16.mxu0 %v10764
    %12365 = vmatpush1.bf16.msra.mxu0 %v10763
    %12366 = vmatprep.subr.bf16.mxu0 %v10780
    %12367 = vmatpush1.bf16.msra.mxu0 %v10779
    %12368 = vmatprep.subr.bf16.mxu0 %v10796
    %12369 = vmatpush1.bf16.msra.mxu0 %v10795
    %12370 = vmatprep.subr.bf16.mxu0 %v10812
    %12371 = vmatpush1.bf16.msra.mxu0 %v10811
    %12372 = vmatprep.subr.bf16.mxu0 %v10828
    %12373 = vmatpush1.bf16.msra.mxu0 %v10827
    %12374 = vmatprep.subr.bf16.mxu0 %v10844
    %12375 = vmatpush1.bf16.msra.mxu0 %v10843
    %12376 = vmatprep.subr.bf16.mxu0 %v10860
    %12377 = vmatpush1.bf16.msra.mxu0 %v10859
    %12378 = vmatprep.mubr.bf16.mxu0 %v5666
    %12379 = vmatmul.mubr.bf16.gmra.mrb[0].mxu0 %v5665
    %v12380 = vpop.f32.mrb[0].mxu0
    %v12381 = vadd.f32 %v12340, %v12380
    %v12382 = vpop.f32.mrb[0].mxu0
    %v12383 = vadd.f32 %v12342, %v12382
    %v12384 = vpop.f32.mrb[0].mxu0
    %v12385 = vpop.f32.mrb[0].mxu0
    %12386 = vdwg.mxu0
    %12387 = vmatprep.subr.bf16.mxu0 %v9854
    %12388 = vmatpush1.bf16.msra.mxu0 %v9853
    %12389 = vmatprep.subr.bf16.mxu0 %v9870
    %12390 = vmatpush1.bf16.msra.mxu0 %v9869
    %12391 = vmatprep.subr.bf16.mxu0 %v9886
    %12392 = vmatpush1.bf16.msra.mxu0 %v9885
    %12393 = vmatprep.subr.bf16.mxu0 %v9902
    %12394 = vmatpush1.bf16.msra.mxu0 %v9901
    %12395 = vmatprep.subr.bf16.mxu0 %v9918
    %12396 = vmatpush1.bf16.msra.mxu0 %v9917
    %12397 = vmatprep.subr.bf16.mxu0 %v9934
    %12398 = vmatpush1.bf16.msra.mxu0 %v9933
    %12399 = vmatprep.subr.bf16.mxu0 %v9950
    %12400 = vmatpush1.bf16.msra.mxu0 %v9949
    %12401 = vmatprep.subr.bf16.mxu0 %v9966
    %12402 = vmatpush1.bf16.msra.mxu0 %v9965
    %12403 = vmatprep.subr.bf16.mxu0 %v9982
    %12404 = vmatpush1.bf16.msra.mxu0 %v9981
    %12405 = vmatprep.subr.bf16.mxu0 %v9998
    %12406 = vmatpush1.bf16.msra.mxu0 %v9997
    %12407 = vmatprep.subr.bf16.mxu0 %v10014
    %12408 = vmatpush1.bf16.msra.mxu0 %v10013
    %12409 = vmatprep.subr.bf16.mxu0 %v10030
    %12410 = vmatpush1.bf16.msra.mxu0 %v10029
    %12411 = vmatprep.subr.bf16.mxu0 %v10046
    %12412 = vmatpush1.bf16.msra.mxu0 %v10045
    %12413 = vmatprep.subr.bf16.mxu0 %v10062
    %12414 = vmatpush1.bf16.msra.mxu0 %v10061
    %12415 = vmatprep.subr.bf16.mxu0 %v10078
    %12416 = vmatpush1.bf16.msra.mxu0 %v10077
    %12417 = vmatprep.subr.bf16.mxu0 %v10094
    %12418 = vmatpush1.bf16.msra.mxu0 %v10093
    %12419 = vmatprep.mubr.bf16.mxu0 %v5660
    %12420 = vmatmul.mubr.bf16.gmra.mrb[0].mxu0 %v5659
    %v12421 = vpop.f32.mrb[0].mxu0
    %v12422 = vadd.f32 %v6722, %v12421
    %v12423 = vpop.f32.mrb[0].mxu0
    %v12424 = vadd.f32 %v6726, %v12423
    %v12425 = vpop.f32.mrb[0].mxu0
    %v12426 = vpop.f32.mrb[0].mxu0
    %12427 = vdwg.mxu0
    %12428 = vmatprep.subr.bf16.mxu0 %v10110
    %12429 = vmatpush1.bf16.msra.mxu0 %v10109
    %12430 = vmatprep.subr.bf16.mxu0 %v10126
    %12431 = vmatpush1.bf16.msra.mxu0 %v10125
    %12432 = vmatprep.subr.bf16.mxu0 %v10142
    %12433 = vmatpush1.bf16.msra.mxu0 %v10141
    %12434 = vmatprep.subr.bf16.mxu0 %v10158
    %12435 = vmatpush1.bf16.msra.mxu0 %v10157
    %12436 = vmatprep.subr.bf16.mxu0 %v10174
    %12437 = vmatpush1.bf16.msra.mxu0 %v10173
    %12438 = vmatprep.subr.bf16.mxu0 %v10190
    %12439 = vmatpush1.bf16.msra.mxu0 %v10189
    %12440 = vmatprep.subr.bf16.mxu0 %v10206
    %12441 = vmatpush1.bf16.msra.mxu0 %v10205
    %12442 = vmatprep.subr.bf16.mxu0 %v10222
    %12443 = vmatpush1.bf16.msra.mxu0 %v10221
    %12444 = vmatprep.subr.bf16.mxu0 %v10238
    %12445 = vmatpush1.bf16.msra.mxu0 %v10237
    %12446 = vmatprep.subr.bf16.mxu0 %v10254
    %12447 = vmatpush1.bf16.msra.mxu0 %v10253
    %12448 = vmatprep.subr.bf16.mxu0 %v10270
    %12449 = vmatpush1.bf16.msra.mxu0 %v10269
    %12450 = vmatprep.subr.bf16.mxu0 %v10286
    %12451 = vmatpush1.bf16.msra.mxu0 %v10285
    %12452 = vmatprep.subr.bf16.mxu0 %v10302
    %12453 = vmatpush1.bf16.msra.mxu0 %v10301
    %12454 = vmatprep.subr.bf16.mxu0 %v10318
    %12455 = vmatpush1.bf16.msra.mxu0 %v10317
    %12456 = vmatprep.subr.bf16.mxu0 %v10334
    %12457 = vmatpush1.bf16.msra.mxu0 %v10333
    %12458 = vmatprep.subr.bf16.mxu0 %v10350
    %12459 = vmatpush1.bf16.msra.mxu0 %v10349
    %12460 = vmatprep.mubr.bf16.mxu0 %v5662
    %12461 = vmatmul.mubr.bf16.gmra.mrb[0].mxu0 %v5661
    %v12462 = vpop.f32.mrb[0].mxu0
    %v12463 = vadd.f32 %v12422, %v12462
    %v12464 = vpop.f32.mrb[0].mxu0
    %v12465 = vadd.f32 %v12424, %v12464
    %v12466 = vpop.f32.mrb[0].mxu0
    %v12467 = vpop.f32.mrb[0].mxu0
    %12468 = vdwg.mxu0
    %12469 = vmatprep.subr.bf16.mxu0 %v10366
    %12470 = vmatpush1.bf16.msra.mxu0 %v10365
    %12471 = vmatprep.subr.bf16.mxu0 %v10382
    %12472 = vmatpush1.bf16.msra.mxu0 %v10381
    %12473 = vmatprep.subr.bf16.mxu0 %v10398
    %12474 = vmatpush1.bf16.msra.mxu0 %v10397
    %12475 = vmatprep.subr.bf16.mxu0 %v10414
    %12476 = vmatpush1.bf16.msra.mxu0 %v10413
    %12477 = vmatprep.subr.bf16.mxu0 %v10430
    %12478 = vmatpush1.bf16.msra.mxu0 %v10429
    %12479 = vmatprep.subr.bf16.mxu0 %v10446
    %12480 = vmatpush1.bf16.msra.mxu0 %v10445
    %12481 = vmatprep.subr.bf16.mxu0 %v10462
    %12482 = vmatpush1.bf16.msra.mxu0 %v10461
    %12483 = vmatprep.subr.bf16.mxu0 %v10478
    %12484 = vmatpush1.bf16.msra.mxu0 %v10477
    %12485 = vmatprep.subr.bf16.mxu0 %v10494
    %12486 = vmatpush1.bf16.msra.mxu0 %v10493
    %12487 = vmatprep.subr.bf16.mxu0 %v10510
    %12488 = vmatpush1.bf16.msra.mxu0 %v10509
    %12489 = vmatprep.subr.bf16.mxu0 %v10526
    %12490 = vmatpush1.bf16.msra.mxu0 %v10525
    %12491 = vmatprep.subr.bf16.mxu0 %v10542
    %12492 = vmatpush1.bf16.msra.mxu0 %v10541
    %12493 = vmatprep.subr.bf16.mxu0 %v10558
    %12494 = vmatpush1.bf16.msra.mxu0 %v10557
    %12495 = vmatprep.subr.bf16.mxu0 %v10574
    %12496 = vmatpush1.bf16.msra.mxu0 %v10573
    %12497 = vmatprep.subr.bf16.mxu0 %v10590
    %12498 = vmatpush1.bf16.msra.mxu0 %v10589
    %12499 = vmatprep.subr.bf16.mxu0 %v10606
    %12500 = vmatpush1.bf16.msra.mxu0 %v10605
    %12501 = vmatprep.mubr.bf16.mxu0 %v5664
    %12502 = vmatmul.mubr.bf16.gmra.mrb[0].mxu0 %v5663
    %v12503 = vpop.f32.mrb[0].mxu0
    %v12504 = vadd.f32 %v12463, %v12503
    %v12505 = vpop.f32.mrb[0].mxu0
    %v12506 = vadd.f32 %v12465, %v12505
    %v12507 = vpop.f32.mrb[0].mxu0
    %v12508 = vpop.f32.mrb[0].mxu0
    %12509 = vdwg.mxu0
    %12510 = vmatprep.subr.bf16.mxu0 %v10622
    %12511 = vmatpush1.bf16.msra.mxu0 %v10621
    %12512 = vmatprep.subr.bf16.mxu0 %v10638
    %12513 = vmatpush1.bf16.msra.mxu0 %v10637
    %12514 = vmatprep.subr.bf16.mxu0 %v10654
    %12515 = vmatpush1.bf16.msra.mxu0 %v10653
    %12516 = vmatprep.subr.bf16.mxu0 %v10670
    %12517 = vmatpush1.bf16.msra.mxu0 %v10669
    %12518 = vmatprep.subr.bf16.mxu0 %v10686
    %12519 = vmatpush1.bf16.msra.mxu0 %v10685
    %12520 = vmatprep.subr.bf16.mxu0 %v10702
    %12521 = vmatpush1.bf16.msra.mxu0 %v10701
    %12522 = vmatprep.subr.bf16.mxu0 %v10718
    %12523 = vmatpush1.bf16.msra.mxu0 %v10717
    %12524 = vmatprep.subr.bf16.mxu0 %v10734
    %12525 = vmatpush1.bf16.msra.mxu0 %v10733
    %12526 = vmatprep.subr.bf16.mxu0 %v10750
    %12527 = vmatpush1.bf16.msra.mxu0 %v10749
    %12528 = vmatprep.subr.bf16.mxu0 %v10766
    %12529 = vmatpush1.bf16.msra.mxu0 %v10765
    %12530 = vmatprep.subr.bf16.mxu0 %v10782
    %12531 = vmatpush1.bf16.msra.mxu0 %v10781
    %12532 = vmatprep.subr.bf16.mxu0 %v10798
    %12533 = vmatpush1.bf16.msra.mxu0 %v10797
    %12534 = vmatprep.subr.bf16.mxu0 %v10814
    %12535 = vmatpush1.bf16.msra.mxu0 %v10813
    %12536 = vmatprep.subr.bf16.mxu0 %v10830
    %12537 = vmatpush1.bf16.msra.mxu0 %v10829
    %12538 = vmatprep.subr.bf16.mxu0 %v10846
    %12539 = vmatpush1.bf16.msra.mxu0 %v10845
    %12540 = vmatprep.subr.bf16.mxu0 %v10862
    %12541 = vmatpush1.bf16.msra.mxu0 %v10861
    %12542 = vmatprep.mubr.bf16.mxu0 %v5666
    %12543 = vmatmul.mubr.bf16.gmra.mrb[0].mxu0 %v5665
    %v12544 = vpop.f32.mrb[0].mxu0
    %v12545 = vadd.f32 %v12504, %v12544
    %v12546 = vpop.f32.mrb[0].mxu0
    %v12547 = vadd.f32 %v12506, %v12546
    %v12548 = vpop.f32.mrb[0].mxu0
    %v12549 = vpop.f32.mrb[0].mxu0
    %12550 = vdwg.mxu0
    %12551 = vmatprep.subr.bf16.mxu0 %v9856
    %12552 = vmatpush1.bf16.msra.mxu0 %v9855
    %12553 = vmatprep.subr.bf16.mxu0 %v9872
    %12554 = vmatpush1.bf16.msra.mxu0 %v9871
    %12555 = vmatprep.subr.bf16.mxu0 %v9888
    %12556 = vmatpush1.bf16.msra.mxu0 %v9887
    %12557 = vmatprep.subr.bf16.mxu0 %v9904
    %12558 = vmatpush1.bf16.msra.mxu0 %v9903
    %12559 = vmatprep.subr.bf16.mxu0 %v9920
    %12560 = vmatpush1.bf16.msra.mxu0 %v9919
    %12561 = vmatprep.subr.bf16.mxu0 %v9936
    %12562 = vmatpush1.bf16.msra.mxu0 %v9935
    %12563 = vmatprep.subr.bf16.mxu0 %v9952
    %12564 = vmatpush1.bf16.msra.mxu0 %v9951
    %12565 = vmatprep.subr.bf16.mxu0 %v9968
    %12566 = vmatpush1.bf16.msra.mxu0 %v9967
    %12567 = vmatprep.subr.bf16.mxu0 %v9984
    %12568 = vmatpush1.bf16.msra.mxu0 %v9983
    %12569 = vmatprep.subr.bf16.mxu0 %v10000
    %12570 = vmatpush1.bf16.msra.mxu0 %v9999
    %12571 = vmatprep.subr.bf16.mxu0 %v10016
    %12572 = vmatpush1.bf16.msra.mxu0 %v10015
    %12573 = vmatprep.subr.bf16.mxu0 %v10032
    %12574 = vmatpush1.bf16.msra.mxu0 %v10031
    %12575 = vmatprep.subr.bf16.mxu0 %v10048
    %12576 = vmatpush1.bf16.msra.mxu0 %v10047
    %12577 = vmatprep.subr.bf16.mxu0 %v10064
    %12578 = vmatpush1.bf16.msra.mxu0 %v10063
    %12579 = vmatprep.subr.bf16.mxu0 %v10080
    %12580 = vmatpush1.bf16.msra.mxu0 %v10079
    %12581 = vmatprep.subr.bf16.mxu0 %v10096
    %12582 = vmatpush1.bf16.msra.mxu0 %v10095
    %12583 = vmatprep.mubr.bf16.mxu0 %v5660
    %12584 = vmatmul.mubr.bf16.gmra.mrb[0].mxu0 %v5659
    %v12585 = vpop.f32.mrb[0].mxu0
    %v12586 = vadd.f32 %v6730, %v12585
    %v12587 = vpop.f32.mrb[0].mxu0
    %v12588 = vadd.f32 %v6734, %v12587
    %v12589 = vpop.f32.mrb[0].mxu0
    %v12590 = vpop.f32.mrb[0].mxu0
    %12591 = vdwg.mxu0
    %12592 = vmatprep.subr.bf16.mxu0 %v10112
    %12593 = vmatpush1.bf16.msra.mxu0 %v10111
    %12594 = vmatprep.subr.bf16.mxu0 %v10128
    %12595 = vmatpush1.bf16.msra.mxu0 %v10127
    %12596 = vmatprep.subr.bf16.mxu0 %v10144
    %12597 = vmatpush1.bf16.msra.mxu0 %v10143
    %12598 = vmatprep.subr.bf16.mxu0 %v10160
    %12599 = vmatpush1.bf16.msra.mxu0 %v10159
    %12600 = vmatprep.subr.bf16.mxu0 %v10176
    %12601 = vmatpush1.bf16.msra.mxu0 %v10175
    %12602 = vmatprep.subr.bf16.mxu0 %v10192
    %12603 = vmatpush1.bf16.msra.mxu0 %v10191
    %12604 = vmatprep.subr.bf16.mxu0 %v10208
    %12605 = vmatpush1.bf16.msra.mxu0 %v10207
    %12606 = vmatprep.subr.bf16.mxu0 %v10224
    %12607 = vmatpush1.bf16.msra.mxu0 %v10223
    %12608 = vmatprep.subr.bf16.mxu0 %v10240
    %12609 = vmatpush1.bf16.msra.mxu0 %v10239
    %12610 = vmatprep.subr.bf16.mxu0 %v10256
    %12611 = vmatpush1.bf16.msra.mxu0 %v10255
    %12612 = vmatprep.subr.bf16.mxu0 %v10272
    %12613 = vmatpush1.bf16.msra.mxu0 %v10271
    %12614 = vmatprep.subr.bf16.mxu0 %v10288
    %12615 = vmatpush1.bf16.msra.mxu0 %v10287
    %12616 = vmatprep.subr.bf16.mxu0 %v10304
    %12617 = vmatpush1.bf16.msra.mxu0 %v10303
    %12618 = vmatprep.subr.bf16.mxu0 %v10320
    %12619 = vmatpush1.bf16.msra.mxu0 %v10319
    %12620 = vmatprep.subr.bf16.mxu0 %v10336
    %12621 = vmatpush1.bf16.msra.mxu0 %v10335
    %12622 = vmatprep.subr.bf16.mxu0 %v10352
    %12623 = vmatpush1.bf16.msra.mxu0 %v10351
    %12624 = vmatprep.mubr.bf16.mxu0 %v5662
    %12625 = vmatmul.mubr.bf16.gmra.mrb[0].mxu0 %v5661
    %v12626 = vpop.f32.mrb[0].mxu0
    %v12627 = vadd.f32 %v12586, %v12626
    %v12628 = vpop.f32.mrb[0].mxu0
    %v12629 = vadd.f32 %v12588, %v12628
    %v12630 = vpop.f32.mrb[0].mxu0
    %v12631 = vpop.f32.mrb[0].mxu0
    %12632 = vdwg.mxu0
    %12633 = vmatprep.subr.bf16.mxu0 %v10368
    %12634 = vmatpush1.bf16.msra.mxu0 %v10367
    %12635 = vmatprep.subr.bf16.mxu0 %v10384
    %12636 = vmatpush1.bf16.msra.mxu0 %v10383
    %12637 = vmatprep.subr.bf16.mxu0 %v10400
    %12638 = vmatpush1.bf16.msra.mxu0 %v10399
    %12639 = vmatprep.subr.bf16.mxu0 %v10416
    %12640 = vmatpush1.bf16.msra.mxu0 %v10415
    %12641 = vmatprep.subr.bf16.mxu0 %v10432
    %12642 = vmatpush1.bf16.msra.mxu0 %v10431
    %12643 = vmatprep.subr.bf16.mxu0 %v10448
    %12644 = vmatpush1.bf16.msra.mxu0 %v10447
    %12645 = vmatprep.subr.bf16.mxu0 %v10464
    %12646 = vmatpush1.bf16.msra.mxu0 %v10463
    %12647 = vmatprep.subr.bf16.mxu0 %v10480
    %12648 = vmatpush1.bf16.msra.mxu0 %v10479
    %12649 = vmatprep.subr.bf16.mxu0 %v10496
    %12650 = vmatpush1.bf16.msra.mxu0 %v10495
    %12651 = vmatprep.subr.bf16.mxu0 %v10512
    %12652 = vmatpush1.bf16.msra.mxu0 %v10511
    %12653 = vmatprep.subr.bf16.mxu0 %v10528
    %12654 = vmatpush1.bf16.msra.mxu0 %v10527
    %12655 = vmatprep.subr.bf16.mxu0 %v10544
    %12656 = vmatpush1.bf16.msra.mxu0 %v10543
    %12657 = vmatprep.subr.bf16.mxu0 %v10560
    %12658 = vmatpush1.bf16.msra.mxu0 %v10559
    %12659 = vmatprep.subr.bf16.mxu0 %v10576
    %12660 = vmatpush1.bf16.msra.mxu0 %v10575
    %12661 = vmatprep.subr.bf16.mxu0 %v10592
    %12662 = vmatpush1.bf16.msra.mxu0 %v10591
    %12663 = vmatprep.subr.bf16.mxu0 %v10608
    %12664 = vmatpush1.bf16.msra.mxu0 %v10607
    %12665 = vmatprep.mubr.bf16.mxu0 %v5664
    %12666 = vmatmul.mubr.bf16.gmra.mrb[0].mxu0 %v5663
    %v12667 = vpop.f32.mrb[0].mxu0
    %v12668 = vadd.f32 %v12627, %v12667
    %v12669 = vpop.f32.mrb[0].mxu0
    %v12670 = vadd.f32 %v12629, %v12669
    %v12671 = vpop.f32.mrb[0].mxu0
    %v12672 = vpop.f32.mrb[0].mxu0
    %12673 = vdwg.mxu0
    %12674 = vmatprep.subr.bf16.mxu0 %v10624
    %12675 = vmatpush1.bf16.msra.mxu0 %v10623
    %12676 = vmatprep.subr.bf16.mxu0 %v10640
    %12677 = vmatpush1.bf16.msra.mxu0 %v10639
    %12678 = vmatprep.subr.bf16.mxu0 %v10656
    %12679 = vmatpush1.bf16.msra.mxu0 %v10655
    %12680 = vmatprep.subr.bf16.mxu0 %v10672
    %12681 = vmatpush1.bf16.msra.mxu0 %v10671
    %12682 = vmatprep.subr.bf16.mxu0 %v10688
    %12683 = vmatpush1.bf16.msra.mxu0 %v10687
    %12684 = vmatprep.subr.bf16.mxu0 %v10704
    %12685 = vmatpush1.bf16.msra.mxu0 %v10703
    %12686 = vmatprep.subr.bf16.mxu0 %v10720
    %12687 = vmatpush1.bf16.msra.mxu0 %v10719
    %12688 = vmatprep.subr.bf16.mxu0 %v10736
    %12689 = vmatpush1.bf16.msra.mxu0 %v10735
    %12690 = vmatprep.subr.bf16.mxu0 %v10752
    %12691 = vmatpush1.bf16.msra.mxu0 %v10751
    %12692 = vmatprep.subr.bf16.mxu0 %v10768
    %12693 = vmatpush1.bf16.msra.mxu0 %v10767
    %12694 = vmatprep.subr.bf16.mxu0 %v10784
    %12695 = vmatpush1.bf16.msra.mxu0 %v10783
    %12696 = vmatprep.subr.bf16.mxu0 %v10800
    %12697 = vmatpush1.bf16.msra.mxu0 %v10799
    %12698 = vmatprep.subr.bf16.mxu0 %v10816
    %12699 = vmatpush1.bf16.msra.mxu0 %v10815
    %12700 = vmatprep.subr.bf16.mxu0 %v10832
    %12701 = vmatpush1.bf16.msra.mxu0 %v10831
    %12702 = vmatprep.subr.bf16.mxu0 %v10848
    %12703 = vmatpush1.bf16.msra.mxu0 %v10847
    %12704 = vmatprep.subr.bf16.mxu0 %v10864
    %12705 = vmatpush1.bf16.msra.mxu0 %v10863
    %12706 = vmatprep.mubr.bf16.mxu0 %v5666
    %12707 = vmatmul.mubr.bf16.gmra.mrb[0].mxu0 %v5665
    %v12708 = vpop.f32.mrb[0].mxu0
    %v12709 = vadd.f32 %v12668, %v12708
    %v12710 = vpop.f32.mrb[0].mxu0
    %v12711 = vadd.f32 %v12670, %v12710
    %v12712 = vpop.f32.mrb[0].mxu0
    %v12713 = vpop.f32.mrb[0].mxu0
    %12714 = vdwg.mxu0
    %12715 = vmatprep.subr.bf16.mxu0 %v9858
    %12716 = vmatpush1.bf16.msra.mxu0 %v9857
    %12717 = vmatprep.subr.bf16.mxu0 %v9874
    %12718 = vmatpush1.bf16.msra.mxu0 %v9873
    %12719 = vmatprep.subr.bf16.mxu0 %v9890
    %12720 = vmatpush1.bf16.msra.mxu0 %v9889
    %12721 = vmatprep.subr.bf16.mxu0 %v9906
    %12722 = vmatpush1.bf16.msra.mxu0 %v9905
    %12723 = vmatprep.subr.bf16.mxu0 %v9922
    %12724 = vmatpush1.bf16.msra.mxu0 %v9921
    %12725 = vmatprep.subr.bf16.mxu0 %v9938
    %12726 = vmatpush1.bf16.msra.mxu0 %v9937
    %12727 = vmatprep.subr.bf16.mxu0 %v9954
    %12728 = vmatpush1.bf16.msra.mxu0 %v9953
    %12729 = vmatprep.subr.bf16.mxu0 %v9970
    %12730 = vmatpush1.bf16.msra.mxu0 %v9969
    %12731 = vmatprep.subr.bf16.mxu0 %v9986
    %12732 = vmatpush1.bf16.msra.mxu0 %v9985
    %12733 = vmatprep.subr.bf16.mxu0 %v10002
    %12734 = vmatpush1.bf16.msra.mxu0 %v10001
    %12735 = vmatprep.subr.bf16.mxu0 %v10018
    %12736 = vmatpush1.bf16.msra.mxu0 %v10017
    %12737 = vmatprep.subr.bf16.mxu0 %v10034
    %12738 = vmatpush1.bf16.msra.mxu0 %v10033
    %12739 = vmatprep.subr.bf16.mxu0 %v10050
    %12740 = vmatpush1.bf16.msra.mxu0 %v10049
    %12741 = vmatprep.subr.bf16.mxu0 %v10066
    %12742 = vmatpush1.bf16.msra.mxu0 %v10065
    %12743 = vmatprep.subr.bf16.mxu0 %v10082
    %12744 = vmatpush1.bf16.msra.mxu0 %v10081
    %12745 = vmatprep.subr.bf16.mxu0 %v10098
    %12746 = vmatpush1.bf16.msra.mxu0 %v10097
    %12747 = vmatprep.mubr.bf16.mxu0 %v5660
    %12748 = vmatmul.mubr.bf16.gmra.mrb[0].mxu0 %v5659
    %v12749 = vpop.f32.mrb[0].mxu0
    %v12750 = vadd.f32 %v6738, %v12749
    %v12751 = vpop.f32.mrb[0].mxu0
    %v12752 = vadd.f32 %v6742, %v12751
    %v12753 = vpop.f32.mrb[0].mxu0
    %v12754 = vpop.f32.mrb[0].mxu0
    %12755 = vdwg.mxu0
    %12756 = vmatprep.subr.bf16.mxu0 %v10114
    %12757 = vmatpush1.bf16.msra.mxu0 %v10113
    %12758 = vmatprep.subr.bf16.mxu0 %v10130
    %12759 = vmatpush1.bf16.msra.mxu0 %v10129
    %12760 = vmatprep.subr.bf16.mxu0 %v10146
    %12761 = vmatpush1.bf16.msra.mxu0 %v10145
    %12762 = vmatprep.subr.bf16.mxu0 %v10162
    %12763 = vmatpush1.bf16.msra.mxu0 %v10161
    %12764 = vmatprep.subr.bf16.mxu0 %v10178
    %12765 = vmatpush1.bf16.msra.mxu0 %v10177
    %12766 = vmatprep.subr.bf16.mxu0 %v10194
    %12767 = vmatpush1.bf16.msra.mxu0 %v10193
    %12768 = vmatprep.subr.bf16.mxu0 %v10210
    %12769 = vmatpush1.bf16.msra.mxu0 %v10209
    %12770 = vmatprep.subr.bf16.mxu0 %v10226
    %12771 = vmatpush1.bf16.msra.mxu0 %v10225
    %12772 = vmatprep.subr.bf16.mxu0 %v10242
    %12773 = vmatpush1.bf16.msra.mxu0 %v10241
    %12774 = vmatprep.subr.bf16.mxu0 %v10258
    %12775 = vmatpush1.bf16.msra.mxu0 %v10257
    %12776 = vmatprep.subr.bf16.mxu0 %v10274
    %12777 = vmatpush1.bf16.msra.mxu0 %v10273
    %12778 = vmatprep.subr.bf16.mxu0 %v10290
    %12779 = vmatpush1.bf16.msra.mxu0 %v10289
    %12780 = vmatprep.subr.bf16.mxu0 %v10306
    %12781 = vmatpush1.bf16.msra.mxu0 %v10305
    %12782 = vmatprep.subr.bf16.mxu0 %v10322
    %12783 = vmatpush1.bf16.msra.mxu0 %v10321
    %12784 = vmatprep.subr.bf16.mxu0 %v10338
    %12785 = vmatpush1.bf16.msra.mxu0 %v10337
    %12786 = vmatprep.subr.bf16.mxu0 %v10354
    %12787 = vmatpush1.bf16.msra.mxu0 %v10353
    %12788 = vmatprep.mubr.bf16.mxu0 %v5662
    %12789 = vmatmul.mubr.bf16.gmra.mrb[0].mxu0 %v5661
    %v12790 = vpop.f32.mrb[0].mxu0
    %v12791 = vadd.f32 %v12750, %v12790
    %v12792 = vpop.f32.mrb[0].mxu0
    %v12793 = vadd.f32 %v12752, %v12792
    %v12794 = vpop.f32.mrb[0].mxu0
    %v12795 = vpop.f32.mrb[0].mxu0
    %12796 = vdwg.mxu0
    %12797 = vmatprep.subr.bf16.mxu0 %v10370
    %12798 = vmatpush1.bf16.msra.mxu0 %v10369
    %12799 = vmatprep.subr.bf16.mxu0 %v10386
    %12800 = vmatpush1.bf16.msra.mxu0 %v10385
    %12801 = vmatprep.subr.bf16.mxu0 %v10402
    %12802 = vmatpush1.bf16.msra.mxu0 %v10401
    %12803 = vmatprep.subr.bf16.mxu0 %v10418
    %12804 = vmatpush1.bf16.msra.mxu0 %v10417
    %12805 = vmatprep.subr.bf16.mxu0 %v10434
    %12806 = vmatpush1.bf16.msra.mxu0 %v10433
    %12807 = vmatprep.subr.bf16.mxu0 %v10450
    %12808 = vmatpush1.bf16.msra.mxu0 %v10449
    %12809 = vmatprep.subr.bf16.mxu0 %v10466
    %12810 = vmatpush1.bf16.msra.mxu0 %v10465
    %12811 = vmatprep.subr.bf16.mxu0 %v10482
    %12812 = vmatpush1.bf16.msra.mxu0 %v10481
    %12813 = vmatprep.subr.bf16.mxu0 %v10498
    %12814 = vmatpush1.bf16.msra.mxu0 %v10497
    %12815 = vmatprep.subr.bf16.mxu0 %v10514
    %12816 = vmatpush1.bf16.msra.mxu0 %v10513
    %12817 = vmatprep.subr.bf16.mxu0 %v10530
    %12818 = vmatpush1.bf16.msra.mxu0 %v10529
    %12819 = vmatprep.subr.bf16.mxu0 %v10546
    %12820 = vmatpush1.bf16.msra.mxu0 %v10545
    %12821 = vmatprep.subr.bf16.mxu0 %v10562
    %12822 = vmatpush1.bf16.msra.mxu0 %v10561
    %12823 = vmatprep.subr.bf16.mxu0 %v10578
    %12824 = vmatpush1.bf16.msra.mxu0 %v10577
    %12825 = vmatprep.subr.bf16.mxu0 %v10594
    %12826 = vmatpush1.bf16.msra.mxu0 %v10593
    %12827 = vmatprep.subr.bf16.mxu0 %v10610
    %12828 = vmatpush1.bf16.msra.mxu0 %v10609
    %12829 = vmatprep.mubr.bf16.mxu0 %v5664
    %12830 = vmatmul.mubr.bf16.gmra.mrb[0].mxu0 %v5663
    %v12831 = vpop.f32.mrb[0].mxu0
    %v12832 = vadd.f32 %v12791, %v12831
    %v12833 = vpop.f32.mrb[0].mxu0
    %v12834 = vadd.f32 %v12793, %v12833
    %v12835 = vpop.f32.mrb[0].mxu0
    %v12836 = vpop.f32.mrb[0].mxu0
    %12837 = vdwg.mxu0
    %12838 = vmatprep.subr.bf16.mxu0 %v10626
    %12839 = vmatpush1.bf16.msra.mxu0 %v10625
    %12840 = vmatprep.subr.bf16.mxu0 %v10642
    %12841 = vmatpush1.bf16.msra.mxu0 %v10641
    %12842 = vmatprep.subr.bf16.mxu0 %v10658
    %12843 = vmatpush1.bf16.msra.mxu0 %v10657
    %12844 = vmatprep.subr.bf16.mxu0 %v10674
    %12845 = vmatpush1.bf16.msra.mxu0 %v10673
    %12846 = vmatprep.subr.bf16.mxu0 %v10690
    %12847 = vmatpush1.bf16.msra.mxu0 %v10689
    %12848 = vmatprep.subr.bf16.mxu0 %v10706
    %12849 = vmatpush1.bf16.msra.mxu0 %v10705
    %12850 = vmatprep.subr.bf16.mxu0 %v10722
    %12851 = vmatpush1.bf16.msra.mxu0 %v10721
    %12852 = vmatprep.subr.bf16.mxu0 %v10738
    %12853 = vmatpush1.bf16.msra.mxu0 %v10737
    %12854 = vmatprep.subr.bf16.mxu0 %v10754
    %12855 = vmatpush1.bf16.msra.mxu0 %v10753
    %12856 = vmatprep.subr.bf16.mxu0 %v10770
    %12857 = vmatpush1.bf16.msra.mxu0 %v10769
    %12858 = vmatprep.subr.bf16.mxu0 %v10786
    %12859 = vmatpush1.bf16.msra.mxu0 %v10785
    %12860 = vmatprep.subr.bf16.mxu0 %v10802
    %12861 = vmatpush1.bf16.msra.mxu0 %v10801
    %12862 = vmatprep.subr.bf16.mxu0 %v10818
    %12863 = vmatpush1.bf16.msra.mxu0 %v10817
    %12864 = vmatprep.subr.bf16.mxu0 %v10834
    %12865 = vmatpush1.bf16.msra.mxu0 %v10833
    %12866 = vmatprep.subr.bf16.mxu0 %v10850
    %12867 = vmatpush1.bf16.msra.mxu0 %v10849
    %12868 = vmatprep.subr.bf16.mxu0 %v10866
    %12869 = vmatpush1.bf16.msra.mxu0 %v10865
    %12870 = vmatprep.mubr.bf16.mxu0 %v5666
    %12871 = vmatmul.mubr.bf16.gmra.mrb[0].mxu0 %v5665
    %v12872 = vpop.f32.mrb[0].mxu0
    %v12873 = vadd.f32 %v12832, %v12872
    %v12874 = vpop.f32.mrb[0].mxu0
    %v12875 = vadd.f32 %v12834, %v12874
    %v12876 = vpop.f32.mrb[0].mxu0
    %v12877 = vpop.f32.mrb[0].mxu0
    %12878 = vdwg.mxu0
    %12879 = vmatprep.subr.bf16.mxu0 %v9860
    %12880 = vmatpush1.bf16.msra.mxu0 %v9859
    %12881 = vmatprep.subr.bf16.mxu0 %v9876
    %12882 = vmatpush1.bf16.msra.mxu0 %v9875
    %12883 = vmatprep.subr.bf16.mxu0 %v9892
    %12884 = vmatpush1.bf16.msra.mxu0 %v9891
    %12885 = vmatprep.subr.bf16.mxu0 %v9908
    %12886 = vmatpush1.bf16.msra.mxu0 %v9907
    %12887 = vmatprep.subr.bf16.mxu0 %v9924
    %12888 = vmatpush1.bf16.msra.mxu0 %v9923
    %12889 = vmatprep.subr.bf16.mxu0 %v9940
    %12890 = vmatpush1.bf16.msra.mxu0 %v9939
    %12891 = vmatprep.subr.bf16.mxu0 %v9956
    %12892 = vmatpush1.bf16.msra.mxu0 %v9955
    %12893 = vmatprep.subr.bf16.mxu0 %v9972
    %12894 = vmatpush1.bf16.msra.mxu0 %v9971
    %12895 = vmatprep.subr.bf16.mxu0 %v9988
    %12896 = vmatpush1.bf16.msra.mxu0 %v9987
    %12897 = vmatprep.subr.bf16.mxu0 %v10004
    %12898 = vmatpush1.bf16.msra.mxu0 %v10003
    %12899 = vmatprep.subr.bf16.mxu0 %v10020
    %12900 = vmatpush1.bf16.msra.mxu0 %v10019
    %12901 = vmatprep.subr.bf16.mxu0 %v10036
    %12902 = vmatpush1.bf16.msra.mxu0 %v10035
    %12903 = vmatprep.subr.bf16.mxu0 %v10052
    %12904 = vmatpush1.bf16.msra.mxu0 %v10051
    %12905 = vmatprep.subr.bf16.mxu0 %v10068
    %12906 = vmatpush1.bf16.msra.mxu0 %v10067
    %12907 = vmatprep.subr.bf16.mxu0 %v10084
    %12908 = vmatpush1.bf16.msra.mxu0 %v10083
    %12909 = vmatprep.subr.bf16.mxu0 %v10100
    %12910 = vmatpush1.bf16.msra.mxu0 %v10099
    %12911 = vmatprep.mubr.bf16.mxu0 %v5660
    %12912 = vmatmul.mubr.bf16.gmra.mrb[0].mxu0 %v5659
    %v12913 = vpop.f32.mrb[0].mxu0
    %v12914 = vadd.f32 %v6746, %v12913
    %v12915 = vpop.f32.mrb[0].mxu0
    %v12916 = vadd.f32 %v6750, %v12915
    %v12917 = vpop.f32.mrb[0].mxu0
    %v12918 = vpop.f32.mrb[0].mxu0
    %12919 = vdwg.mxu0
    %12920 = vmatprep.subr.bf16.mxu0 %v10116
    %12921 = vmatpush1.bf16.msra.mxu0 %v10115
    %12922 = vmatprep.subr.bf16.mxu0 %v10132
    %12923 = vmatpush1.bf16.msra.mxu0 %v10131
    %12924 = vmatprep.subr.bf16.mxu0 %v10148
    %12925 = vmatpush1.bf16.msra.mxu0 %v10147
    %12926 = vmatprep.subr.bf16.mxu0 %v10164
    %12927 = vmatpush1.bf16.msra.mxu0 %v10163
    %12928 = vmatprep.subr.bf16.mxu0 %v10180
    %12929 = vmatpush1.bf16.msra.mxu0 %v10179
    %12930 = vmatprep.subr.bf16.mxu0 %v10196
    %12931 = vmatpush1.bf16.msra.mxu0 %v10195
    %12932 = vmatprep.subr.bf16.mxu0 %v10212
    %12933 = vmatpush1.bf16.msra.mxu0 %v10211
    %12934 = vmatprep.subr.bf16.mxu0 %v10228
    %12935 = vmatpush1.bf16.msra.mxu0 %v10227
    %12936 = vmatprep.subr.bf16.mxu0 %v10244
    %12937 = vmatpush1.bf16.msra.mxu0 %v10243
    %12938 = vmatprep.subr.bf16.mxu0 %v10260
    %12939 = vmatpush1.bf16.msra.mxu0 %v10259
    %12940 = vmatprep.subr.bf16.mxu0 %v10276
    %12941 = vmatpush1.bf16.msra.mxu0 %v10275
    %12942 = vmatprep.subr.bf16.mxu0 %v10292
    %12943 = vmatpush1.bf16.msra.mxu0 %v10291
    %12944 = vmatprep.subr.bf16.mxu0 %v10308
    %12945 = vmatpush1.bf16.msra.mxu0 %v10307
    %12946 = vmatprep.subr.bf16.mxu0 %v10324
    %12947 = vmatpush1.bf16.msra.mxu0 %v10323
    %12948 = vmatprep.subr.bf16.mxu0 %v10340
    %12949 = vmatpush1.bf16.msra.mxu0 %v10339
    %12950 = vmatprep.subr.bf16.mxu0 %v10356
    %12951 = vmatpush1.bf16.msra.mxu0 %v10355
    %12952 = vmatprep.mubr.bf16.mxu0 %v5662
    %12953 = vmatmul.mubr.bf16.gmra.mrb[0].mxu0 %v5661
    %v12954 = vpop.f32.mrb[0].mxu0
    %v12955 = vadd.f32 %v12914, %v12954
    %v12956 = vpop.f32.mrb[0].mxu0
    %v12957 = vadd.f32 %v12916, %v12956
    %v12958 = vpop.f32.mrb[0].mxu0
    %v12959 = vpop.f32.mrb[0].mxu0
    %12960 = vdwg.mxu0
    %12961 = vmatprep.subr.bf16.mxu0 %v10372
    %12962 = vmatpush1.bf16.msra.mxu0 %v10371
    %12963 = vmatprep.subr.bf16.mxu0 %v10388
    %12964 = vmatpush1.bf16.msra.mxu0 %v10387
    %12965 = vmatprep.subr.bf16.mxu0 %v10404
    %12966 = vmatpush1.bf16.msra.mxu0 %v10403
    %12967 = vmatprep.subr.bf16.mxu0 %v10420
    %12968 = vmatpush1.bf16.msra.mxu0 %v10419
    %12969 = vmatprep.subr.bf16.mxu0 %v10436
    %12970 = vmatpush1.bf16.msra.mxu0 %v10435
    %12971 = vmatprep.subr.bf16.mxu0 %v10452
    %12972 = vmatpush1.bf16.msra.mxu0 %v10451
    %12973 = vmatprep.subr.bf16.mxu0 %v10468
    %12974 = vmatpush1.bf16.msra.mxu0 %v10467
    %12975 = vmatprep.subr.bf16.mxu0 %v10484
    %12976 = vmatpush1.bf16.msra.mxu0 %v10483
    %12977 = vmatprep.subr.bf16.mxu0 %v10500
    %12978 = vmatpush1.bf16.msra.mxu0 %v10499
    %12979 = vmatprep.subr.bf16.mxu0 %v10516
    %12980 = vmatpush1.bf16.msra.mxu0 %v10515
    %12981 = vmatprep.subr.bf16.mxu0 %v10532
    %12982 = vmatpush1.bf16.msra.mxu0 %v10531
    %12983 = vmatprep.subr.bf16.mxu0 %v10548
    %12984 = vmatpush1.bf16.msra.mxu0 %v10547
    %12985 = vmatprep.subr.bf16.mxu0 %v10564
    %12986 = vmatpush1.bf16.msra.mxu0 %v10563
    %12987 = vmatprep.subr.bf16.mxu0 %v10580
    %12988 = vmatpush1.bf16.msra.mxu0 %v10579
    %12989 = vmatprep.subr.bf16.mxu0 %v10596
    %12990 = vmatpush1.bf16.msra.mxu0 %v10595
    %12991 = vmatprep.subr.bf16.mxu0 %v10612
    %12992 = vmatpush1.bf16.msra.mxu0 %v10611
    %12993 = vmatprep.mubr.bf16.mxu0 %v5664
    %12994 = vmatmul.mubr.bf16.gmra.mrb[0].mxu0 %v5663
    %v12995 = vpop.f32.mrb[0].mxu0
    %v12996 = vadd.f32 %v12955, %v12995
    %v12997 = vpop.f32.mrb[0].mxu0
    %v12998 = vadd.f32 %v12957, %v12997
    %v12999 = vpop.f32.mrb[0].mxu0
    %v13000 = vpop.f32.mrb[0].mxu0
    %13001 = vdwg.mxu0
    %13002 = vmatprep.subr.bf16.mxu0 %v10628
    %13003 = vmatpush1.bf16.msra.mxu0 %v10627
    %13004 = vmatprep.subr.bf16.mxu0 %v10644
    %13005 = vmatpush1.bf16.msra.mxu0 %v10643
    %13006 = vmatprep.subr.bf16.mxu0 %v10660
    %13007 = vmatpush1.bf16.msra.mxu0 %v10659
    %13008 = vmatprep.subr.bf16.mxu0 %v10676
    %13009 = vmatpush1.bf16.msra.mxu0 %v10675
    %13010 = vmatprep.subr.bf16.mxu0 %v10692
    %13011 = vmatpush1.bf16.msra.mxu0 %v10691
    %13012 = vmatprep.subr.bf16.mxu0 %v10708
    %13013 = vmatpush1.bf16.msra.mxu0 %v10707
    %13014 = vmatprep.subr.bf16.mxu0 %v10724
    %13015 = vmatpush1.bf16.msra.mxu0 %v10723
    %13016 = vmatprep.subr.bf16.mxu0 %v10740
    %13017 = vmatpush1.bf16.msra.mxu0 %v10739
    %13018 = vmatprep.subr.bf16.mxu0 %v10756
    %13019 = vmatpush1.bf16.msra.mxu0 %v10755
    %13020 = vmatprep.subr.bf16.mxu0 %v10772
    %13021 = vmatpush1.bf16.msra.mxu0 %v10771
    %13022 = vmatprep.subr.bf16.mxu0 %v10788
    %13023 = vmatpush1.bf16.msra.mxu0 %v10787
    %13024 = vmatprep.subr.bf16.mxu0 %v10804
    %13025 = vmatpush1.bf16.msra.mxu0 %v10803
    %13026 = vmatprep.subr.bf16.mxu0 %v10820
    %13027 = vmatpush1.bf16.msra.mxu0 %v10819
    %13028 = vmatprep.subr.bf16.mxu0 %v10836
    %13029 = vmatpush1.bf16.msra.mxu0 %v10835
    %13030 = vmatprep.subr.bf16.mxu0 %v10852
    %13031 = vmatpush1.bf16.msra.mxu0 %v10851
    %13032 = vmatprep.subr.bf16.mxu0 %v10868
    %13033 = vmatpush1.bf16.msra.mxu0 %v10867
    %13034 = vmatprep.mubr.bf16.mxu0 %v5666
    %13035 = vmatmul.mubr.bf16.gmra.mrb[0].mxu0 %v5665
    %v13036 = vpop.f32.mrb[0].mxu0
    %v13037 = vadd.f32 %v12996, %v13036
    %v13038 = vpop.f32.mrb[0].mxu0
    %v13039 = vadd.f32 %v12998, %v13038
    %v13040 = vpop.f32.mrb[0].mxu0
    %v13041 = vpop.f32.mrb[0].mxu0
    %13042 = vdwg.mxu0
    %13043 = vmatprep.subr.bf16.mxu0 %v9862
    %13044 = vmatpush1.bf16.msra.mxu0 %v9861
    %13045 = vmatprep.subr.bf16.mxu0 %v9878
    %13046 = vmatpush1.bf16.msra.mxu0 %v9877
    %13047 = vmatprep.subr.bf16.mxu0 %v9894
    %13048 = vmatpush1.bf16.msra.mxu0 %v9893
    %13049 = vmatprep.subr.bf16.mxu0 %v9910
    %13050 = vmatpush1.bf16.msra.mxu0 %v9909
    %13051 = vmatprep.subr.bf16.mxu0 %v9926
    %13052 = vmatpush1.bf16.msra.mxu0 %v9925
    %13053 = vmatprep.subr.bf16.mxu0 %v9942
    %13054 = vmatpush1.bf16.msra.mxu0 %v9941
    %13055 = vmatprep.subr.bf16.mxu0 %v9958
    %13056 = vmatpush1.bf16.msra.mxu0 %v9957
    %13057 = vmatprep.subr.bf16.mxu0 %v9974
    %13058 = vmatpush1.bf16.msra.mxu0 %v9973
    %13059 = vmatprep.subr.bf16.mxu0 %v9990
    %13060 = vmatpush1.bf16.msra.mxu0 %v9989
    %13061 = vmatprep.subr.bf16.mxu0 %v10006
    %13062 = vmatpush1.bf16.msra.mxu0 %v10005
    %13063 = vmatprep.subr.bf16.mxu0 %v10022
    %13064 = vmatpush1.bf16.msra.mxu0 %v10021
    %13065 = vmatprep.subr.bf16.mxu0 %v10038
    %13066 = vmatpush1.bf16.msra.mxu0 %v10037
    %13067 = vmatprep.subr.bf16.mxu0 %v10054
    %13068 = vmatpush1.bf16.msra.mxu0 %v10053
    %13069 = vmatprep.subr.bf16.mxu0 %v10070
    %13070 = vmatpush1.bf16.msra.mxu0 %v10069
    %13071 = vmatprep.subr.bf16.mxu0 %v10086
    %13072 = vmatpush1.bf16.msra.mxu0 %v10085
    %13073 = vmatprep.subr.bf16.mxu0 %v10102
    %13074 = vmatpush1.bf16.msra.mxu0 %v10101
    %13075 = vmatprep.mubr.bf16.mxu0 %v5660
    %13076 = vmatmul.mubr.bf16.gmra.mrb[0].mxu0 %v5659
    %v13077 = vpop.f32.mrb[0].mxu0
    %v13078 = vadd.f32 %v6754, %v13077
    %v13079 = vpop.f32.mrb[0].mxu0
    %v13080 = vadd.f32 %v6758, %v13079
    %v13081 = vpop.f32.mrb[0].mxu0
    %v13082 = vpop.f32.mrb[0].mxu0
    %13083 = vdwg.mxu0
    %13084 = vmatprep.subr.bf16.mxu0 %v10118
    %13085 = vmatpush1.bf16.msra.mxu0 %v10117
    %13086 = vmatprep.subr.bf16.mxu0 %v10134
    %13087 = vmatpush1.bf16.msra.mxu0 %v10133
    %13088 = vmatprep.subr.bf16.mxu0 %v10150
    %13089 = vmatpush1.bf16.msra.mxu0 %v10149
    %13090 = vmatprep.subr.bf16.mxu0 %v10166
    %13091 = vmatpush1.bf16.msra.mxu0 %v10165
    %13092 = vmatprep.subr.bf16.mxu0 %v10182
    %13093 = vmatpush1.bf16.msra.mxu0 %v10181
    %13094 = vmatprep.subr.bf16.mxu0 %v10198
    %13095 = vmatpush1.bf16.msra.mxu0 %v10197
    %13096 = vmatprep.subr.bf16.mxu0 %v10214
    %13097 = vmatpush1.bf16.msra.mxu0 %v10213
    %13098 = vmatprep.subr.bf16.mxu0 %v10230
    %13099 = vmatpush1.bf16.msra.mxu0 %v10229
    %13100 = vmatprep.subr.bf16.mxu0 %v10246
    %13101 = vmatpush1.bf16.msra.mxu0 %v10245
    %13102 = vmatprep.subr.bf16.mxu0 %v10262
    %13103 = vmatpush1.bf16.msra.mxu0 %v10261
    %13104 = vmatprep.subr.bf16.mxu0 %v10278
    %13105 = vmatpush1.bf16.msra.mxu0 %v10277
    %13106 = vmatprep.subr.bf16.mxu0 %v10294
    %13107 = vmatpush1.bf16.msra.mxu0 %v10293
    %13108 = vmatprep.subr.bf16.mxu0 %v10310
    %13109 = vmatpush1.bf16.msra.mxu0 %v10309
    %13110 = vmatprep.subr.bf16.mxu0 %v10326
    %13111 = vmatpush1.bf16.msra.mxu0 %v10325
    %13112 = vmatprep.subr.bf16.mxu0 %v10342
    %13113 = vmatpush1.bf16.msra.mxu0 %v10341
    %13114 = vmatprep.subr.bf16.mxu0 %v10358
    %13115 = vmatpush1.bf16.msra.mxu0 %v10357
    %13116 = vmatprep.mubr.bf16.mxu0 %v5662
    %13117 = vmatmul.mubr.bf16.gmra.mrb[0].mxu0 %v5661
    %v13118 = vpop.f32.mrb[0].mxu0
    %v13119 = vadd.f32 %v13078, %v13118
    %v13120 = vpop.f32.mrb[0].mxu0
    %v13121 = vadd.f32 %v13080, %v13120
    %v13122 = vpop.f32.mrb[0].mxu0
    %v13123 = vpop.f32.mrb[0].mxu0
    %13124 = vdwg.mxu0
    %13125 = vmatprep.subr.bf16.mxu0 %v10374
    %13126 = vmatpush1.bf16.msra.mxu0 %v10373
    %13127 = vmatprep.subr.bf16.mxu0 %v10390
    %13128 = vmatpush1.bf16.msra.mxu0 %v10389
    %13129 = vmatprep.subr.bf16.mxu0 %v10406
    %13130 = vmatpush1.bf16.msra.mxu0 %v10405
    %13131 = vmatprep.subr.bf16.mxu0 %v10422
    %13132 = vmatpush1.bf16.msra.mxu0 %v10421
    %13133 = vmatprep.subr.bf16.mxu0 %v10438
    %13134 = vmatpush1.bf16.msra.mxu0 %v10437
    %13135 = vmatprep.subr.bf16.mxu0 %v10454
    %13136 = vmatpush1.bf16.msra.mxu0 %v10453
    %13137 = vmatprep.subr.bf16.mxu0 %v10470
    %13138 = vmatpush1.bf16.msra.mxu0 %v10469
    %13139 = vmatprep.subr.bf16.mxu0 %v10486
    %13140 = vmatpush1.bf16.msra.mxu0 %v10485
    %13141 = vmatprep.subr.bf16.mxu0 %v10502
    %13142 = vmatpush1.bf16.msra.mxu0 %v10501
    %13143 = vmatprep.subr.bf16.mxu0 %v10518
    %13144 = vmatpush1.bf16.msra.mxu0 %v10517
    %13145 = vmatprep.subr.bf16.mxu0 %v10534
    %13146 = vmatpush1.bf16.msra.mxu0 %v10533
    %13147 = vmatprep.subr.bf16.mxu0 %v10550
    %13148 = vmatpush1.bf16.msra.mxu0 %v10549
    %13149 = vmatprep.subr.bf16.mxu0 %v10566
    %13150 = vmatpush1.bf16.msra.mxu0 %v10565
    %13151 = vmatprep.subr.bf16.mxu0 %v10582
    %13152 = vmatpush1.bf16.msra.mxu0 %v10581
    %13153 = vmatprep.subr.bf16.mxu0 %v10598
    %13154 = vmatpush1.bf16.msra.mxu0 %v10597
    %13155 = vmatprep.subr.bf16.mxu0 %v10614
    %13156 = vmatpush1.bf16.msra.mxu0 %v10613
    %13157 = vmatprep.mubr.bf16.mxu0 %v5664
    %13158 = vmatmul.mubr.bf16.gmra.mrb[0].mxu0 %v5663
    %v13159 = vpop.f32.mrb[0].mxu0
    %v13160 = vadd.f32 %v13119, %v13159
    %v13161 = vpop.f32.mrb[0].mxu0
    %v13162 = vadd.f32 %v13121, %v13161
    %v13163 = vpop.f32.mrb[0].mxu0
    %v13164 = vpop.f32.mrb[0].mxu0
    %13165 = vdwg.mxu0
    %13166 = vmatprep.subr.bf16.mxu0 %v10630
    %13167 = vmatpush1.bf16.msra.mxu0 %v10629
    %13168 = vmatprep.subr.bf16.mxu0 %v10646
    %13169 = vmatpush1.bf16.msra.mxu0 %v10645
    %13170 = vmatprep.subr.bf16.mxu0 %v10662
    %13171 = vmatpush1.bf16.msra.mxu0 %v10661
    %13172 = vmatprep.subr.bf16.mxu0 %v10678
    %13173 = vmatpush1.bf16.msra.mxu0 %v10677
    %13174 = vmatprep.subr.bf16.mxu0 %v10694
    %13175 = vmatpush1.bf16.msra.mxu0 %v10693
    %13176 = vmatprep.subr.bf16.mxu0 %v10710
    %13177 = vmatpush1.bf16.msra.mxu0 %v10709
    %13178 = vmatprep.subr.bf16.mxu0 %v10726
    %13179 = vmatpush1.bf16.msra.mxu0 %v10725
    %13180 = vmatprep.subr.bf16.mxu0 %v10742
    %13181 = vmatpush1.bf16.msra.mxu0 %v10741
    %13182 = vmatprep.subr.bf16.mxu0 %v10758
    %13183 = vmatpush1.bf16.msra.mxu0 %v10757
    %13184 = vmatprep.subr.bf16.mxu0 %v10774
    %13185 = vmatpush1.bf16.msra.mxu0 %v10773
    %13186 = vmatprep.subr.bf16.mxu0 %v10790
    %13187 = vmatpush1.bf16.msra.mxu0 %v10789
    %13188 = vmatprep.subr.bf16.mxu0 %v10806
    %13189 = vmatpush1.bf16.msra.mxu0 %v10805
    %13190 = vmatprep.subr.bf16.mxu0 %v10822
    %13191 = vmatpush1.bf16.msra.mxu0 %v10821
    %13192 = vmatprep.subr.bf16.mxu0 %v10838
    %13193 = vmatpush1.bf16.msra.mxu0 %v10837
    %13194 = vmatprep.subr.bf16.mxu0 %v10854
    %13195 = vmatpush1.bf16.msra.mxu0 %v10853
    %13196 = vmatprep.subr.bf16.mxu0 %v10870
    %13197 = vmatpush1.bf16.msra.mxu0 %v10869
    %13198 = vmatprep.mubr.bf16.mxu0 %v5666
    %13199 = vmatmul.mubr.bf16.gmra.mrb[0].mxu0 %v5665
    %v13200 = vpop.f32.mrb[0].mxu0
    %v13201 = vadd.f32 %v13160, %v13200
    %v13202 = vpop.f32.mrb[0].mxu0
    %v13203 = vadd.f32 %v13162, %v13202
    %v13204 = vpop.f32.mrb[0].mxu0
    %v13205 = vpop.f32.mrb[0].mxu0
    %13206 = vdwg.mxu0
    %v13207 = vmax.f32 %v12053, 0.0
    %v13208 = vmax.f32 %v12055, 0.0
    %v13209 = vmax.f32 %v12217, 0.0
    %v13210 = vmax.f32 %v12219, 0.0
    %v13211 = vmax.f32 %v12381, 0.0
    %v13212 = vmax.f32 %v12383, 0.0
    %v13213 = vmax.f32 %v12545, 0.0
    %v13214 = vmax.f32 %v12547, 0.0
    %v13215 = vmax.f32 %v12709, 0.0
    %v13216 = vmax.f32 %v12711, 0.0
    %v13217 = vmax.f32 %v12873, 0.0
    %v13218 = vmax.f32 %v12875, 0.0
    %v13219 = vmax.f32 %v13037, 0.0
    %v13220 = vmax.f32 %v13039, 0.0
    %v13221 = vmax.f32 %v13201, 0.0
    %v13222 = vmax.f32 %v13203, 0.0
    %v13239 = vcombine.low %v13207, %v13208
    %v13240 = vcombine.low %v13209, %v13210
    %v13242 = vunpack.c.l.s4 1983009808
    %v13243 = vunpack.c.0.s8 %v13242
    %v13244 = vlaneseq
    %v13245 = vshrl.u32 %v13244, 7
    %v13246 = vsub.s32 %v13243, %v13245
    %v13247 = vrot.slane %v13239, %v13246
    %v13249 = vunpack.c.l.s4 1983009808
    %v13250 = vunpack.c.0.s8 %v13249
    %v13251 = vlaneseq
    %v13252 = vshrl.u32 %v13251, 7
    %v13253 = vsub.s32 %v13250, %v13252
    %v13254 = vrot.slane %v13240, %v13253
    %v13255 = vcombine.low %v13247, %v13254
    %v13256 = vcombine.low %v13211, %v13212
    %v13257 = vcombine.low %v13213, %v13214
    %v13259 = vunpack.c.l.s4 1983009808
    %v13260 = vunpack.c.0.s8 %v13259
    %v13261 = vlaneseq
    %v13262 = vshrl.u32 %v13261, 7
    %v13263 = vsub.s32 %v13260, %v13262
    %v13264 = vrot.slane %v13256, %v13263
    %v13266 = vunpack.c.l.s4 1983009808
    %v13267 = vunpack.c.0.s8 %v13266
    %v13268 = vlaneseq
    %v13269 = vshrl.u32 %v13268, 7
    %v13270 = vsub.s32 %v13267, %v13269
    %v13271 = vrot.slane %v13257, %v13270
    %v13272 = vcombine.low %v13264, %v13271
    %v13273 = vcombine.low %v13215, %v13216
    %v13274 = vcombine.low %v13217, %v13218
    %v13276 = vunpack.c.l.s4 1983009808
    %v13277 = vunpack.c.0.s8 %v13276
    %v13278 = vlaneseq
    %v13279 = vshrl.u32 %v13278, 7
    %v13280 = vsub.s32 %v13277, %v13279
    %v13281 = vrot.slane %v13273, %v13280
    %v13283 = vunpack.c.l.s4 1983009808
    %v13284 = vunpack.c.0.s8 %v13283
    %v13285 = vlaneseq
    %v13286 = vshrl.u32 %v13285, 7
    %v13287 = vsub.s32 %v13284, %v13286
    %v13288 = vrot.slane %v13274, %v13287
    %v13289 = vcombine.low %v13281, %v13288
    %v13290 = vcombine.low %v13219, %v13220
    %v13291 = vcombine.low %v13221, %v13222
    %v13293 = vunpack.c.l.s4 1983009808
    %v13294 = vunpack.c.0.s8 %v13293
    %v13295 = vlaneseq
    %v13296 = vshrl.u32 %v13295, 7
    %v13297 = vsub.s32 %v13294, %v13296
    %v13298 = vrot.slane %v13290, %v13297
    %v13300 = vunpack.c.l.s4 1983009808
    %v13301 = vunpack.c.0.s8 %v13300
    %v13302 = vlaneseq
    %v13303 = vshrl.u32 %v13302, 7
    %v13304 = vsub.s32 %v13301, %v13303
    %v13305 = vrot.slane %v13291, %v13304
    %v13306 = vcombine.low %v13298, %v13305
    %13311 = vst [vmem:[%s17] sm:$0xff] %v13255
    %13312 = vst [vmem:[%s17 + $0x8] sm:$0xff] %v13272
    %13313 = vst [vmem:[%s17 + $0x10] sm:$0xff] %v13289
    %13314 = vst [vmem:[%s17 + $0x18] sm:$0xff] %v13306
    // Predicated region
    $region102: #{_backbone_forward.1} parent=1 // pred_check
      _
    $region103: #{_backbone_forward.1} parent=1 // pred_check_branch
      %13316 = sbr.rel (0) target = $region105
    $region104: #{_backbone_forward.1} parent=1 // pred_region
      _
    $region105: #{_backbone_forward.1} parent=1 // pred_fallthru
      _
    // Predicated region
    $region106: #{_backbone_forward.1} parent=1 // pred_check
      _
    $region107: #{_backbone_forward.1} parent=1 // pred_check_branch
      %13318 = sbr.rel (0) target = $region109
    $region108: #{_backbone_forward.1} parent=1 // pred_region
      _
    $region109: #{_backbone_forward.1} parent=1 // pred_fallthru
      _
    // Predicated region
    $region110: #{_backbone_forward.1} parent=1 // pred_check
      _
    $region111: #{_backbone_forward.1} parent=1 // pred_check_branch
      %13320 = sbr.rel (0) target = $region113
    $region112: #{_backbone_forward.1} parent=1 // pred_region
      _
    $region113: #{_backbone_forward.1} parent=1 // pred_fallthru
      _
    // Predicated region
    $region114: #{_backbone_forward.1} parent=1 // pred_check
      _
    $region115: #{_backbone_forward.1} parent=1 // pred_check_branch
      %13322 = sbr.rel (0) target = $region117
    $region116: #{_backbone_forward.1} parent=1 // pred_region
      _
    $region117: #{_backbone_forward.1} parent=1 // pred_fallthru
      _
    // Predicated region
    $region118: #{_backbone_forward.1} parent=1 // pred_check
      _
    $region119: #{_backbone_forward.1} parent=1 // pred_check_branch
      %13324 = sbr.rel (0) target = $region121
    $region120: #{_backbone_forward.1} parent=1 // pred_region
      _
    $region121: #{_backbone_forward.1} parent=1 // pred_fallthru
      _
    // Predicated region
    $region122: #{_backbone_forward.1} parent=1 // pred_check
      _
    $region123: #{_backbone_forward.1} parent=1 // pred_check_branch
      %13326 = sbr.rel (0) target = $region125
    $region124: #{_backbone_forward.1} parent=1 // pred_region
      _
    $region125: #{_backbone_forward.1} parent=1 // pred_fallthru
      _
    // Predicated region
    $region126: #{_backbone_forward.1} parent=1 // pred_check
      _
    $region127: #{_backbone_forward.1} parent=1 // pred_check_branch
      %13328 = sbr.rel (0) target = $region129
    $region128: #{_backbone_forward.1} parent=1 // pred_region
      _
    $region129: #{_backbone_forward.1} parent=1 // pred_fallthru
      _
    // Predicated region
    $region130: #{_backbone_forward.1} parent=1 // pred_check
      _
    $region131: #{_backbone_forward.1} parent=1 // pred_check_branch
      %13330 = sbr.rel (0) target = $region133
    $region132: #{_backbone_forward.1} parent=1 // pred_region
      _
    $region133: #{_backbone_forward.1} parent=1 // pred_fallthru
      _
    // Predicated region
    $region134: #{_backbone_forward.1} parent=1 // pred_check
      _
    $region135: #{_backbone_forward.1} parent=1 // pred_check_branch
      %13332 = sbr.rel (0) target = $region137
    $region136: #{_backbone_forward.1} parent=1 // pred_region
      _
    $region137: #{_backbone_forward.1} parent=1 // pred_fallthru
      _
    // Predicated region
    $region138: #{_backbone_forward.1} parent=1 // pred_check
      _
    $region139: #{_backbone_forward.1} parent=1 // pred_check_branch
      %13334 = sbr.rel (0) target = $region141
    $region140: #{_backbone_forward.1} parent=1 // pred_region
      _
    $region141: #{_backbone_forward.1} parent=1 // pred_fallthru
      _
    %13335 = vsyncpa [#allocation3], 1
    %13336 = vsyncpa [#allocation5], 1
    %13337 = vsyncpa [#allocation8], 1
    %13338 = vsyncpa [#allocation11], 1
    %13339 = vsyncpa [#allocation14], 1
    %13340 = vsyncpa [#allocation17], 1
    %13341 = vsyncpa [#allocation20], 1

</llo_original>
